<compile_context>
chip_gen: v5e
topology: v5e:2x2
jax: 0.10.0
libtpu: 0.0.40
codegen_flags: <defaults>
</compile_context>

<pallas_src>
import functools

import jax
import jax.numpy as jnp
from jax.experimental import pallas as pl
from jax.experimental.pallas import tpu as pltpu


# ----------------------------------------------------------------------------
# helpers
# ----------------------------------------------------------------------------
def _round_up(v, m):
    return ((v + m - 1) // m) * m


def _pad_channels(c):
    # Lane-dense (128) padding only when the channel count is already large;
    # tiny channel counts keep (nearly) their true width so input DMA and
    # output writeback are not inflated 32x (accepting a masked vst).
    if c >= 64:
        return _round_up(c, 128)
    return _round_up(c, 8)


def _vmem_capacity_bytes():
    try:
        return int(pltpu.get_tpu_info().vmem_capacity_bytes)
    except Exception:
        return 64 * 1024 * 1024          # conservative (v7x per-TC)


def _dw_compute_dtype():
    # bf16 VALU exists on v6e / v7x -> do the depthwise MAC in bf16 there;
    # keep f32 on v5e and older (no bf16 VPU) or unknown backends.
    try:
        kind = jax.devices()[0].device_kind.lower()
    except Exception:
        kind = ""
    if "v6" in kind or "v7" in kind:
        return jnp.bfloat16
    return jnp.float32


def _fold_bn(gamma, beta, mean, var, eps=1e-5):
    scale = gamma / jnp.sqrt(var + eps)
    bias = beta - mean * scale
    return scale, bias


def _pick_row_tile(ho, w_img, *, stride, dilation, hidden_p, cout_p,
                   dw_bytes, budget_bytes, cap=64):
    """Largest divisor row-tile of `ho` (capped) whose intermediates fit."""
    wo = (w_img - 1) // stride + 1
    wp_img = w_img + 2 * dilation
    best = 1
    for t in range(1, ho + 1):
        if ho % t or t > cap:
            continue
        rows_in = (t - 1) * stride + 2 * dilation + 1
        need = (rows_in * wp_img * hidden_p * (4 + dw_bytes)   # e (+ dw copy)
                + t * wo * hidden_p * (6 + dw_bytes)           # acc/dwo/dm
                + t * wo * cout_p * 4 * 3)                     # out + 2 bufs
        if need <= budget_bytes:
            best = t
    return best


# ----------------------------------------------------------------------------
# fused InvertedResidual kernel
# ----------------------------------------------------------------------------
def _fused_ir_kernel(*refs, has_expand, use_res, stride, dilation, th,
                     w_img, w_out, hidden_p, cout_p, dw_dtype):
    if has_expand:
        (x_ref, mask_ref, we_ref, be_ref, wd_ref, bd_ref, wp_ref, bp_ref,
         o_ref) = refs
    else:
        (x_ref, wd_ref, bd_ref, wp_ref, bp_ref, o_ref) = refs

    d = dilation
    s = stride
    wp_img = w_img + 2 * d                       # padded width
    rows_in = (th - 1) * s + 2 * d + 1           # input rows incl. halo
    f32_dw = jnp.dtype(dw_dtype) == jnp.dtype(jnp.float32)

    row0 = pl.program_id(1) * (th * s)           # first padded input row
    if (th * s) % 8 == 0:
        row0 = pl.multiple_of(row0, 8)           # aligned slab loads

    # bf16 input rows for this tile (spatially zero-padded, channel-padded)
    x_rows = x_ref[pl.ds(row0, rows_in), :, :]   # (rows_in, wp_img, cin_p)
    cin_p = x_rows.shape[-1]

    # ---- 1x1 expand conv + BN + ReLU6 (MXU: bf16 operands, f32 acc) ----
    if has_expand:
        xm = x_rows.reshape(rows_in * wp_img, cin_p)          # already bf16
        e = jnp.dot(xm, we_ref[...], preferred_element_type=jnp.float32)
        e = jnp.clip(e + be_ref[...], 0.0, 6.0)
        e = e.reshape(rows_in, wp_img, hidden_p)
        # Zero the spatial halo of the *expanded* activation: ReLU6(bias)
        # must not leak into the dw taps.  One multiply with a precomputed
        # 0/1 mask replaces the previous iota/compare/where chain.
        m = mask_ref[pl.ds(row0, rows_in), :]
        e = e * m[:, :, None]                                  # f32
    else:
        e = x_rows                                             # halo already 0

    # ---- 3x3 depthwise conv + BN + ReLU6 (VPU tap-accumulate) ----
    wd = wd_ref[...]                             # (9, hidden_p) in dw_dtype
    if f32_dw:
        # fold bias into the accumulator init (drops a full-tile add)
        acc = jnp.broadcast_to(bd_ref[...].reshape(1, 1, hidden_p),
                               (th, w_out, hidden_p))
    else:
        acc = jnp.zeros((th, w_out, hidden_p), dw_dtype)

    if s == 1:
        e = e.astype(dw_dtype)
        for i in range(3):
            for j in range(3):
                tap = e[i * d:i * d + th, j * d:j * d + w_out, :]
                acc = acc + tap * wd[i * 3 + j][None, None, :]
    else:
        # stride 2: subsample once into 2x2 phase buffers (4 strided slices
        # instead of 9 strided taps), then take contiguous taps from them.
        esrc = e.astype(jnp.float32)
        ph = [[esrc[pr::s, pc::s, :].astype(dw_dtype) for pc in range(s)]
              for pr in range(s)]
        for i in range(3):
            for j in range(3):
                ri, ci = i * d, j * d
                buf = ph[ri % s][ci % s]
                tap = buf[ri // s:ri // s + th, ci // s:ci // s + w_out, :]
                acc = acc + tap * wd[i * 3 + j][None, None, :]

    if f32_dw:
        dwo = jnp.clip(acc, 0.0, 6.0)
    else:
        dwo = jnp.clip(acc.astype(jnp.float32) + bd_ref[...], 0.0, 6.0)

    # ---- 1x1 project conv + BN (MXU: bf16 operands, f32 acc) ----
    dm = dwo.reshape(th * w_out, hidden_p).astype(jnp.bfloat16)
    out = jnp.dot(dm, wp_ref[...], preferred_element_type=jnp.float32)
    out = (out + bp_ref[...]).reshape(th, w_out, cout_p)

    # ---- residual add (stride==1, cin==cout): reuse the same input block ----
    if use_res:
        out = out + x_rows[d:d + th, d:d + w_img, :].astype(jnp.float32)

    o_ref[...] = out.astype(o_ref.dtype)


# ----------------------------------------------------------------------------
# wrapper: BN folding, channel padding, tiling, pallas_call
# ----------------------------------------------------------------------------
def inverted_residual_forward(x, params, *, expand_ratio, stride=1,
                              dilation=1, data_format="NCHW",
                              out_dtype=jnp.float32):
    assert stride in (1, 2)
    x_nhwc = jnp.transpose(x, (0, 2, 3, 1)) if data_format == "NCHW" else x
    n, h, w, cin = x_nhwc.shape
    d = dilation
    has_expand = expand_ratio != 1
    hidden = int(round(cin * expand_ratio))
    cout = params["w_proj"].shape[1]
    use_res = (stride == 1) and (cin == cout)

    cin_p = _pad_channels(cin)
    hidden_p = _pad_channels(hidden)
    cout_p = _pad_channels(cout)
    assert (not use_res) or cin_p == cout_p

    ho = (h - 1) // stride + 1                   # k=3, pad=d, dil=d formula
    wo = (w - 1) // stride + 1
    hp, wp = h + 2 * d, w + 2 * d

    dw_dtype = _dw_compute_dtype()
    dw_bytes = jnp.dtype(dw_dtype).itemsize

    # VMEM-budget-driven row tile.
    capacity = _vmem_capacity_bytes()
    fixed = (hp * wp * cin_p * 2 * 2             # bf16 input block, 2 bufs
             + hp * wp * 4 * 2                   # f32 halo mask, 2 bufs
             + 2 * (cin_p * hidden_p * 2 + hidden_p * cout_p * 2
                    + 9 * hidden_p * dw_bytes + 4 * (hidden_p + cout_p)))
    budget = max(int(0.45 * capacity) - fixed, 1 << 20)
    th = _pick_row_tile(ho, w, stride=stride, dilation=d, hidden_p=hidden_p,
                        cout_p=cout_p, dw_bytes=dw_bytes, budget_bytes=budget)
    n_row_tiles = ho // th
    # TODO(synk): add a width-tile grid axis (and memory_space=pl.ANY + manual
    # halo DMA for the input) as a fallback for very large images / prime ho
    # on v7x's 64 MiB VMEM.

    # bf16 input in HBM: halves the dominant input DMA and VMEM residency.
    xpad = jnp.pad(x_nhwc.astype(jnp.bfloat16),
                   ((0, 0), (d, d), (d, d), (0, cin_p - cin)))

    args = [xpad]
    in_specs = [pl.BlockSpec((None, hp, wp, cin_p), lambda b, r: (b, 0, 0, 0))]

    if has_expand:
        mask = jnp.pad(jnp.ones((h, w), jnp.float32), ((d, d), (d, d)))
        sc, bs = _fold_bn(*params["bn_exp"])
        w_exp = jnp.pad(params["w_exp"] * sc[None, :],
                        ((0, cin_p - cin), (0, hidden_p - hidden))
                        ).astype(jnp.bfloat16)
        b_exp = jnp.pad(bs, (0, hidden_p - hidden)).reshape(1, hidden_p)
        args += [mask, w_exp, b_exp]
        in_specs += [pl.BlockSpec((hp, wp), lambda b, r: (0, 0)),
                     pl.BlockSpec((cin_p, hidden_p), lambda b, r: (0, 0)),
                     pl.BlockSpec((1, hidden_p), lambda b, r: (0, 0))]

    sc, bs = _fold_bn(*params["bn_dw"])
    w_dw = jnp.pad((params["w_dw"] * sc[None, None, :]).reshape(9, hidden),
                   ((0, 0), (0, hidden_p - hidden))).astype(dw_dtype)
    b_dw = jnp.pad(bs, (0, hidden_p - hidden)).reshape(1, hidden_p)
    sc, bs = _fold_bn(*params["bn_proj"])
    w_proj = jnp.pad(params["w_proj"] * sc[None, :],
                     ((0, hidden_p - hidden), (0, cout_p - cout))
                     ).astype(jnp.bfloat16)
    b_proj = jnp.pad(bs, (0, cout_p - cout)).reshape(1, cout_p)
    args += [w_dw, b_dw, w_proj, b_proj]
    # TODO(synk): grid-invariant weight blocks could be single-buffered via
    # pipeline_mode=pl.Buffered(1) to reclaim VMEM for large blocks on v7x.
    in_specs += [pl.BlockSpec((9, hidden_p), lambda b, r: (0, 0)),
                 pl.BlockSpec((1, hidden_p), lambda b, r: (0, 0)),
                 pl.BlockSpec((hidden_p, cout_p), lambda b, r: (0, 0)),
                 pl.BlockSpec((1, cout_p), lambda b, r: (0, 0))]

    kern = functools.partial(
        _fused_ir_kernel, has_expand=has_expand, use_res=use_res,
        stride=stride, dilation=d, th=th, w_img=w, w_out=wo,
        hidden_p=hidden_p, cout_p=cout_p, dw_dtype=dw_dtype)

    flops = 2 * 9 * n * ho * wo * hidden_p + 2 * n * ho * wo * hidden_p * cout_p
    if has_expand:
        flops += 2 * n * hp * wp * cin_p * hidden_p
    bytes_accessed = int(xpad.size * 2
                         + n * ho * wo * cout_p * jnp.dtype(out_dtype).itemsize
                         + hidden_p * (cin_p + cout_p) * 2
                         + 17 * hidden_p * 4 + hp * wp * 4)

    vmem_limit = min(int(0.8 * capacity), 96 * 1024 * 1024)

    out_padded = pl.pallas_call(
        kern,
        out_shape=jax.ShapeDtypeStruct((n, ho, wo, cout_p), out_dtype),
        grid_spec=pltpu.PrefetchScalarGridSpec(
            num_scalar_prefetch=0,
            grid=(n, n_row_tiles),
            in_specs=in_specs,
            out_specs=pl.BlockSpec((None, th, wo, cout_p),
                                   lambda b, r: (b, r, 0, 0)),
        ),
        compiler_params=pltpu.CompilerParams(
            dimension_semantics=("parallel", "parallel"),
            vmem_limit_bytes=vmem_limit),
        cost_estimate=pl.CostEstimate(
            flops=int(flops), transcendentals=0,
            bytes_accessed=bytes_accessed),
    )(*args)

    out = out_padded[..., :cout]                 # drop channel padding
    # TODO(synk): keep data_format="NHWC" end-to-end across stacked blocks to
    # avoid per-block NCHW<->NHWC transpose passes in XLA.
    if data_format == "NCHW":
        out = jnp.transpose(out, (0, 3, 1, 2))
    return out


# ----------------------------------------------------------------------------
# parameter construction (matches the PyTorch module, inference BN)
# ----------------------------------------------------------------------------
def make_params(key, cin, cout, expand_ratio):
    hidden = int(round(cin * expand_ratio))
    keys = jax.random.split(key, 12)
    p = {}
    if expand_ratio != 1:
        p["w_exp"] = 0.1 * jax.random.normal(keys[0], (cin, hidden), jnp.float32)
        p["bn_exp"] = (
            1.0 + 0.1 * jax.random.normal(keys[1], (hidden,), jnp.float32),
            0.1 * jax.random.normal(keys[2], (hidden,), jnp.float32),
            0.1 * jax.random.normal(keys[3], (hidden,), jnp.float32),
            jnp.abs(jax.random.normal(keys[4], (hidden,), jnp.float32)) + 0.5,
        )
    p["w_dw"] = 0.1 * jax.random.normal(keys[5], (3, 3, hidden), jnp.float32)
    p["bn_dw"] = (
        1.0 + 0.1 * jax.random.normal(keys[6], (hidden,), jnp.float32),
        0.1 * jax.random.normal(keys[7], (hidden,), jnp.float32),
        0.1 * jax.random.normal(keys[8], (hidden,), jnp.float32),
        jnp.abs(jax.random.normal(keys[9], (hidden,), jnp.float32)) + 0.5,
    )
    p["w_proj"] = 0.1 * jax.random.normal(keys[10], (hidden, cout), jnp.float32)
    p["bn_proj"] = (
        1.0 + 0.1 * jax.random.normal(keys[11], (cout,), jnp.float32),
        0.1 * jnp.ones((cout,), jnp.float32),
        0.05 * jnp.ones((cout,), jnp.float32),
        jnp.ones((cout,), jnp.float32),
    )
    return p, hidden


# ----------------------------------------------------------------------------
# plain-JAX f32 reference (correctness check)
# ----------------------------------------------------------------------------
def reference_forward(x_nchw, params, *, expand_ratio, stride=1, dilation=1):
    n, cin, h, w = x_nchw.shape
    x = jnp.transpose(x_nchw, (0, 2, 3, 1)).astype(jnp.float32)
    if expand_ratio != 1:
        scale, bias = _fold_bn(*params["bn_exp"])
        y = jnp.einsum("nhwc,cd->nhwd", x, params["w_exp"] * scale[None, :]) + bias
        y = jnp.clip(y, 0.0, 6.0)
    else:
        y = x
    scale, bias = _fold_bn(*params["bn_dw"])
    w_dw = params["w_dw"] * scale[None, None, :]
    pad = dilation
    yp = jnp.pad(y, ((0, 0), (pad, pad), (pad, pad), (0, 0)))
    ho = (h + 2 * pad - dilation * 2 - 1) // stride + 1
    wo = (w + 2 * pad - dilation * 2 - 1) // stride + 1
    acc = jnp.zeros((n, ho, wo, w_dw.shape[-1]), jnp.float32)
    for i in range(3):
        for j in range(3):
            xi = yp[:, i * dilation: i * dilation + (ho - 1) * stride + 1: stride,
                    j * dilation: j * dilation + (wo - 1) * stride + 1: stride, :]
            acc = acc + xi * w_dw[i, j][None, None, None, :]
    dwo = jnp.clip(acc + bias, 0.0, 6.0)
    scale, bias = _fold_bn(*params["bn_proj"])
    o = jnp.einsum("nhwc,cd->nhwd", dwo, params["w_proj"] * scale[None, :]) + bias
    cout = params["w_proj"].shape[1]
    if stride == 1 and cin == cout:
        o = o + x
    return jnp.transpose(o, (0, 3, 1, 2))


if __name__ == "__main__":
    key = jax.random.PRNGKey(0)
    N = 2
    configs = [
        dict(cin=4, cout=4, expand=6, stride=1, dilation=1, h=16, w=16),  # residual
        dict(cin=4, cout=4, expand=1, stride=1, dilation=1, h=16, w=16),  # no expand
        dict(cin=4, cout=8, expand=6, stride=2, dilation=1, h=16, w=16),  # stride 2
        dict(cin=4, cout=4, expand=6, stride=1, dilation=2, h=16, w=16),  # dilation 2
    ]
    for idx, cfg in enumerate(configs):
        kx, kp, key = jax.random.split(key, 3)
        x = jax.random.normal(kx, (N, cfg["cin"], cfg["h"], cfg["w"]), jnp.float32)
        params, _ = make_params(kp, cfg["cin"], cfg["cout"], cfg["expand"])
        out = inverted_residual_forward(
            x, params, expand_ratio=cfg["expand"], stride=cfg["stride"],
            dilation=cfg["dilation"])
        out = jax.block_until_ready(out)
        ref = reference_forward(
            x, params, expand_ratio=cfg["expand"], stride=cfg["stride"],
            dilation=cfg["dilation"])
        assert out.shape == ref.shape, (idx, out.shape, ref.shape)
        max_err = float(jnp.max(jnp.abs(out - ref)))
        # bf16 input / bf16 MXU operands / (v6e+) bf16 depthwise vs f32 ref
        assert jnp.allclose(out, ref, rtol=5e-2, atol=5e-2), (idx, max_err)
    print("KERNEL_OK")
</pallas_src>

<mosaic_0001>
module attributes {stable_mosaic.version = 11 : i64} {
  func.func @_fused_ir_kernel(%arg0: i32, %arg1: i32, %arg2: memref<1x18x18x8xbf16, #tpu.memory_space<vmem>>, %arg3: memref<18x18xf32, #tpu.memory_space<vmem>>, %arg4: memref<8x24xbf16, #tpu.memory_space<vmem>>, %arg5: memref<1x24xf32, #tpu.memory_space<vmem>>, %arg6: memref<9x24xf32, #tpu.memory_space<vmem>>, %arg7: memref<1x24xf32, #tpu.memory_space<vmem>>, %arg8: memref<24x8xbf16, #tpu.memory_space<vmem>>, %arg9: memref<1x8xf32, #tpu.memory_space<vmem>>, %arg10: memref<1x16x16x8xf32, #tpu.memory_space<vmem>>) attributes {dimension_semantics = [#tpu.dimension_semantics<parallel>, #tpu.dimension_semantics<parallel>], iteration_bounds = array<i64: 2, 1>, scalar_prefetch = 0 : i64, scratch_operands = 0 : i64, tpu.core_type = #tpu.core_type<tc>, window_params = [{transform_indices = @transform_0, window_bounds = array<i64: 1, 18, 18, 8>}, {pipeline_mode = #tpu.pipeline_mode<synchronous>, transform_indices = @transform_1, window_bounds = array<i64: 18, 18>}, {pipeline_mode = #tpu.pipeline_mode<synchronous>, transform_indices = @transform_2, window_bounds = array<i64: 8, 24>}, {pipeline_mode = #tpu.pipeline_mode<synchronous>, transform_indices = @transform_3, window_bounds = array<i64: 1, 24>}, {pipeline_mode = #tpu.pipeline_mode<synchronous>, transform_indices = @transform_4, window_bounds = array<i64: 9, 24>}, {pipeline_mode = #tpu.pipeline_mode<synchronous>, transform_indices = @transform_5, window_bounds = array<i64: 1, 24>}, {pipeline_mode = #tpu.pipeline_mode<synchronous>, transform_indices = @transform_6, window_bounds = array<i64: 24, 8>}, {pipeline_mode = #tpu.pipeline_mode<synchronous>, transform_indices = @transform_7, window_bounds = array<i64: 1, 8>}, {transform_indices = @transform_8, window_bounds = array<i64: 1, 16, 16, 8>}]} {
    %c16_i32 = arith.constant 16 : i32
    %0 = arith.muli %arg1, %c16_i32 : i32
    %1 = tpu.assume_multiple %0, 8 : i32
    %c0 = arith.constant 0 : index
    %2 = arith.index_cast %1 : i32 to index
    %c0_0 = arith.constant 0 : index
    %c0_1 = arith.constant 0 : index
    %3 = vector.load %arg2[%c0, %2, %c0_0, %c0_1] : memref<1x18x18x8xbf16, #tpu.memory_space<vmem>>, vector<1x18x18x8xbf16>
    %4 = vector.shape_cast %3 : vector<1x18x18x8xbf16> to vector<18x18x8xbf16>
    %5 = vector.shape_cast %4 : vector<18x18x8xbf16> to vector<324x8xbf16>
    %c0_2 = arith.constant 0 : index
    %c0_3 = arith.constant 0 : index
    %6 = vector.load %arg4[%c0_2, %c0_3] : memref<8x24xbf16, #tpu.memory_space<vmem>>, vector<8x24xbf16>
    %cst = arith.constant dense<0.000000e+00> : vector<324x24xf32>
    %7 = tpu.matmul %5, %6, %cst {dimension_numbers = #tpu.dot_dimension_numbers<[1], [0], [0], [1], [0, 0, 1, 1], [], []>} : vector<324x8xbf16>, vector<8x24xbf16>, vector<324x24xf32> -> vector<324x24xf32>
    %c0_4 = arith.constant 0 : index
    %c0_5 = arith.constant 0 : index
    %8 = vector.load %arg5[%c0_4, %c0_5] : memref<1x24xf32, #tpu.memory_space<vmem>>, vector<1x24xf32>
    %9 = vector.broadcast %8 : vector<1x24xf32> to vector<324x24xf32>
    %10 = arith.addf %7, %9 : vector<324x24xf32>
    %cst_6 = arith.constant 0.000000e+00 : f32
    %cst_7 = arith.constant 6.000000e+00 : f32
    %11 = vector.broadcast %cst_6 : f32 to vector<324x24xf32>
    %12 = arith.maximumf %11, %10 : vector<324x24xf32>
    %13 = vector.broadcast %cst_7 : f32 to vector<324x24xf32>
    %14 = arith.minimumf %13, %12 : vector<324x24xf32>
    %15 = vector.shape_cast %14 : vector<324x24xf32> to vector<18x18x24xf32>
    %16 = arith.index_cast %1 : i32 to index
    %c0_8 = arith.constant 0 : index
    %17 = vector.load %arg3[%16, %c0_8] : memref<18x18xf32, #tpu.memory_space<vmem>>, vector<18x18xf32>
    %18 = vector.shape_cast %17 : vector<18x18xf32> to vector<18x18x1xf32>
    %19 = vector.broadcast %18 : vector<18x18x1xf32> to vector<18x18x24xf32>
    %20 = arith.mulf %15, %19 : vector<18x18x24xf32>
    %c0_9 = arith.constant 0 : index
    %c0_10 = arith.constant 0 : index
    %21 = vector.load %arg6[%c0_9, %c0_10] : memref<9x24xf32, #tpu.memory_space<vmem>>, vector<9x24xf32>
    %c0_11 = arith.constant 0 : index
    %c0_12 = arith.constant 0 : index
    %22 = vector.load %arg7[%c0_11, %c0_12] : memref<1x24xf32, #tpu.memory_space<vmem>>, vector<1x24xf32>
    %23 = vector.shape_cast %22 : vector<1x24xf32> to vector<1x1x24xf32>
    %24 = vector.shape_cast %23 : vector<1x1x24xf32> to vector<1x1x24xf32>
    %25 = vector.broadcast %24 : vector<1x1x24xf32> to vector<16x16x24xf32>
    %26 = vector.extract_strided_slice %20 {offsets = [0, 0, 0], sizes = [16, 16, 24], strides = [1, 1, 1]} : vector<18x18x24xf32> to vector<16x16x24xf32>
    %27 = vector.extract_strided_slice %21 {offsets = [0, 0], sizes = [1, 24], strides = [1, 1]} : vector<9x24xf32> to vector<1x24xf32>
    %28 = vector.shape_cast %27 : vector<1x24xf32> to vector<24xf32>
    %29 = vector.shape_cast %28 : vector<24xf32> to vector<1x1x24xf32>
    %30 = vector.broadcast %29 : vector<1x1x24xf32> to vector<16x16x24xf32>
    %31 = arith.mulf %26, %30 : vector<16x16x24xf32>
    %32 = arith.addf %25, %31 : vector<16x16x24xf32>
    %33 = vector.extract_strided_slice %20 {offsets = [0, 1, 0], sizes = [16, 16, 24], strides = [1, 1, 1]} : vector<18x18x24xf32> to vector<16x16x24xf32>
    %34 = vector.extract_strided_slice %21 {offsets = [1, 0], sizes = [1, 24], strides = [1, 1]} : vector<9x24xf32> to vector<1x24xf32>
    %35 = vector.shape_cast %34 : vector<1x24xf32> to vector<24xf32>
    %36 = vector.shape_cast %35 : vector<24xf32> to vector<1x1x24xf32>
    %37 = vector.broadcast %36 : vector<1x1x24xf32> to vector<16x16x24xf32>
    %38 = arith.mulf %33, %37 : vector<16x16x24xf32>
    %39 = arith.addf %32, %38 : vector<16x16x24xf32>
    %40 = vector.extract_strided_slice %20 {offsets = [0, 2, 0], sizes = [16, 16, 24], strides = [1, 1, 1]} : vector<18x18x24xf32> to vector<16x16x24xf32>
    %41 = vector.extract_strided_slice %21 {offsets = [2, 0], sizes = [1, 24], strides = [1, 1]} : vector<9x24xf32> to vector<1x24xf32>
    %42 = vector.shape_cast %41 : vector<1x24xf32> to vector<24xf32>
    %43 = vector.shape_cast %42 : vector<24xf32> to vector<1x1x24xf32>
    %44 = vector.broadcast %43 : vector<1x1x24xf32> to vector<16x16x24xf32>
    %45 = arith.mulf %40, %44 : vector<16x16x24xf32>
    %46 = arith.addf %39, %45 : vector<16x16x24xf32>
    %47 = vector.extract_strided_slice %20 {offsets = [1, 0, 0], sizes = [16, 16, 24], strides = [1, 1, 1]} : vector<18x18x24xf32> to vector<16x16x24xf32>
    %48 = vector.extract_strided_slice %21 {offsets = [3, 0], sizes = [1, 24], strides = [1, 1]} : vector<9x24xf32> to vector<1x24xf32>
    %49 = vector.shape_cast %48 : vector<1x24xf32> to vector<24xf32>
    %50 = vector.shape_cast %49 : vector<24xf32> to vector<1x1x24xf32>
    %51 = vector.broadcast %50 : vector<1x1x24xf32> to vector<16x16x24xf32>
    %52 = arith.mulf %47, %51 : vector<16x16x24xf32>
    %53 = arith.addf %46, %52 : vector<16x16x24xf32>
    %54 = vector.extract_strided_slice %20 {offsets = [1, 1, 0], sizes = [16, 16, 24], strides = [1, 1, 1]} : vector<18x18x24xf32> to vector<16x16x24xf32>
    %55 = vector.extract_strided_slice %21 {offsets = [4, 0], sizes = [1, 24], strides = [1, 1]} : vector<9x24xf32> to vector<1x24xf32>
    %56 = vector.shape_cast %55 : vector<1x24xf32> to vector<24xf32>
    %57 = vector.shape_cast %56 : vector<24xf32> to vector<1x1x24xf32>
    %58 = vector.broadcast %57 : vector<1x1x24xf32> to vector<16x16x24xf32>
    %59 = arith.mulf %54, %58 : vector<16x16x24xf32>
    %60 = arith.addf %53, %59 : vector<16x16x24xf32>
    %61 = vector.extract_strided_slice %20 {offsets = [1, 2, 0], sizes = [16, 16, 24], strides = [1, 1, 1]} : vector<18x18x24xf32> to vector<16x16x24xf32>
    %62 = vector.extract_strided_slice %21 {offsets = [5, 0], sizes = [1, 24], strides = [1, 1]} : vector<9x24xf32> to vector<1x24xf32>
    %63 = vector.shape_cast %62 : vector<1x24xf32> to vector<24xf32>
    %64 = vector.shape_cast %63 : vector<24xf32> to vector<1x1x24xf32>
    %65 = vector.broadcast %64 : vector<1x1x24xf32> to vector<16x16x24xf32>
    %66 = arith.mulf %61, %65 : vector<16x16x24xf32>
    %67 = arith.addf %60, %66 : vector<16x16x24xf32>
    %68 = vector.extract_strided_slice %20 {offsets = [2, 0, 0], sizes = [16, 16, 24], strides = [1, 1, 1]} : vector<18x18x24xf32> to vector<16x16x24xf32>
    %69 = vector.extract_strided_slice %21 {offsets = [6, 0], sizes = [1, 24], strides = [1, 1]} : vector<9x24xf32> to vector<1x24xf32>
    %70 = vector.shape_cast %69 : vector<1x24xf32> to vector<24xf32>
    %71 = vector.shape_cast %70 : vector<24xf32> to vector<1x1x24xf32>
    %72 = vector.broadcast %71 : vector<1x1x24xf32> to vector<16x16x24xf32>
    %73 = arith.mulf %68, %72 : vector<16x16x24xf32>
    %74 = arith.addf %67, %73 : vector<16x16x24xf32>
    %75 = vector.extract_strided_slice %20 {offsets = [2, 1, 0], sizes = [16, 16, 24], strides = [1, 1, 1]} : vector<18x18x24xf32> to vector<16x16x24xf32>
    %76 = vector.extract_strided_slice %21 {offsets = [7, 0], sizes = [1, 24], strides = [1, 1]} : vector<9x24xf32> to vector<1x24xf32>
    %77 = vector.shape_cast %76 : vector<1x24xf32> to vector<24xf32>
    %78 = vector.shape_cast %77 : vector<24xf32> to vector<1x1x24xf32>
    %79 = vector.broadcast %78 : vector<1x1x24xf32> to vector<16x16x24xf32>
    %80 = arith.mulf %75, %79 : vector<16x16x24xf32>
    %81 = arith.addf %74, %80 : vector<16x16x24xf32>
    %82 = vector.extract_strided_slice %20 {offsets = [2, 2, 0], sizes = [16, 16, 24], strides = [1, 1, 1]} : vector<18x18x24xf32> to vector<16x16x24xf32>
    %83 = vector.extract_strided_slice %21 {offsets = [8, 0], sizes = [1, 24], strides = [1, 1]} : vector<9x24xf32> to vector<1x24xf32>
    %84 = vector.shape_cast %83 : vector<1x24xf32> to vector<24xf32>
    %85 = vector.shape_cast %84 : vector<24xf32> to vector<1x1x24xf32>
    %86 = vector.broadcast %85 : vector<1x1x24xf32> to vector<16x16x24xf32>
    %87 = arith.mulf %82, %86 : vector<16x16x24xf32>
    %88 = arith.addf %81, %87 : vector<16x16x24xf32>
    %cst_13 = arith.constant 0.000000e+00 : f32
    %cst_14 = arith.constant 6.000000e+00 : f32
    %89 = vector.broadcast %cst_13 : f32 to vector<16x16x24xf32>
    %90 = arith.maximumf %89, %88 : vector<16x16x24xf32>
    %91 = vector.broadcast %cst_14 : f32 to vector<16x16x24xf32>
    %92 = arith.minimumf %91, %90 : vector<16x16x24xf32>
    %93 = vector.shape_cast %92 : vector<16x16x24xf32> to vector<256x24xf32>
    %94 = arith.truncf %93 : vector<256x24xf32> to vector<256x24xbf16>
    %c0_15 = arith.constant 0 : index
    %c0_16 = arith.constant 0 : index
    %95 = vector.load %arg8[%c0_15, %c0_16] : memref<24x8xbf16, #tpu.memory_space<vmem>>, vector<24x8xbf16>
    %cst_17 = arith.constant dense<0.000000e+00> : vector<256x8xf32>
    %96 = tpu.matmul %94, %95, %cst_17 {dimension_numbers = #tpu.dot_dimension_numbers<[1], [0], [0], [1], [0, 0, 1, 1], [], []>} : vector<256x24xbf16>, vector<24x8xbf16>, vector<256x8xf32> -> vector<256x8xf32>
    %c0_18 = arith.constant 0 : index
    %c0_19 = arith.constant 0 : index
    %97 = vector.load %arg9[%c0_18, %c0_19] : memref<1x8xf32, #tpu.memory_space<vmem>>, vector<1x8xf32>
    %98 = vector.broadcast %97 : vector<1x8xf32> to vector<256x8xf32>
    %99 = arith.addf %96, %98 : vector<256x8xf32>
    %100 = vector.shape_cast %99 : vector<256x8xf32> to vector<16x16x8xf32>
    %101 = vector.extract_strided_slice %4 {offsets = [1, 1, 0], sizes = [16, 16, 8], strides = [1, 1, 1]} : vector<18x18x8xbf16> to vector<16x16x8xbf16>
    %102 = arith.extf %101 : vector<16x16x8xbf16> to vector<16x16x8xf32>
    %103 = arith.addf %100, %102 : vector<16x16x8xf32>
    %c0_20 = arith.constant 0 : index
    %c0_21 = arith.constant 0 : index
    %c0_22 = arith.constant 0 : index
    %c0_23 = arith.constant 0 : index
    %104 = vector.load %arg10[%c0_20, %c0_21, %c0_22, %c0_23] : memref<1x16x16x8xf32, #tpu.memory_space<vmem>>, vector<1x16x16x8xf32>
    %105 = vector.shape_cast %104 : vector<1x16x16x8xf32> to vector<16x16x8xf32>
    %106 = vector.shape_cast %103 : vector<16x16x8xf32> to vector<1x16x16x8xf32>
    tpu.vector_store %arg10[%c0_20, %c0_21, %c0_22, %c0_23], %106 {strides = array<i32>} : memref<1x16x16x8xf32, #tpu.memory_space<vmem>>, vector<1x16x16x8xf32>,
    return
  }
  func.func @transform_0(%arg0: i32, %arg1: i32) -> (i32, i32, i32, i32) {
    %c0_i32 = arith.constant 0 : i32
    %c0_i32_0 = arith.constant 0 : i32
    %c0_i32_1 = arith.constant 0 : i32
    %c0_i32_2 = arith.constant 0 : i32
    return %arg0, %c0_i32, %c0_i32_0, %c0_i32_1 : i32, i32, i32, i32
  }
  func.func @transform_1(%arg0: i32, %arg1: i32) -> (i32, i32) {
    %c0_i32 = arith.constant 0 : i32
    %c0_i32_0 = arith.constant 0 : i32
    %c0_i32_1 = arith.constant 0 : i32
    return %c0_i32, %c0_i32_0 : i32, i32
  }
  func.func @transform_2(%arg0: i32, %arg1: i32) -> (i32, i32) {
    %c0_i32 = arith.constant 0 : i32
    %c0_i32_0 = arith.constant 0 : i32
    %c0_i32_1 = arith.constant 0 : i32
    return %c0_i32, %c0_i32_0 : i32, i32
  }
  func.func @transform_3(%arg0: i32, %arg1: i32) -> (i32, i32) {
    %c0_i32 = arith.constant 0 : i32
    %c0_i32_0 = arith.constant 0 : i32
    %c0_i32_1 = arith.constant 0 : i32
    return %c0_i32, %c0_i32_0 : i32, i32
  }
  func.func @transform_4(%arg0: i32, %arg1: i32) -> (i32, i32) {
    %c0_i32 = arith.constant 0 : i32
    %c0_i32_0 = arith.constant 0 : i32
    %c0_i32_1 = arith.constant 0 : i32
    return %c0_i32, %c0_i32_0 : i32, i32
  }
  func.func @transform_5(%arg0: i32, %arg1: i32) -> (i32, i32) {
    %c0_i32 = arith.constant 0 : i32
    %c0_i32_0 = arith.constant 0 : i32
    %c0_i32_1 = arith.constant 0 : i32
    return %c0_i32, %c0_i32_0 : i32, i32
  }
  func.func @transform_6(%arg0: i32, %arg1: i32) -> (i32, i32) {
    %c0_i32 = arith.constant 0 : i32
    %c0_i32_0 = arith.constant 0 : i32
    %c0_i32_1 = arith.constant 0 : i32
    return %c0_i32, %c0_i32_0 : i32, i32
  }
  func.func @transform_7(%arg0: i32, %arg1: i32) -> (i32, i32) {
    %c0_i32 = arith.constant 0 : i32
    %c0_i32_0 = arith.constant 0 : i32
    %c0_i32_1 = arith.constant 0 : i32
    return %c0_i32, %c0_i32_0 : i32, i32
  }
  func.func @transform_8(%arg0: i32, %arg1: i32) -> (i32, i32, i32, i32) {
    %c0_i32 = arith.constant 0 : i32
    %c0_i32_0 = arith.constant 0 : i32
    %c0_i32_1 = arith.constant 0 : i32
    return %arg0, %arg1, %c0_i32, %c0_i32_0 : i32, i32, i32, i32
  }
}

</mosaic_0001>

<llo_original>
// kernel: tpu_custom_call.1
$region0: #{tpu_custom_call.1}
  #allocation0 [shape = 'u32[]', space=smem, size = 0x4, offset = 0x4, fixed_abs, tag = 'smem constant byte address 0x4 - core index']
  #allocation1 [shape = 'u32[72,128]{1,0:T(1,128)}', space=vmem, size = 0x9000, scoped, tag = 'internal scratch']
  %s0 = inlined_call_operand.vmem [shape: bf16[2,18,18,8], index: 0, kind: input, shape index: {}]
  %s1 = inlined_call_operand.vmem [shape: f32[18,18], index: 1, kind: input, shape index: {}]
  %s2 = inlined_call_operand.vmem [shape: bf16[8,24], index: 2, kind: input, shape index: {}]
  %s3 = inlined_call_operand.vmem [shape: f32[1,24], index: 3, kind: input, shape index: {}]
  %s4 = inlined_call_operand.vmem [shape: f32[9,24], index: 4, kind: input, shape index: {}]
  %s5 = inlined_call_operand.vmem [shape: f32[1,24], index: 5, kind: input, shape index: {}]
  %s6 = inlined_call_operand.vmem [shape: bf16[24,8], index: 6, kind: input, shape index: {}]
  %s7 = inlined_call_operand.vmem [shape: f32[1,8], index: 7, kind: input, shape index: {}]
  %s8 = inlined_call_operand.vmem [shape: f32[2,16,16,8], index: 8, kind: output, shape index: {}]
  %s9 = sld [smem:[#allocation0]]
  $region65: #{tpu_custom_call.1} parent=0
    _
  %s11 = ssub.s32 1, %s9
  %s12 = scalar_select 0, %s11, %s9
  loop: start=0, step=1, limit=4
  $region2: #{tpu_custom_call.1} parent=0 // loop_pre_header
    _
  $region3: #{tpu_custom_call.1} parent=0 // loop_header
    %s14 = sphi 0, %s18
    %p15 = scmp.ge.s32.totalorder %s14, 4
    %s21 = sphi 0, %s33
    %s22 = sphi 0, %s29
    %s23 = sphi 0, %s21
    %s24 = sphi 0, %s22
    %s25 = sphi 0, %s23
    %s26 = sphi 0, %s24
    %s36 = sphi 0, %s38
    %s39 = sphi 0, %s36
    %s40 = sphi 0, %s39
    %s56 = sphi 0, %s40
    %s60 = sphi 0, %s60
    %s62 = sphi 0, %s60
    %s63 = sphi 0, %s62
    %s77 = sphi 0, %s63
    %s81 = sphi 0, %s81
    %s83 = sphi 0, %s81
    %s84 = sphi 0, %s83
    %s98 = sphi 0, %s84
    %s102 = sphi 0, %s102
    %s104 = sphi 0, %s102
    %s105 = sphi 0, %s104
    %s119 = sphi 0, %s105
    %s123 = sphi 0, %s123
    %s125 = sphi 0, %s123
    %s126 = sphi 0, %s125
    %s140 = sphi 0, %s126
    %s144 = sphi 0, %s144
    %s146 = sphi 0, %s144
    %s147 = sphi 0, %s146
    %s161 = sphi 0, %s147
    %s165 = sphi 0, %s165
    %s167 = sphi 0, %s165
    %s168 = sphi 0, %s167
    %s182 = sphi 0, %s168
    %s186 = sphi 0, %s186
    %s188 = sphi 0, %s186
    %s189 = sphi 0, %s188
    %s203 = sphi 0, %s189
    %s211 = sphi 0, %s213
    %s214 = sphi 0, %s211
    %s215 = sphi 0, %s214
    %s231 = sphi 0, %s215
  $region4: #{tpu_custom_call.1} parent=0 // loop_header_branch
    %17 = sbr.rel (%p15) target = $region8
  $region5: #{tpu_custom_call.1} parent=0 // loop_body
    %s19 = ssub.s32 %s14, 1
    %s20 = ssub.s32 %s14, 2
    %s27 = sadd.s32 1, %s22
    %p28 = scmp.ge.s32.totalorder %s27, 1
    %s29 = scalar_select %p28, 0, %s27
    %s30 = sadd.s32 1, %s21
    %s31 = scalar_select %p28, %s30, %s21
    %p32 = scmp.ge.s32.totalorder %s31, 2
    %s33 = scalar_select %p32, 0, %s31
    %s34 = ssub.s32 %s21, %s33
    %p35 = scmp.eq.s32.totalorder %s34, 0
    %s37 = sadd.s32 %s36, 1
    %s38 = scalar_select %p35, %s36, %s37
    %p41 = pneg %p35
    %p42 = scmp.eq.s32.totalorder %s14, 1
    %p43 = por %p41, %p42
    %p44 = scmp.ne.s32.totalorder %s36, %s39
    %p45 = scmp.eq.s32.totalorder %s14, 0
    %p46 = por %p44, %p45
    %p47 = scmp.ne.s32.totalorder %s36, %s39
    %p48 = scmp.eq.s32.totalorder %s19, 1
    %p49 = por %p47, %p48
    %p50 = scmp.ne.s32.totalorder %s39, %s40
    %p51 = scmp.eq.s32.totalorder %s19, 0
    %p52 = por %p50, %p51
    %p53 = scmp.ne.s32.totalorder %s39, %s40
    %p54 = scmp.eq.s32.totalorder %s20, 1
    %p55 = por %p53, %p54
    %p57 = scmp.ne.s32.totalorder %s40, %s56
    %p58 = scmp.eq.s32.totalorder %s20, 0
    %p59 = por %p57, %p58
    %s61 = sadd.s32 %s60, 1
    %p64 = scmp.eq.s32.totalorder %s14, 1
    %p65 = scmp.ne.s32.totalorder %s60, %s62
    %p66 = scmp.eq.s32.totalorder %s14, 0
    %p67 = por %p65, %p66
    %p68 = scmp.ne.s32.totalorder %s60, %s62
    %p69 = scmp.eq.s32.totalorder %s19, 1
    %p70 = por %p68, %p69
    %p71 = scmp.ne.s32.totalorder %s62, %s63
    %p72 = scmp.eq.s32.totalorder %s19, 0
    %p73 = por %p71, %p72
    %p74 = scmp.ne.s32.totalorder %s62, %s63
    %p75 = scmp.eq.s32.totalorder %s20, 1
    %p76 = por %p74, %p75
    %p78 = scmp.ne.s32.totalorder %s63, %s77
    %p79 = scmp.eq.s32.totalorder %s20, 0
    %p80 = por %p78, %p79
    %s82 = sadd.s32 %s81, 1
    %p85 = scmp.eq.s32.totalorder %s14, 1
    %p86 = scmp.ne.s32.totalorder %s81, %s83
    %p87 = scmp.eq.s32.totalorder %s14, 0
    %p88 = por %p86, %p87
    %p89 = scmp.ne.s32.totalorder %s81, %s83
    %p90 = scmp.eq.s32.totalorder %s19, 1
    %p91 = por %p89, %p90
    %p92 = scmp.ne.s32.totalorder %s83, %s84
    %p93 = scmp.eq.s32.totalorder %s19, 0
    %p94 = por %p92, %p93
    %p95 = scmp.ne.s32.totalorder %s83, %s84
    %p96 = scmp.eq.s32.totalorder %s20, 1
    %p97 = por %p95, %p96
    %p99 = scmp.ne.s32.totalorder %s84, %s98
    %p100 = scmp.eq.s32.totalorder %s20, 0
    %p101 = por %p99, %p100
    %s103 = sadd.s32 %s102, 1
    %p106 = scmp.eq.s32.totalorder %s14, 1
    %p107 = scmp.ne.s32.totalorder %s102, %s104
    %p108 = scmp.eq.s32.totalorder %s14, 0
    %p109 = por %p107, %p108
    %p110 = scmp.ne.s32.totalorder %s102, %s104
    %p111 = scmp.eq.s32.totalorder %s19, 1
    %p112 = por %p110, %p111
    %p113 = scmp.ne.s32.totalorder %s104, %s105
    %p114 = scmp.eq.s32.totalorder %s19, 0
    %p115 = por %p113, %p114
    %p116 = scmp.ne.s32.totalorder %s104, %s105
    %p117 = scmp.eq.s32.totalorder %s20, 1
    %p118 = por %p116, %p117
    %p120 = scmp.ne.s32.totalorder %s105, %s119
    %p121 = scmp.eq.s32.totalorder %s20, 0
    %p122 = por %p120, %p121
    %s124 = sadd.s32 %s123, 1
    %p127 = scmp.eq.s32.totalorder %s14, 1
    %p128 = scmp.ne.s32.totalorder %s123, %s125
    %p129 = scmp.eq.s32.totalorder %s14, 0
    %p130 = por %p128, %p129
    %p131 = scmp.ne.s32.totalorder %s123, %s125
    %p132 = scmp.eq.s32.totalorder %s19, 1
    %p133 = por %p131, %p132
    %p134 = scmp.ne.s32.totalorder %s125, %s126
    %p135 = scmp.eq.s32.totalorder %s19, 0
    %p136 = por %p134, %p135
    %p137 = scmp.ne.s32.totalorder %s125, %s126
    %p138 = scmp.eq.s32.totalorder %s20, 1
    %p139 = por %p137, %p138
    %p141 = scmp.ne.s32.totalorder %s126, %s140
    %p142 = scmp.eq.s32.totalorder %s20, 0
    %p143 = por %p141, %p142
    %s145 = sadd.s32 %s144, 1
    %p148 = scmp.eq.s32.totalorder %s14, 1
    %p149 = scmp.ne.s32.totalorder %s144, %s146
    %p150 = scmp.eq.s32.totalorder %s14, 0
    %p151 = por %p149, %p150
    %p152 = scmp.ne.s32.totalorder %s144, %s146
    %p153 = scmp.eq.s32.totalorder %s19, 1
    %p154 = por %p152, %p153
    %p155 = scmp.ne.s32.totalorder %s146, %s147
    %p156 = scmp.eq.s32.totalorder %s19, 0
    %p157 = por %p155, %p156
    %p158 = scmp.ne.s32.totalorder %s146, %s147
    %p159 = scmp.eq.s32.totalorder %s20, 1
    %p160 = por %p158, %p159
    %p162 = scmp.ne.s32.totalorder %s147, %s161
    %p163 = scmp.eq.s32.totalorder %s20, 0
    %p164 = por %p162, %p163
    %s166 = sadd.s32 %s165, 1
    %p169 = scmp.eq.s32.totalorder %s14, 1
    %p170 = scmp.ne.s32.totalorder %s165, %s167
    %p171 = scmp.eq.s32.totalorder %s14, 0
    %p172 = por %p170, %p171
    %p173 = scmp.ne.s32.totalorder %s165, %s167
    %p174 = scmp.eq.s32.totalorder %s19, 1
    %p175 = por %p173, %p174
    %p176 = scmp.ne.s32.totalorder %s167, %s168
    %p177 = scmp.eq.s32.totalorder %s19, 0
    %p178 = por %p176, %p177
    %p179 = scmp.ne.s32.totalorder %s167, %s168
    %p180 = scmp.eq.s32.totalorder %s20, 1
    %p181 = por %p179, %p180
    %p183 = scmp.ne.s32.totalorder %s168, %s182
    %p184 = scmp.eq.s32.totalorder %s20, 0
    %p185 = por %p183, %p184
    %s187 = sadd.s32 %s186, 1
    %p190 = scmp.eq.s32.totalorder %s14, 1
    %p191 = scmp.ne.s32.totalorder %s186, %s188
    %p192 = scmp.eq.s32.totalorder %s14, 0
    %p193 = por %p191, %p192
    %p194 = scmp.ne.s32.totalorder %s186, %s188
    %p195 = scmp.eq.s32.totalorder %s19, 1
    %p196 = por %p194, %p195
    %p197 = scmp.ne.s32.totalorder %s188, %s189
    %p198 = scmp.eq.s32.totalorder %s19, 0
    %p199 = por %p197, %p198
    %p200 = scmp.ne.s32.totalorder %s188, %s189
    %p201 = scmp.eq.s32.totalorder %s20, 1
    %p202 = por %p200, %p201
    %p204 = scmp.ne.s32.totalorder %s189, %s203
    %p205 = scmp.eq.s32.totalorder %s20, 0
    %p206 = por %p204, %p205
    %s207 = ssub.s32 %s21, %s33
    %s208 = ssub.s32 %s22, %s29
    %s209 = sor.u32 %s207, %s208
    %p210 = scmp.eq.s32.totalorder %s209, 0
    %s212 = sadd.s32 %s211, 1
    %s213 = scalar_select %p210, %s211, %s212
    %p216 = pneg %p210
    %p217 = scmp.eq.s32.totalorder %s14, 1
    %p218 = por %p216, %p217
    %p219 = scmp.ne.s32.totalorder %s211, %s214
    %p220 = scmp.eq.s32.totalorder %s14, 0
    %p221 = por %p219, %p220
    %p222 = scmp.ne.s32.totalorder %s211, %s214
    %p223 = scmp.eq.s32.totalorder %s19, 1
    %p224 = por %p222, %p223
    %p225 = scmp.ne.s32.totalorder %s214, %s215
    %p226 = scmp.eq.s32.totalorder %s19, 0
    %p227 = por %p225, %p226
    %p228 = scmp.ne.s32.totalorder %s214, %s215
    %p229 = scmp.eq.s32.totalorder %s20, 1
    %p230 = por %p228, %p229
    %p232 = scmp.ne.s32.totalorder %s215, %s231
    %p233 = scmp.eq.s32.totalorder %s20, 0
    %p234 = por %p232, %p233
    %p235 = scmp.le.s32.totalorder 1, %s14
    %p236 = scmp.lt.s32.totalorder %s14, 3
    %p237 = pnand %p235, %p236
    %p238 = pneg %p237
    // Predicated region
    $region9: #{tpu_custom_call.1} parent=5 // pred_check
      _
    $region10: #{tpu_custom_call.1} parent=5 // pred_check_branch
      %240 = sbr.rel (%p237) target = $region12
    $region11: #{tpu_custom_call.1} parent=5 // pred_region
      %s241 = ssub.s32 %s14, 1
      // Predicated region
      $region13: #{tpu_custom_call.1} parent=11 // pred_check
        %p242 = pneg %p73
      $region14: #{tpu_custom_call.1} parent=11 // pred_check_branch
        %244 = sbr.rel (%p242) target = $region16
      $region15: #{tpu_custom_call.1} parent=11 // pred_region
        _
      $region16: #{tpu_custom_call.1} parent=11 // pred_fallthru
        _
      // Predicated region
      $region17: #{tpu_custom_call.1} parent=11 // pred_check
        %p245 = pneg %p94
      $region18: #{tpu_custom_call.1} parent=11 // pred_check_branch
        %247 = sbr.rel (%p245) target = $region20
      $region19: #{tpu_custom_call.1} parent=11 // pred_region
        _
      $region20: #{tpu_custom_call.1} parent=11 // pred_fallthru
        _
      // Predicated region
      $region21: #{tpu_custom_call.1} parent=11 // pred_check
        %p248 = pneg %p115
      $region22: #{tpu_custom_call.1} parent=11 // pred_check_branch
        %250 = sbr.rel (%p248) target = $region24
      $region23: #{tpu_custom_call.1} parent=11 // pred_region
        _
      $region24: #{tpu_custom_call.1} parent=11 // pred_fallthru
        _
      // Predicated region
      $region25: #{tpu_custom_call.1} parent=11 // pred_check
        %p251 = pneg %p136
      $region26: #{tpu_custom_call.1} parent=11 // pred_check_branch
        %253 = sbr.rel (%p251) target = $region28
      $region27: #{tpu_custom_call.1} parent=11 // pred_region
        _
      $region28: #{tpu_custom_call.1} parent=11 // pred_fallthru
        _
      // Predicated region
      $region29: #{tpu_custom_call.1} parent=11 // pred_check
        %p254 = pneg %p157
      $region30: #{tpu_custom_call.1} parent=11 // pred_check_branch
        %256 = sbr.rel (%p254) target = $region32
      $region31: #{tpu_custom_call.1} parent=11 // pred_region
        _
      $region32: #{tpu_custom_call.1} parent=11 // pred_fallthru
        _
      // Predicated region
      $region33: #{tpu_custom_call.1} parent=11 // pred_check
        %p257 = pneg %p178
      $region34: #{tpu_custom_call.1} parent=11 // pred_check_branch
        %259 = sbr.rel (%p257) target = $region36
      $region35: #{tpu_custom_call.1} parent=11 // pred_region
        _
      $region36: #{tpu_custom_call.1} parent=11 // pred_fallthru
        _
      // Predicated region
      $region37: #{tpu_custom_call.1} parent=11 // pred_check
        %p260 = pneg %p199
      $region38: #{tpu_custom_call.1} parent=11 // pred_check_branch
        %262 = sbr.rel (%p260) target = $region40
      $region39: #{tpu_custom_call.1} parent=11 // pred_region
        _
      $region40: #{tpu_custom_call.1} parent=11 // pred_fallthru
        _
    $region12: #{tpu_custom_call.1} parent=5 // pred_fallthru
      _
    %p263 = scmp.lt.s32.totalorder %s14, 2
    // Predicated region
    $region41: #{tpu_custom_call.1} parent=5 // pred_check
      %p264 = pneg %p263
    $region42: #{tpu_custom_call.1} parent=5 // pred_check_branch
      %266 = sbr.rel (%p264) target = $region44
    $region43: #{tpu_custom_call.1} parent=5 // pred_region
      // Predicated region
      $region45: #{tpu_custom_call.1} parent=43 // pred_check
        %p267 = pneg %p46
      $region46: #{tpu_custom_call.1} parent=43 // pred_check_branch
        %269 = sbr.rel (%p267) target = $region48
      $region47: #{tpu_custom_call.1} parent=43 // pred_region
        %p270 = scmp.lt.s32.totalorder %s21, 1
        %s271 = scalar_select %p270, %s21, 1
        %s272 = smul.addr %s271, 54
        %s273 = smul.addr %s272, 4
        %s274 = scalar_lea.vmem %s0, %s273
      $region48: #{tpu_custom_call.1} parent=43 // pred_fallthru
        _
    $region44: #{tpu_custom_call.1} parent=5 // pred_fallthru
      _
    %p275 = scmp.le.s32.totalorder 1, %s14
    %p276 = scmp.lt.s32.totalorder %s14, 3
    %p277 = pnand %p275, %p276
    %p278 = pneg %p277
    // Predicated region
    $region49: #{tpu_custom_call.1} parent=5 // pred_check
      _
    $region50: #{tpu_custom_call.1} parent=5 // pred_check_branch
      %280 = sbr.rel (%p277) target = $region52
    $region51: #{tpu_custom_call.1} parent=5 // pred_region
      %s281 = ssub.s32 %s14, 1
      %p282 = scmp.lt.s32.totalorder %s23, 1
      %s283 = scalar_select %p282, %s23, 1
      %s284 = smul.addr %s283, 54
      %s285 = smul.addr %s284, 4
      %s286 = scalar_lea.vmem %s0, %s285
      %p287 = pneg %p52
      %p288 = pneg %p49
      %p289 = pneg %p73
      %p290 = pneg %p70
      %p291 = pneg %p94
      %p292 = pneg %p91
      %p293 = pneg %p115
      %p294 = pneg %p112
      %p295 = pneg %p136
      %p296 = pneg %p133
      %p297 = pneg %p157
      %p298 = pneg %p154
      %p299 = pneg %p178
      %p300 = pneg %p175
      %p301 = pneg %p199
      %p302 = pneg %p196
      %p303 = pneg %p227
      %p304 = pneg %p224
      %s305 = smul.u32 16, %s24
      %p306 = scmp.lt.s32.totalorder %s23, 1
      %s307 = scalar_select %p306, %s23, 1
      %p308 = scmp.lt.s32.totalorder %s305, 15
      %s309 = scalar_select %p308, %s305, 15
      %s310 = smul.addr %s309, 2
      %s311 = smul.addr %s307, 32
      %s312 = sadd.s32 %s310, %s311
      %s313 = smul.addr %s312, 8
      %s314 = scalar_lea.vmem %s8, %s313
      %p315 = scmp.lt.s32.totalorder %s23, 1
      %s316 = scalar_select %p315, %s23, 1
      %s317 = smul.addr %s316, 54
      %s318 = smul.addr %s317, 4
      %s319 = scalar_lea.vmem %s0, %s318
      %s320 = smul.u32 16, %s24
      %p321 = scmp.lt.s32.totalorder %s23, 1
      %s322 = scalar_select %p321, %s23, 1
      %p323 = scmp.lt.s32.totalorder %s320, 15
      %s324 = scalar_select %p323, %s320, 15
      %s325 = smul.addr %s324, 2
      %s326 = smul.addr %s322, 32
      %s327 = sadd.s32 %s325, %s326
      %s328 = smul.addr %s327, 8
      %s329 = scalar_lea.vmem %s8, %s328
      %s330 = smul.u32 16, %s24
      %s332 = smul.u32 %s24, 16
      %s333 = smul.u32 %s332, 3
      %s334 = smul.addr %s333, 4
      %s335 = scalar_lea.vmem %s319, %s334
      %v336 = vld [vmem:[%s335] sm:$0xf]
      %v337 = vld [vmem:[%s335 + $0x4] sm:$0xf]
      %v338 = vld [vmem:[%s335 + $0x8] sm:$0x1]
      %v339 = vld [vmem:[%s335 + $0xc] sm:$0xf]
      %v340 = vld [vmem:[%s335 + $0x10] sm:$0xf]
      %v341 = vld [vmem:[%s335 + $0x14] sm:$0x1]
      %v342 = vld [vmem:[%s335 + $0x18] sm:$0xf]
      %v343 = vld [vmem:[%s335 + $0x1c] sm:$0xf]
      %v344 = vld [vmem:[%s335 + $0x20] sm:$0x1]
      %v345 = vld [vmem:[%s335 + $0x24] sm:$0xf]
      %v346 = vld [vmem:[%s335 + $0x28] sm:$0xf]
      %v347 = vld [vmem:[%s335 + $0x2c] sm:$0x1]
      %v348 = vld [vmem:[%s335 + $0x30] sm:$0xf]
      %v349 = vld [vmem:[%s335 + $0x34] sm:$0xf]
      %v350 = vld [vmem:[%s335 + $0x38] sm:$0x1]
      %v351 = vld [vmem:[%s335 + $0x3c] sm:$0xf]
      %v352 = vld [vmem:[%s335 + $0x40] sm:$0xf]
      %v353 = vld [vmem:[%s335 + $0x44] sm:$0x1]
      %v354 = vld [vmem:[%s335 + $0x48] sm:$0xf]
      %v355 = vld [vmem:[%s335 + $0x4c] sm:$0xf]
      %v356 = vld [vmem:[%s335 + $0x50] sm:$0x1]
      %v357 = vld [vmem:[%s335 + $0x54] sm:$0xf]
      %v358 = vld [vmem:[%s335 + $0x58] sm:$0xf]
      %v359 = vld [vmem:[%s335 + $0x5c] sm:$0x1]
      %v360 = vld [vmem:[%s335 + $0x60] sm:$0xf]
      %v361 = vld [vmem:[%s335 + $0x64] sm:$0xf]
      %v362 = vld [vmem:[%s335 + $0x68] sm:$0x1]
      %v363 = vld [vmem:[%s335 + $0x6c] sm:$0xf]
      %v364 = vld [vmem:[%s335 + $0x70] sm:$0xf]
      %v365 = vld [vmem:[%s335 + $0x74] sm:$0x1]
      %v366 = vld [vmem:[%s335 + $0x78] sm:$0xf]
      %v367 = vld [vmem:[%s335 + $0x7c] sm:$0xf]
      %v368 = vld [vmem:[%s335 + $0x80] sm:$0x1]
      %v369 = vld [vmem:[%s335 + $0x84] sm:$0xf]
      %v370 = vld [vmem:[%s335 + $0x88] sm:$0xf]
      %v371 = vld [vmem:[%s335 + $0x8c] sm:$0x1]
      %v372 = vld [vmem:[%s335 + $0x90] sm:$0xf]
      %v373 = vld [vmem:[%s335 + $0x94] sm:$0xf]
      %v374 = vld [vmem:[%s335 + $0x98] sm:$0x1]
      %v375 = vld [vmem:[%s335 + $0x9c] sm:$0xf]
      %v376 = vld [vmem:[%s335 + $0xa0] sm:$0xf]
      %v377 = vld [vmem:[%s335 + $0xa4] sm:$0x1]
      %v378 = vld [vmem:[%s335 + $0xa8] sm:$0xf]
      %v379 = vld [vmem:[%s335 + $0xac] sm:$0xf]
      %v380 = vld [vmem:[%s335 + $0xb0] sm:$0x1]
      %v381 = vld [vmem:[%s335 + $0xb4] sm:$0xf]
      %v382 = vld [vmem:[%s335 + $0xb8] sm:$0xf]
      %v383 = vld [vmem:[%s335 + $0xbc] sm:$0x1]
      %v384 = vld [vmem:[%s335 + $0xc0] sm:$0xf]
      %v385 = vld [vmem:[%s335 + $0xc4] sm:$0xf]
      %v386 = vld [vmem:[%s335 + $0xc8] sm:$0x1]
      %v387 = vld [vmem:[%s335 + $0xcc] sm:$0xf]
      %v388 = vld [vmem:[%s335 + $0xd0] sm:$0xf]
      %v389 = vld [vmem:[%s335 + $0xd4] sm:$0x1]
      %v444 = vrot.slane %v336, 3
      %v445 = vrot.slane %v337, 3
      %v446 = vrot.slane %v338, 3
      %v447 = vrot.slane %v339, 3
      %v448 = vrot.slane %v340, 3
      %v449 = vrot.slane %v341, 3
      %v450 = vrot.slane %v342, 3
      %v451 = vrot.slane %v343, 3
      %v452 = vrot.slane %v344, 3
      %v453 = vrot.slane %v345, 3
      %v454 = vrot.slane %v346, 3
      %v455 = vrot.slane %v347, 3
      %v456 = vrot.slane %v348, 3
      %v457 = vrot.slane %v349, 3
      %v458 = vrot.slane %v350, 3
      %v459 = vrot.slane %v351, 3
      %v460 = vrot.slane %v352, 3
      %v461 = vrot.slane %v353, 3
      %v462 = vrot.slane %v354, 3
      %v463 = vrot.slane %v355, 3
      %v464 = vrot.slane %v356, 3
      %v465 = vrot.slane %v357, 3
      %v466 = vrot.slane %v358, 3
      %v467 = vrot.slane %v359, 3
      %v468 = vrot.slane %v360, 3
      %v469 = vrot.slane %v361, 3
      %v470 = vrot.slane %v362, 3
      %v471 = vrot.slane %v363, 3
      %v472 = vrot.slane %v364, 3
      %v473 = vrot.slane %v365, 3
      %v474 = vrot.slane %v366, 3
      %v475 = vrot.slane %v367, 3
      %v476 = vrot.slane %v368, 3
      %v477 = vrot.slane %v369, 3
      %v478 = vrot.slane %v370, 3
      %v479 = vrot.slane %v371, 3
      %v480 = vrot.slane %v372, 3
      %v481 = vrot.slane %v373, 3
      %v482 = vrot.slane %v374, 3
      %v483 = vrot.slane %v375, 3
      %v484 = vrot.slane %v376, 3
      %v485 = vrot.slane %v377, 3
      %v486 = vrot.slane %v378, 3
      %v487 = vrot.slane %v379, 3
      %v488 = vrot.slane %v380, 3
      %v489 = vrot.slane %v381, 3
      %v490 = vrot.slane %v382, 3
      %v491 = vrot.slane %v383, 3
      %v492 = vrot.slane %v384, 3
      %v493 = vrot.slane %v385, 3
      %v494 = vrot.slane %v386, 3
      %v495 = vrot.slane %v387, 3
      %v496 = vrot.slane %v388, 3
      %v497 = vrot.slane %v389, 3
      %vm498 = vcmask 1040384
      %v501 = vsel %vm498, %v336, %v444
      %vm502 = vcmask 1041409
      %v503 = vsel %vm502, %v336, %v444
      %v505 = vrot.slane %v503, 1
      %vm506 = vcmask 1042434
      %v507 = vsel %vm506, %v336, %v444
      %v509 = vrot.slane %v507, 2
      %vm510 = vcmask 1043459
      %v511 = vsel %vm510, %v336, %v444
      %v513 = vrot.slane %v511, 3
      %v516 = vsel %vm498, %v337, %v445
      %v517 = vsel %vm502, %v337, %v445
      %v519 = vrot.slane %v517, 1
      %v520 = vsel %vm506, %v337, %v445
      %v522 = vrot.slane %v520, 2
      %v523 = vsel %vm510, %v337, %v445
      %v525 = vrot.slane %v523, 3
      %v528 = vsel %vm498, %v338, %v446
      %v531 = vsel %vm498, %v339, %v447
      %v532 = vsel %vm502, %v339, %v447
      %v534 = vrot.slane %v532, 1
      %v535 = vsel %vm506, %v339, %v447
      %v537 = vrot.slane %v535, 2
      %v538 = vsel %vm510, %v339, %v447
      %v540 = vrot.slane %v538, 3
      %v543 = vsel %vm498, %v340, %v448
      %v544 = vsel %vm502, %v340, %v448
      %v546 = vrot.slane %v544, 1
      %v547 = vsel %vm506, %v340, %v448
      %v549 = vrot.slane %v547, 2
      %v550 = vsel %vm510, %v340, %v448
      %v552 = vrot.slane %v550, 3
      %v555 = vsel %vm498, %v341, %v449
      %v558 = vsel %vm498, %v342, %v450
      %v559 = vsel %vm502, %v342, %v450
      %v561 = vrot.slane %v559, 1
      %v562 = vsel %vm506, %v342, %v450
      %v564 = vrot.slane %v562, 2
      %v565 = vsel %vm510, %v342, %v450
      %v567 = vrot.slane %v565, 3
      %v570 = vsel %vm498, %v343, %v451
      %v571 = vsel %vm502, %v343, %v451
      %v573 = vrot.slane %v571, 1
      %v574 = vsel %vm506, %v343, %v451
      %v576 = vrot.slane %v574, 2
      %v577 = vsel %vm510, %v343, %v451
      %v579 = vrot.slane %v577, 3
      %v582 = vsel %vm498, %v344, %v452
      %v585 = vsel %vm498, %v345, %v453
      %v586 = vsel %vm502, %v345, %v453
      %v588 = vrot.slane %v586, 1
      %v589 = vsel %vm506, %v345, %v453
      %v591 = vrot.slane %v589, 2
      %v592 = vsel %vm510, %v345, %v453
      %v594 = vrot.slane %v592, 3
      %v597 = vsel %vm498, %v346, %v454
      %v598 = vsel %vm502, %v346, %v454
      %v600 = vrot.slane %v598, 1
      %v601 = vsel %vm506, %v346, %v454
      %v603 = vrot.slane %v601, 2
      %v604 = vsel %vm510, %v346, %v454
      %v606 = vrot.slane %v604, 3
      %v609 = vsel %vm498, %v347, %v455
      %v612 = vsel %vm498, %v348, %v456
      %v613 = vsel %vm502, %v348, %v456
      %v615 = vrot.slane %v613, 1
      %v616 = vsel %vm506, %v348, %v456
      %v618 = vrot.slane %v616, 2
      %v619 = vsel %vm510, %v348, %v456
      %v621 = vrot.slane %v619, 3
      %v624 = vsel %vm498, %v349, %v457
      %v625 = vsel %vm502, %v349, %v457
      %v627 = vrot.slane %v625, 1
      %v628 = vsel %vm506, %v349, %v457
      %v630 = vrot.slane %v628, 2
      %v631 = vsel %vm510, %v349, %v457
      %v633 = vrot.slane %v631, 3
      %v636 = vsel %vm498, %v350, %v458
      %v639 = vsel %vm498, %v351, %v459
      %v640 = vsel %vm502, %v351, %v459
      %v642 = vrot.slane %v640, 1
      %v643 = vsel %vm506, %v351, %v459
      %v645 = vrot.slane %v643, 2
      %v646 = vsel %vm510, %v351, %v459
      %v648 = vrot.slane %v646, 3
      %v651 = vsel %vm498, %v352, %v460
      %v652 = vsel %vm502, %v352, %v460
      %v654 = vrot.slane %v652, 1
      %v655 = vsel %vm506, %v352, %v460
      %v657 = vrot.slane %v655, 2
      %v658 = vsel %vm510, %v352, %v460
      %v660 = vrot.slane %v658, 3
      %v663 = vsel %vm498, %v353, %v461
      %v666 = vsel %vm498, %v354, %v462
      %v667 = vsel %vm502, %v354, %v462
      %v669 = vrot.slane %v667, 1
      %v670 = vsel %vm506, %v354, %v462
      %v672 = vrot.slane %v670, 2
      %v673 = vsel %vm510, %v354, %v462
      %v675 = vrot.slane %v673, 3
      %v678 = vsel %vm498, %v355, %v463
      %v679 = vsel %vm502, %v355, %v463
      %v681 = vrot.slane %v679, 1
      %v682 = vsel %vm506, %v355, %v463
      %v684 = vrot.slane %v682, 2
      %v685 = vsel %vm510, %v355, %v463
      %v687 = vrot.slane %v685, 3
      %v690 = vsel %vm498, %v356, %v464
      %v693 = vsel %vm498, %v357, %v465
      %v694 = vsel %vm502, %v357, %v465
      %v696 = vrot.slane %v694, 1
      %v697 = vsel %vm506, %v357, %v465
      %v699 = vrot.slane %v697, 2
      %v700 = vsel %vm510, %v357, %v465
      %v702 = vrot.slane %v700, 3
      %v705 = vsel %vm498, %v358, %v466
      %v706 = vsel %vm502, %v358, %v466
      %v708 = vrot.slane %v706, 1
      %v709 = vsel %vm506, %v358, %v466
      %v711 = vrot.slane %v709, 2
      %v712 = vsel %vm510, %v358, %v466
      %v714 = vrot.slane %v712, 3
      %v717 = vsel %vm498, %v359, %v467
      %v720 = vsel %vm498, %v360, %v468
      %v721 = vsel %vm502, %v360, %v468
      %v723 = vrot.slane %v721, 1
      %v724 = vsel %vm506, %v360, %v468
      %v726 = vrot.slane %v724, 2
      %v727 = vsel %vm510, %v360, %v468
      %v729 = vrot.slane %v727, 3
      %v732 = vsel %vm498, %v361, %v469
      %v733 = vsel %vm502, %v361, %v469
      %v735 = vrot.slane %v733, 1
      %v736 = vsel %vm506, %v361, %v469
      %v738 = vrot.slane %v736, 2
      %v739 = vsel %vm510, %v361, %v469
      %v741 = vrot.slane %v739, 3
      %v744 = vsel %vm498, %v362, %v470
      %v747 = vsel %vm498, %v363, %v471
      %v748 = vsel %vm502, %v363, %v471
      %v750 = vrot.slane %v748, 1
      %v751 = vsel %vm506, %v363, %v471
      %v753 = vrot.slane %v751, 2
      %v754 = vsel %vm510, %v363, %v471
      %v756 = vrot.slane %v754, 3
      %v759 = vsel %vm498, %v364, %v472
      %v760 = vsel %vm502, %v364, %v472
      %v762 = vrot.slane %v760, 1
      %v763 = vsel %vm506, %v364, %v472
      %v765 = vrot.slane %v763, 2
      %v766 = vsel %vm510, %v364, %v472
      %v768 = vrot.slane %v766, 3
      %v771 = vsel %vm498, %v365, %v473
      %v774 = vsel %vm498, %v366, %v474
      %v775 = vsel %vm502, %v366, %v474
      %v777 = vrot.slane %v775, 1
      %v778 = vsel %vm506, %v366, %v474
      %v780 = vrot.slane %v778, 2
      %v781 = vsel %vm510, %v366, %v474
      %v783 = vrot.slane %v781, 3
      %v786 = vsel %vm498, %v367, %v475
      %v787 = vsel %vm502, %v367, %v475
      %v789 = vrot.slane %v787, 1
      %v790 = vsel %vm506, %v367, %v475
      %v792 = vrot.slane %v790, 2
      %v793 = vsel %vm510, %v367, %v475
      %v795 = vrot.slane %v793, 3
      %v798 = vsel %vm498, %v368, %v476
      %v801 = vsel %vm498, %v369, %v477
      %v802 = vsel %vm502, %v369, %v477
      %v804 = vrot.slane %v802, 1
      %v805 = vsel %vm506, %v369, %v477
      %v807 = vrot.slane %v805, 2
      %v808 = vsel %vm510, %v369, %v477
      %v810 = vrot.slane %v808, 3
      %v813 = vsel %vm498, %v370, %v478
      %v814 = vsel %vm502, %v370, %v478
      %v816 = vrot.slane %v814, 1
      %v817 = vsel %vm506, %v370, %v478
      %v819 = vrot.slane %v817, 2
      %v820 = vsel %vm510, %v370, %v478
      %v822 = vrot.slane %v820, 3
      %v825 = vsel %vm498, %v371, %v479
      %v828 = vsel %vm498, %v372, %v480
      %v829 = vsel %vm502, %v372, %v480
      %v831 = vrot.slane %v829, 1
      %v832 = vsel %vm506, %v372, %v480
      %v834 = vrot.slane %v832, 2
      %v835 = vsel %vm510, %v372, %v480
      %v837 = vrot.slane %v835, 3
      %v840 = vsel %vm498, %v373, %v481
      %v841 = vsel %vm502, %v373, %v481
      %v843 = vrot.slane %v841, 1
      %v844 = vsel %vm506, %v373, %v481
      %v846 = vrot.slane %v844, 2
      %v847 = vsel %vm510, %v373, %v481
      %v849 = vrot.slane %v847, 3
      %v852 = vsel %vm498, %v374, %v482
      %v855 = vsel %vm498, %v375, %v483
      %v856 = vsel %vm502, %v375, %v483
      %v858 = vrot.slane %v856, 1
      %v859 = vsel %vm506, %v375, %v483
      %v861 = vrot.slane %v859, 2
      %v862 = vsel %vm510, %v375, %v483
      %v864 = vrot.slane %v862, 3
      %v867 = vsel %vm498, %v376, %v484
      %v868 = vsel %vm502, %v376, %v484
      %v870 = vrot.slane %v868, 1
      %v871 = vsel %vm506, %v376, %v484
      %v873 = vrot.slane %v871, 2
      %v874 = vsel %vm510, %v376, %v484
      %v876 = vrot.slane %v874, 3
      %v879 = vsel %vm498, %v377, %v485
      %v882 = vsel %vm498, %v378, %v486
      %v883 = vsel %vm502, %v378, %v486
      %v885 = vrot.slane %v883, 1
      %v886 = vsel %vm506, %v378, %v486
      %v888 = vrot.slane %v886, 2
      %v889 = vsel %vm510, %v378, %v486
      %v891 = vrot.slane %v889, 3
      %v894 = vsel %vm498, %v379, %v487
      %v895 = vsel %vm502, %v379, %v487
      %v897 = vrot.slane %v895, 1
      %v898 = vsel %vm506, %v379, %v487
      %v900 = vrot.slane %v898, 2
      %v901 = vsel %vm510, %v379, %v487
      %v903 = vrot.slane %v901, 3
      %v906 = vsel %vm498, %v380, %v488
      %v909 = vsel %vm498, %v381, %v489
      %v910 = vsel %vm502, %v381, %v489
      %v912 = vrot.slane %v910, 1
      %v913 = vsel %vm506, %v381, %v489
      %v915 = vrot.slane %v913, 2
      %v916 = vsel %vm510, %v381, %v489
      %v918 = vrot.slane %v916, 3
      %v921 = vsel %vm498, %v382, %v490
      %v922 = vsel %vm502, %v382, %v490
      %v924 = vrot.slane %v922, 1
      %v925 = vsel %vm506, %v382, %v490
      %v927 = vrot.slane %v925, 2
      %v928 = vsel %vm510, %v382, %v490
      %v930 = vrot.slane %v928, 3
      %v933 = vsel %vm498, %v383, %v491
      %v936 = vsel %vm498, %v384, %v492
      %v937 = vsel %vm502, %v384, %v492
      %v939 = vrot.slane %v937, 1
      %v940 = vsel %vm506, %v384, %v492
      %v942 = vrot.slane %v940, 2
      %v943 = vsel %vm510, %v384, %v492
      %v945 = vrot.slane %v943, 3
      %v948 = vsel %vm498, %v385, %v493
      %v949 = vsel %vm502, %v385, %v493
      %v951 = vrot.slane %v949, 1
      %v952 = vsel %vm506, %v385, %v493
      %v954 = vrot.slane %v952, 2
      %v955 = vsel %vm510, %v385, %v493
      %v957 = vrot.slane %v955, 3
      %v960 = vsel %vm498, %v386, %v494
      %v963 = vsel %vm498, %v387, %v495
      %v964 = vsel %vm502, %v387, %v495
      %v966 = vrot.slane %v964, 1
      %v967 = vsel %vm506, %v387, %v495
      %v969 = vrot.slane %v967, 2
      %v970 = vsel %vm510, %v387, %v495
      %v972 = vrot.slane %v970, 3
      %v975 = vsel %vm498, %v388, %v496
      %v976 = vsel %vm502, %v388, %v496
      %v978 = vrot.slane %v976, 1
      %v979 = vsel %vm506, %v388, %v496
      %v981 = vrot.slane %v979, 2
      %v982 = vsel %vm510, %v388, %v496
      %v984 = vrot.slane %v982, 3
      %v987 = vsel %vm498, %v389, %v497
      %v988 = vld [vmem:[%s2] sm:$0xf]
      %v989 = vld [vmem:[%s3] sm:$0x1]
      %v991 = vperm.slane %v989, 0
      %993 = vst [vmem:[#allocation1] ss:$9 sm:$0xff] %v501
      %s995 = scalar_lea.vmem [#allocation1], 1
      %996 = vst [vmem:[%s995] ss:$9 sm:$0xff] %v505
      %s998 = scalar_lea.vmem [#allocation1], 2
      %999 = vst [vmem:[%s998] ss:$9 sm:$0xff] %v509
      %s1001 = scalar_lea.vmem [#allocation1], 3
      %1002 = vst [vmem:[%s1001] ss:$9 sm:$0xff] %v513
      %s1003 = scalar_lea.vmem [#allocation1], 4
      %1004 = vst [vmem:[%s1003] ss:$9 sm:$0xff] %v516
      %s1006 = scalar_lea.vmem [#allocation1], 5
      %1007 = vst [vmem:[%s1006] ss:$9 sm:$0xff] %v519
      %s1009 = scalar_lea.vmem [#allocation1], 6
      %1010 = vst [vmem:[%s1009] ss:$9 sm:$0xff] %v522
      %s1012 = scalar_lea.vmem [#allocation1], 7
      %1013 = vst [vmem:[%s1012] ss:$9 sm:$0xff] %v525
      %v1014 = vld [vmem:[#allocation1] sm:$0xff]
      %1015 = vst [vmem:[#allocation1] ss:$9 sm:$0xff] %v528
      %1016 = vst [vmem:[%s995] ss:$9 sm:$0xff] %v531
      %1018 = vst [vmem:[%s998] ss:$9 sm:$0xff] %v534
      %1020 = vst [vmem:[%s1001] ss:$9 sm:$0xff] %v537
      %1022 = vst [vmem:[%s1003] ss:$9 sm:$0xff] %v540
      %1023 = vst [vmem:[%s1006] ss:$9 sm:$0xff] %v543
      %1025 = vst [vmem:[%s1009] ss:$9 sm:$0xff] %v546
      %1027 = vst [vmem:[%s1012] ss:$9 sm:$0xff] %v549
      %v1028 = vld [vmem:[#allocation1] sm:$0xff]
      %1030 = vst [vmem:[#allocation1] ss:$9 sm:$0xff] %v552
      %1031 = vst [vmem:[%s995] ss:$9 sm:$0xff] %v555
      %1032 = vst [vmem:[%s998] ss:$9 sm:$0xff] %v558
      %1034 = vst [vmem:[%s1001] ss:$9 sm:$0xff] %v561
      %1036 = vst [vmem:[%s1003] ss:$9 sm:$0xff] %v564
      %1038 = vst [vmem:[%s1006] ss:$9 sm:$0xff] %v567
      %1039 = vst [vmem:[%s1009] ss:$9 sm:$0xff] %v570
      %1041 = vst [vmem:[%s1012] ss:$9 sm:$0xff] %v573
      %v1042 = vld [vmem:[#allocation1] sm:$0xff]
      %1044 = vst [vmem:[#allocation1] ss:$9 sm:$0xff] %v576
      %1046 = vst [vmem:[%s995] ss:$9 sm:$0xff] %v579
      %1047 = vst [vmem:[%s998] ss:$9 sm:$0xff] %v582
      %1048 = vst [vmem:[%s1001] ss:$9 sm:$0xff] %v585
      %1050 = vst [vmem:[%s1003] ss:$9 sm:$0xff] %v588
      %1052 = vst [vmem:[%s1006] ss:$9 sm:$0xff] %v591
      %1054 = vst [vmem:[%s1009] ss:$9 sm:$0xff] %v594
      %1055 = vst [vmem:[%s1012] ss:$9 sm:$0xff] %v597
      %v1056 = vld [vmem:[#allocation1] sm:$0xff]
      %1058 = vst [vmem:[#allocation1] ss:$9 sm:$0xff] %v600
      %1060 = vst [vmem:[%s995] ss:$9 sm:$0xff] %v603
      %1062 = vst [vmem:[%s998] ss:$9 sm:$0xff] %v606
      %1063 = vst [vmem:[%s1001] ss:$9 sm:$0xff] %v609
      %1064 = vst [vmem:[%s1003] ss:$9 sm:$0xff] %v612
      %1066 = vst [vmem:[%s1006] ss:$9 sm:$0xff] %v615
      %1068 = vst [vmem:[%s1009] ss:$9 sm:$0xff] %v618
      %1070 = vst [vmem:[%s1012] ss:$9 sm:$0xff] %v621
      %v1071 = vld [vmem:[#allocation1] sm:$0xff]
      %1072 = vst [vmem:[#allocation1] ss:$9 sm:$0xff] %v624
      %1074 = vst [vmem:[%s995] ss:$9 sm:$0xff] %v627
      %1076 = vst [vmem:[%s998] ss:$9 sm:$0xff] %v630
      %1078 = vst [vmem:[%s1001] ss:$9 sm:$0xff] %v633
      %1079 = vst [vmem:[%s1003] ss:$9 sm:$0xff] %v636
      %1080 = vst [vmem:[%s1006] ss:$9 sm:$0xff] %v639
      %1082 = vst [vmem:[%s1009] ss:$9 sm:$0xff] %v642
      %1084 = vst [vmem:[%s1012] ss:$9 sm:$0xff] %v645
      %v1085 = vld [vmem:[#allocation1] sm:$0xff]
      %1087 = vst [vmem:[#allocation1] ss:$9 sm:$0xff] %v648
      %1088 = vst [vmem:[%s995] ss:$9 sm:$0xff] %v651
      %1090 = vst [vmem:[%s998] ss:$9 sm:$0xff] %v654
      %1092 = vst [vmem:[%s1001] ss:$9 sm:$0xff] %v657
      %1094 = vst [vmem:[%s1003] ss:$9 sm:$0xff] %v660
      %1095 = vst [vmem:[%s1006] ss:$9 sm:$0xff] %v663
      %1096 = vst [vmem:[%s1009] ss:$9 sm:$0xff] %v666
      %1098 = vst [vmem:[%s1012] ss:$9 sm:$0xff] %v669
      %v1099 = vld [vmem:[#allocation1] sm:$0xff]
      %1101 = vst [vmem:[#allocation1] ss:$9 sm:$0xff] %v672
      %1103 = vst [vmem:[%s995] ss:$9 sm:$0xff] %v675
      %1104 = vst [vmem:[%s998] ss:$9 sm:$0xff] %v678
      %1106 = vst [vmem:[%s1001] ss:$9 sm:$0xff] %v681
      %1108 = vst [vmem:[%s1003] ss:$9 sm:$0xff] %v684
      %1110 = vst [vmem:[%s1006] ss:$9 sm:$0xff] %v687
      %1111 = vst [vmem:[%s1009] ss:$9 sm:$0xff] %v690
      %1112 = vst [vmem:[%s1012] ss:$9 sm:$0xff] %v693
      %v1113 = vld [vmem:[#allocation1] sm:$0xff]
      %1115 = vst [vmem:[#allocation1] ss:$9 sm:$0xff] %v696
      %1117 = vst [vmem:[%s995] ss:$9 sm:$0xff] %v699
      %1119 = vst [vmem:[%s998] ss:$9 sm:$0xff] %v702
      %1120 = vst [vmem:[%s1001] ss:$9 sm:$0xff] %v705
      %1122 = vst [vmem:[%s1003] ss:$9 sm:$0xff] %v708
      %1124 = vst [vmem:[%s1006] ss:$9 sm:$0xff] %v711
      %1126 = vst [vmem:[%s1009] ss:$9 sm:$0xff] %v714
      %1127 = vst [vmem:[%s1012] ss:$9 sm:$0xff] %v717
      %v1128 = vld [vmem:[#allocation1] sm:$0xff]
      %1129 = vst [vmem:[#allocation1] ss:$9 sm:$0xff] %v720
      %1131 = vst [vmem:[%s995] ss:$9 sm:$0xff] %v723
      %1133 = vst [vmem:[%s998] ss:$9 sm:$0xff] %v726
      %1135 = vst [vmem:[%s1001] ss:$9 sm:$0xff] %v729
      %1136 = vst [vmem:[%s1003] ss:$9 sm:$0xff] %v732
      %1138 = vst [vmem:[%s1006] ss:$9 sm:$0xff] %v735
      %1140 = vst [vmem:[%s1009] ss:$9 sm:$0xff] %v738
      %1142 = vst [vmem:[%s1012] ss:$9 sm:$0xff] %v741
      %v1143 = vld [vmem:[#allocation1] sm:$0xff]
      %1144 = vst [vmem:[#allocation1] ss:$9 sm:$0xff] %v744
      %1145 = vst [vmem:[%s995] ss:$9 sm:$0xff] %v747
      %1147 = vst [vmem:[%s998] ss:$9 sm:$0xff] %v750
      %1149 = vst [vmem:[%s1001] ss:$9 sm:$0xff] %v753
      %1151 = vst [vmem:[%s1003] ss:$9 sm:$0xff] %v756
      %1152 = vst [vmem:[%s1006] ss:$9 sm:$0xff] %v759
      %1154 = vst [vmem:[%s1009] ss:$9 sm:$0xff] %v762
      %1156 = vst [vmem:[%s1012] ss:$9 sm:$0xff] %v765
      %v1157 = vld [vmem:[#allocation1] sm:$0xff]
      %1159 = vst [vmem:[#allocation1] ss:$9 sm:$0xff] %v768
      %1160 = vst [vmem:[%s995] ss:$9 sm:$0xff] %v771
      %1161 = vst [vmem:[%s998] ss:$9 sm:$0xff] %v774
      %1163 = vst [vmem:[%s1001] ss:$9 sm:$0xff] %v777
      %1165 = vst [vmem:[%s1003] ss:$9 sm:$0xff] %v780
      %1167 = vst [vmem:[%s1006] ss:$9 sm:$0xff] %v783
      %1168 = vst [vmem:[%s1009] ss:$9 sm:$0xff] %v786
      %1170 = vst [vmem:[%s1012] ss:$9 sm:$0xff] %v789
      %v1171 = vld [vmem:[#allocation1] sm:$0xff]
      %1173 = vst [vmem:[#allocation1] ss:$9 sm:$0xff] %v792
      %1175 = vst [vmem:[%s995] ss:$9 sm:$0xff] %v795
      %1176 = vst [vmem:[%s998] ss:$9 sm:$0xff] %v798
      %1177 = vst [vmem:[%s1001] ss:$9 sm:$0xff] %v801
      %1179 = vst [vmem:[%s1003] ss:$9 sm:$0xff] %v804
      %1181 = vst [vmem:[%s1006] ss:$9 sm:$0xff] %v807
      %1183 = vst [vmem:[%s1009] ss:$9 sm:$0xff] %v810
      %1184 = vst [vmem:[%s1012] ss:$9 sm:$0xff] %v813
      %v1185 = vld [vmem:[#allocation1] sm:$0xff]
      %1187 = vst [vmem:[#allocation1] ss:$9 sm:$0xff] %v816
      %1189 = vst [vmem:[%s995] ss:$9 sm:$0xff] %v819
      %1191 = vst [vmem:[%s998] ss:$9 sm:$0xff] %v822
      %1192 = vst [vmem:[%s1001] ss:$9 sm:$0xff] %v825
      %1193 = vst [vmem:[%s1003] ss:$9 sm:$0xff] %v828
      %1195 = vst [vmem:[%s1006] ss:$9 sm:$0xff] %v831
      %1197 = vst [vmem:[%s1009] ss:$9 sm:$0xff] %v834
      %1199 = vst [vmem:[%s1012] ss:$9 sm:$0xff] %v837
      %v1200 = vld [vmem:[#allocation1] sm:$0xff]
      %1201 = vst [vmem:[#allocation1] ss:$9 sm:$0xff] %v840
      %1203 = vst [vmem:[%s995] ss:$9 sm:$0xff] %v843
      %1205 = vst [vmem:[%s998] ss:$9 sm:$0xff] %v846
      %1207 = vst [vmem:[%s1001] ss:$9 sm:$0xff] %v849
      %1208 = vst [vmem:[%s1003] ss:$9 sm:$0xff] %v852
      %1209 = vst [vmem:[%s1006] ss:$9 sm:$0xff] %v855
      %1211 = vst [vmem:[%s1009] ss:$9 sm:$0xff] %v858
      %1213 = vst [vmem:[%s1012] ss:$9 sm:$0xff] %v861
      %v1214 = vld [vmem:[#allocation1] sm:$0xff]
      %1216 = vst [vmem:[#allocation1] ss:$9 sm:$0xff] %v864
      %1217 = vst [vmem:[%s995] ss:$9 sm:$0xff] %v867
      %1219 = vst [vmem:[%s998] ss:$9 sm:$0xff] %v870
      %1221 = vst [vmem:[%s1001] ss:$9 sm:$0xff] %v873
      %1223 = vst [vmem:[%s1003] ss:$9 sm:$0xff] %v876
      %1224 = vst [vmem:[%s1006] ss:$9 sm:$0xff] %v879
      %1225 = vst [vmem:[%s1009] ss:$9 sm:$0xff] %v882
      %1227 = vst [vmem:[%s1012] ss:$9 sm:$0xff] %v885
      %v1228 = vld [vmem:[#allocation1] sm:$0xff]
      %1230 = vst [vmem:[#allocation1] ss:$9 sm:$0xff] %v888
      %1232 = vst [vmem:[%s995] ss:$9 sm:$0xff] %v891
      %1233 = vst [vmem:[%s998] ss:$9 sm:$0xff] %v894
      %1235 = vst [vmem:[%s1001] ss:$9 sm:$0xff] %v897
      %1237 = vst [vmem:[%s1003] ss:$9 sm:$0xff] %v900
      %1239 = vst [vmem:[%s1006] ss:$9 sm:$0xff] %v903
      %1240 = vst [vmem:[%s1009] ss:$9 sm:$0xff] %v906
      %1241 = vst [vmem:[%s1012] ss:$9 sm:$0xff] %v909
      %v1242 = vld [vmem:[#allocation1] sm:$0xff]
      %1244 = vst [vmem:[#allocation1] ss:$9 sm:$0xff] %v912
      %1246 = vst [vmem:[%s995] ss:$9 sm:$0xff] %v915
      %1248 = vst [vmem:[%s998] ss:$9 sm:$0xff] %v918
      %1249 = vst [vmem:[%s1001] ss:$9 sm:$0xff] %v921
      %1251 = vst [vmem:[%s1003] ss:$9 sm:$0xff] %v924
      %1253 = vst [vmem:[%s1006] ss:$9 sm:$0xff] %v927
      %1255 = vst [vmem:[%s1009] ss:$9 sm:$0xff] %v930
      %1256 = vst [vmem:[%s1012] ss:$9 sm:$0xff] %v933
      %v1257 = vld [vmem:[#allocation1] sm:$0xff]
      %1258 = vst [vmem:[#allocation1] ss:$9 sm:$0xff] %v936
      %1260 = vst [vmem:[%s995] ss:$9 sm:$0xff] %v939
      %1262 = vst [vmem:[%s998] ss:$9 sm:$0xff] %v942
      %1264 = vst [vmem:[%s1001] ss:$9 sm:$0xff] %v945
      %1265 = vst [vmem:[%s1003] ss:$9 sm:$0xff] %v948
      %1267 = vst [vmem:[%s1006] ss:$9 sm:$0xff] %v951
      %1269 = vst [vmem:[%s1009] ss:$9 sm:$0xff] %v954
      %1271 = vst [vmem:[%s1012] ss:$9 sm:$0xff] %v957
      %v1272 = vld [vmem:[#allocation1] sm:$0xff]
      %1273 = vst [vmem:[#allocation1] ss:$9 sm:$0xff] %v960
      %1274 = vst [vmem:[%s995] ss:$9 sm:$0xff] %v963
      %1276 = vst [vmem:[%s998] ss:$9 sm:$0xff] %v966
      %1278 = vst [vmem:[%s1001] ss:$9 sm:$0xff] %v969
      %1280 = vst [vmem:[%s1003] ss:$9 sm:$0xff] %v972
      %1281 = vst [vmem:[%s1006] ss:$9 sm:$0xff] %v975
      %1283 = vst [vmem:[%s1009] ss:$9 sm:$0xff] %v978
      %1285 = vst [vmem:[%s1012] ss:$9 sm:$0xff] %v981
      %v1286 = vld [vmem:[#allocation1] sm:$0xff]
      %1288 = vst [vmem:[#allocation1] ss:$9 sm:$0xff] %v984
      %1289 = vst [vmem:[%s995] ss:$9 sm:$0xff] %v987
      %v1290 = vld [vmem:[#allocation1] sm:$0xff]
      %vm1291 = vcmask 64512
      %v1292 = vsel %vm1291, %v1014, 0
      %v1294 = vsel %vm1291, %v1028, 0
      %v1296 = vsel %vm1291, %v1042, 0
      %v1298 = vsel %vm1291, %v1056, 0
      %v1300 = vsel %vm1291, %v1071, 0
      %v1302 = vsel %vm1291, %v1085, 0
      %v1304 = vsel %vm1291, %v1099, 0
      %v1306 = vsel %vm1291, %v1113, 0
      %v1308 = vsel %vm1291, %v1128, 0
      %v1310 = vsel %vm1291, %v1143, 0
      %v1312 = vsel %vm1291, %v1157, 0
      %v1314 = vsel %vm1291, %v1171, 0
      %v1316 = vsel %vm1291, %v1185, 0
      %v1318 = vsel %vm1291, %v1200, 0
      %v1320 = vsel %vm1291, %v1214, 0
      %v1322 = vsel %vm1291, %v1228, 0
      %v1324 = vsel %vm1291, %v1242, 0
      %v1326 = vsel %vm1291, %v1257, 0
      %v1328 = vsel %vm1291, %v1272, 0
      %v1330 = vsel %vm1291, %v1286, 0
      %v1332 = vsel %vm1291, %v1290, 0
      %vm1334 = vcmask 1043456
      %v1336 = vsel %vm1334, %v988, 0
      %1338 = vmatpush.bf16.msra.mxu0 0
      %1339 = vmatpush.bf16.msra.mxu0 0
      %1340 = vmatpush.bf16.msra.mxu0 0
      %1341 = vmatpush.bf16.msra.mxu0 0
      %1342 = vmatpush.bf16.msra.mxu0 0
      %1343 = vmatpush.bf16.msra.mxu0 0
      %1344 = vmatpush.bf16.msra.mxu0 0
      %1345 = vmatpush.bf16.msra.mxu0 %v1336
      %1346 = vmatmul.bf16.gmra.mxu0 %v1292
      %v1347 = vpop.f32.mrf.mxu0
      %v1348 = vadd.f32 %v991, %v1347
      %v1349 = vpop.f32.mrf.mxu0
      %v1350 = vadd.f32 %v991, %v1349
      %1351 = vmatmul.bf16.gmra.mxu0 %v1294
      %v1352 = vpop.f32.mrf.mxu0
      %v1353 = vadd.f32 %v991, %v1352
      %v1354 = vpop.f32.mrf.mxu0
      %v1355 = vadd.f32 %v991, %v1354
      %1356 = vmatmul.bf16.gmra.mxu0 %v1296
      %v1357 = vpop.f32.mrf.mxu0
      %v1358 = vadd.f32 %v991, %v1357
      %v1359 = vpop.f32.mrf.mxu0
      %v1360 = vadd.f32 %v991, %v1359
      %1361 = vmatmul.bf16.gmra.mxu0 %v1298
      %v1362 = vpop.f32.mrf.mxu0
      %v1363 = vadd.f32 %v991, %v1362
      %v1364 = vpop.f32.mrf.mxu0
      %v1365 = vadd.f32 %v991, %v1364
      %1366 = vmatmul.bf16.gmra.mxu0 %v1300
      %v1367 = vpop.f32.mrf.mxu0
      %v1368 = vadd.f32 %v991, %v1367
      %v1369 = vpop.f32.mrf.mxu0
      %v1370 = vadd.f32 %v991, %v1369
      %1371 = vmatmul.bf16.gmra.mxu0 %v1302
      %v1372 = vpop.f32.mrf.mxu0
      %v1373 = vadd.f32 %v991, %v1372
      %v1374 = vpop.f32.mrf.mxu0
      %v1375 = vadd.f32 %v991, %v1374
      %1376 = vmatmul.bf16.gmra.mxu0 %v1304
      %v1377 = vpop.f32.mrf.mxu0
      %v1378 = vadd.f32 %v991, %v1377
      %v1379 = vpop.f32.mrf.mxu0
      %v1380 = vadd.f32 %v991, %v1379
      %1381 = vmatmul.bf16.gmra.mxu0 %v1306
      %v1382 = vpop.f32.mrf.mxu0
      %v1383 = vadd.f32 %v991, %v1382
      %v1384 = vpop.f32.mrf.mxu0
      %v1385 = vadd.f32 %v991, %v1384
      %1386 = vmatmul.bf16.gmra.mxu0 %v1308
      %v1387 = vpop.f32.mrf.mxu0
      %v1388 = vadd.f32 %v991, %v1387
      %v1389 = vpop.f32.mrf.mxu0
      %v1390 = vadd.f32 %v991, %v1389
      %1391 = vmatmul.bf16.gmra.mxu0 %v1310
      %v1392 = vpop.f32.mrf.mxu0
      %v1393 = vadd.f32 %v991, %v1392
      %v1394 = vpop.f32.mrf.mxu0
      %v1395 = vadd.f32 %v991, %v1394
      %1396 = vmatmul.bf16.gmra.mxu0 %v1312
      %v1397 = vpop.f32.mrf.mxu0
      %v1398 = vadd.f32 %v991, %v1397
      %v1399 = vpop.f32.mrf.mxu0
      %v1400 = vadd.f32 %v991, %v1399
      %1401 = vmatmul.bf16.gmra.mxu0 %v1314
      %v1402 = vpop.f32.mrf.mxu0
      %v1403 = vadd.f32 %v991, %v1402
      %v1404 = vpop.f32.mrf.mxu0
      %v1405 = vadd.f32 %v991, %v1404
      %1406 = vmatmul.bf16.gmra.mxu0 %v1316
      %v1407 = vpop.f32.mrf.mxu0
      %v1408 = vadd.f32 %v991, %v1407
      %v1409 = vpop.f32.mrf.mxu0
      %v1410 = vadd.f32 %v991, %v1409
      %1411 = vmatmul.bf16.gmra.mxu0 %v1318
      %v1412 = vpop.f32.mrf.mxu0
      %v1413 = vadd.f32 %v991, %v1412
      %v1414 = vpop.f32.mrf.mxu0
      %v1415 = vadd.f32 %v991, %v1414
      %1416 = vmatmul.bf16.gmra.mxu0 %v1320
      %v1417 = vpop.f32.mrf.mxu0
      %v1418 = vadd.f32 %v991, %v1417
      %v1419 = vpop.f32.mrf.mxu0
      %v1420 = vadd.f32 %v991, %v1419
      %1421 = vmatmul.bf16.gmra.mxu0 %v1322
      %v1422 = vpop.f32.mrf.mxu0
      %v1423 = vadd.f32 %v991, %v1422
      %v1424 = vpop.f32.mrf.mxu0
      %v1425 = vadd.f32 %v991, %v1424
      %1426 = vmatmul.bf16.gmra.mxu0 %v1324
      %v1427 = vpop.f32.mrf.mxu0
      %v1428 = vadd.f32 %v991, %v1427
      %v1429 = vpop.f32.mrf.mxu0
      %v1430 = vadd.f32 %v991, %v1429
      %1431 = vmatmul.bf16.gmra.mxu0 %v1326
      %v1432 = vpop.f32.mrf.mxu0
      %v1433 = vadd.f32 %v991, %v1432
      %v1434 = vpop.f32.mrf.mxu0
      %v1435 = vadd.f32 %v991, %v1434
      %1436 = vmatmul.bf16.gmra.mxu0 %v1328
      %v1437 = vpop.f32.mrf.mxu0
      %v1438 = vadd.f32 %v991, %v1437
      %v1439 = vpop.f32.mrf.mxu0
      %v1440 = vadd.f32 %v991, %v1439
      %1441 = vmatmul.bf16.gmra.mxu0 %v1330
      %v1442 = vpop.f32.mrf.mxu0
      %v1443 = vadd.f32 %v991, %v1442
      %v1444 = vpop.f32.mrf.mxu0
      %v1445 = vadd.f32 %v991, %v1444
      %1446 = vmatmul.bf16.gmra.mxu0 %v1332
      %v1447 = vpop.f32.mrf.mxu0
      %v1448 = vadd.f32 %v991, %v1447
      %v1449 = vpop.f32.mrf.mxu0
      %1450 = vdwg.mxu0
      %v1451 = vmax.f32 %v1348, 0.0
      %v1452 = vmax.f32 %v1350, 0.0
      %v1453 = vmax.f32 %v1353, 0.0
      %v1454 = vmax.f32 %v1355, 0.0
      %v1455 = vmax.f32 %v1358, 0.0
      %v1456 = vmax.f32 %v1360, 0.0
      %v1457 = vmax.f32 %v1363, 0.0
      %v1458 = vmax.f32 %v1365, 0.0
      %v1459 = vmax.f32 %v1368, 0.0
      %v1460 = vmax.f32 %v1370, 0.0
      %v1461 = vmax.f32 %v1373, 0.0
      %v1462 = vmax.f32 %v1375, 0.0
      %v1463 = vmax.f32 %v1378, 0.0
      %v1464 = vmax.f32 %v1380, 0.0
      %v1465 = vmax.f32 %v1383, 0.0
      %v1466 = vmax.f32 %v1385, 0.0
      %v1467 = vmax.f32 %v1388, 0.0
      %v1468 = vmax.f32 %v1390, 0.0
      %v1469 = vmax.f32 %v1393, 0.0
      %v1470 = vmax.f32 %v1395, 0.0
      %v1471 = vmax.f32 %v1398, 0.0
      %v1472 = vmax.f32 %v1400, 0.0
      %v1473 = vmax.f32 %v1403, 0.0
      %v1474 = vmax.f32 %v1405, 0.0
      %v1475 = vmax.f32 %v1408, 0.0
      %v1476 = vmax.f32 %v1410, 0.0
      %v1477 = vmax.f32 %v1413, 0.0
      %v1478 = vmax.f32 %v1415, 0.0
      %v1479 = vmax.f32 %v1418, 0.0
      %v1480 = vmax.f32 %v1420, 0.0
      %v1481 = vmax.f32 %v1423, 0.0
      %v1482 = vmax.f32 %v1425, 0.0
      %v1483 = vmax.f32 %v1428, 0.0
      %v1484 = vmax.f32 %v1430, 0.0
      %v1485 = vmax.f32 %v1433, 0.0
      %v1486 = vmax.f32 %v1435, 0.0
      %v1487 = vmax.f32 %v1438, 0.0
      %v1488 = vmax.f32 %v1440, 0.0
      %v1489 = vmax.f32 %v1443, 0.0
      %v1490 = vmax.f32 %v1445, 0.0
      %v1491 = vmax.f32 %v1448, 0.0
      %v1492 = vmin.f32 %v1451, 6.0
      %v1493 = vmin.f32 %v1452, 6.0
      %v1494 = vmin.f32 %v1453, 6.0
      %v1495 = vmin.f32 %v1454, 6.0
      %v1496 = vmin.f32 %v1455, 6.0
      %v1497 = vmin.f32 %v1456, 6.0
      %v1498 = vmin.f32 %v1457, 6.0
      %v1499 = vmin.f32 %v1458, 6.0
      %v1500 = vmin.f32 %v1459, 6.0
      %v1501 = vmin.f32 %v1460, 6.0
      %v1502 = vmin.f32 %v1461, 6.0
      %v1503 = vmin.f32 %v1462, 6.0
      %v1504 = vmin.f32 %v1463, 6.0
      %v1505 = vmin.f32 %v1464, 6.0
      %v1506 = vmin.f32 %v1465, 6.0
      %v1507 = vmin.f32 %v1466, 6.0
      %v1508 = vmin.f32 %v1467, 6.0
      %v1509 = vmin.f32 %v1468, 6.0
      %v1510 = vmin.f32 %v1469, 6.0
      %v1511 = vmin.f32 %v1470, 6.0
      %v1512 = vmin.f32 %v1471, 6.0
      %v1513 = vmin.f32 %v1472, 6.0
      %v1514 = vmin.f32 %v1473, 6.0
      %v1515 = vmin.f32 %v1474, 6.0
      %v1516 = vmin.f32 %v1475, 6.0
      %v1517 = vmin.f32 %v1476, 6.0
      %v1518 = vmin.f32 %v1477, 6.0
      %v1519 = vmin.f32 %v1478, 6.0
      %v1520 = vmin.f32 %v1479, 6.0
      %v1521 = vmin.f32 %v1480, 6.0
      %v1522 = vmin.f32 %v1481, 6.0
      %v1523 = vmin.f32 %v1482, 6.0
      %v1524 = vmin.f32 %v1483, 6.0
      %v1525 = vmin.f32 %v1484, 6.0
      %v1526 = vmin.f32 %v1485, 6.0
      %v1527 = vmin.f32 %v1486, 6.0
      %v1528 = vmin.f32 %v1487, 6.0
      %v1529 = vmin.f32 %v1488, 6.0
      %v1530 = vmin.f32 %v1489, 6.0
      %v1531 = vmin.f32 %v1490, 6.0
      %v1532 = vmin.f32 %v1491, 6.0
      %v1574 = vrot.slane %v1492, 2
      %v1575 = vrot.slane %v1492, 4
      %v1576 = vrot.slane %v1492, 6
      %v1577 = vrot.slane %v1493, 2
      %v1578 = vrot.slane %v1493, 4
      %v1579 = vrot.slane %v1493, 6
      %v1580 = vrot.slane %v1494, 2
      %v1581 = vrot.slane %v1494, 4
      %v1582 = vrot.slane %v1494, 6
      %v1583 = vrot.slane %v1495, 2
      %v1584 = vrot.slane %v1495, 4
      %v1585 = vrot.slane %v1495, 6
      %v1586 = vrot.slane %v1496, 2
      %v1587 = vrot.slane %v1496, 4
      %v1588 = vrot.slane %v1496, 6
      %v1589 = vrot.slane %v1497, 2
      %v1590 = vrot.slane %v1497, 4
      %v1591 = vrot.slane %v1497, 6
      %v1592 = vrot.slane %v1498, 2
      %v1593 = vrot.slane %v1498, 4
      %v1594 = vrot.slane %v1498, 6
      %v1595 = vrot.slane %v1499, 2
      %v1596 = vrot.slane %v1499, 4
      %v1597 = vrot.slane %v1499, 6
      %v1598 = vrot.slane %v1500, 2
      %v1599 = vrot.slane %v1500, 4
      %v1600 = vrot.slane %v1500, 6
      %v1601 = vrot.slane %v1501, 2
      %v1602 = vrot.slane %v1501, 4
      %v1603 = vrot.slane %v1501, 6
      %v1604 = vrot.slane %v1502, 2
      %v1605 = vrot.slane %v1502, 4
      %v1606 = vrot.slane %v1502, 6
      %v1607 = vrot.slane %v1503, 2
      %v1608 = vrot.slane %v1503, 4
      %v1609 = vrot.slane %v1503, 6
      %v1610 = vrot.slane %v1504, 2
      %v1611 = vrot.slane %v1504, 4
      %v1612 = vrot.slane %v1504, 6
      %v1613 = vrot.slane %v1505, 2
      %v1614 = vrot.slane %v1505, 4
      %v1615 = vrot.slane %v1505, 6
      %v1616 = vrot.slane %v1506, 2
      %v1617 = vrot.slane %v1506, 4
      %v1618 = vrot.slane %v1506, 6
      %v1619 = vrot.slane %v1507, 2
      %v1620 = vrot.slane %v1507, 4
      %v1621 = vrot.slane %v1507, 6
      %v1622 = vrot.slane %v1508, 2
      %v1623 = vrot.slane %v1508, 4
      %v1624 = vrot.slane %v1508, 6
      %v1625 = vrot.slane %v1509, 2
      %v1626 = vrot.slane %v1509, 4
      %v1627 = vrot.slane %v1509, 6
      %v1628 = vrot.slane %v1510, 2
      %v1629 = vrot.slane %v1510, 4
      %v1630 = vrot.slane %v1510, 6
      %v1631 = vrot.slane %v1511, 2
      %v1632 = vrot.slane %v1511, 4
      %v1633 = vrot.slane %v1511, 6
      %v1634 = vrot.slane %v1512, 2
      %v1635 = vrot.slane %v1512, 4
      %v1636 = vrot.slane %v1512, 6
      %v1637 = vrot.slane %v1513, 2
      %v1638 = vrot.slane %v1513, 4
      %v1639 = vrot.slane %v1513, 6
      %v1640 = vrot.slane %v1514, 2
      %v1641 = vrot.slane %v1514, 4
      %v1642 = vrot.slane %v1514, 6
      %v1643 = vrot.slane %v1515, 2
      %v1644 = vrot.slane %v1515, 4
      %v1645 = vrot.slane %v1515, 6
      %v1646 = vrot.slane %v1516, 2
      %v1647 = vrot.slane %v1516, 4
      %v1648 = vrot.slane %v1516, 6
      %v1649 = vrot.slane %v1517, 2
      %v1650 = vrot.slane %v1517, 4
      %v1651 = vrot.slane %v1517, 6
      %v1652 = vrot.slane %v1518, 2
      %v1653 = vrot.slane %v1518, 4
      %v1654 = vrot.slane %v1518, 6
      %v1655 = vrot.slane %v1519, 2
      %v1656 = vrot.slane %v1519, 4
      %v1657 = vrot.slane %v1519, 6
      %v1658 = vrot.slane %v1520, 2
      %v1659 = vrot.slane %v1520, 4
      %v1660 = vrot.slane %v1520, 6
      %v1661 = vrot.slane %v1521, 2
      %v1662 = vrot.slane %v1521, 4
      %v1663 = vrot.slane %v1521, 6
      %v1664 = vrot.slane %v1522, 2
      %v1665 = vrot.slane %v1522, 4
      %v1666 = vrot.slane %v1522, 6
      %v1667 = vrot.slane %v1523, 2
      %v1668 = vrot.slane %v1523, 4
      %v1669 = vrot.slane %v1523, 6
      %v1670 = vrot.slane %v1524, 2
      %v1671 = vrot.slane %v1524, 4
      %v1672 = vrot.slane %v1524, 6
      %v1673 = vrot.slane %v1525, 2
      %v1674 = vrot.slane %v1525, 4
      %v1675 = vrot.slane %v1525, 6
      %v1676 = vrot.slane %v1526, 2
      %v1677 = vrot.slane %v1526, 4
      %v1678 = vrot.slane %v1526, 6
      %v1679 = vrot.slane %v1527, 2
      %v1680 = vrot.slane %v1527, 4
      %v1681 = vrot.slane %v1527, 6
      %v1682 = vrot.slane %v1528, 2
      %v1683 = vrot.slane %v1528, 4
      %v1684 = vrot.slane %v1528, 6
      %v1685 = vrot.slane %v1529, 2
      %v1686 = vrot.slane %v1529, 4
      %v1687 = vrot.slane %v1529, 6
      %v1688 = vrot.slane %v1530, 2
      %v1689 = vrot.slane %v1530, 4
      %v1690 = vrot.slane %v1530, 6
      %v1691 = vrot.slane %v1531, 2
      %v1692 = vrot.slane %v1531, 4
      %v1693 = vrot.slane %v1531, 6
      %v1694 = vrot.slane %v1532, 2
      %s1816 = scalar_lea.vmem %s1, %s332
      %v1817 = vld [vmem:[%s1816] sm:$0xff]
      %v1818 = vld [vmem:[%s1816 + $0x8] sm:$0xff]
      %v1819 = vld [vmem:[%s1816 + $0x10] sm:$0x3]
      %v1820 = vperm.slane %v1817, 0
      %v1821 = vlaneseq
      %v1822 = vshrl.u32 %v1821, 7
      %1824 = vset.pattern.permute.xlu0 %v1822
      %1825 = vperm.xlu0 %1824, %v1820
      %v1826 = vpop.permute.xlu0 %1825
      %v1827 = vlaneseq
      %v1828 = vshrl.u32 %v1827, 7
      %v1829 = vadd.s32 %v1828, 8
      %1830 = vset.pattern.permute.xlu0 %v1829
      %1831 = vperm.xlu0 %1830, %v1820
      %v1832 = vpop.permute.xlu0 %1831
      %v1833 = vlaneseq
      %v1834 = vshrl.u32 %v1833, 7
      %v1835 = vadd.s32 %v1834, 16
      %1836 = vset.pattern.permute.xlu0 %v1835
      %1837 = vperm.xlu0 %1836, %v1820
      %v1838 = vpop.permute.xlu0 %1837
      %v1839 = vperm.slane %v1817, 1
      %v1840 = vlaneseq
      %v1841 = vshrl.u32 %v1840, 7
      %1843 = vset.pattern.permute.xlu0 %v1841
      %1844 = vperm.xlu0 %1843, %v1839
      %v1845 = vpop.permute.xlu0 %1844
      %v1846 = vlaneseq
      %v1847 = vshrl.u32 %v1846, 7
      %v1848 = vadd.s32 %v1847, 8
      %1849 = vset.pattern.permute.xlu0 %v1848
      %1850 = vperm.xlu0 %1849, %v1839
      %v1851 = vpop.permute.xlu0 %1850
      %v1852 = vlaneseq
      %v1853 = vshrl.u32 %v1852, 7
      %v1854 = vadd.s32 %v1853, 16
      %1855 = vset.pattern.permute.xlu0 %v1854
      %1856 = vperm.xlu0 %1855, %v1839
      %v1857 = vpop.permute.xlu0 %1856
      %v1858 = vperm.slane %v1817, 2
      %v1859 = vlaneseq
      %v1860 = vshrl.u32 %v1859, 7
      %1862 = vset.pattern.permute.xlu0 %v1860
      %1863 = vperm.xlu0 %1862, %v1858
      %v1864 = vpop.permute.xlu0 %1863
      %v1865 = vlaneseq
      %v1866 = vshrl.u32 %v1865, 7
      %v1867 = vadd.s32 %v1866, 8
      %1868 = vset.pattern.permute.xlu0 %v1867
      %1869 = vperm.xlu0 %1868, %v1858
      %v1870 = vpop.permute.xlu0 %1869
      %v1871 = vlaneseq
      %v1872 = vshrl.u32 %v1871, 7
      %v1873 = vadd.s32 %v1872, 16
      %1874 = vset.pattern.permute.xlu0 %v1873
      %1875 = vperm.xlu0 %1874, %v1858
      %v1876 = vpop.permute.xlu0 %1875
      %v1877 = vperm.slane %v1817, 3
      %v1878 = vlaneseq
      %v1879 = vshrl.u32 %v1878, 7
      %1881 = vset.pattern.permute.xlu0 %v1879
      %1882 = vperm.xlu0 %1881, %v1877
      %v1883 = vpop.permute.xlu0 %1882
      %v1884 = vlaneseq
      %v1885 = vshrl.u32 %v1884, 7
      %v1886 = vadd.s32 %v1885, 8
      %1887 = vset.pattern.permute.xlu0 %v1886
      %1888 = vperm.xlu0 %1887, %v1877
      %v1889 = vpop.permute.xlu0 %1888
      %v1890 = vlaneseq
      %v1891 = vshrl.u32 %v1890, 7
      %v1892 = vadd.s32 %v1891, 16
      %1893 = vset.pattern.permute.xlu0 %v1892
      %1894 = vperm.xlu0 %1893, %v1877
      %v1895 = vpop.permute.xlu0 %1894
      %v1896 = vperm.slane %v1817, 4
      %v1897 = vlaneseq
      %v1898 = vshrl.u32 %v1897, 7
      %1900 = vset.pattern.permute.xlu0 %v1898
      %1901 = vperm.xlu0 %1900, %v1896
      %v1902 = vpop.permute.xlu0 %1901
      %v1903 = vlaneseq
      %v1904 = vshrl.u32 %v1903, 7
      %v1905 = vadd.s32 %v1904, 8
      %1906 = vset.pattern.permute.xlu0 %v1905
      %1907 = vperm.xlu0 %1906, %v1896
      %v1908 = vpop.permute.xlu0 %1907
      %v1909 = vlaneseq
      %v1910 = vshrl.u32 %v1909, 7
      %v1911 = vadd.s32 %v1910, 16
      %1912 = vset.pattern.permute.xlu0 %v1911
      %1913 = vperm.xlu0 %1912, %v1896
      %v1914 = vpop.permute.xlu0 %1913
      %v1915 = vperm.slane %v1817, 5
      %v1916 = vlaneseq
      %v1917 = vshrl.u32 %v1916, 7
      %1919 = vset.pattern.permute.xlu0 %v1917
      %1920 = vperm.xlu0 %1919, %v1915
      %v1921 = vpop.permute.xlu0 %1920
      %v1922 = vlaneseq
      %v1923 = vshrl.u32 %v1922, 7
      %v1924 = vadd.s32 %v1923, 8
      %1925 = vset.pattern.permute.xlu0 %v1924
      %1926 = vperm.xlu0 %1925, %v1915
      %v1927 = vpop.permute.xlu0 %1926
      %v1928 = vlaneseq
      %v1929 = vshrl.u32 %v1928, 7
      %v1930 = vadd.s32 %v1929, 16
      %1931 = vset.pattern.permute.xlu0 %v1930
      %1932 = vperm.xlu0 %1931, %v1915
      %v1933 = vpop.permute.xlu0 %1932
      %v1934 = vperm.slane %v1817, 6
      %v1935 = vlaneseq
      %v1936 = vshrl.u32 %v1935, 7
      %1938 = vset.pattern.permute.xlu0 %v1936
      %1939 = vperm.xlu0 %1938, %v1934
      %v1940 = vpop.permute.xlu0 %1939
      %v1941 = vlaneseq
      %v1942 = vshrl.u32 %v1941, 7
      %v1943 = vadd.s32 %v1942, 8
      %1944 = vset.pattern.permute.xlu0 %v1943
      %1945 = vperm.xlu0 %1944, %v1934
      %v1946 = vpop.permute.xlu0 %1945
      %v1947 = vlaneseq
      %v1948 = vshrl.u32 %v1947, 7
      %v1949 = vadd.s32 %v1948, 16
      %1950 = vset.pattern.permute.xlu0 %v1949
      %1951 = vperm.xlu0 %1950, %v1934
      %v1952 = vpop.permute.xlu0 %1951
      %v1953 = vperm.slane %v1817, 7
      %v1954 = vlaneseq
      %v1955 = vshrl.u32 %v1954, 7
      %1957 = vset.pattern.permute.xlu0 %v1955
      %1958 = vperm.xlu0 %1957, %v1953
      %v1959 = vpop.permute.xlu0 %1958
      %v1960 = vlaneseq
      %v1961 = vshrl.u32 %v1960, 7
      %v1962 = vadd.s32 %v1961, 8
      %1963 = vset.pattern.permute.xlu0 %v1962
      %1964 = vperm.xlu0 %1963, %v1953
      %v1965 = vpop.permute.xlu0 %1964
      %v1966 = vlaneseq
      %v1967 = vshrl.u32 %v1966, 7
      %v1968 = vadd.s32 %v1967, 16
      %1969 = vset.pattern.permute.xlu0 %v1968
      %1970 = vperm.xlu0 %1969, %v1953
      %v1971 = vpop.permute.xlu0 %1970
      %v1972 = vperm.slane %v1818, 0
      %v1973 = vlaneseq
      %v1974 = vshrl.u32 %v1973, 7
      %1976 = vset.pattern.permute.xlu0 %v1974
      %1977 = vperm.xlu0 %1976, %v1972
      %v1978 = vpop.permute.xlu0 %1977
      %v1979 = vlaneseq
      %v1980 = vshrl.u32 %v1979, 7
      %v1981 = vadd.s32 %v1980, 8
      %1982 = vset.pattern.permute.xlu0 %v1981
      %1983 = vperm.xlu0 %1982, %v1972
      %v1984 = vpop.permute.xlu0 %1983
      %v1985 = vlaneseq
      %v1986 = vshrl.u32 %v1985, 7
      %v1987 = vadd.s32 %v1986, 16
      %1988 = vset.pattern.permute.xlu0 %v1987
      %1989 = vperm.xlu0 %1988, %v1972
      %v1990 = vpop.permute.xlu0 %1989
      %v1991 = vperm.slane %v1818, 1
      %v1992 = vlaneseq
      %v1993 = vshrl.u32 %v1992, 7
      %1995 = vset.pattern.permute.xlu0 %v1993
      %1996 = vperm.xlu0 %1995, %v1991
      %v1997 = vpop.permute.xlu0 %1996
      %v1998 = vlaneseq
      %v1999 = vshrl.u32 %v1998, 7
      %v2000 = vadd.s32 %v1999, 8
      %2001 = vset.pattern.permute.xlu0 %v2000
      %2002 = vperm.xlu0 %2001, %v1991
      %v2003 = vpop.permute.xlu0 %2002
      %v2004 = vlaneseq
      %v2005 = vshrl.u32 %v2004, 7
      %v2006 = vadd.s32 %v2005, 16
      %2007 = vset.pattern.permute.xlu0 %v2006
      %2008 = vperm.xlu0 %2007, %v1991
      %v2009 = vpop.permute.xlu0 %2008
      %v2010 = vperm.slane %v1818, 2
      %v2011 = vlaneseq
      %v2012 = vshrl.u32 %v2011, 7
      %2014 = vset.pattern.permute.xlu0 %v2012
      %2015 = vperm.xlu0 %2014, %v2010
      %v2016 = vpop.permute.xlu0 %2015
      %v2017 = vlaneseq
      %v2018 = vshrl.u32 %v2017, 7
      %v2019 = vadd.s32 %v2018, 8
      %2020 = vset.pattern.permute.xlu0 %v2019
      %2021 = vperm.xlu0 %2020, %v2010
      %v2022 = vpop.permute.xlu0 %2021
      %v2023 = vlaneseq
      %v2024 = vshrl.u32 %v2023, 7
      %v2025 = vadd.s32 %v2024, 16
      %2026 = vset.pattern.permute.xlu0 %v2025
      %2027 = vperm.xlu0 %2026, %v2010
      %v2028 = vpop.permute.xlu0 %2027
      %v2029 = vperm.slane %v1818, 3
      %v2030 = vlaneseq
      %v2031 = vshrl.u32 %v2030, 7
      %2033 = vset.pattern.permute.xlu0 %v2031
      %2034 = vperm.xlu0 %2033, %v2029
      %v2035 = vpop.permute.xlu0 %2034
      %v2036 = vlaneseq
      %v2037 = vshrl.u32 %v2036, 7
      %v2038 = vadd.s32 %v2037, 8
      %2039 = vset.pattern.permute.xlu0 %v2038
      %2040 = vperm.xlu0 %2039, %v2029
      %v2041 = vpop.permute.xlu0 %2040
      %v2042 = vlaneseq
      %v2043 = vshrl.u32 %v2042, 7
      %v2044 = vadd.s32 %v2043, 16
      %2045 = vset.pattern.permute.xlu0 %v2044
      %2046 = vperm.xlu0 %2045, %v2029
      %v2047 = vpop.permute.xlu0 %2046
      %v2048 = vperm.slane %v1818, 4
      %v2049 = vlaneseq
      %v2050 = vshrl.u32 %v2049, 7
      %2052 = vset.pattern.permute.xlu0 %v2050
      %2053 = vperm.xlu0 %2052, %v2048
      %v2054 = vpop.permute.xlu0 %2053
      %v2055 = vlaneseq
      %v2056 = vshrl.u32 %v2055, 7
      %v2057 = vadd.s32 %v2056, 8
      %2058 = vset.pattern.permute.xlu0 %v2057
      %2059 = vperm.xlu0 %2058, %v2048
      %v2060 = vpop.permute.xlu0 %2059
      %v2061 = vlaneseq
      %v2062 = vshrl.u32 %v2061, 7
      %v2063 = vadd.s32 %v2062, 16
      %2064 = vset.pattern.permute.xlu0 %v2063
      %2065 = vperm.xlu0 %2064, %v2048
      %v2066 = vpop.permute.xlu0 %2065
      %v2067 = vperm.slane %v1818, 5
      %v2068 = vlaneseq
      %v2069 = vshrl.u32 %v2068, 7
      %2071 = vset.pattern.permute.xlu0 %v2069
      %2072 = vperm.xlu0 %2071, %v2067
      %v2073 = vpop.permute.xlu0 %2072
      %v2074 = vlaneseq
      %v2075 = vshrl.u32 %v2074, 7
      %v2076 = vadd.s32 %v2075, 8
      %2077 = vset.pattern.permute.xlu0 %v2076
      %2078 = vperm.xlu0 %2077, %v2067
      %v2079 = vpop.permute.xlu0 %2078
      %v2080 = vlaneseq
      %v2081 = vshrl.u32 %v2080, 7
      %v2082 = vadd.s32 %v2081, 16
      %2083 = vset.pattern.permute.xlu0 %v2082
      %2084 = vperm.xlu0 %2083, %v2067
      %v2085 = vpop.permute.xlu0 %2084
      %v2086 = vperm.slane %v1818, 6
      %v2087 = vlaneseq
      %v2088 = vshrl.u32 %v2087, 7
      %2090 = vset.pattern.permute.xlu0 %v2088
      %2091 = vperm.xlu0 %2090, %v2086
      %v2092 = vpop.permute.xlu0 %2091
      %v2093 = vlaneseq
      %v2094 = vshrl.u32 %v2093, 7
      %v2095 = vadd.s32 %v2094, 8
      %2096 = vset.pattern.permute.xlu0 %v2095
      %2097 = vperm.xlu0 %2096, %v2086
      %v2098 = vpop.permute.xlu0 %2097
      %v2099 = vlaneseq
      %v2100 = vshrl.u32 %v2099, 7
      %v2101 = vadd.s32 %v2100, 16
      %2102 = vset.pattern.permute.xlu0 %v2101
      %2103 = vperm.xlu0 %2102, %v2086
      %v2104 = vpop.permute.xlu0 %2103
      %v2105 = vperm.slane %v1818, 7
      %v2106 = vlaneseq
      %v2107 = vshrl.u32 %v2106, 7
      %2109 = vset.pattern.permute.xlu0 %v2107
      %2110 = vperm.xlu0 %2109, %v2105
      %v2111 = vpop.permute.xlu0 %2110
      %v2112 = vlaneseq
      %v2113 = vshrl.u32 %v2112, 7
      %v2114 = vadd.s32 %v2113, 8
      %2115 = vset.pattern.permute.xlu0 %v2114
      %2116 = vperm.xlu0 %2115, %v2105
      %v2117 = vpop.permute.xlu0 %2116
      %v2118 = vlaneseq
      %v2119 = vshrl.u32 %v2118, 7
      %v2120 = vadd.s32 %v2119, 16
      %2121 = vset.pattern.permute.xlu0 %v2120
      %2122 = vperm.xlu0 %2121, %v2105
      %v2123 = vpop.permute.xlu0 %2122
      %v2124 = vperm.slane %v1819, 0
      %v2125 = vlaneseq
      %v2126 = vshrl.u32 %v2125, 7
      %2128 = vset.pattern.permute.xlu0 %v2126
      %2129 = vperm.xlu0 %2128, %v2124
      %v2130 = vpop.permute.xlu0 %2129
      %v2131 = vlaneseq
      %v2132 = vshrl.u32 %v2131, 7
      %v2133 = vadd.s32 %v2132, 8
      %2134 = vset.pattern.permute.xlu0 %v2133
      %2135 = vperm.xlu0 %2134, %v2124
      %v2136 = vpop.permute.xlu0 %2135
      %v2137 = vlaneseq
      %v2138 = vshrl.u32 %v2137, 7
      %v2139 = vadd.s32 %v2138, 16
      %2140 = vset.pattern.permute.xlu0 %v2139
      %2141 = vperm.xlu0 %2140, %v2124
      %v2142 = vpop.permute.xlu0 %2141
      %v2143 = vperm.slane %v1819, 1
      %v2144 = vlaneseq
      %v2145 = vshrl.u32 %v2144, 7
      %2147 = vset.pattern.permute.xlu0 %v2145
      %2148 = vperm.xlu0 %2147, %v2143
      %v2149 = vpop.permute.xlu0 %2148
      %v2150 = vlaneseq
      %v2151 = vshrl.u32 %v2150, 7
      %v2152 = vadd.s32 %v2151, 8
      %2153 = vset.pattern.permute.xlu0 %v2152
      %2154 = vperm.xlu0 %2153, %v2143
      %v2155 = vpop.permute.xlu0 %2154
      %v2156 = vlaneseq
      %v2157 = vshrl.u32 %v2156, 7
      %v2158 = vadd.s32 %v2157, 16
      %2159 = vset.pattern.permute.xlu0 %v2158
      %2160 = vperm.xlu0 %2159, %v2143
      %v2161 = vpop.permute.xlu0 %2160
      %v2217 = vunpack.c.l.s4 269488144
      %v2218 = vunpack.c.0.s8 %v2217
      %v2219 = vperm.slane %v1826, %v2218
      %v2221 = vunpack.c.l.s4 842150450
      %v2222 = vunpack.c.0.s8 %v2221
      %v2223 = vperm.slane %v1826, %v2222
      %v2225 = vunpack.c.l.s4 1414812756
      %v2226 = vunpack.c.0.s8 %v2225
      %v2227 = vperm.slane %v1826, %v2226
      %v2229 = vunpack.c.l.s4 1987475062
      %v2230 = vunpack.c.0.s8 %v2229
      %v2231 = vperm.slane %v1826, %v2230
      %v2233 = vunpack.c.l.s4 269488144
      %v2234 = vunpack.c.0.s8 %v2233
      %v2235 = vperm.slane %v1832, %v2234
      %v2237 = vunpack.c.l.s4 842150450
      %v2238 = vunpack.c.0.s8 %v2237
      %v2239 = vperm.slane %v1832, %v2238
      %v2241 = vunpack.c.l.s4 1414812756
      %v2242 = vunpack.c.0.s8 %v2241
      %v2243 = vperm.slane %v1832, %v2242
      %v2245 = vunpack.c.l.s4 1987475062
      %v2246 = vunpack.c.0.s8 %v2245
      %v2247 = vperm.slane %v1832, %v2246
      %v2249 = vunpack.c.l.s4 269488144
      %v2250 = vunpack.c.0.s8 %v2249
      %v2251 = vperm.slane %v1838, %v2250
      %v2253 = vunpack.c.l.s4 269488144
      %v2254 = vunpack.c.0.s8 %v2253
      %v2255 = vperm.slane %v1845, %v2254
      %v2257 = vunpack.c.l.s4 842150450
      %v2258 = vunpack.c.0.s8 %v2257
      %v2259 = vperm.slane %v1845, %v2258
      %v2261 = vunpack.c.l.s4 1414812756
      %v2262 = vunpack.c.0.s8 %v2261
      %v2263 = vperm.slane %v1845, %v2262
      %v2265 = vunpack.c.l.s4 1987475062
      %v2266 = vunpack.c.0.s8 %v2265
      %v2267 = vperm.slane %v1845, %v2266
      %v2269 = vunpack.c.l.s4 269488144
      %v2270 = vunpack.c.0.s8 %v2269
      %v2271 = vperm.slane %v1851, %v2270
      %v2273 = vunpack.c.l.s4 842150450
      %v2274 = vunpack.c.0.s8 %v2273
      %v2275 = vperm.slane %v1851, %v2274
      %v2277 = vunpack.c.l.s4 1414812756
      %v2278 = vunpack.c.0.s8 %v2277
      %v2279 = vperm.slane %v1851, %v2278
      %v2281 = vunpack.c.l.s4 1987475062
      %v2282 = vunpack.c.0.s8 %v2281
      %v2283 = vperm.slane %v1851, %v2282
      %v2285 = vunpack.c.l.s4 269488144
      %v2286 = vunpack.c.0.s8 %v2285
      %v2287 = vperm.slane %v1857, %v2286
      %v2289 = vunpack.c.l.s4 269488144
      %v2290 = vunpack.c.0.s8 %v2289
      %v2291 = vperm.slane %v1864, %v2290
      %v2293 = vunpack.c.l.s4 842150450
      %v2294 = vunpack.c.0.s8 %v2293
      %v2295 = vperm.slane %v1864, %v2294
      %v2297 = vunpack.c.l.s4 1414812756
      %v2298 = vunpack.c.0.s8 %v2297
      %v2299 = vperm.slane %v1864, %v2298
      %v2301 = vunpack.c.l.s4 1987475062
      %v2302 = vunpack.c.0.s8 %v2301
      %v2303 = vperm.slane %v1864, %v2302
      %v2305 = vunpack.c.l.s4 269488144
      %v2306 = vunpack.c.0.s8 %v2305
      %v2307 = vperm.slane %v1870, %v2306
      %v2309 = vunpack.c.l.s4 842150450
      %v2310 = vunpack.c.0.s8 %v2309
      %v2311 = vperm.slane %v1870, %v2310
      %v2313 = vunpack.c.l.s4 1414812756
      %v2314 = vunpack.c.0.s8 %v2313
      %v2315 = vperm.slane %v1870, %v2314
      %v2317 = vunpack.c.l.s4 1987475062
      %v2318 = vunpack.c.0.s8 %v2317
      %v2319 = vperm.slane %v1870, %v2318
      %v2321 = vunpack.c.l.s4 269488144
      %v2322 = vunpack.c.0.s8 %v2321
      %v2323 = vperm.slane %v1876, %v2322
      %v2325 = vunpack.c.l.s4 269488144
      %v2326 = vunpack.c.0.s8 %v2325
      %v2327 = vperm.slane %v1883, %v2326
      %v2329 = vunpack.c.l.s4 842150450
      %v2330 = vunpack.c.0.s8 %v2329
      %v2331 = vperm.slane %v1883, %v2330
      %v2333 = vunpack.c.l.s4 1414812756
      %v2334 = vunpack.c.0.s8 %v2333
      %v2335 = vperm.slane %v1883, %v2334
      %v2337 = vunpack.c.l.s4 1987475062
      %v2338 = vunpack.c.0.s8 %v2337
      %v2339 = vperm.slane %v1883, %v2338
      %v2341 = vunpack.c.l.s4 269488144
      %v2342 = vunpack.c.0.s8 %v2341
      %v2343 = vperm.slane %v1889, %v2342
      %v2345 = vunpack.c.l.s4 842150450
      %v2346 = vunpack.c.0.s8 %v2345
      %v2347 = vperm.slane %v1889, %v2346
      %v2349 = vunpack.c.l.s4 1414812756
      %v2350 = vunpack.c.0.s8 %v2349
      %v2351 = vperm.slane %v1889, %v2350
      %v2353 = vunpack.c.l.s4 1987475062
      %v2354 = vunpack.c.0.s8 %v2353
      %v2355 = vperm.slane %v1889, %v2354
      %v2357 = vunpack.c.l.s4 269488144
      %v2358 = vunpack.c.0.s8 %v2357
      %v2359 = vperm.slane %v1895, %v2358
      %v2361 = vunpack.c.l.s4 269488144
      %v2362 = vunpack.c.0.s8 %v2361
      %v2363 = vperm.slane %v1902, %v2362
      %v2365 = vunpack.c.l.s4 842150450
      %v2366 = vunpack.c.0.s8 %v2365
      %v2367 = vperm.slane %v1902, %v2366
      %v2369 = vunpack.c.l.s4 1414812756
      %v2370 = vunpack.c.0.s8 %v2369
      %v2371 = vperm.slane %v1902, %v2370
      %v2373 = vunpack.c.l.s4 1987475062
      %v2374 = vunpack.c.0.s8 %v2373
      %v2375 = vperm.slane %v1902, %v2374
      %v2377 = vunpack.c.l.s4 269488144
      %v2378 = vunpack.c.0.s8 %v2377
      %v2379 = vperm.slane %v1908, %v2378
      %v2381 = vunpack.c.l.s4 842150450
      %v2382 = vunpack.c.0.s8 %v2381
      %v2383 = vperm.slane %v1908, %v2382
      %v2385 = vunpack.c.l.s4 1414812756
      %v2386 = vunpack.c.0.s8 %v2385
      %v2387 = vperm.slane %v1908, %v2386
      %v2389 = vunpack.c.l.s4 1987475062
      %v2390 = vunpack.c.0.s8 %v2389
      %v2391 = vperm.slane %v1908, %v2390
      %v2393 = vunpack.c.l.s4 269488144
      %v2394 = vunpack.c.0.s8 %v2393
      %v2395 = vperm.slane %v1914, %v2394
      %v2397 = vunpack.c.l.s4 269488144
      %v2398 = vunpack.c.0.s8 %v2397
      %v2399 = vperm.slane %v1921, %v2398
      %v2401 = vunpack.c.l.s4 842150450
      %v2402 = vunpack.c.0.s8 %v2401
      %v2403 = vperm.slane %v1921, %v2402
      %v2405 = vunpack.c.l.s4 1414812756
      %v2406 = vunpack.c.0.s8 %v2405
      %v2407 = vperm.slane %v1921, %v2406
      %v2409 = vunpack.c.l.s4 1987475062
      %v2410 = vunpack.c.0.s8 %v2409
      %v2411 = vperm.slane %v1921, %v2410
      %v2413 = vunpack.c.l.s4 269488144
      %v2414 = vunpack.c.0.s8 %v2413
      %v2415 = vperm.slane %v1927, %v2414
      %v2417 = vunpack.c.l.s4 842150450
      %v2418 = vunpack.c.0.s8 %v2417
      %v2419 = vperm.slane %v1927, %v2418
      %v2421 = vunpack.c.l.s4 1414812756
      %v2422 = vunpack.c.0.s8 %v2421
      %v2423 = vperm.slane %v1927, %v2422
      %v2425 = vunpack.c.l.s4 1987475062
      %v2426 = vunpack.c.0.s8 %v2425
      %v2427 = vperm.slane %v1927, %v2426
      %v2429 = vunpack.c.l.s4 269488144
      %v2430 = vunpack.c.0.s8 %v2429
      %v2431 = vperm.slane %v1933, %v2430
      %v2433 = vunpack.c.l.s4 269488144
      %v2434 = vunpack.c.0.s8 %v2433
      %v2435 = vperm.slane %v1940, %v2434
      %v2437 = vunpack.c.l.s4 842150450
      %v2438 = vunpack.c.0.s8 %v2437
      %v2439 = vperm.slane %v1940, %v2438
      %v2441 = vunpack.c.l.s4 1414812756
      %v2442 = vunpack.c.0.s8 %v2441
      %v2443 = vperm.slane %v1940, %v2442
      %v2445 = vunpack.c.l.s4 1987475062
      %v2446 = vunpack.c.0.s8 %v2445
      %v2447 = vperm.slane %v1940, %v2446
      %v2449 = vunpack.c.l.s4 269488144
      %v2450 = vunpack.c.0.s8 %v2449
      %v2451 = vperm.slane %v1946, %v2450
      %v2453 = vunpack.c.l.s4 842150450
      %v2454 = vunpack.c.0.s8 %v2453
      %v2455 = vperm.slane %v1946, %v2454
      %v2457 = vunpack.c.l.s4 1414812756
      %v2458 = vunpack.c.0.s8 %v2457
      %v2459 = vperm.slane %v1946, %v2458
      %v2461 = vunpack.c.l.s4 1987475062
      %v2462 = vunpack.c.0.s8 %v2461
      %v2463 = vperm.slane %v1946, %v2462
      %v2465 = vunpack.c.l.s4 269488144
      %v2466 = vunpack.c.0.s8 %v2465
      %v2467 = vperm.slane %v1952, %v2466
      %v2469 = vunpack.c.l.s4 269488144
      %v2470 = vunpack.c.0.s8 %v2469
      %v2471 = vperm.slane %v1959, %v2470
      %v2473 = vunpack.c.l.s4 842150450
      %v2474 = vunpack.c.0.s8 %v2473
      %v2475 = vperm.slane %v1959, %v2474
      %v2477 = vunpack.c.l.s4 1414812756
      %v2478 = vunpack.c.0.s8 %v2477
      %v2479 = vperm.slane %v1959, %v2478
      %v2481 = vunpack.c.l.s4 1987475062
      %v2482 = vunpack.c.0.s8 %v2481
      %v2483 = vperm.slane %v1959, %v2482
      %v2485 = vunpack.c.l.s4 269488144
      %v2486 = vunpack.c.0.s8 %v2485
      %v2487 = vperm.slane %v1965, %v2486
      %v2489 = vunpack.c.l.s4 842150450
      %v2490 = vunpack.c.0.s8 %v2489
      %v2491 = vperm.slane %v1965, %v2490
      %v2493 = vunpack.c.l.s4 1414812756
      %v2494 = vunpack.c.0.s8 %v2493
      %v2495 = vperm.slane %v1965, %v2494
      %v2497 = vunpack.c.l.s4 1987475062
      %v2498 = vunpack.c.0.s8 %v2497
      %v2499 = vperm.slane %v1965, %v2498
      %v2501 = vunpack.c.l.s4 269488144
      %v2502 = vunpack.c.0.s8 %v2501
      %v2503 = vperm.slane %v1971, %v2502
      %v2505 = vunpack.c.l.s4 269488144
      %v2506 = vunpack.c.0.s8 %v2505
      %v2507 = vperm.slane %v1978, %v2506
      %v2509 = vunpack.c.l.s4 842150450
      %v2510 = vunpack.c.0.s8 %v2509
      %v2511 = vperm.slane %v1978, %v2510
      %v2513 = vunpack.c.l.s4 1414812756
      %v2514 = vunpack.c.0.s8 %v2513
      %v2515 = vperm.slane %v1978, %v2514
      %v2517 = vunpack.c.l.s4 1987475062
      %v2518 = vunpack.c.0.s8 %v2517
      %v2519 = vperm.slane %v1978, %v2518
      %v2521 = vunpack.c.l.s4 269488144
      %v2522 = vunpack.c.0.s8 %v2521
      %v2523 = vperm.slane %v1984, %v2522
      %v2525 = vunpack.c.l.s4 842150450
      %v2526 = vunpack.c.0.s8 %v2525
      %v2527 = vperm.slane %v1984, %v2526
      %v2529 = vunpack.c.l.s4 1414812756
      %v2530 = vunpack.c.0.s8 %v2529
      %v2531 = vperm.slane %v1984, %v2530
      %v2533 = vunpack.c.l.s4 1987475062
      %v2534 = vunpack.c.0.s8 %v2533
      %v2535 = vperm.slane %v1984, %v2534
      %v2537 = vunpack.c.l.s4 269488144
      %v2538 = vunpack.c.0.s8 %v2537
      %v2539 = vperm.slane %v1990, %v2538
      %v2541 = vunpack.c.l.s4 269488144
      %v2542 = vunpack.c.0.s8 %v2541
      %v2543 = vperm.slane %v1997, %v2542
      %v2545 = vunpack.c.l.s4 842150450
      %v2546 = vunpack.c.0.s8 %v2545
      %v2547 = vperm.slane %v1997, %v2546
      %v2549 = vunpack.c.l.s4 1414812756
      %v2550 = vunpack.c.0.s8 %v2549
      %v2551 = vperm.slane %v1997, %v2550
      %v2553 = vunpack.c.l.s4 1987475062
      %v2554 = vunpack.c.0.s8 %v2553
      %v2555 = vperm.slane %v1997, %v2554
      %v2557 = vunpack.c.l.s4 269488144
      %v2558 = vunpack.c.0.s8 %v2557
      %v2559 = vperm.slane %v2003, %v2558
      %v2561 = vunpack.c.l.s4 842150450
      %v2562 = vunpack.c.0.s8 %v2561
      %v2563 = vperm.slane %v2003, %v2562
      %v2565 = vunpack.c.l.s4 1414812756
      %v2566 = vunpack.c.0.s8 %v2565
      %v2567 = vperm.slane %v2003, %v2566
      %v2569 = vunpack.c.l.s4 1987475062
      %v2570 = vunpack.c.0.s8 %v2569
      %v2571 = vperm.slane %v2003, %v2570
      %v2573 = vunpack.c.l.s4 269488144
      %v2574 = vunpack.c.0.s8 %v2573
      %v2575 = vperm.slane %v2009, %v2574
      %v2577 = vunpack.c.l.s4 269488144
      %v2578 = vunpack.c.0.s8 %v2577
      %v2579 = vperm.slane %v2016, %v2578
      %v2581 = vunpack.c.l.s4 842150450
      %v2582 = vunpack.c.0.s8 %v2581
      %v2583 = vperm.slane %v2016, %v2582
      %v2585 = vunpack.c.l.s4 1414812756
      %v2586 = vunpack.c.0.s8 %v2585
      %v2587 = vperm.slane %v2016, %v2586
      %v2589 = vunpack.c.l.s4 1987475062
      %v2590 = vunpack.c.0.s8 %v2589
      %v2591 = vperm.slane %v2016, %v2590
      %v2593 = vunpack.c.l.s4 269488144
      %v2594 = vunpack.c.0.s8 %v2593
      %v2595 = vperm.slane %v2022, %v2594
      %v2597 = vunpack.c.l.s4 842150450
      %v2598 = vunpack.c.0.s8 %v2597
      %v2599 = vperm.slane %v2022, %v2598
      %v2601 = vunpack.c.l.s4 1414812756
      %v2602 = vunpack.c.0.s8 %v2601
      %v2603 = vperm.slane %v2022, %v2602
      %v2605 = vunpack.c.l.s4 1987475062
      %v2606 = vunpack.c.0.s8 %v2605
      %v2607 = vperm.slane %v2022, %v2606
      %v2609 = vunpack.c.l.s4 269488144
      %v2610 = vunpack.c.0.s8 %v2609
      %v2611 = vperm.slane %v2028, %v2610
      %v2613 = vunpack.c.l.s4 269488144
      %v2614 = vunpack.c.0.s8 %v2613
      %v2615 = vperm.slane %v2035, %v2614
      %v2617 = vunpack.c.l.s4 842150450
      %v2618 = vunpack.c.0.s8 %v2617
      %v2619 = vperm.slane %v2035, %v2618
      %v2621 = vunpack.c.l.s4 1414812756
      %v2622 = vunpack.c.0.s8 %v2621
      %v2623 = vperm.slane %v2035, %v2622
      %v2625 = vunpack.c.l.s4 1987475062
      %v2626 = vunpack.c.0.s8 %v2625
      %v2627 = vperm.slane %v2035, %v2626
      %v2629 = vunpack.c.l.s4 269488144
      %v2630 = vunpack.c.0.s8 %v2629
      %v2631 = vperm.slane %v2041, %v2630
      %v2633 = vunpack.c.l.s4 842150450
      %v2634 = vunpack.c.0.s8 %v2633
      %v2635 = vperm.slane %v2041, %v2634
      %v2637 = vunpack.c.l.s4 1414812756
      %v2638 = vunpack.c.0.s8 %v2637
      %v2639 = vperm.slane %v2041, %v2638
      %v2641 = vunpack.c.l.s4 1987475062
      %v2642 = vunpack.c.0.s8 %v2641
      %v2643 = vperm.slane %v2041, %v2642
      %v2645 = vunpack.c.l.s4 269488144
      %v2646 = vunpack.c.0.s8 %v2645
      %v2647 = vperm.slane %v2047, %v2646
      %v2649 = vunpack.c.l.s4 269488144
      %v2650 = vunpack.c.0.s8 %v2649
      %v2651 = vperm.slane %v2054, %v2650
      %v2653 = vunpack.c.l.s4 842150450
      %v2654 = vunpack.c.0.s8 %v2653
      %v2655 = vperm.slane %v2054, %v2654
      %v2657 = vunpack.c.l.s4 1414812756
      %v2658 = vunpack.c.0.s8 %v2657
      %v2659 = vperm.slane %v2054, %v2658
      %v2661 = vunpack.c.l.s4 1987475062
      %v2662 = vunpack.c.0.s8 %v2661
      %v2663 = vperm.slane %v2054, %v2662
      %v2665 = vunpack.c.l.s4 269488144
      %v2666 = vunpack.c.0.s8 %v2665
      %v2667 = vperm.slane %v2060, %v2666
      %v2669 = vunpack.c.l.s4 842150450
      %v2670 = vunpack.c.0.s8 %v2669
      %v2671 = vperm.slane %v2060, %v2670
      %v2673 = vunpack.c.l.s4 1414812756
      %v2674 = vunpack.c.0.s8 %v2673
      %v2675 = vperm.slane %v2060, %v2674
      %v2677 = vunpack.c.l.s4 1987475062
      %v2678 = vunpack.c.0.s8 %v2677
      %v2679 = vperm.slane %v2060, %v2678
      %v2681 = vunpack.c.l.s4 269488144
      %v2682 = vunpack.c.0.s8 %v2681
      %v2683 = vperm.slane %v2066, %v2682
      %v2685 = vunpack.c.l.s4 269488144
      %v2686 = vunpack.c.0.s8 %v2685
      %v2687 = vperm.slane %v2073, %v2686
      %v2689 = vunpack.c.l.s4 842150450
      %v2690 = vunpack.c.0.s8 %v2689
      %v2691 = vperm.slane %v2073, %v2690
      %v2693 = vunpack.c.l.s4 1414812756
      %v2694 = vunpack.c.0.s8 %v2693
      %v2695 = vperm.slane %v2073, %v2694
      %v2697 = vunpack.c.l.s4 1987475062
      %v2698 = vunpack.c.0.s8 %v2697
      %v2699 = vperm.slane %v2073, %v2698
      %v2701 = vunpack.c.l.s4 269488144
      %v2702 = vunpack.c.0.s8 %v2701
      %v2703 = vperm.slane %v2079, %v2702
      %v2705 = vunpack.c.l.s4 842150450
      %v2706 = vunpack.c.0.s8 %v2705
      %v2707 = vperm.slane %v2079, %v2706
      %v2709 = vunpack.c.l.s4 1414812756
      %v2710 = vunpack.c.0.s8 %v2709
      %v2711 = vperm.slane %v2079, %v2710
      %v2713 = vunpack.c.l.s4 1987475062
      %v2714 = vunpack.c.0.s8 %v2713
      %v2715 = vperm.slane %v2079, %v2714
      %v2717 = vunpack.c.l.s4 269488144
      %v2718 = vunpack.c.0.s8 %v2717
      %v2719 = vperm.slane %v2085, %v2718
      %v2721 = vunpack.c.l.s4 269488144
      %v2722 = vunpack.c.0.s8 %v2721
      %v2723 = vperm.slane %v2092, %v2722
      %v2725 = vunpack.c.l.s4 842150450
      %v2726 = vunpack.c.0.s8 %v2725
      %v2727 = vperm.slane %v2092, %v2726
      %v2729 = vunpack.c.l.s4 1414812756
      %v2730 = vunpack.c.0.s8 %v2729
      %v2731 = vperm.slane %v2092, %v2730
      %v2733 = vunpack.c.l.s4 1987475062
      %v2734 = vunpack.c.0.s8 %v2733
      %v2735 = vperm.slane %v2092, %v2734
      %v2737 = vunpack.c.l.s4 269488144
      %v2738 = vunpack.c.0.s8 %v2737
      %v2739 = vperm.slane %v2098, %v2738
      %v2741 = vunpack.c.l.s4 842150450
      %v2742 = vunpack.c.0.s8 %v2741
      %v2743 = vperm.slane %v2098, %v2742
      %v2745 = vunpack.c.l.s4 1414812756
      %v2746 = vunpack.c.0.s8 %v2745
      %v2747 = vperm.slane %v2098, %v2746
      %v2749 = vunpack.c.l.s4 1987475062
      %v2750 = vunpack.c.0.s8 %v2749
      %v2751 = vperm.slane %v2098, %v2750
      %v2753 = vunpack.c.l.s4 269488144
      %v2754 = vunpack.c.0.s8 %v2753
      %v2755 = vperm.slane %v2104, %v2754
      %v2757 = vunpack.c.l.s4 269488144
      %v2758 = vunpack.c.0.s8 %v2757
      %v2759 = vperm.slane %v2111, %v2758
      %v2761 = vunpack.c.l.s4 842150450
      %v2762 = vunpack.c.0.s8 %v2761
      %v2763 = vperm.slane %v2111, %v2762
      %v2765 = vunpack.c.l.s4 1414812756
      %v2766 = vunpack.c.0.s8 %v2765
      %v2767 = vperm.slane %v2111, %v2766
      %v2769 = vunpack.c.l.s4 1987475062
      %v2770 = vunpack.c.0.s8 %v2769
      %v2771 = vperm.slane %v2111, %v2770
      %v2773 = vunpack.c.l.s4 269488144
      %v2774 = vunpack.c.0.s8 %v2773
      %v2775 = vperm.slane %v2117, %v2774
      %v2777 = vunpack.c.l.s4 842150450
      %v2778 = vunpack.c.0.s8 %v2777
      %v2779 = vperm.slane %v2117, %v2778
      %v2781 = vunpack.c.l.s4 1414812756
      %v2782 = vunpack.c.0.s8 %v2781
      %v2783 = vperm.slane %v2117, %v2782
      %v2785 = vunpack.c.l.s4 1987475062
      %v2786 = vunpack.c.0.s8 %v2785
      %v2787 = vperm.slane %v2117, %v2786
      %v2789 = vunpack.c.l.s4 269488144
      %v2790 = vunpack.c.0.s8 %v2789
      %v2791 = vperm.slane %v2123, %v2790
      %v2793 = vunpack.c.l.s4 269488144
      %v2794 = vunpack.c.0.s8 %v2793
      %v2795 = vperm.slane %v2130, %v2794
      %v2797 = vunpack.c.l.s4 842150450
      %v2798 = vunpack.c.0.s8 %v2797
      %v2799 = vperm.slane %v2130, %v2798
      %v2801 = vunpack.c.l.s4 1414812756
      %v2802 = vunpack.c.0.s8 %v2801
      %v2803 = vperm.slane %v2130, %v2802
      %v2805 = vunpack.c.l.s4 1987475062
      %v2806 = vunpack.c.0.s8 %v2805
      %v2807 = vperm.slane %v2130, %v2806
      %v2809 = vunpack.c.l.s4 269488144
      %v2810 = vunpack.c.0.s8 %v2809
      %v2811 = vperm.slane %v2136, %v2810
      %v2813 = vunpack.c.l.s4 842150450
      %v2814 = vunpack.c.0.s8 %v2813
      %v2815 = vperm.slane %v2136, %v2814
      %v2817 = vunpack.c.l.s4 1414812756
      %v2818 = vunpack.c.0.s8 %v2817
      %v2819 = vperm.slane %v2136, %v2818
      %v2821 = vunpack.c.l.s4 1987475062
      %v2822 = vunpack.c.0.s8 %v2821
      %v2823 = vperm.slane %v2136, %v2822
      %v2825 = vunpack.c.l.s4 269488144
      %v2826 = vunpack.c.0.s8 %v2825
      %v2827 = vperm.slane %v2142, %v2826
      %v2829 = vunpack.c.l.s4 269488144
      %v2830 = vunpack.c.0.s8 %v2829
      %v2831 = vperm.slane %v2149, %v2830
      %v2833 = vunpack.c.l.s4 842150450
      %v2834 = vunpack.c.0.s8 %v2833
      %v2835 = vperm.slane %v2149, %v2834
      %v2837 = vunpack.c.l.s4 1414812756
      %v2838 = vunpack.c.0.s8 %v2837
      %v2839 = vperm.slane %v2149, %v2838
      %v2841 = vunpack.c.l.s4 1987475062
      %v2842 = vunpack.c.0.s8 %v2841
      %v2843 = vperm.slane %v2149, %v2842
      %v2845 = vunpack.c.l.s4 269488144
      %v2846 = vunpack.c.0.s8 %v2845
      %v2847 = vperm.slane %v2155, %v2846
      %v2849 = vunpack.c.l.s4 842150450
      %v2850 = vunpack.c.0.s8 %v2849
      %v2851 = vperm.slane %v2155, %v2850
      %v2853 = vunpack.c.l.s4 1414812756
      %v2854 = vunpack.c.0.s8 %v2853
      %v2855 = vperm.slane %v2155, %v2854
      %v2857 = vunpack.c.l.s4 1987475062
      %v2858 = vunpack.c.0.s8 %v2857
      %v2859 = vperm.slane %v2155, %v2858
      %v2861 = vunpack.c.l.s4 269488144
      %v2862 = vunpack.c.0.s8 %v2861
      %v2863 = vperm.slane %v2161, %v2862
      %v3026 = vmul.f32 %v1492, %v2219
      %v3027 = vmul.f32 %v1574, %v2223
      %v3028 = vmul.f32 %v1575, %v2227
      %v3029 = vmul.f32 %v1576, %v2231
      %v3030 = vmul.f32 %v1493, %v2235
      %v3031 = vmul.f32 %v1577, %v2239
      %v3032 = vmul.f32 %v1578, %v2243
      %v3033 = vmul.f32 %v1579, %v2247
      %v3034 = vmul.f32 %v1494, %v2251
      %v3035 = vmul.f32 %v1580, %v2255
      %v3036 = vmul.f32 %v1581, %v2259
      %v3037 = vmul.f32 %v1582, %v2263
      %v3038 = vmul.f32 %v1495, %v2267
      %v3039 = vmul.f32 %v1583, %v2271
      %v3040 = vmul.f32 %v1584, %v2275
      %v3041 = vmul.f32 %v1585, %v2279
      %v3042 = vmul.f32 %v1496, %v2283
      %v3043 = vmul.f32 %v1586, %v2287
      %v3044 = vmul.f32 %v1587, %v2291
      %v3045 = vmul.f32 %v1588, %v2295
      %v3046 = vmul.f32 %v1497, %v2299
      %v3047 = vmul.f32 %v1589, %v2303
      %v3048 = vmul.f32 %v1590, %v2307
      %v3049 = vmul.f32 %v1591, %v2311
      %v3050 = vmul.f32 %v1498, %v2315
      %v3051 = vmul.f32 %v1592, %v2319
      %v3052 = vmul.f32 %v1593, %v2323
      %v3053 = vmul.f32 %v1594, %v2327
      %v3054 = vmul.f32 %v1499, %v2331
      %v3055 = vmul.f32 %v1595, %v2335
      %v3056 = vmul.f32 %v1596, %v2339
      %v3057 = vmul.f32 %v1597, %v2343
      %v3058 = vmul.f32 %v1500, %v2347
      %v3059 = vmul.f32 %v1598, %v2351
      %v3060 = vmul.f32 %v1599, %v2355
      %v3061 = vmul.f32 %v1600, %v2359
      %v3062 = vmul.f32 %v1501, %v2363
      %v3063 = vmul.f32 %v1601, %v2367
      %v3064 = vmul.f32 %v1602, %v2371
      %v3065 = vmul.f32 %v1603, %v2375
      %v3066 = vmul.f32 %v1502, %v2379
      %v3067 = vmul.f32 %v1604, %v2383
      %v3068 = vmul.f32 %v1605, %v2387
      %v3069 = vmul.f32 %v1606, %v2391
      %v3070 = vmul.f32 %v1503, %v2395
      %v3071 = vmul.f32 %v1607, %v2399
      %v3072 = vmul.f32 %v1608, %v2403
      %v3073 = vmul.f32 %v1609, %v2407
      %v3074 = vmul.f32 %v1504, %v2411
      %v3075 = vmul.f32 %v1610, %v2415
      %v3076 = vmul.f32 %v1611, %v2419
      %v3077 = vmul.f32 %v1612, %v2423
      %v3078 = vmul.f32 %v1505, %v2427
      %v3079 = vmul.f32 %v1613, %v2431
      %v3080 = vmul.f32 %v1614, %v2435
      %v3081 = vmul.f32 %v1615, %v2439
      %v3082 = vmul.f32 %v1506, %v2443
      %v3083 = vmul.f32 %v1616, %v2447
      %v3084 = vmul.f32 %v1617, %v2451
      %v3085 = vmul.f32 %v1618, %v2455
      %v3086 = vmul.f32 %v1507, %v2459
      %v3087 = vmul.f32 %v1619, %v2463
      %v3088 = vmul.f32 %v1620, %v2467
      %v3089 = vmul.f32 %v1621, %v2471
      %v3090 = vmul.f32 %v1508, %v2475
      %v3091 = vmul.f32 %v1622, %v2479
      %v3092 = vmul.f32 %v1623, %v2483
      %v3093 = vmul.f32 %v1624, %v2487
      %v3094 = vmul.f32 %v1509, %v2491
      %v3095 = vmul.f32 %v1625, %v2495
      %v3096 = vmul.f32 %v1626, %v2499
      %v3097 = vmul.f32 %v1627, %v2503
      %v3098 = vmul.f32 %v1510, %v2507
      %v3099 = vmul.f32 %v1628, %v2511
      %v3100 = vmul.f32 %v1629, %v2515
      %v3101 = vmul.f32 %v1630, %v2519
      %v3102 = vmul.f32 %v1511, %v2523
      %v3103 = vmul.f32 %v1631, %v2527
      %v3104 = vmul.f32 %v1632, %v2531
      %v3105 = vmul.f32 %v1633, %v2535
      %v3106 = vmul.f32 %v1512, %v2539
      %v3107 = vmul.f32 %v1634, %v2543
      %v3108 = vmul.f32 %v1635, %v2547
      %v3109 = vmul.f32 %v1636, %v2551
      %v3110 = vmul.f32 %v1513, %v2555
      %v3111 = vmul.f32 %v1637, %v2559
      %v3112 = vmul.f32 %v1638, %v2563
      %v3113 = vmul.f32 %v1639, %v2567
      %v3114 = vmul.f32 %v1514, %v2571
      %v3115 = vmul.f32 %v1640, %v2575
      %v3116 = vmul.f32 %v1641, %v2579
      %v3117 = vmul.f32 %v1642, %v2583
      %v3118 = vmul.f32 %v1515, %v2587
      %v3119 = vmul.f32 %v1643, %v2591
      %v3120 = vmul.f32 %v1644, %v2595
      %v3121 = vmul.f32 %v1645, %v2599
      %v3122 = vmul.f32 %v1516, %v2603
      %v3123 = vmul.f32 %v1646, %v2607
      %v3124 = vmul.f32 %v1647, %v2611
      %v3125 = vmul.f32 %v1648, %v2615
      %v3126 = vmul.f32 %v1517, %v2619
      %v3127 = vmul.f32 %v1649, %v2623
      %v3128 = vmul.f32 %v1650, %v2627
      %v3129 = vmul.f32 %v1651, %v2631
      %v3130 = vmul.f32 %v1518, %v2635
      %v3131 = vmul.f32 %v1652, %v2639
      %v3132 = vmul.f32 %v1653, %v2643
      %v3133 = vmul.f32 %v1654, %v2647
      %v3134 = vmul.f32 %v1519, %v2651
      %v3135 = vmul.f32 %v1655, %v2655
      %v3136 = vmul.f32 %v1656, %v2659
      %v3137 = vmul.f32 %v1657, %v2663
      %v3138 = vmul.f32 %v1520, %v2667
      %v3139 = vmul.f32 %v1658, %v2671
      %v3140 = vmul.f32 %v1659, %v2675
      %v3141 = vmul.f32 %v1660, %v2679
      %v3142 = vmul.f32 %v1521, %v2683
      %v3143 = vmul.f32 %v1661, %v2687
      %v3144 = vmul.f32 %v1662, %v2691
      %v3145 = vmul.f32 %v1663, %v2695
      %v3146 = vmul.f32 %v1522, %v2699
      %v3147 = vmul.f32 %v1664, %v2703
      %v3148 = vmul.f32 %v1665, %v2707
      %v3149 = vmul.f32 %v1666, %v2711
      %v3150 = vmul.f32 %v1523, %v2715
      %v3151 = vmul.f32 %v1667, %v2719
      %v3152 = vmul.f32 %v1668, %v2723
      %v3153 = vmul.f32 %v1669, %v2727
      %v3154 = vmul.f32 %v1524, %v2731
      %v3155 = vmul.f32 %v1670, %v2735
      %v3156 = vmul.f32 %v1671, %v2739
      %v3157 = vmul.f32 %v1672, %v2743
      %v3158 = vmul.f32 %v1525, %v2747
      %v3159 = vmul.f32 %v1673, %v2751
      %v3160 = vmul.f32 %v1674, %v2755
      %v3161 = vmul.f32 %v1675, %v2759
      %v3162 = vmul.f32 %v1526, %v2763
      %v3163 = vmul.f32 %v1676, %v2767
      %v3164 = vmul.f32 %v1677, %v2771
      %v3165 = vmul.f32 %v1678, %v2775
      %v3166 = vmul.f32 %v1527, %v2779
      %v3167 = vmul.f32 %v1679, %v2783
      %v3168 = vmul.f32 %v1680, %v2787
      %v3169 = vmul.f32 %v1681, %v2791
      %v3170 = vmul.f32 %v1528, %v2795
      %v3171 = vmul.f32 %v1682, %v2799
      %v3172 = vmul.f32 %v1683, %v2803
      %v3173 = vmul.f32 %v1684, %v2807
      %v3174 = vmul.f32 %v1529, %v2811
      %v3175 = vmul.f32 %v1685, %v2815
      %v3176 = vmul.f32 %v1686, %v2819
      %v3177 = vmul.f32 %v1687, %v2823
      %v3178 = vmul.f32 %v1530, %v2827
      %v3179 = vmul.f32 %v1688, %v2831
      %v3180 = vmul.f32 %v1689, %v2835
      %v3181 = vmul.f32 %v1690, %v2839
      %v3182 = vmul.f32 %v1531, %v2843
      %v3183 = vmul.f32 %v1691, %v2847
      %v3184 = vmul.f32 %v1692, %v2851
      %v3185 = vmul.f32 %v1693, %v2855
      %v3186 = vmul.f32 %v1532, %v2859
      %v3187 = vmul.f32 %v1694, %v2863
      %v3188 = vld [vmem:[%s4] sm:$0xff]
      %v3189 = vld [vmem:[%s4 + $0x8] sm:$0x1]
      %v3190 = vld [vmem:[%s5] sm:$0x1]
      %v3192 = vperm.slane %v3190, 0
      %v3194 = vperm.slane %v3188, 0
      %v3196 = vrot.slane %v3194, 2
      %v3197 = vrot.slane %v3194, 4
      %v3198 = vrot.slane %v3194, 6
      %v3202 = vmul.f32 %v3026, %v3194
      %v3203 = vmul.f32 %v3027, %v3196
      %v3204 = vmul.f32 %v3028, %v3197
      %v3205 = vmul.f32 %v3029, %v3198
      %v3206 = vmul.f32 %v3030, %v3194
      %v3207 = vmul.f32 %v3031, %v3196
      %v3208 = vmul.f32 %v3032, %v3197
      %v3209 = vmul.f32 %v3033, %v3198
      %v3210 = vmul.f32 %v3035, %v3194
      %v3211 = vmul.f32 %v3036, %v3196
      %v3212 = vmul.f32 %v3037, %v3197
      %v3213 = vmul.f32 %v3038, %v3198
      %v3214 = vmul.f32 %v3039, %v3194
      %v3215 = vmul.f32 %v3040, %v3196
      %v3216 = vmul.f32 %v3041, %v3197
      %v3217 = vmul.f32 %v3042, %v3198
      %v3218 = vmul.f32 %v3044, %v3194
      %v3219 = vmul.f32 %v3045, %v3196
      %v3220 = vmul.f32 %v3046, %v3197
      %v3221 = vmul.f32 %v3047, %v3198
      %v3222 = vmul.f32 %v3048, %v3194
      %v3223 = vmul.f32 %v3049, %v3196
      %v3224 = vmul.f32 %v3050, %v3197
      %v3225 = vmul.f32 %v3051, %v3198
      %v3226 = vmul.f32 %v3053, %v3194
      %v3227 = vmul.f32 %v3054, %v3196
      %v3228 = vmul.f32 %v3055, %v3197
      %v3229 = vmul.f32 %v3056, %v3198
      %v3230 = vmul.f32 %v3057, %v3194
      %v3231 = vmul.f32 %v3058, %v3196
      %v3232 = vmul.f32 %v3059, %v3197
      %v3233 = vmul.f32 %v3060, %v3198
      %v3234 = vmul.f32 %v3062, %v3194
      %v3235 = vmul.f32 %v3063, %v3196
      %v3236 = vmul.f32 %v3064, %v3197
      %v3237 = vmul.f32 %v3065, %v3198
      %v3238 = vmul.f32 %v3066, %v3194
      %v3239 = vmul.f32 %v3067, %v3196
      %v3240 = vmul.f32 %v3068, %v3197
      %v3241 = vmul.f32 %v3069, %v3198
      %v3242 = vmul.f32 %v3071, %v3194
      %v3243 = vmul.f32 %v3072, %v3196
      %v3244 = vmul.f32 %v3073, %v3197
      %v3245 = vmul.f32 %v3074, %v3198
      %v3246 = vmul.f32 %v3075, %v3194
      %v3247 = vmul.f32 %v3076, %v3196
      %v3248 = vmul.f32 %v3077, %v3197
      %v3249 = vmul.f32 %v3078, %v3198
      %v3250 = vmul.f32 %v3080, %v3194
      %v3251 = vmul.f32 %v3081, %v3196
      %v3252 = vmul.f32 %v3082, %v3197
      %v3253 = vmul.f32 %v3083, %v3198
      %v3254 = vmul.f32 %v3084, %v3194
      %v3255 = vmul.f32 %v3085, %v3196
      %v3256 = vmul.f32 %v3086, %v3197
      %v3257 = vmul.f32 %v3087, %v3198
      %v3258 = vmul.f32 %v3089, %v3194
      %v3259 = vmul.f32 %v3090, %v3196
      %v3260 = vmul.f32 %v3091, %v3197
      %v3261 = vmul.f32 %v3092, %v3198
      %v3262 = vmul.f32 %v3093, %v3194
      %v3263 = vmul.f32 %v3094, %v3196
      %v3264 = vmul.f32 %v3095, %v3197
      %v3265 = vmul.f32 %v3096, %v3198
      %v3266 = vmul.f32 %v3098, %v3194
      %v3267 = vmul.f32 %v3099, %v3196
      %v3268 = vmul.f32 %v3100, %v3197
      %v3269 = vmul.f32 %v3101, %v3198
      %v3270 = vmul.f32 %v3102, %v3194
      %v3271 = vmul.f32 %v3103, %v3196
      %v3272 = vmul.f32 %v3104, %v3197
      %v3273 = vmul.f32 %v3105, %v3198
      %v3274 = vmul.f32 %v3107, %v3194
      %v3275 = vmul.f32 %v3108, %v3196
      %v3276 = vmul.f32 %v3109, %v3197
      %v3277 = vmul.f32 %v3110, %v3198
      %v3278 = vmul.f32 %v3111, %v3194
      %v3279 = vmul.f32 %v3112, %v3196
      %v3280 = vmul.f32 %v3113, %v3197
      %v3281 = vmul.f32 %v3114, %v3198
      %v3282 = vmul.f32 %v3116, %v3194
      %v3283 = vmul.f32 %v3117, %v3196
      %v3284 = vmul.f32 %v3118, %v3197
      %v3285 = vmul.f32 %v3119, %v3198
      %v3286 = vmul.f32 %v3120, %v3194
      %v3287 = vmul.f32 %v3121, %v3196
      %v3288 = vmul.f32 %v3122, %v3197
      %v3289 = vmul.f32 %v3123, %v3198
      %v3290 = vmul.f32 %v3125, %v3194
      %v3291 = vmul.f32 %v3126, %v3196
      %v3292 = vmul.f32 %v3127, %v3197
      %v3293 = vmul.f32 %v3128, %v3198
      %v3294 = vmul.f32 %v3129, %v3194
      %v3295 = vmul.f32 %v3130, %v3196
      %v3296 = vmul.f32 %v3131, %v3197
      %v3297 = vmul.f32 %v3132, %v3198
      %v3298 = vmul.f32 %v3134, %v3194
      %v3299 = vmul.f32 %v3135, %v3196
      %v3300 = vmul.f32 %v3136, %v3197
      %v3301 = vmul.f32 %v3137, %v3198
      %v3302 = vmul.f32 %v3138, %v3194
      %v3303 = vmul.f32 %v3139, %v3196
      %v3304 = vmul.f32 %v3140, %v3197
      %v3305 = vmul.f32 %v3141, %v3198
      %v3306 = vmul.f32 %v3143, %v3194
      %v3307 = vmul.f32 %v3144, %v3196
      %v3308 = vmul.f32 %v3145, %v3197
      %v3309 = vmul.f32 %v3146, %v3198
      %v3310 = vmul.f32 %v3147, %v3194
      %v3311 = vmul.f32 %v3148, %v3196
      %v3312 = vmul.f32 %v3149, %v3197
      %v3313 = vmul.f32 %v3150, %v3198
      %v3314 = vmul.f32 %v3152, %v3194
      %v3315 = vmul.f32 %v3153, %v3196
      %v3316 = vmul.f32 %v3154, %v3197
      %v3317 = vmul.f32 %v3155, %v3198
      %v3318 = vmul.f32 %v3156, %v3194
      %v3319 = vmul.f32 %v3157, %v3196
      %v3320 = vmul.f32 %v3158, %v3197
      %v3321 = vmul.f32 %v3159, %v3198
      %v3322 = vmul.f32 %v3161, %v3194
      %v3323 = vmul.f32 %v3162, %v3196
      %v3324 = vmul.f32 %v3163, %v3197
      %v3325 = vmul.f32 %v3164, %v3198
      %v3326 = vmul.f32 %v3165, %v3194
      %v3327 = vmul.f32 %v3166, %v3196
      %v3328 = vmul.f32 %v3167, %v3197
      %v3329 = vmul.f32 %v3168, %v3198
      %3458 = vst [vmem:[#allocation1] ss:$4 sm:$0xff] %v3202
      %s3459 = scalar_lea.vmem [#allocation1], 1
      %3460 = vst [vmem:[%s3459] ss:$4 sm:$0xff] %v3203
      %s3461 = scalar_lea.vmem [#allocation1], 2
      %3462 = vst [vmem:[%s3461] ss:$4 sm:$0xff] %v3204
      %s3463 = scalar_lea.vmem [#allocation1], 3
      %3464 = vst [vmem:[%s3463] ss:$4 sm:$0xff] %v3205
      %s3465 = scalar_lea.vmem [#allocation1], 32
      %3466 = vst [vmem:[%s3465] ss:$4 sm:$0xff] %v3206
      %s3467 = scalar_lea.vmem [#allocation1], 33
      %3468 = vst [vmem:[%s3467] ss:$4 sm:$0xff] %v3207
      %s3469 = scalar_lea.vmem [#allocation1], 34
      %3470 = vst [vmem:[%s3469] ss:$4 sm:$0xff] %v3208
      %s3471 = scalar_lea.vmem [#allocation1], 35
      %3472 = vst [vmem:[%s3471] ss:$4 sm:$0xff] %v3209
      %v3473 = vld.sshfl [vmem:[#allocation1] sm:$0xff pattern:$0x73625140]
      %v3474 = vld.sshfl [vmem:[#allocation1 + $0x20] sm:$0xff pattern:$0x73625140]
      %3475 = vst [vmem:[#allocation1] ss:$4 sm:$0xff] %v3210
      %3476 = vst [vmem:[%s3459] ss:$4 sm:$0xff] %v3211
      %3477 = vst [vmem:[%s3461] ss:$4 sm:$0xff] %v3212
      %3478 = vst [vmem:[%s3463] ss:$4 sm:$0xff] %v3213
      %3479 = vst [vmem:[%s3465] ss:$4 sm:$0xff] %v3214
      %3480 = vst [vmem:[%s3467] ss:$4 sm:$0xff] %v3215
      %3481 = vst [vmem:[%s3469] ss:$4 sm:$0xff] %v3216
      %3482 = vst [vmem:[%s3471] ss:$4 sm:$0xff] %v3217
      %v3483 = vld.sshfl [vmem:[#allocation1] sm:$0xff pattern:$0x73625140]
      %v3484 = vld.sshfl [vmem:[#allocation1 + $0x20] sm:$0xff pattern:$0x73625140]
      %3485 = vst [vmem:[#allocation1] ss:$4 sm:$0xff] %v3218
      %3486 = vst [vmem:[%s3459] ss:$4 sm:$0xff] %v3219
      %3487 = vst [vmem:[%s3461] ss:$4 sm:$0xff] %v3220
      %3488 = vst [vmem:[%s3463] ss:$4 sm:$0xff] %v3221
      %3489 = vst [vmem:[%s3465] ss:$4 sm:$0xff] %v3222
      %3490 = vst [vmem:[%s3467] ss:$4 sm:$0xff] %v3223
      %3491 = vst [vmem:[%s3469] ss:$4 sm:$0xff] %v3224
      %3492 = vst [vmem:[%s3471] ss:$4 sm:$0xff] %v3225
      %v3493 = vld.sshfl [vmem:[#allocation1] sm:$0xff pattern:$0x73625140]
      %v3494 = vld.sshfl [vmem:[#allocation1 + $0x20] sm:$0xff pattern:$0x73625140]
      %3495 = vst [vmem:[#allocation1] ss:$4 sm:$0xff] %v3226
      %3496 = vst [vmem:[%s3459] ss:$4 sm:$0xff] %v3227
      %3497 = vst [vmem:[%s3461] ss:$4 sm:$0xff] %v3228
      %3498 = vst [vmem:[%s3463] ss:$4 sm:$0xff] %v3229
      %3499 = vst [vmem:[%s3465] ss:$4 sm:$0xff] %v3230
      %3500 = vst [vmem:[%s3467] ss:$4 sm:$0xff] %v3231
      %3501 = vst [vmem:[%s3469] ss:$4 sm:$0xff] %v3232
      %3502 = vst [vmem:[%s3471] ss:$4 sm:$0xff] %v3233
      %v3503 = vld.sshfl [vmem:[#allocation1] sm:$0xff pattern:$0x73625140]
      %v3504 = vld.sshfl [vmem:[#allocation1 + $0x20] sm:$0xff pattern:$0x73625140]
      %3505 = vst [vmem:[#allocation1] ss:$4 sm:$0xff] %v3234
      %3506 = vst [vmem:[%s3459] ss:$4 sm:$0xff] %v3235
      %3507 = vst [vmem:[%s3461] ss:$4 sm:$0xff] %v3236
      %3508 = vst [vmem:[%s3463] ss:$4 sm:$0xff] %v3237
      %3509 = vst [vmem:[%s3465] ss:$4 sm:$0xff] %v3238
      %3510 = vst [vmem:[%s3467] ss:$4 sm:$0xff] %v3239
      %3511 = vst [vmem:[%s3469] ss:$4 sm:$0xff] %v3240
      %3512 = vst [vmem:[%s3471] ss:$4 sm:$0xff] %v3241
      %v3513 = vld.sshfl [vmem:[#allocation1] sm:$0xff pattern:$0x73625140]
      %v3514 = vld.sshfl [vmem:[#allocation1 + $0x20] sm:$0xff pattern:$0x73625140]
      %3515 = vst [vmem:[#allocation1] ss:$4 sm:$0xff] %v3242
      %3516 = vst [vmem:[%s3459] ss:$4 sm:$0xff] %v3243
      %3517 = vst [vmem:[%s3461] ss:$4 sm:$0xff] %v3244
      %3518 = vst [vmem:[%s3463] ss:$4 sm:$0xff] %v3245
      %3519 = vst [vmem:[%s3465] ss:$4 sm:$0xff] %v3246
      %3520 = vst [vmem:[%s3467] ss:$4 sm:$0xff] %v3247
      %3521 = vst [vmem:[%s3469] ss:$4 sm:$0xff] %v3248
      %3522 = vst [vmem:[%s3471] ss:$4 sm:$0xff] %v3249
      %v3523 = vld.sshfl [vmem:[#allocation1] sm:$0xff pattern:$0x73625140]
      %v3524 = vld.sshfl [vmem:[#allocation1 + $0x20] sm:$0xff pattern:$0x73625140]
      %3525 = vst [vmem:[#allocation1] ss:$4 sm:$0xff] %v3250
      %3526 = vst [vmem:[%s3459] ss:$4 sm:$0xff] %v3251
      %3527 = vst [vmem:[%s3461] ss:$4 sm:$0xff] %v3252
      %3528 = vst [vmem:[%s3463] ss:$4 sm:$0xff] %v3253
      %3529 = vst [vmem:[%s3465] ss:$4 sm:$0xff] %v3254
      %3530 = vst [vmem:[%s3467] ss:$4 sm:$0xff] %v3255
      %3531 = vst [vmem:[%s3469] ss:$4 sm:$0xff] %v3256
      %3532 = vst [vmem:[%s3471] ss:$4 sm:$0xff] %v3257
      %v3533 = vld.sshfl [vmem:[#allocation1] sm:$0xff pattern:$0x73625140]
      %v3534 = vld.sshfl [vmem:[#allocation1 + $0x20] sm:$0xff pattern:$0x73625140]
      %3535 = vst [vmem:[#allocation1] ss:$4 sm:$0xff] %v3258
      %3536 = vst [vmem:[%s3459] ss:$4 sm:$0xff] %v3259
      %3537 = vst [vmem:[%s3461] ss:$4 sm:$0xff] %v3260
      %3538 = vst [vmem:[%s3463] ss:$4 sm:$0xff] %v3261
      %3539 = vst [vmem:[%s3465] ss:$4 sm:$0xff] %v3262
      %3540 = vst [vmem:[%s3467] ss:$4 sm:$0xff] %v3263
      %3541 = vst [vmem:[%s3469] ss:$4 sm:$0xff] %v3264
      %3542 = vst [vmem:[%s3471] ss:$4 sm:$0xff] %v3265
      %v3543 = vld.sshfl [vmem:[#allocation1] sm:$0xff pattern:$0x73625140]
      %v3544 = vld.sshfl [vmem:[#allocation1 + $0x20] sm:$0xff pattern:$0x73625140]
      %3545 = vst [vmem:[#allocation1] ss:$4 sm:$0xff] %v3266
      %3546 = vst [vmem:[%s3459] ss:$4 sm:$0xff] %v3267
      %3547 = vst [vmem:[%s3461] ss:$4 sm:$0xff] %v3268
      %3548 = vst [vmem:[%s3463] ss:$4 sm:$0xff] %v3269
      %3549 = vst [vmem:[%s3465] ss:$4 sm:$0xff] %v3270
      %3550 = vst [vmem:[%s3467] ss:$4 sm:$0xff] %v3271
      %3551 = vst [vmem:[%s3469] ss:$4 sm:$0xff] %v3272
      %3552 = vst [vmem:[%s3471] ss:$4 sm:$0xff] %v3273
      %v3553 = vld.sshfl [vmem:[#allocation1] sm:$0xff pattern:$0x73625140]
      %v3554 = vld.sshfl [vmem:[#allocation1 + $0x20] sm:$0xff pattern:$0x73625140]
      %3555 = vst [vmem:[#allocation1] ss:$4 sm:$0xff] %v3274
      %3556 = vst [vmem:[%s3459] ss:$4 sm:$0xff] %v3275
      %3557 = vst [vmem:[%s3461] ss:$4 sm:$0xff] %v3276
      %3558 = vst [vmem:[%s3463] ss:$4 sm:$0xff] %v3277
      %3559 = vst [vmem:[%s3465] ss:$4 sm:$0xff] %v3278
      %3560 = vst [vmem:[%s3467] ss:$4 sm:$0xff] %v3279
      %3561 = vst [vmem:[%s3469] ss:$4 sm:$0xff] %v3280
      %3562 = vst [vmem:[%s3471] ss:$4 sm:$0xff] %v3281
      %v3563 = vld.sshfl [vmem:[#allocation1] sm:$0xff pattern:$0x73625140]
      %v3564 = vld.sshfl [vmem:[#allocation1 + $0x20] sm:$0xff pattern:$0x73625140]
      %3565 = vst [vmem:[#allocation1] ss:$4 sm:$0xff] %v3282
      %3566 = vst [vmem:[%s3459] ss:$4 sm:$0xff] %v3283
      %3567 = vst [vmem:[%s3461] ss:$4 sm:$0xff] %v3284
      %3568 = vst [vmem:[%s3463] ss:$4 sm:$0xff] %v3285
      %3569 = vst [vmem:[%s3465] ss:$4 sm:$0xff] %v3286
      %3570 = vst [vmem:[%s3467] ss:$4 sm:$0xff] %v3287
      %3571 = vst [vmem:[%s3469] ss:$4 sm:$0xff] %v3288
      %3572 = vst [vmem:[%s3471] ss:$4 sm:$0xff] %v3289
      %v3573 = vld.sshfl [vmem:[#allocation1] sm:$0xff pattern:$0x73625140]
      %v3574 = vld.sshfl [vmem:[#allocation1 + $0x20] sm:$0xff pattern:$0x73625140]
      %3575 = vst [vmem:[#allocation1] ss:$4 sm:$0xff] %v3290
      %3576 = vst [vmem:[%s3459] ss:$4 sm:$0xff] %v3291
      %3577 = vst [vmem:[%s3461] ss:$4 sm:$0xff] %v3292
      %3578 = vst [vmem:[%s3463] ss:$4 sm:$0xff] %v3293
      %3579 = vst [vmem:[%s3465] ss:$4 sm:$0xff] %v3294
      %3580 = vst [vmem:[%s3467] ss:$4 sm:$0xff] %v3295
      %3581 = vst [vmem:[%s3469] ss:$4 sm:$0xff] %v3296
      %3582 = vst [vmem:[%s3471] ss:$4 sm:$0xff] %v3297
      %v3583 = vld.sshfl [vmem:[#allocation1] sm:$0xff pattern:$0x73625140]
      %v3584 = vld.sshfl [vmem:[#allocation1 + $0x20] sm:$0xff pattern:$0x73625140]
      %3585 = vst [vmem:[#allocation1] ss:$4 sm:$0xff] %v3298
      %3586 = vst [vmem:[%s3459] ss:$4 sm:$0xff] %v3299
      %3587 = vst [vmem:[%s3461] ss:$4 sm:$0xff] %v3300
      %3588 = vst [vmem:[%s3463] ss:$4 sm:$0xff] %v3301
      %3589 = vst [vmem:[%s3465] ss:$4 sm:$0xff] %v3302
      %3590 = vst [vmem:[%s3467] ss:$4 sm:$0xff] %v3303
      %3591 = vst [vmem:[%s3469] ss:$4 sm:$0xff] %v3304
      %3592 = vst [vmem:[%s3471] ss:$4 sm:$0xff] %v3305
      %v3593 = vld.sshfl [vmem:[#allocation1] sm:$0xff pattern:$0x73625140]
      %v3594 = vld.sshfl [vmem:[#allocation1 + $0x20] sm:$0xff pattern:$0x73625140]
      %3595 = vst [vmem:[#allocation1] ss:$4 sm:$0xff] %v3306
      %3596 = vst [vmem:[%s3459] ss:$4 sm:$0xff] %v3307
      %3597 = vst [vmem:[%s3461] ss:$4 sm:$0xff] %v3308
      %3598 = vst [vmem:[%s3463] ss:$4 sm:$0xff] %v3309
      %3599 = vst [vmem:[%s3465] ss:$4 sm:$0xff] %v3310
      %3600 = vst [vmem:[%s3467] ss:$4 sm:$0xff] %v3311
      %3601 = vst [vmem:[%s3469] ss:$4 sm:$0xff] %v3312
      %3602 = vst [vmem:[%s3471] ss:$4 sm:$0xff] %v3313
      %v3603 = vld.sshfl [vmem:[#allocation1] sm:$0xff pattern:$0x73625140]
      %v3604 = vld.sshfl [vmem:[#allocation1 + $0x20] sm:$0xff pattern:$0x73625140]
      %3605 = vst [vmem:[#allocation1] ss:$4 sm:$0xff] %v3314
      %3606 = vst [vmem:[%s3459] ss:$4 sm:$0xff] %v3315
      %3607 = vst [vmem:[%s3461] ss:$4 sm:$0xff] %v3316
      %3608 = vst [vmem:[%s3463] ss:$4 sm:$0xff] %v3317
      %3609 = vst [vmem:[%s3465] ss:$4 sm:$0xff] %v3318
      %3610 = vst [vmem:[%s3467] ss:$4 sm:$0xff] %v3319
      %3611 = vst [vmem:[%s3469] ss:$4 sm:$0xff] %v3320
      %3612 = vst [vmem:[%s3471] ss:$4 sm:$0xff] %v3321
      %v3613 = vld.sshfl [vmem:[#allocation1] sm:$0xff pattern:$0x73625140]
      %v3614 = vld.sshfl [vmem:[#allocation1 + $0x20] sm:$0xff pattern:$0x73625140]
      %3615 = vst [vmem:[#allocation1] ss:$4 sm:$0xff] %v3322
      %3616 = vst [vmem:[%s3459] ss:$4 sm:$0xff] %v3323
      %3617 = vst [vmem:[%s3461] ss:$4 sm:$0xff] %v3324
      %3618 = vst [vmem:[%s3463] ss:$4 sm:$0xff] %v3325
      %3619 = vst [vmem:[%s3465] ss:$4 sm:$0xff] %v3326
      %3620 = vst [vmem:[%s3467] ss:$4 sm:$0xff] %v3327
      %3621 = vst [vmem:[%s3469] ss:$4 sm:$0xff] %v3328
      %3622 = vst [vmem:[%s3471] ss:$4 sm:$0xff] %v3329
      %v3623 = vld.sshfl [vmem:[#allocation1] sm:$0xff pattern:$0x73625140]
      %v3624 = vld.sshfl [vmem:[#allocation1 + $0x20] sm:$0xff pattern:$0x73625140]
      %v3657 = vadd.f32 %v3192, %v3473
      %v3658 = vadd.f32 %v3192, %v3474
      %v3659 = vadd.f32 %v3192, %v3483
      %v3660 = vadd.f32 %v3192, %v3484
      %v3661 = vadd.f32 %v3192, %v3493
      %v3662 = vadd.f32 %v3192, %v3494
      %v3663 = vadd.f32 %v3192, %v3503
      %v3664 = vadd.f32 %v3192, %v3504
      %v3665 = vadd.f32 %v3192, %v3513
      %v3666 = vadd.f32 %v3192, %v3514
      %v3667 = vadd.f32 %v3192, %v3523
      %v3668 = vadd.f32 %v3192, %v3524
      %v3669 = vadd.f32 %v3192, %v3533
      %v3670 = vadd.f32 %v3192, %v3534
      %v3671 = vadd.f32 %v3192, %v3543
      %v3672 = vadd.f32 %v3192, %v3544
      %v3673 = vadd.f32 %v3192, %v3553
      %v3674 = vadd.f32 %v3192, %v3554
      %v3675 = vadd.f32 %v3192, %v3563
      %v3676 = vadd.f32 %v3192, %v3564
      %v3677 = vadd.f32 %v3192, %v3573
      %v3678 = vadd.f32 %v3192, %v3574
      %v3679 = vadd.f32 %v3192, %v3583
      %v3680 = vadd.f32 %v3192, %v3584
      %v3681 = vadd.f32 %v3192, %v3593
      %v3682 = vadd.f32 %v3192, %v3594
      %v3683 = vadd.f32 %v3192, %v3603
      %v3684 = vadd.f32 %v3192, %v3604
      %v3685 = vadd.f32 %v3192, %v3613
      %v3686 = vadd.f32 %v3192, %v3614
      %v3687 = vadd.f32 %v3192, %v3623
      %v3688 = vadd.f32 %v3192, %v3624
      %v3689 = vperm.slane %v3188, 1
      %v3691 = vrot.slane %v3689, 2
      %v3692 = vrot.slane %v3689, 4
      %v3693 = vrot.slane %v3689, 6
      %vm3694 = vmor %vm498, %vm506
      %vm3695 = vcmask 1044484
      %vm3696 = vmor %vm3694, %vm3695
      %vm3697 = vcmask 1046534
      %vm3698 = vmor %vm3696, %vm3697
      %v3699 = vrot.slane %v3689, 7
      %v3700 = vrot.slane %v3699, 2
      %v3701 = vrot.slane %v3691, 7
      %v3702 = vsel %vm3698, %v3700, %v3701
      %v3703 = vrot.slane %v3701, 2
      %v3704 = vrot.slane %v3692, 7
      %v3705 = vsel %vm3698, %v3703, %v3704
      %v3706 = vrot.slane %v3704, 2
      %v3707 = vrot.slane %v3693, 7
      %v3708 = vsel %vm3698, %v3706, %v3707
      %v3709 = vrot.slane %v3707, 2
      %v3710 = vsel %vm3698, %v3709, %v3699
      %v3717 = vmul.f32 %v3026, %v3699
      %v3718 = vmul.f32 %v3027, %v3702
      %v3719 = vmul.f32 %v3028, %v3705
      %v3720 = vmul.f32 %v3029, %v3708
      %v3721 = vmul.f32 %v3030, %v3710
      %v3722 = vmul.f32 %v3031, %v3702
      %v3723 = vmul.f32 %v3032, %v3705
      %v3724 = vmul.f32 %v3033, %v3708
      %v3725 = vmul.f32 %v3034, %v3709
      %v3726 = vmul.f32 %v3035, %v3699
      %v3727 = vmul.f32 %v3036, %v3702
      %v3728 = vmul.f32 %v3037, %v3705
      %v3729 = vmul.f32 %v3038, %v3708
      %v3730 = vmul.f32 %v3039, %v3710
      %v3731 = vmul.f32 %v3040, %v3702
      %v3732 = vmul.f32 %v3041, %v3705
      %v3733 = vmul.f32 %v3042, %v3708
      %v3734 = vmul.f32 %v3043, %v3709
      %v3735 = vmul.f32 %v3044, %v3699
      %v3736 = vmul.f32 %v3045, %v3702
      %v3737 = vmul.f32 %v3046, %v3705
      %v3738 = vmul.f32 %v3047, %v3708
      %v3739 = vmul.f32 %v3048, %v3710
      %v3740 = vmul.f32 %v3049, %v3702
      %v3741 = vmul.f32 %v3050, %v3705
      %v3742 = vmul.f32 %v3051, %v3708
      %v3743 = vmul.f32 %v3052, %v3709
      %v3744 = vmul.f32 %v3053, %v3699
      %v3745 = vmul.f32 %v3054, %v3702
      %v3746 = vmul.f32 %v3055, %v3705
      %v3747 = vmul.f32 %v3056, %v3708
      %v3748 = vmul.f32 %v3057, %v3710
      %v3749 = vmul.f32 %v3058, %v3702
      %v3750 = vmul.f32 %v3059, %v3705
      %v3751 = vmul.f32 %v3060, %v3708
      %v3752 = vmul.f32 %v3061, %v3709
      %v3753 = vmul.f32 %v3062, %v3699
      %v3754 = vmul.f32 %v3063, %v3702
      %v3755 = vmul.f32 %v3064, %v3705
      %v3756 = vmul.f32 %v3065, %v3708
      %v3757 = vmul.f32 %v3066, %v3710
      %v3758 = vmul.f32 %v3067, %v3702
      %v3759 = vmul.f32 %v3068, %v3705
      %v3760 = vmul.f32 %v3069, %v3708
      %v3761 = vmul.f32 %v3070, %v3709
      %v3762 = vmul.f32 %v3071, %v3699
      %v3763 = vmul.f32 %v3072, %v3702
      %v3764 = vmul.f32 %v3073, %v3705
      %v3765 = vmul.f32 %v3074, %v3708
      %v3766 = vmul.f32 %v3075, %v3710
      %v3767 = vmul.f32 %v3076, %v3702
      %v3768 = vmul.f32 %v3077, %v3705
      %v3769 = vmul.f32 %v3078, %v3708
      %v3770 = vmul.f32 %v3079, %v3709
      %v3771 = vmul.f32 %v3080, %v3699
      %v3772 = vmul.f32 %v3081, %v3702
      %v3773 = vmul.f32 %v3082, %v3705
      %v3774 = vmul.f32 %v3083, %v3708
      %v3775 = vmul.f32 %v3084, %v3710
      %v3776 = vmul.f32 %v3085, %v3702
      %v3777 = vmul.f32 %v3086, %v3705
      %v3778 = vmul.f32 %v3087, %v3708
      %v3779 = vmul.f32 %v3088, %v3709
      %v3780 = vmul.f32 %v3089, %v3699
      %v3781 = vmul.f32 %v3090, %v3702
      %v3782 = vmul.f32 %v3091, %v3705
      %v3783 = vmul.f32 %v3092, %v3708
      %v3784 = vmul.f32 %v3093, %v3710
      %v3785 = vmul.f32 %v3094, %v3702
      %v3786 = vmul.f32 %v3095, %v3705
      %v3787 = vmul.f32 %v3096, %v3708
      %v3788 = vmul.f32 %v3097, %v3709
      %v3789 = vmul.f32 %v3098, %v3699
      %v3790 = vmul.f32 %v3099, %v3702
      %v3791 = vmul.f32 %v3100, %v3705
      %v3792 = vmul.f32 %v3101, %v3708
      %v3793 = vmul.f32 %v3102, %v3710
      %v3794 = vmul.f32 %v3103, %v3702
      %v3795 = vmul.f32 %v3104, %v3705
      %v3796 = vmul.f32 %v3105, %v3708
      %v3797 = vmul.f32 %v3106, %v3709
      %v3798 = vmul.f32 %v3107, %v3699
      %v3799 = vmul.f32 %v3108, %v3702
      %v3800 = vmul.f32 %v3109, %v3705
      %v3801 = vmul.f32 %v3110, %v3708
      %v3802 = vmul.f32 %v3111, %v3710
      %v3803 = vmul.f32 %v3112, %v3702
      %v3804 = vmul.f32 %v3113, %v3705
      %v3805 = vmul.f32 %v3114, %v3708
      %v3806 = vmul.f32 %v3115, %v3709
      %v3807 = vmul.f32 %v3116, %v3699
      %v3808 = vmul.f32 %v3117, %v3702
      %v3809 = vmul.f32 %v3118, %v3705
      %v3810 = vmul.f32 %v3119, %v3708
      %v3811 = vmul.f32 %v3120, %v3710
      %v3812 = vmul.f32 %v3121, %v3702
      %v3813 = vmul.f32 %v3122, %v3705
      %v3814 = vmul.f32 %v3123, %v3708
      %v3815 = vmul.f32 %v3124, %v3709
      %v3816 = vmul.f32 %v3125, %v3699
      %v3817 = vmul.f32 %v3126, %v3702
      %v3818 = vmul.f32 %v3127, %v3705
      %v3819 = vmul.f32 %v3128, %v3708
      %v3820 = vmul.f32 %v3129, %v3710
      %v3821 = vmul.f32 %v3130, %v3702
      %v3822 = vmul.f32 %v3131, %v3705
      %v3823 = vmul.f32 %v3132, %v3708
      %v3824 = vmul.f32 %v3133, %v3709
      %v3825 = vmul.f32 %v3134, %v3699
      %v3826 = vmul.f32 %v3135, %v3702
      %v3827 = vmul.f32 %v3136, %v3705
      %v3828 = vmul.f32 %v3137, %v3708
      %v3829 = vmul.f32 %v3138, %v3710
      %v3830 = vmul.f32 %v3139, %v3702
      %v3831 = vmul.f32 %v3140, %v3705
      %v3832 = vmul.f32 %v3141, %v3708
      %v3833 = vmul.f32 %v3142, %v3709
      %v3834 = vmul.f32 %v3143, %v3699
      %v3835 = vmul.f32 %v3144, %v3702
      %v3836 = vmul.f32 %v3145, %v3705
      %v3837 = vmul.f32 %v3146, %v3708
      %v3838 = vmul.f32 %v3147, %v3710
      %v3839 = vmul.f32 %v3148, %v3702
      %v3840 = vmul.f32 %v3149, %v3705
      %v3841 = vmul.f32 %v3150, %v3708
      %v3842 = vmul.f32 %v3151, %v3709
      %v3843 = vmul.f32 %v3152, %v3699
      %v3844 = vmul.f32 %v3153, %v3702
      %v3845 = vmul.f32 %v3154, %v3705
      %v3846 = vmul.f32 %v3155, %v3708
      %v3847 = vmul.f32 %v3156, %v3710
      %v3848 = vmul.f32 %v3157, %v3702
      %v3849 = vmul.f32 %v3158, %v3705
      %v3850 = vmul.f32 %v3159, %v3708
      %v3851 = vmul.f32 %v3160, %v3709
      %v3852 = vmul.f32 %v3161, %v3699
      %v3853 = vmul.f32 %v3162, %v3702
      %v3854 = vmul.f32 %v3163, %v3705
      %v3855 = vmul.f32 %v3164, %v3708
      %v3856 = vmul.f32 %v3165, %v3710
      %v3857 = vmul.f32 %v3166, %v3702
      %v3858 = vmul.f32 %v3167, %v3705
      %v3859 = vmul.f32 %v3168, %v3708
      %v3860 = vmul.f32 %v3169, %v3709
      %4005 = vst [vmem:[#allocation1] ss:$4 sm:$0xff] %v3717
      %s4006 = scalar_lea.vmem [#allocation1], 1
      %4007 = vst [vmem:[%s4006] ss:$4 sm:$0xff] %v3718
      %s4008 = scalar_lea.vmem [#allocation1], 2
      %4009 = vst [vmem:[%s4008] ss:$4 sm:$0xff] %v3719
      %s4010 = scalar_lea.vmem [#allocation1], 3
      %4011 = vst [vmem:[%s4010] ss:$4 sm:$0xff] %v3720
      %s4012 = scalar_lea.vmem [#allocation1], 32
      %4013 = vst [vmem:[%s4012] ss:$4 sm:$0xff] %v3721
      %s4014 = scalar_lea.vmem [#allocation1], 33
      %4015 = vst [vmem:[%s4014] ss:$4 sm:$0xff] %v3722
      %s4016 = scalar_lea.vmem [#allocation1], 34
      %4017 = vst [vmem:[%s4016] ss:$4 sm:$0xff] %v3723
      %s4018 = scalar_lea.vmem [#allocation1], 35
      %4019 = vst [vmem:[%s4018] ss:$4 sm:$0xff] %v3724
      %v4020 = vld.sshfl [vmem:[#allocation1] sm:$0xff pattern:$0x73625140]
      %v4021 = vld.sshfl [vmem:[#allocation1 + $0x20] sm:$0xff pattern:$0x73625140]
      %4022 = vst [vmem:[#allocation1] ss:$4 sm:$0xff] %v3725
      %v4023 = vld.sshfl [vmem:[#allocation1] sm:$0xff pattern:$0x73625140]
      %4024 = vst [vmem:[%s4012] ss:$4 sm:$0xff] %v3726
      %4025 = vst [vmem:[%s4014] ss:$4 sm:$0xff] %v3727
      %4026 = vst [vmem:[%s4016] ss:$4 sm:$0xff] %v3728
      %4027 = vst [vmem:[%s4018] ss:$4 sm:$0xff] %v3729
      %v4028 = vld.sshfl [vmem:[#allocation1 + $0x20] sm:$0xff pattern:$0x73625140]
      %4029 = vst [vmem:[#allocation1] ss:$4 sm:$0xff] %v3730
      %4030 = vst [vmem:[%s4006] ss:$4 sm:$0xff] %v3731
      %4031 = vst [vmem:[%s4008] ss:$4 sm:$0xff] %v3732
      %4032 = vst [vmem:[%s4010] ss:$4 sm:$0xff] %v3733
      %4033 = vst [vmem:[%s4012] ss:$4 sm:$0xff] %v3734
      %v4034 = vld.sshfl [vmem:[#allocation1] sm:$0xff pattern:$0x73625140]
      %v4035 = vld.sshfl [vmem:[#allocation1 + $0x20] sm:$0xff pattern:$0x73625140]
      %4036 = vst [vmem:[#allocation1] ss:$4 sm:$0xff] %v3735
      %4037 = vst [vmem:[%s4006] ss:$4 sm:$0xff] %v3736
      %4038 = vst [vmem:[%s4008] ss:$4 sm:$0xff] %v3737
      %4039 = vst [vmem:[%s4010] ss:$4 sm:$0xff] %v3738
      %4040 = vst [vmem:[%s4012] ss:$4 sm:$0xff] %v3739
      %4041 = vst [vmem:[%s4014] ss:$4 sm:$0xff] %v3740
      %4042 = vst [vmem:[%s4016] ss:$4 sm:$0xff] %v3741
      %4043 = vst [vmem:[%s4018] ss:$4 sm:$0xff] %v3742
      %v4044 = vld.sshfl [vmem:[#allocation1] sm:$0xff pattern:$0x73625140]
      %v4045 = vld.sshfl [vmem:[#allocation1 + $0x20] sm:$0xff pattern:$0x73625140]
      %4046 = vst [vmem:[#allocation1] ss:$4 sm:$0xff] %v3743
      %v4047 = vld.sshfl [vmem:[#allocation1] sm:$0xff pattern:$0x73625140]
      %4048 = vst [vmem:[%s4012] ss:$4 sm:$0xff] %v3744
      %4049 = vst [vmem:[%s4014] ss:$4 sm:$0xff] %v3745
      %4050 = vst [vmem:[%s4016] ss:$4 sm:$0xff] %v3746
      %4051 = vst [vmem:[%s4018] ss:$4 sm:$0xff] %v3747
      %v4052 = vld.sshfl [vmem:[#allocation1 + $0x20] sm:$0xff pattern:$0x73625140]
      %4053 = vst [vmem:[#allocation1] ss:$4 sm:$0xff] %v3748
      %4054 = vst [vmem:[%s4006] ss:$4 sm:$0xff] %v3749
      %4055 = vst [vmem:[%s4008] ss:$4 sm:$0xff] %v3750
      %4056 = vst [vmem:[%s4010] ss:$4 sm:$0xff] %v3751
      %4057 = vst [vmem:[%s4012] ss:$4 sm:$0xff] %v3752
      %v4058 = vld.sshfl [vmem:[#allocation1] sm:$0xff pattern:$0x73625140]
      %v4059 = vld.sshfl [vmem:[#allocation1 + $0x20] sm:$0xff pattern:$0x73625140]
      %4060 = vst [vmem:[#allocation1] ss:$4 sm:$0xff] %v3753
      %4061 = vst [vmem:[%s4006] ss:$4 sm:$0xff] %v3754
      %4062 = vst [vmem:[%s4008] ss:$4 sm:$0xff] %v3755
      %4063 = vst [vmem:[%s4010] ss:$4 sm:$0xff] %v3756
      %4064 = vst [vmem:[%s4012] ss:$4 sm:$0xff] %v3757
      %4065 = vst [vmem:[%s4014] ss:$4 sm:$0xff] %v3758
      %4066 = vst [vmem:[%s4016] ss:$4 sm:$0xff] %v3759
      %4067 = vst [vmem:[%s4018] ss:$4 sm:$0xff] %v3760
      %v4068 = vld.sshfl [vmem:[#allocation1] sm:$0xff pattern:$0x73625140]
      %v4069 = vld.sshfl [vmem:[#allocation1 + $0x20] sm:$0xff pattern:$0x73625140]
      %4070 = vst [vmem:[#allocation1] ss:$4 sm:$0xff] %v3761
      %v4071 = vld.sshfl [vmem:[#allocation1] sm:$0xff pattern:$0x73625140]
      %4072 = vst [vmem:[%s4012] ss:$4 sm:$0xff] %v3762
      %4073 = vst [vmem:[%s4014] ss:$4 sm:$0xff] %v3763
      %4074 = vst [vmem:[%s4016] ss:$4 sm:$0xff] %v3764
      %4075 = vst [vmem:[%s4018] ss:$4 sm:$0xff] %v3765
      %v4076 = vld.sshfl [vmem:[#allocation1 + $0x20] sm:$0xff pattern:$0x73625140]
      %4077 = vst [vmem:[#allocation1] ss:$4 sm:$0xff] %v3766
      %4078 = vst [vmem:[%s4006] ss:$4 sm:$0xff] %v3767
      %4079 = vst [vmem:[%s4008] ss:$4 sm:$0xff] %v3768
      %4080 = vst [vmem:[%s4010] ss:$4 sm:$0xff] %v3769
      %4081 = vst [vmem:[%s4012] ss:$4 sm:$0xff] %v3770
      %v4082 = vld.sshfl [vmem:[#allocation1] sm:$0xff pattern:$0x73625140]
      %v4083 = vld.sshfl [vmem:[#allocation1 + $0x20] sm:$0xff pattern:$0x73625140]
      %4084 = vst [vmem:[#allocation1] ss:$4 sm:$0xff] %v3771
      %4085 = vst [vmem:[%s4006] ss:$4 sm:$0xff] %v3772
      %4086 = vst [vmem:[%s4008] ss:$4 sm:$0xff] %v3773
      %4087 = vst [vmem:[%s4010] ss:$4 sm:$0xff] %v3774
      %4088 = vst [vmem:[%s4012] ss:$4 sm:$0xff] %v3775
      %4089 = vst [vmem:[%s4014] ss:$4 sm:$0xff] %v3776
      %4090 = vst [vmem:[%s4016] ss:$4 sm:$0xff] %v3777
      %4091 = vst [vmem:[%s4018] ss:$4 sm:$0xff] %v3778
      %v4092 = vld.sshfl [vmem:[#allocation1] sm:$0xff pattern:$0x73625140]
      %v4093 = vld.sshfl [vmem:[#allocation1 + $0x20] sm:$0xff pattern:$0x73625140]
      %4094 = vst [vmem:[#allocation1] ss:$4 sm:$0xff] %v3779
      %v4095 = vld.sshfl [vmem:[#allocation1] sm:$0xff pattern:$0x73625140]
      %4096 = vst [vmem:[%s4012] ss:$4 sm:$0xff] %v3780
      %4097 = vst [vmem:[%s4014] ss:$4 sm:$0xff] %v3781
      %4098 = vst [vmem:[%s4016] ss:$4 sm:$0xff] %v3782
      %4099 = vst [vmem:[%s4018] ss:$4 sm:$0xff] %v3783
      %v4100 = vld.sshfl [vmem:[#allocation1 + $0x20] sm:$0xff pattern:$0x73625140]
      %4101 = vst [vmem:[#allocation1] ss:$4 sm:$0xff] %v3784
      %4102 = vst [vmem:[%s4006] ss:$4 sm:$0xff] %v3785
      %4103 = vst [vmem:[%s4008] ss:$4 sm:$0xff] %v3786
      %4104 = vst [vmem:[%s4010] ss:$4 sm:$0xff] %v3787
      %4105 = vst [vmem:[%s4012] ss:$4 sm:$0xff] %v3788
      %v4106 = vld.sshfl [vmem:[#allocation1] sm:$0xff pattern:$0x73625140]
      %v4107 = vld.sshfl [vmem:[#allocation1 + $0x20] sm:$0xff pattern:$0x73625140]
      %4108 = vst [vmem:[#allocation1] ss:$4 sm:$0xff] %v3789
      %4109 = vst [vmem:[%s4006] ss:$4 sm:$0xff] %v3790
      %4110 = vst [vmem:[%s4008] ss:$4 sm:$0xff] %v3791
      %4111 = vst [vmem:[%s4010] ss:$4 sm:$0xff] %v3792
      %4112 = vst [vmem:[%s4012] ss:$4 sm:$0xff] %v3793
      %4113 = vst [vmem:[%s4014] ss:$4 sm:$0xff] %v3794
      %4114 = vst [vmem:[%s4016] ss:$4 sm:$0xff] %v3795
      %4115 = vst [vmem:[%s4018] ss:$4 sm:$0xff] %v3796
      %v4116 = vld.sshfl [vmem:[#allocation1] sm:$0xff pattern:$0x73625140]
      %v4117 = vld.sshfl [vmem:[#allocation1 + $0x20] sm:$0xff pattern:$0x73625140]
      %4118 = vst [vmem:[#allocation1] ss:$4 sm:$0xff] %v3797
      %v4119 = vld.sshfl [vmem:[#allocation1] sm:$0xff pattern:$0x73625140]
      %4120 = vst [vmem:[%s4012] ss:$4 sm:$0xff] %v3798
      %4121 = vst [vmem:[%s4014] ss:$4 sm:$0xff] %v3799
      %4122 = vst [vmem:[%s4016] ss:$4 sm:$0xff] %v3800
      %4123 = vst [vmem:[%s4018] ss:$4 sm:$0xff] %v3801
      %v4124 = vld.sshfl [vmem:[#allocation1 + $0x20] sm:$0xff pattern:$0x73625140]
      %4125 = vst [vmem:[#allocation1] ss:$4 sm:$0xff] %v3802
      %4126 = vst [vmem:[%s4006] ss:$4 sm:$0xff] %v3803
      %4127 = vst [vmem:[%s4008] ss:$4 sm:$0xff] %v3804
      %4128 = vst [vmem:[%s4010] ss:$4 sm:$0xff] %v3805
      %4129 = vst [vmem:[%s4012] ss:$4 sm:$0xff] %v3806
      %v4130 = vld.sshfl [vmem:[#allocation1] sm:$0xff pattern:$0x73625140]
      %v4131 = vld.sshfl [vmem:[#allocation1 + $0x20] sm:$0xff pattern:$0x73625140]
      %4132 = vst [vmem:[#allocation1] ss:$4 sm:$0xff] %v3807
      %4133 = vst [vmem:[%s4006] ss:$4 sm:$0xff] %v3808
      %4134 = vst [vmem:[%s4008] ss:$4 sm:$0xff] %v3809
      %4135 = vst [vmem:[%s4010] ss:$4 sm:$0xff] %v3810
      %4136 = vst [vmem:[%s4012] ss:$4 sm:$0xff] %v3811
      %4137 = vst [vmem:[%s4014] ss:$4 sm:$0xff] %v3812
      %4138 = vst [vmem:[%s4016] ss:$4 sm:$0xff] %v3813
      %4139 = vst [vmem:[%s4018] ss:$4 sm:$0xff] %v3814
      %v4140 = vld.sshfl [vmem:[#allocation1] sm:$0xff pattern:$0x73625140]
      %v4141 = vld.sshfl [vmem:[#allocation1 + $0x20] sm:$0xff pattern:$0x73625140]
      %4142 = vst [vmem:[#allocation1] ss:$4 sm:$0xff] %v3815
      %v4143 = vld.sshfl [vmem:[#allocation1] sm:$0xff pattern:$0x73625140]
      %4144 = vst [vmem:[%s4012] ss:$4 sm:$0xff] %v3816
      %4145 = vst [vmem:[%s4014] ss:$4 sm:$0xff] %v3817
      %4146 = vst [vmem:[%s4016] ss:$4 sm:$0xff] %v3818
      %4147 = vst [vmem:[%s4018] ss:$4 sm:$0xff] %v3819
      %v4148 = vld.sshfl [vmem:[#allocation1 + $0x20] sm:$0xff pattern:$0x73625140]
      %4149 = vst [vmem:[#allocation1] ss:$4 sm:$0xff] %v3820
      %4150 = vst [vmem:[%s4006] ss:$4 sm:$0xff] %v3821
      %4151 = vst [vmem:[%s4008] ss:$4 sm:$0xff] %v3822
      %4152 = vst [vmem:[%s4010] ss:$4 sm:$0xff] %v3823
      %4153 = vst [vmem:[%s4012] ss:$4 sm:$0xff] %v3824
      %v4154 = vld.sshfl [vmem:[#allocation1] sm:$0xff pattern:$0x73625140]
      %v4155 = vld.sshfl [vmem:[#allocation1 + $0x20] sm:$0xff pattern:$0x73625140]
      %4156 = vst [vmem:[#allocation1] ss:$4 sm:$0xff] %v3825
      %4157 = vst [vmem:[%s4006] ss:$4 sm:$0xff] %v3826
      %4158 = vst [vmem:[%s4008] ss:$4 sm:$0xff] %v3827
      %4159 = vst [vmem:[%s4010] ss:$4 sm:$0xff] %v3828
      %4160 = vst [vmem:[%s4012] ss:$4 sm:$0xff] %v3829
      %4161 = vst [vmem:[%s4014] ss:$4 sm:$0xff] %v3830
      %4162 = vst [vmem:[%s4016] ss:$4 sm:$0xff] %v3831
      %4163 = vst [vmem:[%s4018] ss:$4 sm:$0xff] %v3832
      %v4164 = vld.sshfl [vmem:[#allocation1] sm:$0xff pattern:$0x73625140]
      %v4165 = vld.sshfl [vmem:[#allocation1 + $0x20] sm:$0xff pattern:$0x73625140]
      %4166 = vst [vmem:[#allocation1] ss:$4 sm:$0xff] %v3833
      %v4167 = vld.sshfl [vmem:[#allocation1] sm:$0xff pattern:$0x73625140]
      %4168 = vst [vmem:[%s4012] ss:$4 sm:$0xff] %v3834
      %4169 = vst [vmem:[%s4014] ss:$4 sm:$0xff] %v3835
      %4170 = vst [vmem:[%s4016] ss:$4 sm:$0xff] %v3836
      %4171 = vst [vmem:[%s4018] ss:$4 sm:$0xff] %v3837
      %v4172 = vld.sshfl [vmem:[#allocation1 + $0x20] sm:$0xff pattern:$0x73625140]
      %4173 = vst [vmem:[#allocation1] ss:$4 sm:$0xff] %v3838
      %4174 = vst [vmem:[%s4006] ss:$4 sm:$0xff] %v3839
      %4175 = vst [vmem:[%s4008] ss:$4 sm:$0xff] %v3840
      %4176 = vst [vmem:[%s4010] ss:$4 sm:$0xff] %v3841
      %4177 = vst [vmem:[%s4012] ss:$4 sm:$0xff] %v3842
      %v4178 = vld.sshfl [vmem:[#allocation1] sm:$0xff pattern:$0x73625140]
      %v4179 = vld.sshfl [vmem:[#allocation1 + $0x20] sm:$0xff pattern:$0x73625140]
      %4180 = vst [vmem:[#allocation1] ss:$4 sm:$0xff] %v3843
      %4181 = vst [vmem:[%s4006] ss:$4 sm:$0xff] %v3844
      %4182 = vst [vmem:[%s4008] ss:$4 sm:$0xff] %v3845
      %4183 = vst [vmem:[%s4010] ss:$4 sm:$0xff] %v3846
      %4184 = vst [vmem:[%s4012] ss:$4 sm:$0xff] %v3847
      %4185 = vst [vmem:[%s4014] ss:$4 sm:$0xff] %v3848
      %4186 = vst [vmem:[%s4016] ss:$4 sm:$0xff] %v3849
      %4187 = vst [vmem:[%s4018] ss:$4 sm:$0xff] %v3850
      %v4188 = vld.sshfl [vmem:[#allocation1] sm:$0xff pattern:$0x73625140]
      %v4189 = vld.sshfl [vmem:[#allocation1 + $0x20] sm:$0xff pattern:$0x73625140]
      %4190 = vst [vmem:[#allocation1] ss:$4 sm:$0xff] %v3851
      %v4191 = vld.sshfl [vmem:[#allocation1] sm:$0xff pattern:$0x73625140]
      %4192 = vst [vmem:[%s4012] ss:$4 sm:$0xff] %v3852
      %4193 = vst [vmem:[%s4014] ss:$4 sm:$0xff] %v3853
      %4194 = vst [vmem:[%s4016] ss:$4 sm:$0xff] %v3854
      %4195 = vst [vmem:[%s4018] ss:$4 sm:$0xff] %v3855
      %v4196 = vld.sshfl [vmem:[#allocation1 + $0x20] sm:$0xff pattern:$0x73625140]
      %4197 = vst [vmem:[#allocation1] ss:$4 sm:$0xff] %v3856
      %4198 = vst [vmem:[%s4006] ss:$4 sm:$0xff] %v3857
      %4199 = vst [vmem:[%s4008] ss:$4 sm:$0xff] %v3858
      %4200 = vst [vmem:[%s4010] ss:$4 sm:$0xff] %v3859
      %4201 = vst [vmem:[%s4012] ss:$4 sm:$0xff] %v3860
      %v4202 = vld.sshfl [vmem:[#allocation1] sm:$0xff pattern:$0x73625140]
      %v4203 = vld.sshfl [vmem:[#allocation1 + $0x20] sm:$0xff pattern:$0x73625140]
      %vm4204 = vcmask 1046528
      %v4205 = vrot.slane %v4020, 1
      %v4206 = vrot.slane %v4021, 1
      %v4207 = vsel %vm4204, %v4205, %v4206
      %v4208 = vrot.slane %v4023, 1
      %v4209 = vsel %vm4204, %v4206, %v4208
      %v4210 = vrot.slane %v4028, 1
      %v4211 = vrot.slane %v4034, 1
      %v4212 = vsel %vm4204, %v4210, %v4211
      %v4213 = vrot.slane %v4035, 1
      %v4214 = vsel %vm4204, %v4211, %v4213
      %v4215 = vrot.slane %v4044, 1
      %v4216 = vrot.slane %v4045, 1
      %v4217 = vsel %vm4204, %v4215, %v4216
      %v4218 = vrot.slane %v4047, 1
      %v4219 = vsel %vm4204, %v4216, %v4218
      %v4220 = vrot.slane %v4052, 1
      %v4221 = vrot.slane %v4058, 1
      %v4222 = vsel %vm4204, %v4220, %v4221
      %v4223 = vrot.slane %v4059, 1
      %v4224 = vsel %vm4204, %v4221, %v4223
      %v4225 = vrot.slane %v4068, 1
      %v4226 = vrot.slane %v4069, 1
      %v4227 = vsel %vm4204, %v4225, %v4226
      %v4228 = vrot.slane %v4071, 1
      %v4229 = vsel %vm4204, %v4226, %v4228
      %v4230 = vrot.slane %v4076, 1
      %v4231 = vrot.slane %v4082, 1
      %v4232 = vsel %vm4204, %v4230, %v4231
      %v4233 = vrot.slane %v4083, 1
      %v4234 = vsel %vm4204, %v4231, %v4233
      %v4235 = vrot.slane %v4092, 1
      %v4236 = vrot.slane %v4093, 1
      %v4237 = vsel %vm4204, %v4235, %v4236
      %v4238 = vrot.slane %v4095, 1
      %v4239 = vsel %vm4204, %v4236, %v4238
      %v4240 = vrot.slane %v4100, 1
      %v4241 = vrot.slane %v4106, 1
      %v4242 = vsel %vm4204, %v4240, %v4241
      %v4243 = vrot.slane %v4107, 1
      %v4244 = vsel %vm4204, %v4241, %v4243
      %v4245 = vrot.slane %v4116, 1
      %v4246 = vrot.slane %v4117, 1
      %v4247 = vsel %vm4204, %v4245, %v4246
      %v4248 = vrot.slane %v4119, 1
      %v4249 = vsel %vm4204, %v4246, %v4248
      %v4250 = vrot.slane %v4124, 1
      %v4251 = vrot.slane %v4130, 1
      %v4252 = vsel %vm4204, %v4250, %v4251
      %v4253 = vrot.slane %v4131, 1
      %v4254 = vsel %vm4204, %v4251, %v4253
      %v4255 = vrot.slane %v4140, 1
      %v4256 = vrot.slane %v4141, 1
      %v4257 = vsel %vm4204, %v4255, %v4256
      %v4258 = vrot.slane %v4143, 1
      %v4259 = vsel %vm4204, %v4256, %v4258
      %v4260 = vrot.slane %v4148, 1
      %v4261 = vrot.slane %v4154, 1
      %v4262 = vsel %vm4204, %v4260, %v4261
      %v4263 = vrot.slane %v4155, 1
      %v4264 = vsel %vm4204, %v4261, %v4263
      %v4265 = vrot.slane %v4164, 1
      %v4266 = vrot.slane %v4165, 1
      %v4267 = vsel %vm4204, %v4265, %v4266
      %v4268 = vrot.slane %v4167, 1
      %v4269 = vsel %vm4204, %v4266, %v4268
      %v4270 = vrot.slane %v4172, 1
      %v4271 = vrot.slane %v4178, 1
      %v4272 = vsel %vm4204, %v4270, %v4271
      %v4273 = vrot.slane %v4179, 1
      %v4274 = vsel %vm4204, %v4271, %v4273
      %v4275 = vrot.slane %v4188, 1
      %v4276 = vrot.slane %v4189, 1
      %v4277 = vsel %vm4204, %v4275, %v4276
      %v4278 = vrot.slane %v4191, 1
      %v4279 = vsel %vm4204, %v4276, %v4278
      %v4280 = vrot.slane %v4196, 1
      %v4281 = vrot.slane %v4202, 1
      %v4282 = vsel %vm4204, %v4280, %v4281
      %v4283 = vrot.slane %v4203, 1
      %v4284 = vsel %vm4204, %v4281, %v4283
      %v4317 = vadd.f32 %v3657, %v4207
      %v4318 = vadd.f32 %v3658, %v4209
      %v4319 = vadd.f32 %v3659, %v4212
      %v4320 = vadd.f32 %v3660, %v4214
      %v4321 = vadd.f32 %v3661, %v4217
      %v4322 = vadd.f32 %v3662, %v4219
      %v4323 = vadd.f32 %v3663, %v4222
      %v4324 = vadd.f32 %v3664, %v4224
      %v4325 = vadd.f32 %v3665, %v4227
      %v4326 = vadd.f32 %v3666, %v4229
      %v4327 = vadd.f32 %v3667, %v4232
      %v4328 = vadd.f32 %v3668, %v4234
      %v4329 = vadd.f32 %v3669, %v4237
      %v4330 = vadd.f32 %v3670, %v4239
      %v4331 = vadd.f32 %v3671, %v4242
      %v4332 = vadd.f32 %v3672, %v4244
      %v4333 = vadd.f32 %v3673, %v4247
      %v4334 = vadd.f32 %v3674, %v4249
      %v4335 = vadd.f32 %v3675, %v4252
      %v4336 = vadd.f32 %v3676, %v4254
      %v4337 = vadd.f32 %v3677, %v4257
      %v4338 = vadd.f32 %v3678, %v4259
      %v4339 = vadd.f32 %v3679, %v4262
      %v4340 = vadd.f32 %v3680, %v4264
      %v4341 = vadd.f32 %v3681, %v4267
      %v4342 = vadd.f32 %v3682, %v4269
      %v4343 = vadd.f32 %v3683, %v4272
      %v4344 = vadd.f32 %v3684, %v4274
      %v4345 = vadd.f32 %v3685, %v4277
      %v4346 = vadd.f32 %v3686, %v4279
      %v4347 = vadd.f32 %v3687, %v4282
      %v4348 = vadd.f32 %v3688, %v4284
      %v4349 = vperm.slane %v3188, 2
      %v4351 = vrot.slane %v4349, 2
      %v4352 = vrot.slane %v4349, 4
      %v4353 = vrot.slane %v4349, 6
      %v4357 = vmul.f32 %v3027, %v4349
      %v4358 = vmul.f32 %v3028, %v4351
      %v4359 = vmul.f32 %v3029, %v4352
      %v4360 = vmul.f32 %v3030, %v4353
      %v4361 = vmul.f32 %v3031, %v4349
      %v4362 = vmul.f32 %v3032, %v4351
      %v4363 = vmul.f32 %v3033, %v4352
      %v4364 = vmul.f32 %v3034, %v4353
      %v4365 = vmul.f32 %v3036, %v4349
      %v4366 = vmul.f32 %v3037, %v4351
      %v4367 = vmul.f32 %v3038, %v4352
      %v4368 = vmul.f32 %v3039, %v4353
      %v4369 = vmul.f32 %v3040, %v4349
      %v4370 = vmul.f32 %v3041, %v4351
      %v4371 = vmul.f32 %v3042, %v4352
      %v4372 = vmul.f32 %v3043, %v4353
      %v4373 = vmul.f32 %v3045, %v4349
      %v4374 = vmul.f32 %v3046, %v4351
      %v4375 = vmul.f32 %v3047, %v4352
      %v4376 = vmul.f32 %v3048, %v4353
      %v4377 = vmul.f32 %v3049, %v4349
      %v4378 = vmul.f32 %v3050, %v4351
      %v4379 = vmul.f32 %v3051, %v4352
      %v4380 = vmul.f32 %v3052, %v4353
      %v4381 = vmul.f32 %v3054, %v4349
      %v4382 = vmul.f32 %v3055, %v4351
      %v4383 = vmul.f32 %v3056, %v4352
      %v4384 = vmul.f32 %v3057, %v4353
      %v4385 = vmul.f32 %v3058, %v4349
      %v4386 = vmul.f32 %v3059, %v4351
      %v4387 = vmul.f32 %v3060, %v4352
      %v4388 = vmul.f32 %v3061, %v4353
      %v4389 = vmul.f32 %v3063, %v4349
      %v4390 = vmul.f32 %v3064, %v4351
      %v4391 = vmul.f32 %v3065, %v4352
      %v4392 = vmul.f32 %v3066, %v4353
      %v4393 = vmul.f32 %v3067, %v4349
      %v4394 = vmul.f32 %v3068, %v4351
      %v4395 = vmul.f32 %v3069, %v4352
      %v4396 = vmul.f32 %v3070, %v4353
      %v4397 = vmul.f32 %v3072, %v4349
      %v4398 = vmul.f32 %v3073, %v4351
      %v4399 = vmul.f32 %v3074, %v4352
      %v4400 = vmul.f32 %v3075, %v4353
      %v4401 = vmul.f32 %v3076, %v4349
      %v4402 = vmul.f32 %v3077, %v4351
      %v4403 = vmul.f32 %v3078, %v4352
      %v4404 = vmul.f32 %v3079, %v4353
      %v4405 = vmul.f32 %v3081, %v4349
      %v4406 = vmul.f32 %v3082, %v4351
      %v4407 = vmul.f32 %v3083, %v4352
      %v4408 = vmul.f32 %v3084, %v4353
      %v4409 = vmul.f32 %v3085, %v4349
      %v4410 = vmul.f32 %v3086, %v4351
      %v4411 = vmul.f32 %v3087, %v4352
      %v4412 = vmul.f32 %v3088, %v4353
      %v4413 = vmul.f32 %v3090, %v4349
      %v4414 = vmul.f32 %v3091, %v4351
      %v4415 = vmul.f32 %v3092, %v4352
      %v4416 = vmul.f32 %v3093, %v4353
      %v4417 = vmul.f32 %v3094, %v4349
      %v4418 = vmul.f32 %v3095, %v4351
      %v4419 = vmul.f32 %v3096, %v4352
      %v4420 = vmul.f32 %v3097, %v4353
      %v4421 = vmul.f32 %v3099, %v4349
      %v4422 = vmul.f32 %v3100, %v4351
      %v4423 = vmul.f32 %v3101, %v4352
      %v4424 = vmul.f32 %v3102, %v4353
      %v4425 = vmul.f32 %v3103, %v4349
      %v4426 = vmul.f32 %v3104, %v4351
      %v4427 = vmul.f32 %v3105, %v4352
      %v4428 = vmul.f32 %v3106, %v4353
      %v4429 = vmul.f32 %v3108, %v4349
      %v4430 = vmul.f32 %v3109, %v4351
      %v4431 = vmul.f32 %v3110, %v4352
      %v4432 = vmul.f32 %v3111, %v4353
      %v4433 = vmul.f32 %v3112, %v4349
      %v4434 = vmul.f32 %v3113, %v4351
      %v4435 = vmul.f32 %v3114, %v4352
      %v4436 = vmul.f32 %v3115, %v4353
      %v4437 = vmul.f32 %v3117, %v4349
      %v4438 = vmul.f32 %v3118, %v4351
      %v4439 = vmul.f32 %v3119, %v4352
      %v4440 = vmul.f32 %v3120, %v4353
      %v4441 = vmul.f32 %v3121, %v4349
      %v4442 = vmul.f32 %v3122, %v4351
      %v4443 = vmul.f32 %v3123, %v4352
      %v4444 = vmul.f32 %v3124, %v4353
      %v4445 = vmul.f32 %v3126, %v4349
      %v4446 = vmul.f32 %v3127, %v4351
      %v4447 = vmul.f32 %v3128, %v4352
      %v4448 = vmul.f32 %v3129, %v4353
      %v4449 = vmul.f32 %v3130, %v4349
      %v4450 = vmul.f32 %v3131, %v4351
      %v4451 = vmul.f32 %v3132, %v4352
      %v4452 = vmul.f32 %v3133, %v4353
      %v4453 = vmul.f32 %v3135, %v4349
      %v4454 = vmul.f32 %v3136, %v4351
      %v4455 = vmul.f32 %v3137, %v4352
      %v4456 = vmul.f32 %v3138, %v4353
      %v4457 = vmul.f32 %v3139, %v4349
      %v4458 = vmul.f32 %v3140, %v4351
      %v4459 = vmul.f32 %v3141, %v4352
      %v4460 = vmul.f32 %v3142, %v4353
      %v4461 = vmul.f32 %v3144, %v4349
      %v4462 = vmul.f32 %v3145, %v4351
      %v4463 = vmul.f32 %v3146, %v4352
      %v4464 = vmul.f32 %v3147, %v4353
      %v4465 = vmul.f32 %v3148, %v4349
      %v4466 = vmul.f32 %v3149, %v4351
      %v4467 = vmul.f32 %v3150, %v4352
      %v4468 = vmul.f32 %v3151, %v4353
      %v4469 = vmul.f32 %v3153, %v4349
      %v4470 = vmul.f32 %v3154, %v4351
      %v4471 = vmul.f32 %v3155, %v4352
      %v4472 = vmul.f32 %v3156, %v4353
      %v4473 = vmul.f32 %v3157, %v4349
      %v4474 = vmul.f32 %v3158, %v4351
      %v4475 = vmul.f32 %v3159, %v4352
      %v4476 = vmul.f32 %v3160, %v4353
      %v4477 = vmul.f32 %v3162, %v4349
      %v4478 = vmul.f32 %v3163, %v4351
      %v4479 = vmul.f32 %v3164, %v4352
      %v4480 = vmul.f32 %v3165, %v4353
      %v4481 = vmul.f32 %v3166, %v4349
      %v4482 = vmul.f32 %v3167, %v4351
      %v4483 = vmul.f32 %v3168, %v4352
      %v4484 = vmul.f32 %v3169, %v4353
      %4613 = vst [vmem:[#allocation1] ss:$4 sm:$0xff] %v4357
      %s4614 = scalar_lea.vmem [#allocation1], 1
      %4615 = vst [vmem:[%s4614] ss:$4 sm:$0xff] %v4358
      %s4616 = scalar_lea.vmem [#allocation1], 2
      %4617 = vst [vmem:[%s4616] ss:$4 sm:$0xff] %v4359
      %s4618 = scalar_lea.vmem [#allocation1], 3
      %4619 = vst [vmem:[%s4618] ss:$4 sm:$0xff] %v4360
      %s4620 = scalar_lea.vmem [#allocation1], 32
      %4621 = vst [vmem:[%s4620] ss:$4 sm:$0xff] %v4361
      %s4622 = scalar_lea.vmem [#allocation1], 33
      %4623 = vst [vmem:[%s4622] ss:$4 sm:$0xff] %v4362
      %s4624 = scalar_lea.vmem [#allocation1], 34
      %4625 = vst [vmem:[%s4624] ss:$4 sm:$0xff] %v4363
      %s4626 = scalar_lea.vmem [#allocation1], 35
      %4627 = vst [vmem:[%s4626] ss:$4 sm:$0xff] %v4364
      %v4628 = vld.sshfl [vmem:[#allocation1] sm:$0xff pattern:$0x73625140]
      %v4629 = vld.sshfl [vmem:[#allocation1 + $0x20] sm:$0xff pattern:$0x73625140]
      %4630 = vst [vmem:[#allocation1] ss:$4 sm:$0xff] %v4365
      %4631 = vst [vmem:[%s4614] ss:$4 sm:$0xff] %v4366
      %4632 = vst [vmem:[%s4616] ss:$4 sm:$0xff] %v4367
      %4633 = vst [vmem:[%s4618] ss:$4 sm:$0xff] %v4368
      %4634 = vst [vmem:[%s4620] ss:$4 sm:$0xff] %v4369
      %4635 = vst [vmem:[%s4622] ss:$4 sm:$0xff] %v4370
      %4636 = vst [vmem:[%s4624] ss:$4 sm:$0xff] %v4371
      %4637 = vst [vmem:[%s4626] ss:$4 sm:$0xff] %v4372
      %v4638 = vld.sshfl [vmem:[#allocation1] sm:$0xff pattern:$0x73625140]
      %v4639 = vld.sshfl [vmem:[#allocation1 + $0x20] sm:$0xff pattern:$0x73625140]
      %4640 = vst [vmem:[#allocation1] ss:$4 sm:$0xff] %v4373
      %4641 = vst [vmem:[%s4614] ss:$4 sm:$0xff] %v4374
      %4642 = vst [vmem:[%s4616] ss:$4 sm:$0xff] %v4375
      %4643 = vst [vmem:[%s4618] ss:$4 sm:$0xff] %v4376
      %4644 = vst [vmem:[%s4620] ss:$4 sm:$0xff] %v4377
      %4645 = vst [vmem:[%s4622] ss:$4 sm:$0xff] %v4378
      %4646 = vst [vmem:[%s4624] ss:$4 sm:$0xff] %v4379
      %4647 = vst [vmem:[%s4626] ss:$4 sm:$0xff] %v4380
      %v4648 = vld.sshfl [vmem:[#allocation1] sm:$0xff pattern:$0x73625140]
      %v4649 = vld.sshfl [vmem:[#allocation1 + $0x20] sm:$0xff pattern:$0x73625140]
      %4650 = vst [vmem:[#allocation1] ss:$4 sm:$0xff] %v4381
      %4651 = vst [vmem:[%s4614] ss:$4 sm:$0xff] %v4382
      %4652 = vst [vmem:[%s4616] ss:$4 sm:$0xff] %v4383
      %4653 = vst [vmem:[%s4618] ss:$4 sm:$0xff] %v4384
      %4654 = vst [vmem:[%s4620] ss:$4 sm:$0xff] %v4385
      %4655 = vst [vmem:[%s4622] ss:$4 sm:$0xff] %v4386
      %4656 = vst [vmem:[%s4624] ss:$4 sm:$0xff] %v4387
      %4657 = vst [vmem:[%s4626] ss:$4 sm:$0xff] %v4388
      %v4658 = vld.sshfl [vmem:[#allocation1] sm:$0xff pattern:$0x73625140]
      %v4659 = vld.sshfl [vmem:[#allocation1 + $0x20] sm:$0xff pattern:$0x73625140]
      %4660 = vst [vmem:[#allocation1] ss:$4 sm:$0xff] %v4389
      %4661 = vst [vmem:[%s4614] ss:$4 sm:$0xff] %v4390
      %4662 = vst [vmem:[%s4616] ss:$4 sm:$0xff] %v4391
      %4663 = vst [vmem:[%s4618] ss:$4 sm:$0xff] %v4392
      %4664 = vst [vmem:[%s4620] ss:$4 sm:$0xff] %v4393
      %4665 = vst [vmem:[%s4622] ss:$4 sm:$0xff] %v4394
      %4666 = vst [vmem:[%s4624] ss:$4 sm:$0xff] %v4395
      %4667 = vst [vmem:[%s4626] ss:$4 sm:$0xff] %v4396
      %v4668 = vld.sshfl [vmem:[#allocation1] sm:$0xff pattern:$0x73625140]
      %v4669 = vld.sshfl [vmem:[#allocation1 + $0x20] sm:$0xff pattern:$0x73625140]
      %4670 = vst [vmem:[#allocation1] ss:$4 sm:$0xff] %v4397
      %4671 = vst [vmem:[%s4614] ss:$4 sm:$0xff] %v4398
      %4672 = vst [vmem:[%s4616] ss:$4 sm:$0xff] %v4399
      %4673 = vst [vmem:[%s4618] ss:$4 sm:$0xff] %v4400
      %4674 = vst [vmem:[%s4620] ss:$4 sm:$0xff] %v4401
      %4675 = vst [vmem:[%s4622] ss:$4 sm:$0xff] %v4402
      %4676 = vst [vmem:[%s4624] ss:$4 sm:$0xff] %v4403
      %4677 = vst [vmem:[%s4626] ss:$4 sm:$0xff] %v4404
      %v4678 = vld.sshfl [vmem:[#allocation1] sm:$0xff pattern:$0x73625140]
      %v4679 = vld.sshfl [vmem:[#allocation1 + $0x20] sm:$0xff pattern:$0x73625140]
      %4680 = vst [vmem:[#allocation1] ss:$4 sm:$0xff] %v4405
      %4681 = vst [vmem:[%s4614] ss:$4 sm:$0xff] %v4406
      %4682 = vst [vmem:[%s4616] ss:$4 sm:$0xff] %v4407
      %4683 = vst [vmem:[%s4618] ss:$4 sm:$0xff] %v4408
      %4684 = vst [vmem:[%s4620] ss:$4 sm:$0xff] %v4409
      %4685 = vst [vmem:[%s4622] ss:$4 sm:$0xff] %v4410
      %4686 = vst [vmem:[%s4624] ss:$4 sm:$0xff] %v4411
      %4687 = vst [vmem:[%s4626] ss:$4 sm:$0xff] %v4412
      %v4688 = vld.sshfl [vmem:[#allocation1] sm:$0xff pattern:$0x73625140]
      %v4689 = vld.sshfl [vmem:[#allocation1 + $0x20] sm:$0xff pattern:$0x73625140]
      %4690 = vst [vmem:[#allocation1] ss:$4 sm:$0xff] %v4413
      %4691 = vst [vmem:[%s4614] ss:$4 sm:$0xff] %v4414
      %4692 = vst [vmem:[%s4616] ss:$4 sm:$0xff] %v4415
      %4693 = vst [vmem:[%s4618] ss:$4 sm:$0xff] %v4416
      %4694 = vst [vmem:[%s4620] ss:$4 sm:$0xff] %v4417
      %4695 = vst [vmem:[%s4622] ss:$4 sm:$0xff] %v4418
      %4696 = vst [vmem:[%s4624] ss:$4 sm:$0xff] %v4419
      %4697 = vst [vmem:[%s4626] ss:$4 sm:$0xff] %v4420
      %v4698 = vld.sshfl [vmem:[#allocation1] sm:$0xff pattern:$0x73625140]
      %v4699 = vld.sshfl [vmem:[#allocation1 + $0x20] sm:$0xff pattern:$0x73625140]
      %4700 = vst [vmem:[#allocation1] ss:$4 sm:$0xff] %v4421
      %4701 = vst [vmem:[%s4614] ss:$4 sm:$0xff] %v4422
      %4702 = vst [vmem:[%s4616] ss:$4 sm:$0xff] %v4423
      %4703 = vst [vmem:[%s4618] ss:$4 sm:$0xff] %v4424
      %4704 = vst [vmem:[%s4620] ss:$4 sm:$0xff] %v4425
      %4705 = vst [vmem:[%s4622] ss:$4 sm:$0xff] %v4426
      %4706 = vst [vmem:[%s4624] ss:$4 sm:$0xff] %v4427
      %4707 = vst [vmem:[%s4626] ss:$4 sm:$0xff] %v4428
      %v4708 = vld.sshfl [vmem:[#allocation1] sm:$0xff pattern:$0x73625140]
      %v4709 = vld.sshfl [vmem:[#allocation1 + $0x20] sm:$0xff pattern:$0x73625140]
      %4710 = vst [vmem:[#allocation1] ss:$4 sm:$0xff] %v4429
      %4711 = vst [vmem:[%s4614] ss:$4 sm:$0xff] %v4430
      %4712 = vst [vmem:[%s4616] ss:$4 sm:$0xff] %v4431
      %4713 = vst [vmem:[%s4618] ss:$4 sm:$0xff] %v4432
      %4714 = vst [vmem:[%s4620] ss:$4 sm:$0xff] %v4433
      %4715 = vst [vmem:[%s4622] ss:$4 sm:$0xff] %v4434
      %4716 = vst [vmem:[%s4624] ss:$4 sm:$0xff] %v4435
      %4717 = vst [vmem:[%s4626] ss:$4 sm:$0xff] %v4436
      %v4718 = vld.sshfl [vmem:[#allocation1] sm:$0xff pattern:$0x73625140]
      %v4719 = vld.sshfl [vmem:[#allocation1 + $0x20] sm:$0xff pattern:$0x73625140]
      %4720 = vst [vmem:[#allocation1] ss:$4 sm:$0xff] %v4437
      %4721 = vst [vmem:[%s4614] ss:$4 sm:$0xff] %v4438
      %4722 = vst [vmem:[%s4616] ss:$4 sm:$0xff] %v4439
      %4723 = vst [vmem:[%s4618] ss:$4 sm:$0xff] %v4440
      %4724 = vst [vmem:[%s4620] ss:$4 sm:$0xff] %v4441
      %4725 = vst [vmem:[%s4622] ss:$4 sm:$0xff] %v4442
      %4726 = vst [vmem:[%s4624] ss:$4 sm:$0xff] %v4443
      %4727 = vst [vmem:[%s4626] ss:$4 sm:$0xff] %v4444
      %v4728 = vld.sshfl [vmem:[#allocation1] sm:$0xff pattern:$0x73625140]
      %v4729 = vld.sshfl [vmem:[#allocation1 + $0x20] sm:$0xff pattern:$0x73625140]
      %4730 = vst [vmem:[#allocation1] ss:$4 sm:$0xff] %v4445
      %4731 = vst [vmem:[%s4614] ss:$4 sm:$0xff] %v4446
      %4732 = vst [vmem:[%s4616] ss:$4 sm:$0xff] %v4447
      %4733 = vst [vmem:[%s4618] ss:$4 sm:$0xff] %v4448
      %4734 = vst [vmem:[%s4620] ss:$4 sm:$0xff] %v4449
      %4735 = vst [vmem:[%s4622] ss:$4 sm:$0xff] %v4450
      %4736 = vst [vmem:[%s4624] ss:$4 sm:$0xff] %v4451
      %4737 = vst [vmem:[%s4626] ss:$4 sm:$0xff] %v4452
      %v4738 = vld.sshfl [vmem:[#allocation1] sm:$0xff pattern:$0x73625140]
      %v4739 = vld.sshfl [vmem:[#allocation1 + $0x20] sm:$0xff pattern:$0x73625140]
      %4740 = vst [vmem:[#allocation1] ss:$4 sm:$0xff] %v4453
      %4741 = vst [vmem:[%s4614] ss:$4 sm:$0xff] %v4454
      %4742 = vst [vmem:[%s4616] ss:$4 sm:$0xff] %v4455
      %4743 = vst [vmem:[%s4618] ss:$4 sm:$0xff] %v4456
      %4744 = vst [vmem:[%s4620] ss:$4 sm:$0xff] %v4457
      %4745 = vst [vmem:[%s4622] ss:$4 sm:$0xff] %v4458
      %4746 = vst [vmem:[%s4624] ss:$4 sm:$0xff] %v4459
      %4747 = vst [vmem:[%s4626] ss:$4 sm:$0xff] %v4460
      %v4748 = vld.sshfl [vmem:[#allocation1] sm:$0xff pattern:$0x73625140]
      %v4749 = vld.sshfl [vmem:[#allocation1 + $0x20] sm:$0xff pattern:$0x73625140]
      %4750 = vst [vmem:[#allocation1] ss:$4 sm:$0xff] %v4461
      %4751 = vst [vmem:[%s4614] ss:$4 sm:$0xff] %v4462
      %4752 = vst [vmem:[%s4616] ss:$4 sm:$0xff] %v4463
      %4753 = vst [vmem:[%s4618] ss:$4 sm:$0xff] %v4464
      %4754 = vst [vmem:[%s4620] ss:$4 sm:$0xff] %v4465
      %4755 = vst [vmem:[%s4622] ss:$4 sm:$0xff] %v4466
      %4756 = vst [vmem:[%s4624] ss:$4 sm:$0xff] %v4467
      %4757 = vst [vmem:[%s4626] ss:$4 sm:$0xff] %v4468
      %v4758 = vld.sshfl [vmem:[#allocation1] sm:$0xff pattern:$0x73625140]
      %v4759 = vld.sshfl [vmem:[#allocation1 + $0x20] sm:$0xff pattern:$0x73625140]
      %4760 = vst [vmem:[#allocation1] ss:$4 sm:$0xff] %v4469
      %4761 = vst [vmem:[%s4614] ss:$4 sm:$0xff] %v4470
      %4762 = vst [vmem:[%s4616] ss:$4 sm:$0xff] %v4471
      %4763 = vst [vmem:[%s4618] ss:$4 sm:$0xff] %v4472
      %4764 = vst [vmem:[%s4620] ss:$4 sm:$0xff] %v4473
      %4765 = vst [vmem:[%s4622] ss:$4 sm:$0xff] %v4474
      %4766 = vst [vmem:[%s4624] ss:$4 sm:$0xff] %v4475
      %4767 = vst [vmem:[%s4626] ss:$4 sm:$0xff] %v4476
      %v4768 = vld.sshfl [vmem:[#allocation1] sm:$0xff pattern:$0x73625140]
      %v4769 = vld.sshfl [vmem:[#allocation1 + $0x20] sm:$0xff pattern:$0x73625140]
      %4770 = vst [vmem:[#allocation1] ss:$4 sm:$0xff] %v4477
      %4771 = vst [vmem:[%s4614] ss:$4 sm:$0xff] %v4478
      %4772 = vst [vmem:[%s4616] ss:$4 sm:$0xff] %v4479
      %4773 = vst [vmem:[%s4618] ss:$4 sm:$0xff] %v4480
      %4774 = vst [vmem:[%s4620] ss:$4 sm:$0xff] %v4481
      %4775 = vst [vmem:[%s4622] ss:$4 sm:$0xff] %v4482
      %4776 = vst [vmem:[%s4624] ss:$4 sm:$0xff] %v4483
      %4777 = vst [vmem:[%s4626] ss:$4 sm:$0xff] %v4484
      %v4778 = vld.sshfl [vmem:[#allocation1] sm:$0xff pattern:$0x73625140]
      %v4779 = vld.sshfl [vmem:[#allocation1 + $0x20] sm:$0xff pattern:$0x73625140]
      %v4812 = vadd.f32 %v4317, %v4628
      %v4813 = vadd.f32 %v4318, %v4629
      %v4814 = vadd.f32 %v4319, %v4638
      %v4815 = vadd.f32 %v4320, %v4639
      %v4816 = vadd.f32 %v4321, %v4648
      %v4817 = vadd.f32 %v4322, %v4649
      %v4818 = vadd.f32 %v4323, %v4658
      %v4819 = vadd.f32 %v4324, %v4659
      %v4820 = vadd.f32 %v4325, %v4668
      %v4821 = vadd.f32 %v4326, %v4669
      %v4822 = vadd.f32 %v4327, %v4678
      %v4823 = vadd.f32 %v4328, %v4679
      %v4824 = vadd.f32 %v4329, %v4688
      %v4825 = vadd.f32 %v4330, %v4689
      %v4826 = vadd.f32 %v4331, %v4698
      %v4827 = vadd.f32 %v4332, %v4699
      %v4828 = vadd.f32 %v4333, %v4708
      %v4829 = vadd.f32 %v4334, %v4709
      %v4830 = vadd.f32 %v4335, %v4718
      %v4831 = vadd.f32 %v4336, %v4719
      %v4832 = vadd.f32 %v4337, %v4728
      %v4833 = vadd.f32 %v4338, %v4729
      %v4834 = vadd.f32 %v4339, %v4738
      %v4835 = vadd.f32 %v4340, %v4739
      %v4836 = vadd.f32 %v4341, %v4748
      %v4837 = vadd.f32 %v4342, %v4749
      %v4838 = vadd.f32 %v4343, %v4758
      %v4839 = vadd.f32 %v4344, %v4759
      %v4840 = vadd.f32 %v4345, %v4768
      %v4841 = vadd.f32 %v4346, %v4769
      %v4842 = vadd.f32 %v4347, %v4778
      %v4843 = vadd.f32 %v4348, %v4779
      %v4844 = vperm.slane %v3188, 3
      %v4846 = vrot.slane %v4844, 2
      %v4847 = vrot.slane %v4844, 4
      %v4848 = vrot.slane %v4844, 6
      %v4852 = vmul.f32 %v3035, %v4844
      %v4853 = vmul.f32 %v3036, %v4846
      %v4854 = vmul.f32 %v3037, %v4847
      %v4855 = vmul.f32 %v3038, %v4848
      %v4856 = vmul.f32 %v3039, %v4844
      %v4857 = vmul.f32 %v3040, %v4846
      %v4858 = vmul.f32 %v3041, %v4847
      %v4859 = vmul.f32 %v3042, %v4848
      %v4860 = vmul.f32 %v3044, %v4844
      %v4861 = vmul.f32 %v3045, %v4846
      %v4862 = vmul.f32 %v3046, %v4847
      %v4863 = vmul.f32 %v3047, %v4848
      %v4864 = vmul.f32 %v3048, %v4844
      %v4865 = vmul.f32 %v3049, %v4846
      %v4866 = vmul.f32 %v3050, %v4847
      %v4867 = vmul.f32 %v3051, %v4848
      %v4868 = vmul.f32 %v3053, %v4844
      %v4869 = vmul.f32 %v3054, %v4846
      %v4870 = vmul.f32 %v3055, %v4847
      %v4871 = vmul.f32 %v3056, %v4848
      %v4872 = vmul.f32 %v3057, %v4844
      %v4873 = vmul.f32 %v3058, %v4846
      %v4874 = vmul.f32 %v3059, %v4847
      %v4875 = vmul.f32 %v3060, %v4848
      %v4876 = vmul.f32 %v3062, %v4844
      %v4877 = vmul.f32 %v3063, %v4846
      %v4878 = vmul.f32 %v3064, %v4847
      %v4879 = vmul.f32 %v3065, %v4848
      %v4880 = vmul.f32 %v3066, %v4844
      %v4881 = vmul.f32 %v3067, %v4846
      %v4882 = vmul.f32 %v3068, %v4847
      %v4883 = vmul.f32 %v3069, %v4848
      %v4884 = vmul.f32 %v3071, %v4844
      %v4885 = vmul.f32 %v3072, %v4846
      %v4886 = vmul.f32 %v3073, %v4847
      %v4887 = vmul.f32 %v3074, %v4848
      %v4888 = vmul.f32 %v3075, %v4844
      %v4889 = vmul.f32 %v3076, %v4846
      %v4890 = vmul.f32 %v3077, %v4847
      %v4891 = vmul.f32 %v3078, %v4848
      %v4892 = vmul.f32 %v3080, %v4844
      %v4893 = vmul.f32 %v3081, %v4846
      %v4894 = vmul.f32 %v3082, %v4847
      %v4895 = vmul.f32 %v3083, %v4848
      %v4896 = vmul.f32 %v3084, %v4844
      %v4897 = vmul.f32 %v3085, %v4846
      %v4898 = vmul.f32 %v3086, %v4847
      %v4899 = vmul.f32 %v3087, %v4848
      %v4900 = vmul.f32 %v3089, %v4844
      %v4901 = vmul.f32 %v3090, %v4846
      %v4902 = vmul.f32 %v3091, %v4847
      %v4903 = vmul.f32 %v3092, %v4848
      %v4904 = vmul.f32 %v3093, %v4844
      %v4905 = vmul.f32 %v3094, %v4846
      %v4906 = vmul.f32 %v3095, %v4847
      %v4907 = vmul.f32 %v3096, %v4848
      %v4908 = vmul.f32 %v3098, %v4844
      %v4909 = vmul.f32 %v3099, %v4846
      %v4910 = vmul.f32 %v3100, %v4847
      %v4911 = vmul.f32 %v3101, %v4848
      %v4912 = vmul.f32 %v3102, %v4844
      %v4913 = vmul.f32 %v3103, %v4846
      %v4914 = vmul.f32 %v3104, %v4847
      %v4915 = vmul.f32 %v3105, %v4848
      %v4916 = vmul.f32 %v3107, %v4844
      %v4917 = vmul.f32 %v3108, %v4846
      %v4918 = vmul.f32 %v3109, %v4847
      %v4919 = vmul.f32 %v3110, %v4848
      %v4920 = vmul.f32 %v3111, %v4844
      %v4921 = vmul.f32 %v3112, %v4846
      %v4922 = vmul.f32 %v3113, %v4847
      %v4923 = vmul.f32 %v3114, %v4848
      %v4924 = vmul.f32 %v3116, %v4844
      %v4925 = vmul.f32 %v3117, %v4846
      %v4926 = vmul.f32 %v3118, %v4847
      %v4927 = vmul.f32 %v3119, %v4848
      %v4928 = vmul.f32 %v3120, %v4844
      %v4929 = vmul.f32 %v3121, %v4846
      %v4930 = vmul.f32 %v3122, %v4847
      %v4931 = vmul.f32 %v3123, %v4848
      %v4932 = vmul.f32 %v3125, %v4844
      %v4933 = vmul.f32 %v3126, %v4846
      %v4934 = vmul.f32 %v3127, %v4847
      %v4935 = vmul.f32 %v3128, %v4848
      %v4936 = vmul.f32 %v3129, %v4844
      %v4937 = vmul.f32 %v3130, %v4846
      %v4938 = vmul.f32 %v3131, %v4847
      %v4939 = vmul.f32 %v3132, %v4848
      %v4940 = vmul.f32 %v3134, %v4844
      %v4941 = vmul.f32 %v3135, %v4846
      %v4942 = vmul.f32 %v3136, %v4847
      %v4943 = vmul.f32 %v3137, %v4848
      %v4944 = vmul.f32 %v3138, %v4844
      %v4945 = vmul.f32 %v3139, %v4846
      %v4946 = vmul.f32 %v3140, %v4847
      %v4947 = vmul.f32 %v3141, %v4848
      %v4948 = vmul.f32 %v3143, %v4844
      %v4949 = vmul.f32 %v3144, %v4846
      %v4950 = vmul.f32 %v3145, %v4847
      %v4951 = vmul.f32 %v3146, %v4848
      %v4952 = vmul.f32 %v3147, %v4844
      %v4953 = vmul.f32 %v3148, %v4846
      %v4954 = vmul.f32 %v3149, %v4847
      %v4955 = vmul.f32 %v3150, %v4848
      %v4956 = vmul.f32 %v3152, %v4844
      %v4957 = vmul.f32 %v3153, %v4846
      %v4958 = vmul.f32 %v3154, %v4847
      %v4959 = vmul.f32 %v3155, %v4848
      %v4960 = vmul.f32 %v3156, %v4844
      %v4961 = vmul.f32 %v3157, %v4846
      %v4962 = vmul.f32 %v3158, %v4847
      %v4963 = vmul.f32 %v3159, %v4848
      %v4964 = vmul.f32 %v3161, %v4844
      %v4965 = vmul.f32 %v3162, %v4846
      %v4966 = vmul.f32 %v3163, %v4847
      %v4967 = vmul.f32 %v3164, %v4848
      %v4968 = vmul.f32 %v3165, %v4844
      %v4969 = vmul.f32 %v3166, %v4846
      %v4970 = vmul.f32 %v3167, %v4847
      %v4971 = vmul.f32 %v3168, %v4848
      %v4972 = vmul.f32 %v3170, %v4844
      %v4973 = vmul.f32 %v3171, %v4846
      %v4974 = vmul.f32 %v3172, %v4847
      %v4975 = vmul.f32 %v3173, %v4848
      %v4976 = vmul.f32 %v3174, %v4844
      %v4977 = vmul.f32 %v3175, %v4846
      %v4978 = vmul.f32 %v3176, %v4847
      %v4979 = vmul.f32 %v3177, %v4848
      %5108 = vst [vmem:[#allocation1] ss:$4 sm:$0xff] %v4852
      %s5109 = scalar_lea.vmem [#allocation1], 1
      %5110 = vst [vmem:[%s5109] ss:$4 sm:$0xff] %v4853
      %s5111 = scalar_lea.vmem [#allocation1], 2
      %5112 = vst [vmem:[%s5111] ss:$4 sm:$0xff] %v4854
      %s5113 = scalar_lea.vmem [#allocation1], 3
      %5114 = vst [vmem:[%s5113] ss:$4 sm:$0xff] %v4855
      %s5115 = scalar_lea.vmem [#allocation1], 32
      %5116 = vst [vmem:[%s5115] ss:$4 sm:$0xff] %v4856
      %s5117 = scalar_lea.vmem [#allocation1], 33
      %5118 = vst [vmem:[%s5117] ss:$4 sm:$0xff] %v4857
      %s5119 = scalar_lea.vmem [#allocation1], 34
      %5120 = vst [vmem:[%s5119] ss:$4 sm:$0xff] %v4858
      %s5121 = scalar_lea.vmem [#allocation1], 35
      %5122 = vst [vmem:[%s5121] ss:$4 sm:$0xff] %v4859
      %v5123 = vld.sshfl [vmem:[#allocation1] sm:$0xff pattern:$0x73625140]
      %v5124 = vld.sshfl [vmem:[#allocation1 + $0x20] sm:$0xff pattern:$0x73625140]
      %5125 = vst [vmem:[#allocation1] ss:$4 sm:$0xff] %v4860
      %5126 = vst [vmem:[%s5109] ss:$4 sm:$0xff] %v4861
      %5127 = vst [vmem:[%s5111] ss:$4 sm:$0xff] %v4862
      %5128 = vst [vmem:[%s5113] ss:$4 sm:$0xff] %v4863
      %5129 = vst [vmem:[%s5115] ss:$4 sm:$0xff] %v4864
      %5130 = vst [vmem:[%s5117] ss:$4 sm:$0xff] %v4865
      %5131 = vst [vmem:[%s5119] ss:$4 sm:$0xff] %v4866
      %5132 = vst [vmem:[%s5121] ss:$4 sm:$0xff] %v4867
      %v5133 = vld.sshfl [vmem:[#allocation1] sm:$0xff pattern:$0x73625140]
      %v5134 = vld.sshfl [vmem:[#allocation1 + $0x20] sm:$0xff pattern:$0x73625140]
      %5135 = vst [vmem:[#allocation1] ss:$4 sm:$0xff] %v4868
      %5136 = vst [vmem:[%s5109] ss:$4 sm:$0xff] %v4869
      %5137 = vst [vmem:[%s5111] ss:$4 sm:$0xff] %v4870
      %5138 = vst [vmem:[%s5113] ss:$4 sm:$0xff] %v4871
      %5139 = vst [vmem:[%s5115] ss:$4 sm:$0xff] %v4872
      %5140 = vst [vmem:[%s5117] ss:$4 sm:$0xff] %v4873
      %5141 = vst [vmem:[%s5119] ss:$4 sm:$0xff] %v4874
      %5142 = vst [vmem:[%s5121] ss:$4 sm:$0xff] %v4875
      %v5143 = vld.sshfl [vmem:[#allocation1] sm:$0xff pattern:$0x73625140]
      %v5144 = vld.sshfl [vmem:[#allocation1 + $0x20] sm:$0xff pattern:$0x73625140]
      %5145 = vst [vmem:[#allocation1] ss:$4 sm:$0xff] %v4876
      %5146 = vst [vmem:[%s5109] ss:$4 sm:$0xff] %v4877
      %5147 = vst [vmem:[%s5111] ss:$4 sm:$0xff] %v4878
      %5148 = vst [vmem:[%s5113] ss:$4 sm:$0xff] %v4879
      %5149 = vst [vmem:[%s5115] ss:$4 sm:$0xff] %v4880
      %5150 = vst [vmem:[%s5117] ss:$4 sm:$0xff] %v4881
      %5151 = vst [vmem:[%s5119] ss:$4 sm:$0xff] %v4882
      %5152 = vst [vmem:[%s5121] ss:$4 sm:$0xff] %v4883
      %v5153 = vld.sshfl [vmem:[#allocation1] sm:$0xff pattern:$0x73625140]
      %v5154 = vld.sshfl [vmem:[#allocation1 + $0x20] sm:$0xff pattern:$0x73625140]
      %5155 = vst [vmem:[#allocation1] ss:$4 sm:$0xff] %v4884
      %5156 = vst [vmem:[%s5109] ss:$4 sm:$0xff] %v4885
      %5157 = vst [vmem:[%s5111] ss:$4 sm:$0xff] %v4886
      %5158 = vst [vmem:[%s5113] ss:$4 sm:$0xff] %v4887
      %5159 = vst [vmem:[%s5115] ss:$4 sm:$0xff] %v4888
      %5160 = vst [vmem:[%s5117] ss:$4 sm:$0xff] %v4889
      %5161 = vst [vmem:[%s5119] ss:$4 sm:$0xff] %v4890
      %5162 = vst [vmem:[%s5121] ss:$4 sm:$0xff] %v4891
      %v5163 = vld.sshfl [vmem:[#allocation1] sm:$0xff pattern:$0x73625140]
      %v5164 = vld.sshfl [vmem:[#allocation1 + $0x20] sm:$0xff pattern:$0x73625140]
      %5165 = vst [vmem:[#allocation1] ss:$4 sm:$0xff] %v4892
      %5166 = vst [vmem:[%s5109] ss:$4 sm:$0xff] %v4893
      %5167 = vst [vmem:[%s5111] ss:$4 sm:$0xff] %v4894
      %5168 = vst [vmem:[%s5113] ss:$4 sm:$0xff] %v4895
      %5169 = vst [vmem:[%s5115] ss:$4 sm:$0xff] %v4896
      %5170 = vst [vmem:[%s5117] ss:$4 sm:$0xff] %v4897
      %5171 = vst [vmem:[%s5119] ss:$4 sm:$0xff] %v4898
      %5172 = vst [vmem:[%s5121] ss:$4 sm:$0xff] %v4899
      %v5173 = vld.sshfl [vmem:[#allocation1] sm:$0xff pattern:$0x73625140]
      %v5174 = vld.sshfl [vmem:[#allocation1 + $0x20] sm:$0xff pattern:$0x73625140]
      %5175 = vst [vmem:[#allocation1] ss:$4 sm:$0xff] %v4900
      %5176 = vst [vmem:[%s5109] ss:$4 sm:$0xff] %v4901
      %5177 = vst [vmem:[%s5111] ss:$4 sm:$0xff] %v4902
      %5178 = vst [vmem:[%s5113] ss:$4 sm:$0xff] %v4903
      %5179 = vst [vmem:[%s5115] ss:$4 sm:$0xff] %v4904
      %5180 = vst [vmem:[%s5117] ss:$4 sm:$0xff] %v4905
      %5181 = vst [vmem:[%s5119] ss:$4 sm:$0xff] %v4906
      %5182 = vst [vmem:[%s5121] ss:$4 sm:$0xff] %v4907
      %v5183 = vld.sshfl [vmem:[#allocation1] sm:$0xff pattern:$0x73625140]
      %v5184 = vld.sshfl [vmem:[#allocation1 + $0x20] sm:$0xff pattern:$0x73625140]
      %5185 = vst [vmem:[#allocation1] ss:$4 sm:$0xff] %v4908
      %5186 = vst [vmem:[%s5109] ss:$4 sm:$0xff] %v4909
      %5187 = vst [vmem:[%s5111] ss:$4 sm:$0xff] %v4910
      %5188 = vst [vmem:[%s5113] ss:$4 sm:$0xff] %v4911
      %5189 = vst [vmem:[%s5115] ss:$4 sm:$0xff] %v4912
      %5190 = vst [vmem:[%s5117] ss:$4 sm:$0xff] %v4913
      %5191 = vst [vmem:[%s5119] ss:$4 sm:$0xff] %v4914
      %5192 = vst [vmem:[%s5121] ss:$4 sm:$0xff] %v4915
      %v5193 = vld.sshfl [vmem:[#allocation1] sm:$0xff pattern:$0x73625140]
      %v5194 = vld.sshfl [vmem:[#allocation1 + $0x20] sm:$0xff pattern:$0x73625140]
      %5195 = vst [vmem:[#allocation1] ss:$4 sm:$0xff] %v4916
      %5196 = vst [vmem:[%s5109] ss:$4 sm:$0xff] %v4917
      %5197 = vst [vmem:[%s5111] ss:$4 sm:$0xff] %v4918
      %5198 = vst [vmem:[%s5113] ss:$4 sm:$0xff] %v4919
      %5199 = vst [vmem:[%s5115] ss:$4 sm:$0xff] %v4920
      %5200 = vst [vmem:[%s5117] ss:$4 sm:$0xff] %v4921
      %5201 = vst [vmem:[%s5119] ss:$4 sm:$0xff] %v4922
      %5202 = vst [vmem:[%s5121] ss:$4 sm:$0xff] %v4923
      %v5203 = vld.sshfl [vmem:[#allocation1] sm:$0xff pattern:$0x73625140]
      %v5204 = vld.sshfl [vmem:[#allocation1 + $0x20] sm:$0xff pattern:$0x73625140]
      %5205 = vst [vmem:[#allocation1] ss:$4 sm:$0xff] %v4924
      %5206 = vst [vmem:[%s5109] ss:$4 sm:$0xff] %v4925
      %5207 = vst [vmem:[%s5111] ss:$4 sm:$0xff] %v4926
      %5208 = vst [vmem:[%s5113] ss:$4 sm:$0xff] %v4927
      %5209 = vst [vmem:[%s5115] ss:$4 sm:$0xff] %v4928
      %5210 = vst [vmem:[%s5117] ss:$4 sm:$0xff] %v4929
      %5211 = vst [vmem:[%s5119] ss:$4 sm:$0xff] %v4930
      %5212 = vst [vmem:[%s5121] ss:$4 sm:$0xff] %v4931
      %v5213 = vld.sshfl [vmem:[#allocation1] sm:$0xff pattern:$0x73625140]
      %v5214 = vld.sshfl [vmem:[#allocation1 + $0x20] sm:$0xff pattern:$0x73625140]
      %5215 = vst [vmem:[#allocation1] ss:$4 sm:$0xff] %v4932
      %5216 = vst [vmem:[%s5109] ss:$4 sm:$0xff] %v4933
      %5217 = vst [vmem:[%s5111] ss:$4 sm:$0xff] %v4934
      %5218 = vst [vmem:[%s5113] ss:$4 sm:$0xff] %v4935
      %5219 = vst [vmem:[%s5115] ss:$4 sm:$0xff] %v4936
      %5220 = vst [vmem:[%s5117] ss:$4 sm:$0xff] %v4937
      %5221 = vst [vmem:[%s5119] ss:$4 sm:$0xff] %v4938
      %5222 = vst [vmem:[%s5121] ss:$4 sm:$0xff] %v4939
      %v5223 = vld.sshfl [vmem:[#allocation1] sm:$0xff pattern:$0x73625140]
      %v5224 = vld.sshfl [vmem:[#allocation1 + $0x20] sm:$0xff pattern:$0x73625140]
      %5225 = vst [vmem:[#allocation1] ss:$4 sm:$0xff] %v4940
      %5226 = vst [vmem:[%s5109] ss:$4 sm:$0xff] %v4941
      %5227 = vst [vmem:[%s5111] ss:$4 sm:$0xff] %v4942
      %5228 = vst [vmem:[%s5113] ss:$4 sm:$0xff] %v4943
      %5229 = vst [vmem:[%s5115] ss:$4 sm:$0xff] %v4944
      %5230 = vst [vmem:[%s5117] ss:$4 sm:$0xff] %v4945
      %5231 = vst [vmem:[%s5119] ss:$4 sm:$0xff] %v4946
      %5232 = vst [vmem:[%s5121] ss:$4 sm:$0xff] %v4947
      %v5233 = vld.sshfl [vmem:[#allocation1] sm:$0xff pattern:$0x73625140]
      %v5234 = vld.sshfl [vmem:[#allocation1 + $0x20] sm:$0xff pattern:$0x73625140]
      %5235 = vst [vmem:[#allocation1] ss:$4 sm:$0xff] %v4948
      %5236 = vst [vmem:[%s5109] ss:$4 sm:$0xff] %v4949
      %5237 = vst [vmem:[%s5111] ss:$4 sm:$0xff] %v4950
      %5238 = vst [vmem:[%s5113] ss:$4 sm:$0xff] %v4951
      %5239 = vst [vmem:[%s5115] ss:$4 sm:$0xff] %v4952
      %5240 = vst [vmem:[%s5117] ss:$4 sm:$0xff] %v4953
      %5241 = vst [vmem:[%s5119] ss:$4 sm:$0xff] %v4954
      %5242 = vst [vmem:[%s5121] ss:$4 sm:$0xff] %v4955
      %v5243 = vld.sshfl [vmem:[#allocation1] sm:$0xff pattern:$0x73625140]
      %v5244 = vld.sshfl [vmem:[#allocation1 + $0x20] sm:$0xff pattern:$0x73625140]
      %5245 = vst [vmem:[#allocation1] ss:$4 sm:$0xff] %v4956
      %5246 = vst [vmem:[%s5109] ss:$4 sm:$0xff] %v4957
      %5247 = vst [vmem:[%s5111] ss:$4 sm:$0xff] %v4958
      %5248 = vst [vmem:[%s5113] ss:$4 sm:$0xff] %v4959
      %5249 = vst [vmem:[%s5115] ss:$4 sm:$0xff] %v4960
      %5250 = vst [vmem:[%s5117] ss:$4 sm:$0xff] %v4961
      %5251 = vst [vmem:[%s5119] ss:$4 sm:$0xff] %v4962
      %5252 = vst [vmem:[%s5121] ss:$4 sm:$0xff] %v4963
      %v5253 = vld.sshfl [vmem:[#allocation1] sm:$0xff pattern:$0x73625140]
      %v5254 = vld.sshfl [vmem:[#allocation1 + $0x20] sm:$0xff pattern:$0x73625140]
      %5255 = vst [vmem:[#allocation1] ss:$4 sm:$0xff] %v4964
      %5256 = vst [vmem:[%s5109] ss:$4 sm:$0xff] %v4965
      %5257 = vst [vmem:[%s5111] ss:$4 sm:$0xff] %v4966
      %5258 = vst [vmem:[%s5113] ss:$4 sm:$0xff] %v4967
      %5259 = vst [vmem:[%s5115] ss:$4 sm:$0xff] %v4968
      %5260 = vst [vmem:[%s5117] ss:$4 sm:$0xff] %v4969
      %5261 = vst [vmem:[%s5119] ss:$4 sm:$0xff] %v4970
      %5262 = vst [vmem:[%s5121] ss:$4 sm:$0xff] %v4971
      %v5263 = vld.sshfl [vmem:[#allocation1] sm:$0xff pattern:$0x73625140]
      %v5264 = vld.sshfl [vmem:[#allocation1 + $0x20] sm:$0xff pattern:$0x73625140]
      %5265 = vst [vmem:[#allocation1] ss:$4 sm:$0xff] %v4972
      %5266 = vst [vmem:[%s5109] ss:$4 sm:$0xff] %v4973
      %5267 = vst [vmem:[%s5111] ss:$4 sm:$0xff] %v4974
      %5268 = vst [vmem:[%s5113] ss:$4 sm:$0xff] %v4975
      %5269 = vst [vmem:[%s5115] ss:$4 sm:$0xff] %v4976
      %5270 = vst [vmem:[%s5117] ss:$4 sm:$0xff] %v4977
      %5271 = vst [vmem:[%s5119] ss:$4 sm:$0xff] %v4978
      %5272 = vst [vmem:[%s5121] ss:$4 sm:$0xff] %v4979
      %v5273 = vld.sshfl [vmem:[#allocation1] sm:$0xff pattern:$0x73625140]
      %v5274 = vld.sshfl [vmem:[#allocation1 + $0x20] sm:$0xff pattern:$0x73625140]
      %v5307 = vadd.f32 %v4812, %v5123
      %v5308 = vadd.f32 %v4813, %v5124
      %v5309 = vadd.f32 %v4814, %v5133
      %v5310 = vadd.f32 %v4815, %v5134
      %v5311 = vadd.f32 %v4816, %v5143
      %v5312 = vadd.f32 %v4817, %v5144
      %v5313 = vadd.f32 %v4818, %v5153
      %v5314 = vadd.f32 %v4819, %v5154
      %v5315 = vadd.f32 %v4820, %v5163
      %v5316 = vadd.f32 %v4821, %v5164
      %v5317 = vadd.f32 %v4822, %v5173
      %v5318 = vadd.f32 %v4823, %v5174
      %v5319 = vadd.f32 %v4824, %v5183
      %v5320 = vadd.f32 %v4825, %v5184
      %v5321 = vadd.f32 %v4826, %v5193
      %v5322 = vadd.f32 %v4827, %v5194
      %v5323 = vadd.f32 %v4828, %v5203
      %v5324 = vadd.f32 %v4829, %v5204
      %v5325 = vadd.f32 %v4830, %v5213
      %v5326 = vadd.f32 %v4831, %v5214
      %v5327 = vadd.f32 %v4832, %v5223
      %v5328 = vadd.f32 %v4833, %v5224
      %v5329 = vadd.f32 %v4834, %v5233
      %v5330 = vadd.f32 %v4835, %v5234
      %v5331 = vadd.f32 %v4836, %v5243
      %v5332 = vadd.f32 %v4837, %v5244
      %v5333 = vadd.f32 %v4838, %v5253
      %v5334 = vadd.f32 %v4839, %v5254
      %v5335 = vadd.f32 %v4840, %v5263
      %v5336 = vadd.f32 %v4841, %v5264
      %v5337 = vadd.f32 %v4842, %v5273
      %v5338 = vadd.f32 %v4843, %v5274
      %v5339 = vperm.slane %v3188, 4
      %v5341 = vrot.slane %v5339, 2
      %v5342 = vrot.slane %v5339, 4
      %v5343 = vrot.slane %v5339, 6
      %v5344 = vrot.slane %v5339, 7
      %v5345 = vrot.slane %v5344, 2
      %v5346 = vrot.slane %v5341, 7
      %v5347 = vsel %vm3698, %v5345, %v5346
      %v5348 = vrot.slane %v5346, 2
      %v5349 = vrot.slane %v5342, 7
      %v5350 = vsel %vm3698, %v5348, %v5349
      %v5351 = vrot.slane %v5349, 2
      %v5352 = vrot.slane %v5343, 7
      %v5353 = vsel %vm3698, %v5351, %v5352
      %v5354 = vrot.slane %v5352, 2
      %v5355 = vsel %vm3698, %v5354, %v5344
      %v5362 = vmul.f32 %v3035, %v5344
      %v5363 = vmul.f32 %v3036, %v5347
      %v5364 = vmul.f32 %v3037, %v5350
      %v5365 = vmul.f32 %v3038, %v5353
      %v5366 = vmul.f32 %v3039, %v5355
      %v5367 = vmul.f32 %v3040, %v5347
      %v5368 = vmul.f32 %v3041, %v5350
      %v5369 = vmul.f32 %v3042, %v5353
      %v5370 = vmul.f32 %v3043, %v5354
      %v5371 = vmul.f32 %v3044, %v5344
      %v5372 = vmul.f32 %v3045, %v5347
      %v5373 = vmul.f32 %v3046, %v5350
      %v5374 = vmul.f32 %v3047, %v5353
      %v5375 = vmul.f32 %v3048, %v5355
      %v5376 = vmul.f32 %v3049, %v5347
      %v5377 = vmul.f32 %v3050, %v5350
      %v5378 = vmul.f32 %v3051, %v5353
      %v5379 = vmul.f32 %v3052, %v5354
      %v5380 = vmul.f32 %v3053, %v5344
      %v5381 = vmul.f32 %v3054, %v5347
      %v5382 = vmul.f32 %v3055, %v5350
      %v5383 = vmul.f32 %v3056, %v5353
      %v5384 = vmul.f32 %v3057, %v5355
      %v5385 = vmul.f32 %v3058, %v5347
      %v5386 = vmul.f32 %v3059, %v5350
      %v5387 = vmul.f32 %v3060, %v5353
      %v5388 = vmul.f32 %v3061, %v5354
      %v5389 = vmul.f32 %v3062, %v5344
      %v5390 = vmul.f32 %v3063, %v5347
      %v5391 = vmul.f32 %v3064, %v5350
      %v5392 = vmul.f32 %v3065, %v5353
      %v5393 = vmul.f32 %v3066, %v5355
      %v5394 = vmul.f32 %v3067, %v5347
      %v5395 = vmul.f32 %v3068, %v5350
      %v5396 = vmul.f32 %v3069, %v5353
      %v5397 = vmul.f32 %v3070, %v5354
      %v5398 = vmul.f32 %v3071, %v5344
      %v5399 = vmul.f32 %v3072, %v5347
      %v5400 = vmul.f32 %v3073, %v5350
      %v5401 = vmul.f32 %v3074, %v5353
      %v5402 = vmul.f32 %v3075, %v5355
      %v5403 = vmul.f32 %v3076, %v5347
      %v5404 = vmul.f32 %v3077, %v5350
      %v5405 = vmul.f32 %v3078, %v5353
      %v5406 = vmul.f32 %v3079, %v5354
      %v5407 = vmul.f32 %v3080, %v5344
      %v5408 = vmul.f32 %v3081, %v5347
      %v5409 = vmul.f32 %v3082, %v5350
      %v5410 = vmul.f32 %v3083, %v5353
      %v5411 = vmul.f32 %v3084, %v5355
      %v5412 = vmul.f32 %v3085, %v5347
      %v5413 = vmul.f32 %v3086, %v5350
      %v5414 = vmul.f32 %v3087, %v5353
      %v5415 = vmul.f32 %v3088, %v5354
      %v5416 = vmul.f32 %v3089, %v5344
      %v5417 = vmul.f32 %v3090, %v5347
      %v5418 = vmul.f32 %v3091, %v5350
      %v5419 = vmul.f32 %v3092, %v5353
      %v5420 = vmul.f32 %v3093, %v5355
      %v5421 = vmul.f32 %v3094, %v5347
      %v5422 = vmul.f32 %v3095, %v5350
      %v5423 = vmul.f32 %v3096, %v5353
      %v5424 = vmul.f32 %v3097, %v5354
      %v5425 = vmul.f32 %v3098, %v5344
      %v5426 = vmul.f32 %v3099, %v5347
      %v5427 = vmul.f32 %v3100, %v5350
      %v5428 = vmul.f32 %v3101, %v5353
      %v5429 = vmul.f32 %v3102, %v5355
      %v5430 = vmul.f32 %v3103, %v5347
      %v5431 = vmul.f32 %v3104, %v5350
      %v5432 = vmul.f32 %v3105, %v5353
      %v5433 = vmul.f32 %v3106, %v5354
      %v5434 = vmul.f32 %v3107, %v5344
      %v5435 = vmul.f32 %v3108, %v5347
      %v5436 = vmul.f32 %v3109, %v5350
      %v5437 = vmul.f32 %v3110, %v5353
      %v5438 = vmul.f32 %v3111, %v5355
      %v5439 = vmul.f32 %v3112, %v5347
      %v5440 = vmul.f32 %v3113, %v5350
      %v5441 = vmul.f32 %v3114, %v5353
      %v5442 = vmul.f32 %v3115, %v5354
      %v5443 = vmul.f32 %v3116, %v5344
      %v5444 = vmul.f32 %v3117, %v5347
      %v5445 = vmul.f32 %v3118, %v5350
      %v5446 = vmul.f32 %v3119, %v5353
      %v5447 = vmul.f32 %v3120, %v5355
      %v5448 = vmul.f32 %v3121, %v5347
      %v5449 = vmul.f32 %v3122, %v5350
      %v5450 = vmul.f32 %v3123, %v5353
      %v5451 = vmul.f32 %v3124, %v5354
      %v5452 = vmul.f32 %v3125, %v5344
      %v5453 = vmul.f32 %v3126, %v5347
      %v5454 = vmul.f32 %v3127, %v5350
      %v5455 = vmul.f32 %v3128, %v5353
      %v5456 = vmul.f32 %v3129, %v5355
      %v5457 = vmul.f32 %v3130, %v5347
      %v5458 = vmul.f32 %v3131, %v5350
      %v5459 = vmul.f32 %v3132, %v5353
      %v5460 = vmul.f32 %v3133, %v5354
      %v5461 = vmul.f32 %v3134, %v5344
      %v5462 = vmul.f32 %v3135, %v5347
      %v5463 = vmul.f32 %v3136, %v5350
      %v5464 = vmul.f32 %v3137, %v5353
      %v5465 = vmul.f32 %v3138, %v5355
      %v5466 = vmul.f32 %v3139, %v5347
      %v5467 = vmul.f32 %v3140, %v5350
      %v5468 = vmul.f32 %v3141, %v5353
      %v5469 = vmul.f32 %v3142, %v5354
      %v5470 = vmul.f32 %v3143, %v5344
      %v5471 = vmul.f32 %v3144, %v5347
      %v5472 = vmul.f32 %v3145, %v5350
      %v5473 = vmul.f32 %v3146, %v5353
      %v5474 = vmul.f32 %v3147, %v5355
      %v5475 = vmul.f32 %v3148, %v5347
      %v5476 = vmul.f32 %v3149, %v5350
      %v5477 = vmul.f32 %v3150, %v5353
      %v5478 = vmul.f32 %v3151, %v5354
      %v5479 = vmul.f32 %v3152, %v5344
      %v5480 = vmul.f32 %v3153, %v5347
      %v5481 = vmul.f32 %v3154, %v5350
      %v5482 = vmul.f32 %v3155, %v5353
      %v5483 = vmul.f32 %v3156, %v5355
      %v5484 = vmul.f32 %v3157, %v5347
      %v5485 = vmul.f32 %v3158, %v5350
      %v5486 = vmul.f32 %v3159, %v5353
      %v5487 = vmul.f32 %v3160, %v5354
      %v5488 = vmul.f32 %v3161, %v5344
      %v5489 = vmul.f32 %v3162, %v5347
      %v5490 = vmul.f32 %v3163, %v5350
      %v5491 = vmul.f32 %v3164, %v5353
      %v5492 = vmul.f32 %v3165, %v5355
      %v5493 = vmul.f32 %v3166, %v5347
      %v5494 = vmul.f32 %v3167, %v5350
      %v5495 = vmul.f32 %v3168, %v5353
      %v5496 = vmul.f32 %v3169, %v5354
      %v5497 = vmul.f32 %v3170, %v5344
      %v5498 = vmul.f32 %v3171, %v5347
      %v5499 = vmul.f32 %v3172, %v5350
      %v5500 = vmul.f32 %v3173, %v5353
      %v5501 = vmul.f32 %v3174, %v5355
      %v5502 = vmul.f32 %v3175, %v5347
      %v5503 = vmul.f32 %v3176, %v5350
      %v5504 = vmul.f32 %v3177, %v5353
      %v5505 = vmul.f32 %v3178, %v5354
      %5650 = vst [vmem:[#allocation1] ss:$4 sm:$0xff] %v5362
      %s5651 = scalar_lea.vmem [#allocation1], 1
      %5652 = vst [vmem:[%s5651] ss:$4 sm:$0xff] %v5363
      %s5653 = scalar_lea.vmem [#allocation1], 2
      %5654 = vst [vmem:[%s5653] ss:$4 sm:$0xff] %v5364
      %s5655 = scalar_lea.vmem [#allocation1], 3
      %5656 = vst [vmem:[%s5655] ss:$4 sm:$0xff] %v5365
      %s5657 = scalar_lea.vmem [#allocation1], 32
      %5658 = vst [vmem:[%s5657] ss:$4 sm:$0xff] %v5366
      %s5659 = scalar_lea.vmem [#allocation1], 33
      %5660 = vst [vmem:[%s5659] ss:$4 sm:$0xff] %v5367
      %s5661 = scalar_lea.vmem [#allocation1], 34
      %5662 = vst [vmem:[%s5661] ss:$4 sm:$0xff] %v5368
      %s5663 = scalar_lea.vmem [#allocation1], 35
      %5664 = vst [vmem:[%s5663] ss:$4 sm:$0xff] %v5369
      %v5665 = vld.sshfl [vmem:[#allocation1] sm:$0xff pattern:$0x73625140]
      %v5666 = vld.sshfl [vmem:[#allocation1 + $0x20] sm:$0xff pattern:$0x73625140]
      %5667 = vst [vmem:[#allocation1] ss:$4 sm:$0xff] %v5370
      %v5668 = vld.sshfl [vmem:[#allocation1] sm:$0xff pattern:$0x73625140]
      %5669 = vst [vmem:[%s5657] ss:$4 sm:$0xff] %v5371
      %5670 = vst [vmem:[%s5659] ss:$4 sm:$0xff] %v5372
      %5671 = vst [vmem:[%s5661] ss:$4 sm:$0xff] %v5373
      %5672 = vst [vmem:[%s5663] ss:$4 sm:$0xff] %v5374
      %v5673 = vld.sshfl [vmem:[#allocation1 + $0x20] sm:$0xff pattern:$0x73625140]
      %5674 = vst [vmem:[#allocation1] ss:$4 sm:$0xff] %v5375
      %5675 = vst [vmem:[%s5651] ss:$4 sm:$0xff] %v5376
      %5676 = vst [vmem:[%s5653] ss:$4 sm:$0xff] %v5377
      %5677 = vst [vmem:[%s5655] ss:$4 sm:$0xff] %v5378
      %5678 = vst [vmem:[%s5657] ss:$4 sm:$0xff] %v5379
      %v5679 = vld.sshfl [vmem:[#allocation1] sm:$0xff pattern:$0x73625140]
      %v5680 = vld.sshfl [vmem:[#allocation1 + $0x20] sm:$0xff pattern:$0x73625140]
      %5681 = vst [vmem:[#allocation1] ss:$4 sm:$0xff] %v5380
      %5682 = vst [vmem:[%s5651] ss:$4 sm:$0xff] %v5381
      %5683 = vst [vmem:[%s5653] ss:$4 sm:$0xff] %v5382
      %5684 = vst [vmem:[%s5655] ss:$4 sm:$0xff] %v5383
      %5685 = vst [vmem:[%s5657] ss:$4 sm:$0xff] %v5384
      %5686 = vst [vmem:[%s5659] ss:$4 sm:$0xff] %v5385
      %5687 = vst [vmem:[%s5661] ss:$4 sm:$0xff] %v5386
      %5688 = vst [vmem:[%s5663] ss:$4 sm:$0xff] %v5387
      %v5689 = vld.sshfl [vmem:[#allocation1] sm:$0xff pattern:$0x73625140]
      %v5690 = vld.sshfl [vmem:[#allocation1 + $0x20] sm:$0xff pattern:$0x73625140]
      %5691 = vst [vmem:[#allocation1] ss:$4 sm:$0xff] %v5388
      %v5692 = vld.sshfl [vmem:[#allocation1] sm:$0xff pattern:$0x73625140]
      %5693 = vst [vmem:[%s5657] ss:$4 sm:$0xff] %v5389
      %5694 = vst [vmem:[%s5659] ss:$4 sm:$0xff] %v5390
      %5695 = vst [vmem:[%s5661] ss:$4 sm:$0xff] %v5391
      %5696 = vst [vmem:[%s5663] ss:$4 sm:$0xff] %v5392
      %v5697 = vld.sshfl [vmem:[#allocation1 + $0x20] sm:$0xff pattern:$0x73625140]
      %5698 = vst [vmem:[#allocation1] ss:$4 sm:$0xff] %v5393
      %5699 = vst [vmem:[%s5651] ss:$4 sm:$0xff] %v5394
      %5700 = vst [vmem:[%s5653] ss:$4 sm:$0xff] %v5395
      %5701 = vst [vmem:[%s5655] ss:$4 sm:$0xff] %v5396
      %5702 = vst [vmem:[%s5657] ss:$4 sm:$0xff] %v5397
      %v5703 = vld.sshfl [vmem:[#allocation1] sm:$0xff pattern:$0x73625140]
      %v5704 = vld.sshfl [vmem:[#allocation1 + $0x20] sm:$0xff pattern:$0x73625140]
      %5705 = vst [vmem:[#allocation1] ss:$4 sm:$0xff] %v5398
      %5706 = vst [vmem:[%s5651] ss:$4 sm:$0xff] %v5399
      %5707 = vst [vmem:[%s5653] ss:$4 sm:$0xff] %v5400
      %5708 = vst [vmem:[%s5655] ss:$4 sm:$0xff] %v5401
      %5709 = vst [vmem:[%s5657] ss:$4 sm:$0xff] %v5402
      %5710 = vst [vmem:[%s5659] ss:$4 sm:$0xff] %v5403
      %5711 = vst [vmem:[%s5661] ss:$4 sm:$0xff] %v5404
      %5712 = vst [vmem:[%s5663] ss:$4 sm:$0xff] %v5405
      %v5713 = vld.sshfl [vmem:[#allocation1] sm:$0xff pattern:$0x73625140]
      %v5714 = vld.sshfl [vmem:[#allocation1 + $0x20] sm:$0xff pattern:$0x73625140]
      %5715 = vst [vmem:[#allocation1] ss:$4 sm:$0xff] %v5406
      %v5716 = vld.sshfl [vmem:[#allocation1] sm:$0xff pattern:$0x73625140]
      %5717 = vst [vmem:[%s5657] ss:$4 sm:$0xff] %v5407
      %5718 = vst [vmem:[%s5659] ss:$4 sm:$0xff] %v5408
      %5719 = vst [vmem:[%s5661] ss:$4 sm:$0xff] %v5409
      %5720 = vst [vmem:[%s5663] ss:$4 sm:$0xff] %v5410
      %v5721 = vld.sshfl [vmem:[#allocation1 + $0x20] sm:$0xff pattern:$0x73625140]
      %5722 = vst [vmem:[#allocation1] ss:$4 sm:$0xff] %v5411
      %5723 = vst [vmem:[%s5651] ss:$4 sm:$0xff] %v5412
      %5724 = vst [vmem:[%s5653] ss:$4 sm:$0xff] %v5413
      %5725 = vst [vmem:[%s5655] ss:$4 sm:$0xff] %v5414
      %5726 = vst [vmem:[%s5657] ss:$4 sm:$0xff] %v5415
      %v5727 = vld.sshfl [vmem:[#allocation1] sm:$0xff pattern:$0x73625140]
      %v5728 = vld.sshfl [vmem:[#allocation1 + $0x20] sm:$0xff pattern:$0x73625140]
      %5729 = vst [vmem:[#allocation1] ss:$4 sm:$0xff] %v5416
      %5730 = vst [vmem:[%s5651] ss:$4 sm:$0xff] %v5417
      %5731 = vst [vmem:[%s5653] ss:$4 sm:$0xff] %v5418
      %5732 = vst [vmem:[%s5655] ss:$4 sm:$0xff] %v5419
      %5733 = vst [vmem:[%s5657] ss:$4 sm:$0xff] %v5420
      %5734 = vst [vmem:[%s5659] ss:$4 sm:$0xff] %v5421
      %5735 = vst [vmem:[%s5661] ss:$4 sm:$0xff] %v5422
      %5736 = vst [vmem:[%s5663] ss:$4 sm:$0xff] %v5423
      %v5737 = vld.sshfl [vmem:[#allocation1] sm:$0xff pattern:$0x73625140]
      %v5738 = vld.sshfl [vmem:[#allocation1 + $0x20] sm:$0xff pattern:$0x73625140]
      %5739 = vst [vmem:[#allocation1] ss:$4 sm:$0xff] %v5424
      %v5740 = vld.sshfl [vmem:[#allocation1] sm:$0xff pattern:$0x73625140]
      %5741 = vst [vmem:[%s5657] ss:$4 sm:$0xff] %v5425
      %5742 = vst [vmem:[%s5659] ss:$4 sm:$0xff] %v5426
      %5743 = vst [vmem:[%s5661] ss:$4 sm:$0xff] %v5427
      %5744 = vst [vmem:[%s5663] ss:$4 sm:$0xff] %v5428
      %v5745 = vld.sshfl [vmem:[#allocation1 + $0x20] sm:$0xff pattern:$0x73625140]
      %5746 = vst [vmem:[#allocation1] ss:$4 sm:$0xff] %v5429
      %5747 = vst [vmem:[%s5651] ss:$4 sm:$0xff] %v5430
      %5748 = vst [vmem:[%s5653] ss:$4 sm:$0xff] %v5431
      %5749 = vst [vmem:[%s5655] ss:$4 sm:$0xff] %v5432
      %5750 = vst [vmem:[%s5657] ss:$4 sm:$0xff] %v5433
      %v5751 = vld.sshfl [vmem:[#allocation1] sm:$0xff pattern:$0x73625140]
      %v5752 = vld.sshfl [vmem:[#allocation1 + $0x20] sm:$0xff pattern:$0x73625140]
      %5753 = vst [vmem:[#allocation1] ss:$4 sm:$0xff] %v5434
      %5754 = vst [vmem:[%s5651] ss:$4 sm:$0xff] %v5435
      %5755 = vst [vmem:[%s5653] ss:$4 sm:$0xff] %v5436
      %5756 = vst [vmem:[%s5655] ss:$4 sm:$0xff] %v5437
      %5757 = vst [vmem:[%s5657] ss:$4 sm:$0xff] %v5438
      %5758 = vst [vmem:[%s5659] ss:$4 sm:$0xff] %v5439
      %5759 = vst [vmem:[%s5661] ss:$4 sm:$0xff] %v5440
      %5760 = vst [vmem:[%s5663] ss:$4 sm:$0xff] %v5441
      %v5761 = vld.sshfl [vmem:[#allocation1] sm:$0xff pattern:$0x73625140]
      %v5762 = vld.sshfl [vmem:[#allocation1 + $0x20] sm:$0xff pattern:$0x73625140]
      %5763 = vst [vmem:[#allocation1] ss:$4 sm:$0xff] %v5442
      %v5764 = vld.sshfl [vmem:[#allocation1] sm:$0xff pattern:$0x73625140]
      %5765 = vst [vmem:[%s5657] ss:$4 sm:$0xff] %v5443
      %5766 = vst [vmem:[%s5659] ss:$4 sm:$0xff] %v5444
      %5767 = vst [vmem:[%s5661] ss:$4 sm:$0xff] %v5445
      %5768 = vst [vmem:[%s5663] ss:$4 sm:$0xff] %v5446
      %v5769 = vld.sshfl [vmem:[#allocation1 + $0x20] sm:$0xff pattern:$0x73625140]
      %5770 = vst [vmem:[#allocation1] ss:$4 sm:$0xff] %v5447
      %5771 = vst [vmem:[%s5651] ss:$4 sm:$0xff] %v5448
      %5772 = vst [vmem:[%s5653] ss:$4 sm:$0xff] %v5449
      %5773 = vst [vmem:[%s5655] ss:$4 sm:$0xff] %v5450
      %5774 = vst [vmem:[%s5657] ss:$4 sm:$0xff] %v5451
      %v5775 = vld.sshfl [vmem:[#allocation1] sm:$0xff pattern:$0x73625140]
      %v5776 = vld.sshfl [vmem:[#allocation1 + $0x20] sm:$0xff pattern:$0x73625140]
      %5777 = vst [vmem:[#allocation1] ss:$4 sm:$0xff] %v5452
      %5778 = vst [vmem:[%s5651] ss:$4 sm:$0xff] %v5453
      %5779 = vst [vmem:[%s5653] ss:$4 sm:$0xff] %v5454
      %5780 = vst [vmem:[%s5655] ss:$4 sm:$0xff] %v5455
      %5781 = vst [vmem:[%s5657] ss:$4 sm:$0xff] %v5456
      %5782 = vst [vmem:[%s5659] ss:$4 sm:$0xff] %v5457
      %5783 = vst [vmem:[%s5661] ss:$4 sm:$0xff] %v5458
      %5784 = vst [vmem:[%s5663] ss:$4 sm:$0xff] %v5459
      %v5785 = vld.sshfl [vmem:[#allocation1] sm:$0xff pattern:$0x73625140]
      %v5786 = vld.sshfl [vmem:[#allocation1 + $0x20] sm:$0xff pattern:$0x73625140]
      %5787 = vst [vmem:[#allocation1] ss:$4 sm:$0xff] %v5460
      %v5788 = vld.sshfl [vmem:[#allocation1] sm:$0xff pattern:$0x73625140]
      %5789 = vst [vmem:[%s5657] ss:$4 sm:$0xff] %v5461
      %5790 = vst [vmem:[%s5659] ss:$4 sm:$0xff] %v5462
      %5791 = vst [vmem:[%s5661] ss:$4 sm:$0xff] %v5463
      %5792 = vst [vmem:[%s5663] ss:$4 sm:$0xff] %v5464
      %v5793 = vld.sshfl [vmem:[#allocation1 + $0x20] sm:$0xff pattern:$0x73625140]
      %5794 = vst [vmem:[#allocation1] ss:$4 sm:$0xff] %v5465
      %5795 = vst [vmem:[%s5651] ss:$4 sm:$0xff] %v5466
      %5796 = vst [vmem:[%s5653] ss:$4 sm:$0xff] %v5467
      %5797 = vst [vmem:[%s5655] ss:$4 sm:$0xff] %v5468
      %5798 = vst [vmem:[%s5657] ss:$4 sm:$0xff] %v5469
      %v5799 = vld.sshfl [vmem:[#allocation1] sm:$0xff pattern:$0x73625140]
      %v5800 = vld.sshfl [vmem:[#allocation1 + $0x20] sm:$0xff pattern:$0x73625140]
      %5801 = vst [vmem:[#allocation1] ss:$4 sm:$0xff] %v5470
      %5802 = vst [vmem:[%s5651] ss:$4 sm:$0xff] %v5471
      %5803 = vst [vmem:[%s5653] ss:$4 sm:$0xff] %v5472
      %5804 = vst [vmem:[%s5655] ss:$4 sm:$0xff] %v5473
      %5805 = vst [vmem:[%s5657] ss:$4 sm:$0xff] %v5474
      %5806 = vst [vmem:[%s5659] ss:$4 sm:$0xff] %v5475
      %5807 = vst [vmem:[%s5661] ss:$4 sm:$0xff] %v5476
      %5808 = vst [vmem:[%s5663] ss:$4 sm:$0xff] %v5477
      %v5809 = vld.sshfl [vmem:[#allocation1] sm:$0xff pattern:$0x73625140]
      %v5810 = vld.sshfl [vmem:[#allocation1 + $0x20] sm:$0xff pattern:$0x73625140]
      %5811 = vst [vmem:[#allocation1] ss:$4 sm:$0xff] %v5478
      %v5812 = vld.sshfl [vmem:[#allocation1] sm:$0xff pattern:$0x73625140]
      %5813 = vst [vmem:[%s5657] ss:$4 sm:$0xff] %v5479
      %5814 = vst [vmem:[%s5659] ss:$4 sm:$0xff] %v5480
      %5815 = vst [vmem:[%s5661] ss:$4 sm:$0xff] %v5481
      %5816 = vst [vmem:[%s5663] ss:$4 sm:$0xff] %v5482
      %v5817 = vld.sshfl [vmem:[#allocation1 + $0x20] sm:$0xff pattern:$0x73625140]
      %5818 = vst [vmem:[#allocation1] ss:$4 sm:$0xff] %v5483
      %5819 = vst [vmem:[%s5651] ss:$4 sm:$0xff] %v5484
      %5820 = vst [vmem:[%s5653] ss:$4 sm:$0xff] %v5485
      %5821 = vst [vmem:[%s5655] ss:$4 sm:$0xff] %v5486
      %5822 = vst [vmem:[%s5657] ss:$4 sm:$0xff] %v5487
      %v5823 = vld.sshfl [vmem:[#allocation1] sm:$0xff pattern:$0x73625140]
      %v5824 = vld.sshfl [vmem:[#allocation1 + $0x20] sm:$0xff pattern:$0x73625140]
      %5825 = vst [vmem:[#allocation1] ss:$4 sm:$0xff] %v5488
      %5826 = vst [vmem:[%s5651] ss:$4 sm:$0xff] %v5489
      %5827 = vst [vmem:[%s5653] ss:$4 sm:$0xff] %v5490
      %5828 = vst [vmem:[%s5655] ss:$4 sm:$0xff] %v5491
      %5829 = vst [vmem:[%s5657] ss:$4 sm:$0xff] %v5492
      %5830 = vst [vmem:[%s5659] ss:$4 sm:$0xff] %v5493
      %5831 = vst [vmem:[%s5661] ss:$4 sm:$0xff] %v5494
      %5832 = vst [vmem:[%s5663] ss:$4 sm:$0xff] %v5495
      %v5833 = vld.sshfl [vmem:[#allocation1] sm:$0xff pattern:$0x73625140]
      %v5834 = vld.sshfl [vmem:[#allocation1 + $0x20] sm:$0xff pattern:$0x73625140]
      %5835 = vst [vmem:[#allocation1] ss:$4 sm:$0xff] %v5496
      %v5836 = vld.sshfl [vmem:[#allocation1] sm:$0xff pattern:$0x73625140]
      %5837 = vst [vmem:[%s5657] ss:$4 sm:$0xff] %v5497
      %5838 = vst [vmem:[%s5659] ss:$4 sm:$0xff] %v5498
      %5839 = vst [vmem:[%s5661] ss:$4 sm:$0xff] %v5499
      %5840 = vst [vmem:[%s5663] ss:$4 sm:$0xff] %v5500
      %v5841 = vld.sshfl [vmem:[#allocation1 + $0x20] sm:$0xff pattern:$0x73625140]
      %5842 = vst [vmem:[#allocation1] ss:$4 sm:$0xff] %v5501
      %5843 = vst [vmem:[%s5651] ss:$4 sm:$0xff] %v5502
      %5844 = vst [vmem:[%s5653] ss:$4 sm:$0xff] %v5503
      %5845 = vst [vmem:[%s5655] ss:$4 sm:$0xff] %v5504
      %5846 = vst [vmem:[%s5657] ss:$4 sm:$0xff] %v5505
      %v5847 = vld.sshfl [vmem:[#allocation1] sm:$0xff pattern:$0x73625140]
      %v5848 = vld.sshfl [vmem:[#allocation1 + $0x20] sm:$0xff pattern:$0x73625140]
      %v5849 = vrot.slane %v5665, 1
      %v5850 = vrot.slane %v5666, 1
      %v5851 = vsel %vm4204, %v5849, %v5850
      %v5852 = vrot.slane %v5668, 1
      %v5853 = vsel %vm4204, %v5850, %v5852
      %v5854 = vrot.slane %v5673, 1
      %v5855 = vrot.slane %v5679, 1
      %v5856 = vsel %vm4204, %v5854, %v5855
      %v5857 = vrot.slane %v5680, 1
      %v5858 = vsel %vm4204, %v5855, %v5857
      %v5859 = vrot.slane %v5689, 1
      %v5860 = vrot.slane %v5690, 1
      %v5861 = vsel %vm4204, %v5859, %v5860
      %v5862 = vrot.slane %v5692, 1
      %v5863 = vsel %vm4204, %v5860, %v5862
      %v5864 = vrot.slane %v5697, 1
      %v5865 = vrot.slane %v5703, 1
      %v5866 = vsel %vm4204, %v5864, %v5865
      %v5867 = vrot.slane %v5704, 1
      %v5868 = vsel %vm4204, %v5865, %v5867
      %v5869 = vrot.slane %v5713, 1
      %v5870 = vrot.slane %v5714, 1
      %v5871 = vsel %vm4204, %v5869, %v5870
      %v5872 = vrot.slane %v5716, 1
      %v5873 = vsel %vm4204, %v5870, %v5872
      %v5874 = vrot.slane %v5721, 1
      %v5875 = vrot.slane %v5727, 1
      %v5876 = vsel %vm4204, %v5874, %v5875
      %v5877 = vrot.slane %v5728, 1
      %v5878 = vsel %vm4204, %v5875, %v5877
      %v5879 = vrot.slane %v5737, 1
      %v5880 = vrot.slane %v5738, 1
      %v5881 = vsel %vm4204, %v5879, %v5880
      %v5882 = vrot.slane %v5740, 1
      %v5883 = vsel %vm4204, %v5880, %v5882
      %v5884 = vrot.slane %v5745, 1
      %v5885 = vrot.slane %v5751, 1
      %v5886 = vsel %vm4204, %v5884, %v5885
      %v5887 = vrot.slane %v5752, 1
      %v5888 = vsel %vm4204, %v5885, %v5887
      %v5889 = vrot.slane %v5761, 1
      %v5890 = vrot.slane %v5762, 1
      %v5891 = vsel %vm4204, %v5889, %v5890
      %v5892 = vrot.slane %v5764, 1
      %v5893 = vsel %vm4204, %v5890, %v5892
      %v5894 = vrot.slane %v5769, 1
      %v5895 = vrot.slane %v5775, 1
      %v5896 = vsel %vm4204, %v5894, %v5895
      %v5897 = vrot.slane %v5776, 1
      %v5898 = vsel %vm4204, %v5895, %v5897
      %v5899 = vrot.slane %v5785, 1
      %v5900 = vrot.slane %v5786, 1
      %v5901 = vsel %vm4204, %v5899, %v5900
      %v5902 = vrot.slane %v5788, 1
      %v5903 = vsel %vm4204, %v5900, %v5902
      %v5904 = vrot.slane %v5793, 1
      %v5905 = vrot.slane %v5799, 1
      %v5906 = vsel %vm4204, %v5904, %v5905
      %v5907 = vrot.slane %v5800, 1
      %v5908 = vsel %vm4204, %v5905, %v5907
      %v5909 = vrot.slane %v5809, 1
      %v5910 = vrot.slane %v5810, 1
      %v5911 = vsel %vm4204, %v5909, %v5910
      %v5912 = vrot.slane %v5812, 1
      %v5913 = vsel %vm4204, %v5910, %v5912
      %v5914 = vrot.slane %v5817, 1
      %v5915 = vrot.slane %v5823, 1
      %v5916 = vsel %vm4204, %v5914, %v5915
      %v5917 = vrot.slane %v5824, 1
      %v5918 = vsel %vm4204, %v5915, %v5917
      %v5919 = vrot.slane %v5833, 1
      %v5920 = vrot.slane %v5834, 1
      %v5921 = vsel %vm4204, %v5919, %v5920
      %v5922 = vrot.slane %v5836, 1
      %v5923 = vsel %vm4204, %v5920, %v5922
      %v5924 = vrot.slane %v5841, 1
      %v5925 = vrot.slane %v5847, 1
      %v5926 = vsel %vm4204, %v5924, %v5925
      %v5927 = vrot.slane %v5848, 1
      %v5928 = vsel %vm4204, %v5925, %v5927
      %v5961 = vadd.f32 %v5307, %v5851
      %v5962 = vadd.f32 %v5308, %v5853
      %v5963 = vadd.f32 %v5309, %v5856
      %v5964 = vadd.f32 %v5310, %v5858
      %v5965 = vadd.f32 %v5311, %v5861
      %v5966 = vadd.f32 %v5312, %v5863
      %v5967 = vadd.f32 %v5313, %v5866
      %v5968 = vadd.f32 %v5314, %v5868
      %v5969 = vadd.f32 %v5315, %v5871
      %v5970 = vadd.f32 %v5316, %v5873
      %v5971 = vadd.f32 %v5317, %v5876
      %v5972 = vadd.f32 %v5318, %v5878
      %v5973 = vadd.f32 %v5319, %v5881
      %v5974 = vadd.f32 %v5320, %v5883
      %v5975 = vadd.f32 %v5321, %v5886
      %v5976 = vadd.f32 %v5322, %v5888
      %v5977 = vadd.f32 %v5323, %v5891
      %v5978 = vadd.f32 %v5324, %v5893
      %v5979 = vadd.f32 %v5325, %v5896
      %v5980 = vadd.f32 %v5326, %v5898
      %v5981 = vadd.f32 %v5327, %v5901
      %v5982 = vadd.f32 %v5328, %v5903
      %v5983 = vadd.f32 %v5329, %v5906
      %v5984 = vadd.f32 %v5330, %v5908
      %v5985 = vadd.f32 %v5331, %v5911
      %v5986 = vadd.f32 %v5332, %v5913
      %v5987 = vadd.f32 %v5333, %v5916
      %v5988 = vadd.f32 %v5334, %v5918
      %v5989 = vadd.f32 %v5335, %v5921
      %v5990 = vadd.f32 %v5336, %v5923
      %v5991 = vadd.f32 %v5337, %v5926
      %v5992 = vadd.f32 %v5338, %v5928
      %v5993 = vperm.slane %v3188, 5
      %v5995 = vrot.slane %v5993, 2
      %v5996 = vrot.slane %v5993, 4
      %v5997 = vrot.slane %v5993, 6
      %v6001 = vmul.f32 %v3036, %v5993
      %v6002 = vmul.f32 %v3037, %v5995
      %v6003 = vmul.f32 %v3038, %v5996
      %v6004 = vmul.f32 %v3039, %v5997
      %v6005 = vmul.f32 %v3040, %v5993
      %v6006 = vmul.f32 %v3041, %v5995
      %v6007 = vmul.f32 %v3042, %v5996
      %v6008 = vmul.f32 %v3043, %v5997
      %v6009 = vmul.f32 %v3045, %v5993
      %v6010 = vmul.f32 %v3046, %v5995
      %v6011 = vmul.f32 %v3047, %v5996
      %v6012 = vmul.f32 %v3048, %v5997
      %v6013 = vmul.f32 %v3049, %v5993
      %v6014 = vmul.f32 %v3050, %v5995
      %v6015 = vmul.f32 %v3051, %v5996
      %v6016 = vmul.f32 %v3052, %v5997
      %v6017 = vmul.f32 %v3054, %v5993
      %v6018 = vmul.f32 %v3055, %v5995
      %v6019 = vmul.f32 %v3056, %v5996
      %v6020 = vmul.f32 %v3057, %v5997
      %v6021 = vmul.f32 %v3058, %v5993
      %v6022 = vmul.f32 %v3059, %v5995
      %v6023 = vmul.f32 %v3060, %v5996
      %v6024 = vmul.f32 %v3061, %v5997
      %v6025 = vmul.f32 %v3063, %v5993
      %v6026 = vmul.f32 %v3064, %v5995
      %v6027 = vmul.f32 %v3065, %v5996
      %v6028 = vmul.f32 %v3066, %v5997
      %v6029 = vmul.f32 %v3067, %v5993
      %v6030 = vmul.f32 %v3068, %v5995
      %v6031 = vmul.f32 %v3069, %v5996
      %v6032 = vmul.f32 %v3070, %v5997
      %v6033 = vmul.f32 %v3072, %v5993
      %v6034 = vmul.f32 %v3073, %v5995
      %v6035 = vmul.f32 %v3074, %v5996
      %v6036 = vmul.f32 %v3075, %v5997
      %v6037 = vmul.f32 %v3076, %v5993
      %v6038 = vmul.f32 %v3077, %v5995
      %v6039 = vmul.f32 %v3078, %v5996
      %v6040 = vmul.f32 %v3079, %v5997
      %v6041 = vmul.f32 %v3081, %v5993
      %v6042 = vmul.f32 %v3082, %v5995
      %v6043 = vmul.f32 %v3083, %v5996
      %v6044 = vmul.f32 %v3084, %v5997
      %v6045 = vmul.f32 %v3085, %v5993
      %v6046 = vmul.f32 %v3086, %v5995
      %v6047 = vmul.f32 %v3087, %v5996
      %v6048 = vmul.f32 %v3088, %v5997
      %v6049 = vmul.f32 %v3090, %v5993
      %v6050 = vmul.f32 %v3091, %v5995
      %v6051 = vmul.f32 %v3092, %v5996
      %v6052 = vmul.f32 %v3093, %v5997
      %v6053 = vmul.f32 %v3094, %v5993
      %v6054 = vmul.f32 %v3095, %v5995
      %v6055 = vmul.f32 %v3096, %v5996
      %v6056 = vmul.f32 %v3097, %v5997
      %v6057 = vmul.f32 %v3099, %v5993
      %v6058 = vmul.f32 %v3100, %v5995
      %v6059 = vmul.f32 %v3101, %v5996
      %v6060 = vmul.f32 %v3102, %v5997
      %v6061 = vmul.f32 %v3103, %v5993
      %v6062 = vmul.f32 %v3104, %v5995
      %v6063 = vmul.f32 %v3105, %v5996
      %v6064 = vmul.f32 %v3106, %v5997
      %v6065 = vmul.f32 %v3108, %v5993
      %v6066 = vmul.f32 %v3109, %v5995
      %v6067 = vmul.f32 %v3110, %v5996
      %v6068 = vmul.f32 %v3111, %v5997
      %v6069 = vmul.f32 %v3112, %v5993
      %v6070 = vmul.f32 %v3113, %v5995
      %v6071 = vmul.f32 %v3114, %v5996
      %v6072 = vmul.f32 %v3115, %v5997
      %v6073 = vmul.f32 %v3117, %v5993
      %v6074 = vmul.f32 %v3118, %v5995
      %v6075 = vmul.f32 %v3119, %v5996
      %v6076 = vmul.f32 %v3120, %v5997
      %v6077 = vmul.f32 %v3121, %v5993
      %v6078 = vmul.f32 %v3122, %v5995
      %v6079 = vmul.f32 %v3123, %v5996
      %v6080 = vmul.f32 %v3124, %v5997
      %v6081 = vmul.f32 %v3126, %v5993
      %v6082 = vmul.f32 %v3127, %v5995
      %v6083 = vmul.f32 %v3128, %v5996
      %v6084 = vmul.f32 %v3129, %v5997
      %v6085 = vmul.f32 %v3130, %v5993
      %v6086 = vmul.f32 %v3131, %v5995
      %v6087 = vmul.f32 %v3132, %v5996
      %v6088 = vmul.f32 %v3133, %v5997
      %v6089 = vmul.f32 %v3135, %v5993
      %v6090 = vmul.f32 %v3136, %v5995
      %v6091 = vmul.f32 %v3137, %v5996
      %v6092 = vmul.f32 %v3138, %v5997
      %v6093 = vmul.f32 %v3139, %v5993
      %v6094 = vmul.f32 %v3140, %v5995
      %v6095 = vmul.f32 %v3141, %v5996
      %v6096 = vmul.f32 %v3142, %v5997
      %v6097 = vmul.f32 %v3144, %v5993
      %v6098 = vmul.f32 %v3145, %v5995
      %v6099 = vmul.f32 %v3146, %v5996
      %v6100 = vmul.f32 %v3147, %v5997
      %v6101 = vmul.f32 %v3148, %v5993
      %v6102 = vmul.f32 %v3149, %v5995
      %v6103 = vmul.f32 %v3150, %v5996
      %v6104 = vmul.f32 %v3151, %v5997
      %v6105 = vmul.f32 %v3153, %v5993
      %v6106 = vmul.f32 %v3154, %v5995
      %v6107 = vmul.f32 %v3155, %v5996
      %v6108 = vmul.f32 %v3156, %v5997
      %v6109 = vmul.f32 %v3157, %v5993
      %v6110 = vmul.f32 %v3158, %v5995
      %v6111 = vmul.f32 %v3159, %v5996
      %v6112 = vmul.f32 %v3160, %v5997
      %v6113 = vmul.f32 %v3162, %v5993
      %v6114 = vmul.f32 %v3163, %v5995
      %v6115 = vmul.f32 %v3164, %v5996
      %v6116 = vmul.f32 %v3165, %v5997
      %v6117 = vmul.f32 %v3166, %v5993
      %v6118 = vmul.f32 %v3167, %v5995
      %v6119 = vmul.f32 %v3168, %v5996
      %v6120 = vmul.f32 %v3169, %v5997
      %v6121 = vmul.f32 %v3171, %v5993
      %v6122 = vmul.f32 %v3172, %v5995
      %v6123 = vmul.f32 %v3173, %v5996
      %v6124 = vmul.f32 %v3174, %v5997
      %v6125 = vmul.f32 %v3175, %v5993
      %v6126 = vmul.f32 %v3176, %v5995
      %v6127 = vmul.f32 %v3177, %v5996
      %v6128 = vmul.f32 %v3178, %v5997
      %6257 = vst [vmem:[#allocation1] ss:$4 sm:$0xff] %v6001
      %s6258 = scalar_lea.vmem [#allocation1], 1
      %6259 = vst [vmem:[%s6258] ss:$4 sm:$0xff] %v6002
      %s6260 = scalar_lea.vmem [#allocation1], 2
      %6261 = vst [vmem:[%s6260] ss:$4 sm:$0xff] %v6003
      %s6262 = scalar_lea.vmem [#allocation1], 3
      %6263 = vst [vmem:[%s6262] ss:$4 sm:$0xff] %v6004
      %s6264 = scalar_lea.vmem [#allocation1], 32
      %6265 = vst [vmem:[%s6264] ss:$4 sm:$0xff] %v6005
      %s6266 = scalar_lea.vmem [#allocation1], 33
      %6267 = vst [vmem:[%s6266] ss:$4 sm:$0xff] %v6006
      %s6268 = scalar_lea.vmem [#allocation1], 34
      %6269 = vst [vmem:[%s6268] ss:$4 sm:$0xff] %v6007
      %s6270 = scalar_lea.vmem [#allocation1], 35
      %6271 = vst [vmem:[%s6270] ss:$4 sm:$0xff] %v6008
      %v6272 = vld.sshfl [vmem:[#allocation1] sm:$0xff pattern:$0x73625140]
      %v6273 = vld.sshfl [vmem:[#allocation1 + $0x20] sm:$0xff pattern:$0x73625140]
      %6274 = vst [vmem:[#allocation1] ss:$4 sm:$0xff] %v6009
      %6275 = vst [vmem:[%s6258] ss:$4 sm:$0xff] %v6010
      %6276 = vst [vmem:[%s6260] ss:$4 sm:$0xff] %v6011
      %6277 = vst [vmem:[%s6262] ss:$4 sm:$0xff] %v6012
      %6278 = vst [vmem:[%s6264] ss:$4 sm:$0xff] %v6013
      %6279 = vst [vmem:[%s6266] ss:$4 sm:$0xff] %v6014
      %6280 = vst [vmem:[%s6268] ss:$4 sm:$0xff] %v6015
      %6281 = vst [vmem:[%s6270] ss:$4 sm:$0xff] %v6016
      %v6282 = vld.sshfl [vmem:[#allocation1] sm:$0xff pattern:$0x73625140]
      %v6283 = vld.sshfl [vmem:[#allocation1 + $0x20] sm:$0xff pattern:$0x73625140]
      %6284 = vst [vmem:[#allocation1] ss:$4 sm:$0xff] %v6017
      %6285 = vst [vmem:[%s6258] ss:$4 sm:$0xff] %v6018
      %6286 = vst [vmem:[%s6260] ss:$4 sm:$0xff] %v6019
      %6287 = vst [vmem:[%s6262] ss:$4 sm:$0xff] %v6020
      %6288 = vst [vmem:[%s6264] ss:$4 sm:$0xff] %v6021
      %6289 = vst [vmem:[%s6266] ss:$4 sm:$0xff] %v6022
      %6290 = vst [vmem:[%s6268] ss:$4 sm:$0xff] %v6023
      %6291 = vst [vmem:[%s6270] ss:$4 sm:$0xff] %v6024
      %v6292 = vld.sshfl [vmem:[#allocation1] sm:$0xff pattern:$0x73625140]
      %v6293 = vld.sshfl [vmem:[#allocation1 + $0x20] sm:$0xff pattern:$0x73625140]
      %6294 = vst [vmem:[#allocation1] ss:$4 sm:$0xff] %v6025
      %6295 = vst [vmem:[%s6258] ss:$4 sm:$0xff] %v6026
      %6296 = vst [vmem:[%s6260] ss:$4 sm:$0xff] %v6027
      %6297 = vst [vmem:[%s6262] ss:$4 sm:$0xff] %v6028
      %6298 = vst [vmem:[%s6264] ss:$4 sm:$0xff] %v6029
      %6299 = vst [vmem:[%s6266] ss:$4 sm:$0xff] %v6030
      %6300 = vst [vmem:[%s6268] ss:$4 sm:$0xff] %v6031
      %6301 = vst [vmem:[%s6270] ss:$4 sm:$0xff] %v6032
      %v6302 = vld.sshfl [vmem:[#allocation1] sm:$0xff pattern:$0x73625140]
      %v6303 = vld.sshfl [vmem:[#allocation1 + $0x20] sm:$0xff pattern:$0x73625140]
      %6304 = vst [vmem:[#allocation1] ss:$4 sm:$0xff] %v6033
      %6305 = vst [vmem:[%s6258] ss:$4 sm:$0xff] %v6034
      %6306 = vst [vmem:[%s6260] ss:$4 sm:$0xff] %v6035
      %6307 = vst [vmem:[%s6262] ss:$4 sm:$0xff] %v6036
      %6308 = vst [vmem:[%s6264] ss:$4 sm:$0xff] %v6037
      %6309 = vst [vmem:[%s6266] ss:$4 sm:$0xff] %v6038
      %6310 = vst [vmem:[%s6268] ss:$4 sm:$0xff] %v6039
      %6311 = vst [vmem:[%s6270] ss:$4 sm:$0xff] %v6040
      %v6312 = vld.sshfl [vmem:[#allocation1] sm:$0xff pattern:$0x73625140]
      %v6313 = vld.sshfl [vmem:[#allocation1 + $0x20] sm:$0xff pattern:$0x73625140]
      %6314 = vst [vmem:[#allocation1] ss:$4 sm:$0xff] %v6041
      %6315 = vst [vmem:[%s6258] ss:$4 sm:$0xff] %v6042
      %6316 = vst [vmem:[%s6260] ss:$4 sm:$0xff] %v6043
      %6317 = vst [vmem:[%s6262] ss:$4 sm:$0xff] %v6044
      %6318 = vst [vmem:[%s6264] ss:$4 sm:$0xff] %v6045
      %6319 = vst [vmem:[%s6266] ss:$4 sm:$0xff] %v6046
      %6320 = vst [vmem:[%s6268] ss:$4 sm:$0xff] %v6047
      %6321 = vst [vmem:[%s6270] ss:$4 sm:$0xff] %v6048
      %v6322 = vld.sshfl [vmem:[#allocation1] sm:$0xff pattern:$0x73625140]
      %v6323 = vld.sshfl [vmem:[#allocation1 + $0x20] sm:$0xff pattern:$0x73625140]
      %6324 = vst [vmem:[#allocation1] ss:$4 sm:$0xff] %v6049
      %6325 = vst [vmem:[%s6258] ss:$4 sm:$0xff] %v6050
      %6326 = vst [vmem:[%s6260] ss:$4 sm:$0xff] %v6051
      %6327 = vst [vmem:[%s6262] ss:$4 sm:$0xff] %v6052
      %6328 = vst [vmem:[%s6264] ss:$4 sm:$0xff] %v6053
      %6329 = vst [vmem:[%s6266] ss:$4 sm:$0xff] %v6054
      %6330 = vst [vmem:[%s6268] ss:$4 sm:$0xff] %v6055
      %6331 = vst [vmem:[%s6270] ss:$4 sm:$0xff] %v6056
      %v6332 = vld.sshfl [vmem:[#allocation1] sm:$0xff pattern:$0x73625140]
      %v6333 = vld.sshfl [vmem:[#allocation1 + $0x20] sm:$0xff pattern:$0x73625140]
      %6334 = vst [vmem:[#allocation1] ss:$4 sm:$0xff] %v6057
      %6335 = vst [vmem:[%s6258] ss:$4 sm:$0xff] %v6058
      %6336 = vst [vmem:[%s6260] ss:$4 sm:$0xff] %v6059
      %6337 = vst [vmem:[%s6262] ss:$4 sm:$0xff] %v6060
      %6338 = vst [vmem:[%s6264] ss:$4 sm:$0xff] %v6061
      %6339 = vst [vmem:[%s6266] ss:$4 sm:$0xff] %v6062
      %6340 = vst [vmem:[%s6268] ss:$4 sm:$0xff] %v6063
      %6341 = vst [vmem:[%s6270] ss:$4 sm:$0xff] %v6064
      %v6342 = vld.sshfl [vmem:[#allocation1] sm:$0xff pattern:$0x73625140]
      %v6343 = vld.sshfl [vmem:[#allocation1 + $0x20] sm:$0xff pattern:$0x73625140]
      %6344 = vst [vmem:[#allocation1] ss:$4 sm:$0xff] %v6065
      %6345 = vst [vmem:[%s6258] ss:$4 sm:$0xff] %v6066
      %6346 = vst [vmem:[%s6260] ss:$4 sm:$0xff] %v6067
      %6347 = vst [vmem:[%s6262] ss:$4 sm:$0xff] %v6068
      %6348 = vst [vmem:[%s6264] ss:$4 sm:$0xff] %v6069
      %6349 = vst [vmem:[%s6266] ss:$4 sm:$0xff] %v6070
      %6350 = vst [vmem:[%s6268] ss:$4 sm:$0xff] %v6071
      %6351 = vst [vmem:[%s6270] ss:$4 sm:$0xff] %v6072
      %v6352 = vld.sshfl [vmem:[#allocation1] sm:$0xff pattern:$0x73625140]
      %v6353 = vld.sshfl [vmem:[#allocation1 + $0x20] sm:$0xff pattern:$0x73625140]
      %6354 = vst [vmem:[#allocation1] ss:$4 sm:$0xff] %v6073
      %6355 = vst [vmem:[%s6258] ss:$4 sm:$0xff] %v6074
      %6356 = vst [vmem:[%s6260] ss:$4 sm:$0xff] %v6075
      %6357 = vst [vmem:[%s6262] ss:$4 sm:$0xff] %v6076
      %6358 = vst [vmem:[%s6264] ss:$4 sm:$0xff] %v6077
      %6359 = vst [vmem:[%s6266] ss:$4 sm:$0xff] %v6078
      %6360 = vst [vmem:[%s6268] ss:$4 sm:$0xff] %v6079
      %6361 = vst [vmem:[%s6270] ss:$4 sm:$0xff] %v6080
      %v6362 = vld.sshfl [vmem:[#allocation1] sm:$0xff pattern:$0x73625140]
      %v6363 = vld.sshfl [vmem:[#allocation1 + $0x20] sm:$0xff pattern:$0x73625140]
      %6364 = vst [vmem:[#allocation1] ss:$4 sm:$0xff] %v6081
      %6365 = vst [vmem:[%s6258] ss:$4 sm:$0xff] %v6082
      %6366 = vst [vmem:[%s6260] ss:$4 sm:$0xff] %v6083
      %6367 = vst [vmem:[%s6262] ss:$4 sm:$0xff] %v6084
      %6368 = vst [vmem:[%s6264] ss:$4 sm:$0xff] %v6085
      %6369 = vst [vmem:[%s6266] ss:$4 sm:$0xff] %v6086
      %6370 = vst [vmem:[%s6268] ss:$4 sm:$0xff] %v6087
      %6371 = vst [vmem:[%s6270] ss:$4 sm:$0xff] %v6088
      %v6372 = vld.sshfl [vmem:[#allocation1] sm:$0xff pattern:$0x73625140]
      %v6373 = vld.sshfl [vmem:[#allocation1 + $0x20] sm:$0xff pattern:$0x73625140]
      %6374 = vst [vmem:[#allocation1] ss:$4 sm:$0xff] %v6089
      %6375 = vst [vmem:[%s6258] ss:$4 sm:$0xff] %v6090
      %6376 = vst [vmem:[%s6260] ss:$4 sm:$0xff] %v6091
      %6377 = vst [vmem:[%s6262] ss:$4 sm:$0xff] %v6092
      %6378 = vst [vmem:[%s6264] ss:$4 sm:$0xff] %v6093
      %6379 = vst [vmem:[%s6266] ss:$4 sm:$0xff] %v6094
      %6380 = vst [vmem:[%s6268] ss:$4 sm:$0xff] %v6095
      %6381 = vst [vmem:[%s6270] ss:$4 sm:$0xff] %v6096
      %v6382 = vld.sshfl [vmem:[#allocation1] sm:$0xff pattern:$0x73625140]
      %v6383 = vld.sshfl [vmem:[#allocation1 + $0x20] sm:$0xff pattern:$0x73625140]
      %6384 = vst [vmem:[#allocation1] ss:$4 sm:$0xff] %v6097
      %6385 = vst [vmem:[%s6258] ss:$4 sm:$0xff] %v6098
      %6386 = vst [vmem:[%s6260] ss:$4 sm:$0xff] %v6099
      %6387 = vst [vmem:[%s6262] ss:$4 sm:$0xff] %v6100
      %6388 = vst [vmem:[%s6264] ss:$4 sm:$0xff] %v6101
      %6389 = vst [vmem:[%s6266] ss:$4 sm:$0xff] %v6102
      %6390 = vst [vmem:[%s6268] ss:$4 sm:$0xff] %v6103
      %6391 = vst [vmem:[%s6270] ss:$4 sm:$0xff] %v6104
      %v6392 = vld.sshfl [vmem:[#allocation1] sm:$0xff pattern:$0x73625140]
      %v6393 = vld.sshfl [vmem:[#allocation1 + $0x20] sm:$0xff pattern:$0x73625140]
      %6394 = vst [vmem:[#allocation1] ss:$4 sm:$0xff] %v6105
      %6395 = vst [vmem:[%s6258] ss:$4 sm:$0xff] %v6106
      %6396 = vst [vmem:[%s6260] ss:$4 sm:$0xff] %v6107
      %6397 = vst [vmem:[%s6262] ss:$4 sm:$0xff] %v6108
      %6398 = vst [vmem:[%s6264] ss:$4 sm:$0xff] %v6109
      %6399 = vst [vmem:[%s6266] ss:$4 sm:$0xff] %v6110
      %6400 = vst [vmem:[%s6268] ss:$4 sm:$0xff] %v6111
      %6401 = vst [vmem:[%s6270] ss:$4 sm:$0xff] %v6112
      %v6402 = vld.sshfl [vmem:[#allocation1] sm:$0xff pattern:$0x73625140]
      %v6403 = vld.sshfl [vmem:[#allocation1 + $0x20] sm:$0xff pattern:$0x73625140]
      %6404 = vst [vmem:[#allocation1] ss:$4 sm:$0xff] %v6113
      %6405 = vst [vmem:[%s6258] ss:$4 sm:$0xff] %v6114
      %6406 = vst [vmem:[%s6260] ss:$4 sm:$0xff] %v6115
      %6407 = vst [vmem:[%s6262] ss:$4 sm:$0xff] %v6116
      %6408 = vst [vmem:[%s6264] ss:$4 sm:$0xff] %v6117
      %6409 = vst [vmem:[%s6266] ss:$4 sm:$0xff] %v6118
      %6410 = vst [vmem:[%s6268] ss:$4 sm:$0xff] %v6119
      %6411 = vst [vmem:[%s6270] ss:$4 sm:$0xff] %v6120
      %v6412 = vld.sshfl [vmem:[#allocation1] sm:$0xff pattern:$0x73625140]
      %v6413 = vld.sshfl [vmem:[#allocation1 + $0x20] sm:$0xff pattern:$0x73625140]
      %6414 = vst [vmem:[#allocation1] ss:$4 sm:$0xff] %v6121
      %6415 = vst [vmem:[%s6258] ss:$4 sm:$0xff] %v6122
      %6416 = vst [vmem:[%s6260] ss:$4 sm:$0xff] %v6123
      %6417 = vst [vmem:[%s6262] ss:$4 sm:$0xff] %v6124
      %6418 = vst [vmem:[%s6264] ss:$4 sm:$0xff] %v6125
      %6419 = vst [vmem:[%s6266] ss:$4 sm:$0xff] %v6126
      %6420 = vst [vmem:[%s6268] ss:$4 sm:$0xff] %v6127
      %6421 = vst [vmem:[%s6270] ss:$4 sm:$0xff] %v6128
      %v6422 = vld.sshfl [vmem:[#allocation1] sm:$0xff pattern:$0x73625140]
      %v6423 = vld.sshfl [vmem:[#allocation1 + $0x20] sm:$0xff pattern:$0x73625140]
      %v6456 = vadd.f32 %v5961, %v6272
      %v6457 = vadd.f32 %v5962, %v6273
      %v6458 = vadd.f32 %v5963, %v6282
      %v6459 = vadd.f32 %v5964, %v6283
      %v6460 = vadd.f32 %v5965, %v6292
      %v6461 = vadd.f32 %v5966, %v6293
      %v6462 = vadd.f32 %v5967, %v6302
      %v6463 = vadd.f32 %v5968, %v6303
      %v6464 = vadd.f32 %v5969, %v6312
      %v6465 = vadd.f32 %v5970, %v6313
      %v6466 = vadd.f32 %v5971, %v6322
      %v6467 = vadd.f32 %v5972, %v6323
      %v6468 = vadd.f32 %v5973, %v6332
      %v6469 = vadd.f32 %v5974, %v6333
      %v6470 = vadd.f32 %v5975, %v6342
      %v6471 = vadd.f32 %v5976, %v6343
      %v6472 = vadd.f32 %v5977, %v6352
      %v6473 = vadd.f32 %v5978, %v6353
      %v6474 = vadd.f32 %v5979, %v6362
      %v6475 = vadd.f32 %v5980, %v6363
      %v6476 = vadd.f32 %v5981, %v6372
      %v6477 = vadd.f32 %v5982, %v6373
      %v6478 = vadd.f32 %v5983, %v6382
      %v6479 = vadd.f32 %v5984, %v6383
      %v6480 = vadd.f32 %v5985, %v6392
      %v6481 = vadd.f32 %v5986, %v6393
      %v6482 = vadd.f32 %v5987, %v6402
      %v6483 = vadd.f32 %v5988, %v6403
      %v6484 = vadd.f32 %v5989, %v6412
      %v6485 = vadd.f32 %v5990, %v6413
      %v6486 = vadd.f32 %v5991, %v6422
      %v6487 = vadd.f32 %v5992, %v6423
      %v6488 = vperm.slane %v3188, 6
      %v6490 = vrot.slane %v6488, 2
      %v6491 = vrot.slane %v6488, 4
      %v6492 = vrot.slane %v6488, 6
      %v6496 = vmul.f32 %v3044, %v6488
      %v6497 = vmul.f32 %v3045, %v6490
      %v6498 = vmul.f32 %v3046, %v6491
      %v6499 = vmul.f32 %v3047, %v6492
      %v6500 = vmul.f32 %v3048, %v6488
      %v6501 = vmul.f32 %v3049, %v6490
      %v6502 = vmul.f32 %v3050, %v6491
      %v6503 = vmul.f32 %v3051, %v6492
      %v6504 = vmul.f32 %v3053, %v6488
      %v6505 = vmul.f32 %v3054, %v6490
      %v6506 = vmul.f32 %v3055, %v6491
      %v6507 = vmul.f32 %v3056, %v6492
      %v6508 = vmul.f32 %v3057, %v6488
      %v6509 = vmul.f32 %v3058, %v6490
      %v6510 = vmul.f32 %v3059, %v6491
      %v6511 = vmul.f32 %v3060, %v6492
      %v6512 = vmul.f32 %v3062, %v6488
      %v6513 = vmul.f32 %v3063, %v6490
      %v6514 = vmul.f32 %v3064, %v6491
      %v6515 = vmul.f32 %v3065, %v6492
      %v6516 = vmul.f32 %v3066, %v6488
      %v6517 = vmul.f32 %v3067, %v6490
      %v6518 = vmul.f32 %v3068, %v6491
      %v6519 = vmul.f32 %v3069, %v6492
      %v6520 = vmul.f32 %v3071, %v6488
      %v6521 = vmul.f32 %v3072, %v6490
      %v6522 = vmul.f32 %v3073, %v6491
      %v6523 = vmul.f32 %v3074, %v6492
      %v6524 = vmul.f32 %v3075, %v6488
      %v6525 = vmul.f32 %v3076, %v6490
      %v6526 = vmul.f32 %v3077, %v6491
      %v6527 = vmul.f32 %v3078, %v6492
      %v6528 = vmul.f32 %v3080, %v6488
      %v6529 = vmul.f32 %v3081, %v6490
      %v6530 = vmul.f32 %v3082, %v6491
      %v6531 = vmul.f32 %v3083, %v6492
      %v6532 = vmul.f32 %v3084, %v6488
      %v6533 = vmul.f32 %v3085, %v6490
      %v6534 = vmul.f32 %v3086, %v6491
      %v6535 = vmul.f32 %v3087, %v6492
      %v6536 = vmul.f32 %v3089, %v6488
      %v6537 = vmul.f32 %v3090, %v6490
      %v6538 = vmul.f32 %v3091, %v6491
      %v6539 = vmul.f32 %v3092, %v6492
      %v6540 = vmul.f32 %v3093, %v6488
      %v6541 = vmul.f32 %v3094, %v6490
      %v6542 = vmul.f32 %v3095, %v6491
      %v6543 = vmul.f32 %v3096, %v6492
      %v6544 = vmul.f32 %v3098, %v6488
      %v6545 = vmul.f32 %v3099, %v6490
      %v6546 = vmul.f32 %v3100, %v6491
      %v6547 = vmul.f32 %v3101, %v6492
      %v6548 = vmul.f32 %v3102, %v6488
      %v6549 = vmul.f32 %v3103, %v6490
      %v6550 = vmul.f32 %v3104, %v6491
      %v6551 = vmul.f32 %v3105, %v6492
      %v6552 = vmul.f32 %v3107, %v6488
      %v6553 = vmul.f32 %v3108, %v6490
      %v6554 = vmul.f32 %v3109, %v6491
      %v6555 = vmul.f32 %v3110, %v6492
      %v6556 = vmul.f32 %v3111, %v6488
      %v6557 = vmul.f32 %v3112, %v6490
      %v6558 = vmul.f32 %v3113, %v6491
      %v6559 = vmul.f32 %v3114, %v6492
      %v6560 = vmul.f32 %v3116, %v6488
      %v6561 = vmul.f32 %v3117, %v6490
      %v6562 = vmul.f32 %v3118, %v6491
      %v6563 = vmul.f32 %v3119, %v6492
      %v6564 = vmul.f32 %v3120, %v6488
      %v6565 = vmul.f32 %v3121, %v6490
      %v6566 = vmul.f32 %v3122, %v6491
      %v6567 = vmul.f32 %v3123, %v6492
      %v6568 = vmul.f32 %v3125, %v6488
      %v6569 = vmul.f32 %v3126, %v6490
      %v6570 = vmul.f32 %v3127, %v6491
      %v6571 = vmul.f32 %v3128, %v6492
      %v6572 = vmul.f32 %v3129, %v6488
      %v6573 = vmul.f32 %v3130, %v6490
      %v6574 = vmul.f32 %v3131, %v6491
      %v6575 = vmul.f32 %v3132, %v6492
      %v6576 = vmul.f32 %v3134, %v6488
      %v6577 = vmul.f32 %v3135, %v6490
      %v6578 = vmul.f32 %v3136, %v6491
      %v6579 = vmul.f32 %v3137, %v6492
      %v6580 = vmul.f32 %v3138, %v6488
      %v6581 = vmul.f32 %v3139, %v6490
      %v6582 = vmul.f32 %v3140, %v6491
      %v6583 = vmul.f32 %v3141, %v6492
      %v6584 = vmul.f32 %v3143, %v6488
      %v6585 = vmul.f32 %v3144, %v6490
      %v6586 = vmul.f32 %v3145, %v6491
      %v6587 = vmul.f32 %v3146, %v6492
      %v6588 = vmul.f32 %v3147, %v6488
      %v6589 = vmul.f32 %v3148, %v6490
      %v6590 = vmul.f32 %v3149, %v6491
      %v6591 = vmul.f32 %v3150, %v6492
      %v6592 = vmul.f32 %v3152, %v6488
      %v6593 = vmul.f32 %v3153, %v6490
      %v6594 = vmul.f32 %v3154, %v6491
      %v6595 = vmul.f32 %v3155, %v6492
      %v6596 = vmul.f32 %v3156, %v6488
      %v6597 = vmul.f32 %v3157, %v6490
      %v6598 = vmul.f32 %v3158, %v6491
      %v6599 = vmul.f32 %v3159, %v6492
      %v6600 = vmul.f32 %v3161, %v6488
      %v6601 = vmul.f32 %v3162, %v6490
      %v6602 = vmul.f32 %v3163, %v6491
      %v6603 = vmul.f32 %v3164, %v6492
      %v6604 = vmul.f32 %v3165, %v6488
      %v6605 = vmul.f32 %v3166, %v6490
      %v6606 = vmul.f32 %v3167, %v6491
      %v6607 = vmul.f32 %v3168, %v6492
      %v6608 = vmul.f32 %v3170, %v6488
      %v6609 = vmul.f32 %v3171, %v6490
      %v6610 = vmul.f32 %v3172, %v6491
      %v6611 = vmul.f32 %v3173, %v6492
      %v6612 = vmul.f32 %v3174, %v6488
      %v6613 = vmul.f32 %v3175, %v6490
      %v6614 = vmul.f32 %v3176, %v6491
      %v6615 = vmul.f32 %v3177, %v6492
      %v6616 = vmul.f32 %v3179, %v6488
      %v6617 = vmul.f32 %v3180, %v6490
      %v6618 = vmul.f32 %v3181, %v6491
      %v6619 = vmul.f32 %v3182, %v6492
      %v6620 = vmul.f32 %v3183, %v6488
      %v6621 = vmul.f32 %v3184, %v6490
      %v6622 = vmul.f32 %v3185, %v6491
      %v6623 = vmul.f32 %v3186, %v6492
      %6752 = vst [vmem:[#allocation1] ss:$4 sm:$0xff] %v6496
      %s6753 = scalar_lea.vmem [#allocation1], 1
      %6754 = vst [vmem:[%s6753] ss:$4 sm:$0xff] %v6497
      %s6755 = scalar_lea.vmem [#allocation1], 2
      %6756 = vst [vmem:[%s6755] ss:$4 sm:$0xff] %v6498
      %s6757 = scalar_lea.vmem [#allocation1], 3
      %6758 = vst [vmem:[%s6757] ss:$4 sm:$0xff] %v6499
      %s6759 = scalar_lea.vmem [#allocation1], 32
      %6760 = vst [vmem:[%s6759] ss:$4 sm:$0xff] %v6500
      %s6761 = scalar_lea.vmem [#allocation1], 33
      %6762 = vst [vmem:[%s6761] ss:$4 sm:$0xff] %v6501
      %s6763 = scalar_lea.vmem [#allocation1], 34
      %6764 = vst [vmem:[%s6763] ss:$4 sm:$0xff] %v6502
      %s6765 = scalar_lea.vmem [#allocation1], 35
      %6766 = vst [vmem:[%s6765] ss:$4 sm:$0xff] %v6503
      %v6767 = vld.sshfl [vmem:[#allocation1] sm:$0xff pattern:$0x73625140]
      %v6768 = vld.sshfl [vmem:[#allocation1 + $0x20] sm:$0xff pattern:$0x73625140]
      %6769 = vst [vmem:[#allocation1] ss:$4 sm:$0xff] %v6504
      %6770 = vst [vmem:[%s6753] ss:$4 sm:$0xff] %v6505
      %6771 = vst [vmem:[%s6755] ss:$4 sm:$0xff] %v6506
      %6772 = vst [vmem:[%s6757] ss:$4 sm:$0xff] %v6507
      %6773 = vst [vmem:[%s6759] ss:$4 sm:$0xff] %v6508
      %6774 = vst [vmem:[%s6761] ss:$4 sm:$0xff] %v6509
      %6775 = vst [vmem:[%s6763] ss:$4 sm:$0xff] %v6510
      %6776 = vst [vmem:[%s6765] ss:$4 sm:$0xff] %v6511
      %v6777 = vld.sshfl [vmem:[#allocation1] sm:$0xff pattern:$0x73625140]
      %v6778 = vld.sshfl [vmem:[#allocation1 + $0x20] sm:$0xff pattern:$0x73625140]
      %6779 = vst [vmem:[#allocation1] ss:$4 sm:$0xff] %v6512
      %6780 = vst [vmem:[%s6753] ss:$4 sm:$0xff] %v6513
      %6781 = vst [vmem:[%s6755] ss:$4 sm:$0xff] %v6514
      %6782 = vst [vmem:[%s6757] ss:$4 sm:$0xff] %v6515
      %6783 = vst [vmem:[%s6759] ss:$4 sm:$0xff] %v6516
      %6784 = vst [vmem:[%s6761] ss:$4 sm:$0xff] %v6517
      %6785 = vst [vmem:[%s6763] ss:$4 sm:$0xff] %v6518
      %6786 = vst [vmem:[%s6765] ss:$4 sm:$0xff] %v6519
      %v6787 = vld.sshfl [vmem:[#allocation1] sm:$0xff pattern:$0x73625140]
      %v6788 = vld.sshfl [vmem:[#allocation1 + $0x20] sm:$0xff pattern:$0x73625140]
      %6789 = vst [vmem:[#allocation1] ss:$4 sm:$0xff] %v6520
      %6790 = vst [vmem:[%s6753] ss:$4 sm:$0xff] %v6521
      %6791 = vst [vmem:[%s6755] ss:$4 sm:$0xff] %v6522
      %6792 = vst [vmem:[%s6757] ss:$4 sm:$0xff] %v6523
      %6793 = vst [vmem:[%s6759] ss:$4 sm:$0xff] %v6524
      %6794 = vst [vmem:[%s6761] ss:$4 sm:$0xff] %v6525
      %6795 = vst [vmem:[%s6763] ss:$4 sm:$0xff] %v6526
      %6796 = vst [vmem:[%s6765] ss:$4 sm:$0xff] %v6527
      %v6797 = vld.sshfl [vmem:[#allocation1] sm:$0xff pattern:$0x73625140]
      %v6798 = vld.sshfl [vmem:[#allocation1 + $0x20] sm:$0xff pattern:$0x73625140]
      %6799 = vst [vmem:[#allocation1] ss:$4 sm:$0xff] %v6528
      %6800 = vst [vmem:[%s6753] ss:$4 sm:$0xff] %v6529
      %6801 = vst [vmem:[%s6755] ss:$4 sm:$0xff] %v6530
      %6802 = vst [vmem:[%s6757] ss:$4 sm:$0xff] %v6531
      %6803 = vst [vmem:[%s6759] ss:$4 sm:$0xff] %v6532
      %6804 = vst [vmem:[%s6761] ss:$4 sm:$0xff] %v6533
      %6805 = vst [vmem:[%s6763] ss:$4 sm:$0xff] %v6534
      %6806 = vst [vmem:[%s6765] ss:$4 sm:$0xff] %v6535
      %v6807 = vld.sshfl [vmem:[#allocation1] sm:$0xff pattern:$0x73625140]
      %v6808 = vld.sshfl [vmem:[#allocation1 + $0x20] sm:$0xff pattern:$0x73625140]
      %6809 = vst [vmem:[#allocation1] ss:$4 sm:$0xff] %v6536
      %6810 = vst [vmem:[%s6753] ss:$4 sm:$0xff] %v6537
      %6811 = vst [vmem:[%s6755] ss:$4 sm:$0xff] %v6538
      %6812 = vst [vmem:[%s6757] ss:$4 sm:$0xff] %v6539
      %6813 = vst [vmem:[%s6759] ss:$4 sm:$0xff] %v6540
      %6814 = vst [vmem:[%s6761] ss:$4 sm:$0xff] %v6541
      %6815 = vst [vmem:[%s6763] ss:$4 sm:$0xff] %v6542
      %6816 = vst [vmem:[%s6765] ss:$4 sm:$0xff] %v6543
      %v6817 = vld.sshfl [vmem:[#allocation1] sm:$0xff pattern:$0x73625140]
      %v6818 = vld.sshfl [vmem:[#allocation1 + $0x20] sm:$0xff pattern:$0x73625140]
      %6819 = vst [vmem:[#allocation1] ss:$4 sm:$0xff] %v6544
      %6820 = vst [vmem:[%s6753] ss:$4 sm:$0xff] %v6545
      %6821 = vst [vmem:[%s6755] ss:$4 sm:$0xff] %v6546
      %6822 = vst [vmem:[%s6757] ss:$4 sm:$0xff] %v6547
      %6823 = vst [vmem:[%s6759] ss:$4 sm:$0xff] %v6548
      %6824 = vst [vmem:[%s6761] ss:$4 sm:$0xff] %v6549
      %6825 = vst [vmem:[%s6763] ss:$4 sm:$0xff] %v6550
      %6826 = vst [vmem:[%s6765] ss:$4 sm:$0xff] %v6551
      %v6827 = vld.sshfl [vmem:[#allocation1] sm:$0xff pattern:$0x73625140]
      %v6828 = vld.sshfl [vmem:[#allocation1 + $0x20] sm:$0xff pattern:$0x73625140]
      %6829 = vst [vmem:[#allocation1] ss:$4 sm:$0xff] %v6552
      %6830 = vst [vmem:[%s6753] ss:$4 sm:$0xff] %v6553
      %6831 = vst [vmem:[%s6755] ss:$4 sm:$0xff] %v6554
      %6832 = vst [vmem:[%s6757] ss:$4 sm:$0xff] %v6555
      %6833 = vst [vmem:[%s6759] ss:$4 sm:$0xff] %v6556
      %6834 = vst [vmem:[%s6761] ss:$4 sm:$0xff] %v6557
      %6835 = vst [vmem:[%s6763] ss:$4 sm:$0xff] %v6558
      %6836 = vst [vmem:[%s6765] ss:$4 sm:$0xff] %v6559
      %v6837 = vld.sshfl [vmem:[#allocation1] sm:$0xff pattern:$0x73625140]
      %v6838 = vld.sshfl [vmem:[#allocation1 + $0x20] sm:$0xff pattern:$0x73625140]
      %6839 = vst [vmem:[#allocation1] ss:$4 sm:$0xff] %v6560
      %6840 = vst [vmem:[%s6753] ss:$4 sm:$0xff] %v6561
      %6841 = vst [vmem:[%s6755] ss:$4 sm:$0xff] %v6562
      %6842 = vst [vmem:[%s6757] ss:$4 sm:$0xff] %v6563
      %6843 = vst [vmem:[%s6759] ss:$4 sm:$0xff] %v6564
      %6844 = vst [vmem:[%s6761] ss:$4 sm:$0xff] %v6565
      %6845 = vst [vmem:[%s6763] ss:$4 sm:$0xff] %v6566
      %6846 = vst [vmem:[%s6765] ss:$4 sm:$0xff] %v6567
      %v6847 = vld.sshfl [vmem:[#allocation1] sm:$0xff pattern:$0x73625140]
      %v6848 = vld.sshfl [vmem:[#allocation1 + $0x20] sm:$0xff pattern:$0x73625140]
      %6849 = vst [vmem:[#allocation1] ss:$4 sm:$0xff] %v6568
      %6850 = vst [vmem:[%s6753] ss:$4 sm:$0xff] %v6569
      %6851 = vst [vmem:[%s6755] ss:$4 sm:$0xff] %v6570
      %6852 = vst [vmem:[%s6757] ss:$4 sm:$0xff] %v6571
      %6853 = vst [vmem:[%s6759] ss:$4 sm:$0xff] %v6572
      %6854 = vst [vmem:[%s6761] ss:$4 sm:$0xff] %v6573
      %6855 = vst [vmem:[%s6763] ss:$4 sm:$0xff] %v6574
      %6856 = vst [vmem:[%s6765] ss:$4 sm:$0xff] %v6575
      %v6857 = vld.sshfl [vmem:[#allocation1] sm:$0xff pattern:$0x73625140]
      %v6858 = vld.sshfl [vmem:[#allocation1 + $0x20] sm:$0xff pattern:$0x73625140]
      %6859 = vst [vmem:[#allocation1] ss:$4 sm:$0xff] %v6576
      %6860 = vst [vmem:[%s6753] ss:$4 sm:$0xff] %v6577
      %6861 = vst [vmem:[%s6755] ss:$4 sm:$0xff] %v6578
      %6862 = vst [vmem:[%s6757] ss:$4 sm:$0xff] %v6579
      %6863 = vst [vmem:[%s6759] ss:$4 sm:$0xff] %v6580
      %6864 = vst [vmem:[%s6761] ss:$4 sm:$0xff] %v6581
      %6865 = vst [vmem:[%s6763] ss:$4 sm:$0xff] %v6582
      %6866 = vst [vmem:[%s6765] ss:$4 sm:$0xff] %v6583
      %v6867 = vld.sshfl [vmem:[#allocation1] sm:$0xff pattern:$0x73625140]
      %v6868 = vld.sshfl [vmem:[#allocation1 + $0x20] sm:$0xff pattern:$0x73625140]
      %6869 = vst [vmem:[#allocation1] ss:$4 sm:$0xff] %v6584
      %6870 = vst [vmem:[%s6753] ss:$4 sm:$0xff] %v6585
      %6871 = vst [vmem:[%s6755] ss:$4 sm:$0xff] %v6586
      %6872 = vst [vmem:[%s6757] ss:$4 sm:$0xff] %v6587
      %6873 = vst [vmem:[%s6759] ss:$4 sm:$0xff] %v6588
      %6874 = vst [vmem:[%s6761] ss:$4 sm:$0xff] %v6589
      %6875 = vst [vmem:[%s6763] ss:$4 sm:$0xff] %v6590
      %6876 = vst [vmem:[%s6765] ss:$4 sm:$0xff] %v6591
      %v6877 = vld.sshfl [vmem:[#allocation1] sm:$0xff pattern:$0x73625140]
      %v6878 = vld.sshfl [vmem:[#allocation1 + $0x20] sm:$0xff pattern:$0x73625140]
      %6879 = vst [vmem:[#allocation1] ss:$4 sm:$0xff] %v6592
      %6880 = vst [vmem:[%s6753] ss:$4 sm:$0xff] %v6593
      %6881 = vst [vmem:[%s6755] ss:$4 sm:$0xff] %v6594
      %6882 = vst [vmem:[%s6757] ss:$4 sm:$0xff] %v6595
      %6883 = vst [vmem:[%s6759] ss:$4 sm:$0xff] %v6596
      %6884 = vst [vmem:[%s6761] ss:$4 sm:$0xff] %v6597
      %6885 = vst [vmem:[%s6763] ss:$4 sm:$0xff] %v6598
      %6886 = vst [vmem:[%s6765] ss:$4 sm:$0xff] %v6599
      %v6887 = vld.sshfl [vmem:[#allocation1] sm:$0xff pattern:$0x73625140]
      %v6888 = vld.sshfl [vmem:[#allocation1 + $0x20] sm:$0xff pattern:$0x73625140]
      %6889 = vst [vmem:[#allocation1] ss:$4 sm:$0xff] %v6600
      %6890 = vst [vmem:[%s6753] ss:$4 sm:$0xff] %v6601
      %6891 = vst [vmem:[%s6755] ss:$4 sm:$0xff] %v6602
      %6892 = vst [vmem:[%s6757] ss:$4 sm:$0xff] %v6603
      %6893 = vst [vmem:[%s6759] ss:$4 sm:$0xff] %v6604
      %6894 = vst [vmem:[%s6761] ss:$4 sm:$0xff] %v6605
      %6895 = vst [vmem:[%s6763] ss:$4 sm:$0xff] %v6606
      %6896 = vst [vmem:[%s6765] ss:$4 sm:$0xff] %v6607
      %v6897 = vld.sshfl [vmem:[#allocation1] sm:$0xff pattern:$0x73625140]
      %v6898 = vld.sshfl [vmem:[#allocation1 + $0x20] sm:$0xff pattern:$0x73625140]
      %6899 = vst [vmem:[#allocation1] ss:$4 sm:$0xff] %v6608
      %6900 = vst [vmem:[%s6753] ss:$4 sm:$0xff] %v6609
      %6901 = vst [vmem:[%s6755] ss:$4 sm:$0xff] %v6610
      %6902 = vst [vmem:[%s6757] ss:$4 sm:$0xff] %v6611
      %6903 = vst [vmem:[%s6759] ss:$4 sm:$0xff] %v6612
      %6904 = vst [vmem:[%s6761] ss:$4 sm:$0xff] %v6613
      %6905 = vst [vmem:[%s6763] ss:$4 sm:$0xff] %v6614
      %6906 = vst [vmem:[%s6765] ss:$4 sm:$0xff] %v6615
      %v6907 = vld.sshfl [vmem:[#allocation1] sm:$0xff pattern:$0x73625140]
      %v6908 = vld.sshfl [vmem:[#allocation1 + $0x20] sm:$0xff pattern:$0x73625140]
      %6909 = vst [vmem:[#allocation1] ss:$4 sm:$0xff] %v6616
      %6910 = vst [vmem:[%s6753] ss:$4 sm:$0xff] %v6617
      %6911 = vst [vmem:[%s6755] ss:$4 sm:$0xff] %v6618
      %6912 = vst [vmem:[%s6757] ss:$4 sm:$0xff] %v6619
      %6913 = vst [vmem:[%s6759] ss:$4 sm:$0xff] %v6620
      %6914 = vst [vmem:[%s6761] ss:$4 sm:$0xff] %v6621
      %6915 = vst [vmem:[%s6763] ss:$4 sm:$0xff] %v6622
      %6916 = vst [vmem:[%s6765] ss:$4 sm:$0xff] %v6623
      %v6917 = vld.sshfl [vmem:[#allocation1] sm:$0xff pattern:$0x73625140]
      %v6918 = vld.sshfl [vmem:[#allocation1 + $0x20] sm:$0xff pattern:$0x73625140]
      %v6951 = vadd.f32 %v6456, %v6767
      %v6952 = vadd.f32 %v6457, %v6768
      %v6953 = vadd.f32 %v6458, %v6777
      %v6954 = vadd.f32 %v6459, %v6778
      %v6955 = vadd.f32 %v6460, %v6787
      %v6956 = vadd.f32 %v6461, %v6788
      %v6957 = vadd.f32 %v6462, %v6797
      %v6958 = vadd.f32 %v6463, %v6798
      %v6959 = vadd.f32 %v6464, %v6807
      %v6960 = vadd.f32 %v6465, %v6808
      %v6961 = vadd.f32 %v6466, %v6817
      %v6962 = vadd.f32 %v6467, %v6818
      %v6963 = vadd.f32 %v6468, %v6827
      %v6964 = vadd.f32 %v6469, %v6828
      %v6965 = vadd.f32 %v6470, %v6837
      %v6966 = vadd.f32 %v6471, %v6838
      %v6967 = vadd.f32 %v6472, %v6847
      %v6968 = vadd.f32 %v6473, %v6848
      %v6969 = vadd.f32 %v6474, %v6857
      %v6970 = vadd.f32 %v6475, %v6858
      %v6971 = vadd.f32 %v6476, %v6867
      %v6972 = vadd.f32 %v6477, %v6868
      %v6973 = vadd.f32 %v6478, %v6877
      %v6974 = vadd.f32 %v6479, %v6878
      %v6975 = vadd.f32 %v6480, %v6887
      %v6976 = vadd.f32 %v6481, %v6888
      %v6977 = vadd.f32 %v6482, %v6897
      %v6978 = vadd.f32 %v6483, %v6898
      %v6979 = vadd.f32 %v6484, %v6907
      %v6980 = vadd.f32 %v6485, %v6908
      %v6981 = vadd.f32 %v6486, %v6917
      %v6982 = vadd.f32 %v6487, %v6918
      %v6983 = vperm.slane %v3188, 7
      %v6985 = vrot.slane %v6983, 2
      %v6986 = vrot.slane %v6983, 4
      %v6987 = vrot.slane %v6983, 6
      %v6988 = vrot.slane %v6983, 7
      %v6989 = vrot.slane %v6988, 2
      %v6990 = vrot.slane %v6985, 7
      %v6991 = vsel %vm3698, %v6989, %v6990
      %v6992 = vrot.slane %v6990, 2
      %v6993 = vrot.slane %v6986, 7
      %v6994 = vsel %vm3698, %v6992, %v6993
      %v6995 = vrot.slane %v6993, 2
      %v6996 = vrot.slane %v6987, 7
      %v6997 = vsel %vm3698, %v6995, %v6996
      %v6998 = vrot.slane %v6996, 2
      %v6999 = vsel %vm3698, %v6998, %v6988
      %v7006 = vmul.f32 %v3044, %v6988
      %v7007 = vmul.f32 %v3045, %v6991
      %v7008 = vmul.f32 %v3046, %v6994
      %v7009 = vmul.f32 %v3047, %v6997
      %v7010 = vmul.f32 %v3048, %v6999
      %v7011 = vmul.f32 %v3049, %v6991
      %v7012 = vmul.f32 %v3050, %v6994
      %v7013 = vmul.f32 %v3051, %v6997
      %v7014 = vmul.f32 %v3052, %v6998
      %v7015 = vmul.f32 %v3053, %v6988
      %v7016 = vmul.f32 %v3054, %v6991
      %v7017 = vmul.f32 %v3055, %v6994
      %v7018 = vmul.f32 %v3056, %v6997
      %v7019 = vmul.f32 %v3057, %v6999
      %v7020 = vmul.f32 %v3058, %v6991
      %v7021 = vmul.f32 %v3059, %v6994
      %v7022 = vmul.f32 %v3060, %v6997
      %v7023 = vmul.f32 %v3061, %v6998
      %v7024 = vmul.f32 %v3062, %v6988
      %v7025 = vmul.f32 %v3063, %v6991
      %v7026 = vmul.f32 %v3064, %v6994
      %v7027 = vmul.f32 %v3065, %v6997
      %v7028 = vmul.f32 %v3066, %v6999
      %v7029 = vmul.f32 %v3067, %v6991
      %v7030 = vmul.f32 %v3068, %v6994
      %v7031 = vmul.f32 %v3069, %v6997
      %v7032 = vmul.f32 %v3070, %v6998
      %v7033 = vmul.f32 %v3071, %v6988
      %v7034 = vmul.f32 %v3072, %v6991
      %v7035 = vmul.f32 %v3073, %v6994
      %v7036 = vmul.f32 %v3074, %v6997
      %v7037 = vmul.f32 %v3075, %v6999
      %v7038 = vmul.f32 %v3076, %v6991
      %v7039 = vmul.f32 %v3077, %v6994
      %v7040 = vmul.f32 %v3078, %v6997
      %v7041 = vmul.f32 %v3079, %v6998
      %v7042 = vmul.f32 %v3080, %v6988
      %v7043 = vmul.f32 %v3081, %v6991
      %v7044 = vmul.f32 %v3082, %v6994
      %v7045 = vmul.f32 %v3083, %v6997
      %v7046 = vmul.f32 %v3084, %v6999
      %v7047 = vmul.f32 %v3085, %v6991
      %v7048 = vmul.f32 %v3086, %v6994
      %v7049 = vmul.f32 %v3087, %v6997
      %v7050 = vmul.f32 %v3088, %v6998
      %v7051 = vmul.f32 %v3089, %v6988
      %v7052 = vmul.f32 %v3090, %v6991
      %v7053 = vmul.f32 %v3091, %v6994
      %v7054 = vmul.f32 %v3092, %v6997
      %v7055 = vmul.f32 %v3093, %v6999
      %v7056 = vmul.f32 %v3094, %v6991
      %v7057 = vmul.f32 %v3095, %v6994
      %v7058 = vmul.f32 %v3096, %v6997
      %v7059 = vmul.f32 %v3097, %v6998
      %v7060 = vmul.f32 %v3098, %v6988
      %v7061 = vmul.f32 %v3099, %v6991
      %v7062 = vmul.f32 %v3100, %v6994
      %v7063 = vmul.f32 %v3101, %v6997
      %v7064 = vmul.f32 %v3102, %v6999
      %v7065 = vmul.f32 %v3103, %v6991
      %v7066 = vmul.f32 %v3104, %v6994
      %v7067 = vmul.f32 %v3105, %v6997
      %v7068 = vmul.f32 %v3106, %v6998
      %v7069 = vmul.f32 %v3107, %v6988
      %v7070 = vmul.f32 %v3108, %v6991
      %v7071 = vmul.f32 %v3109, %v6994
      %v7072 = vmul.f32 %v3110, %v6997
      %v7073 = vmul.f32 %v3111, %v6999
      %v7074 = vmul.f32 %v3112, %v6991
      %v7075 = vmul.f32 %v3113, %v6994
      %v7076 = vmul.f32 %v3114, %v6997
      %v7077 = vmul.f32 %v3115, %v6998
      %v7078 = vmul.f32 %v3116, %v6988
      %v7079 = vmul.f32 %v3117, %v6991
      %v7080 = vmul.f32 %v3118, %v6994
      %v7081 = vmul.f32 %v3119, %v6997
      %v7082 = vmul.f32 %v3120, %v6999
      %v7083 = vmul.f32 %v3121, %v6991
      %v7084 = vmul.f32 %v3122, %v6994
      %v7085 = vmul.f32 %v3123, %v6997
      %v7086 = vmul.f32 %v3124, %v6998
      %v7087 = vmul.f32 %v3125, %v6988
      %v7088 = vmul.f32 %v3126, %v6991
      %v7089 = vmul.f32 %v3127, %v6994
      %v7090 = vmul.f32 %v3128, %v6997
      %v7091 = vmul.f32 %v3129, %v6999
      %v7092 = vmul.f32 %v3130, %v6991
      %v7093 = vmul.f32 %v3131, %v6994
      %v7094 = vmul.f32 %v3132, %v6997
      %v7095 = vmul.f32 %v3133, %v6998
      %v7096 = vmul.f32 %v3134, %v6988
      %v7097 = vmul.f32 %v3135, %v6991
      %v7098 = vmul.f32 %v3136, %v6994
      %v7099 = vmul.f32 %v3137, %v6997
      %v7100 = vmul.f32 %v3138, %v6999
      %v7101 = vmul.f32 %v3139, %v6991
      %v7102 = vmul.f32 %v3140, %v6994
      %v7103 = vmul.f32 %v3141, %v6997
      %v7104 = vmul.f32 %v3142, %v6998
      %v7105 = vmul.f32 %v3143, %v6988
      %v7106 = vmul.f32 %v3144, %v6991
      %v7107 = vmul.f32 %v3145, %v6994
      %v7108 = vmul.f32 %v3146, %v6997
      %v7109 = vmul.f32 %v3147, %v6999
      %v7110 = vmul.f32 %v3148, %v6991
      %v7111 = vmul.f32 %v3149, %v6994
      %v7112 = vmul.f32 %v3150, %v6997
      %v7113 = vmul.f32 %v3151, %v6998
      %v7114 = vmul.f32 %v3152, %v6988
      %v7115 = vmul.f32 %v3153, %v6991
      %v7116 = vmul.f32 %v3154, %v6994
      %v7117 = vmul.f32 %v3155, %v6997
      %v7118 = vmul.f32 %v3156, %v6999
      %v7119 = vmul.f32 %v3157, %v6991
      %v7120 = vmul.f32 %v3158, %v6994
      %v7121 = vmul.f32 %v3159, %v6997
      %v7122 = vmul.f32 %v3160, %v6998
      %v7123 = vmul.f32 %v3161, %v6988
      %v7124 = vmul.f32 %v3162, %v6991
      %v7125 = vmul.f32 %v3163, %v6994
      %v7126 = vmul.f32 %v3164, %v6997
      %v7127 = vmul.f32 %v3165, %v6999
      %v7128 = vmul.f32 %v3166, %v6991
      %v7129 = vmul.f32 %v3167, %v6994
      %v7130 = vmul.f32 %v3168, %v6997
      %v7131 = vmul.f32 %v3169, %v6998
      %v7132 = vmul.f32 %v3170, %v6988
      %v7133 = vmul.f32 %v3171, %v6991
      %v7134 = vmul.f32 %v3172, %v6994
      %v7135 = vmul.f32 %v3173, %v6997
      %v7136 = vmul.f32 %v3174, %v6999
      %v7137 = vmul.f32 %v3175, %v6991
      %v7138 = vmul.f32 %v3176, %v6994
      %v7139 = vmul.f32 %v3177, %v6997
      %v7140 = vmul.f32 %v3178, %v6998
      %v7141 = vmul.f32 %v3179, %v6988
      %v7142 = vmul.f32 %v3180, %v6991
      %v7143 = vmul.f32 %v3181, %v6994
      %v7144 = vmul.f32 %v3182, %v6997
      %v7145 = vmul.f32 %v3183, %v6999
      %v7146 = vmul.f32 %v3184, %v6991
      %v7147 = vmul.f32 %v3185, %v6994
      %v7148 = vmul.f32 %v3186, %v6997
      %v7149 = vmul.f32 %v3187, %v6998
      %7294 = vst [vmem:[#allocation1] ss:$4 sm:$0xff] %v7006
      %s7295 = scalar_lea.vmem [#allocation1], 1
      %7296 = vst [vmem:[%s7295] ss:$4 sm:$0xff] %v7007
      %s7297 = scalar_lea.vmem [#allocation1], 2
      %7298 = vst [vmem:[%s7297] ss:$4 sm:$0xff] %v7008
      %s7299 = scalar_lea.vmem [#allocation1], 3
      %7300 = vst [vmem:[%s7299] ss:$4 sm:$0xff] %v7009
      %s7301 = scalar_lea.vmem [#allocation1], 32
      %7302 = vst [vmem:[%s7301] ss:$4 sm:$0xff] %v7010
      %s7303 = scalar_lea.vmem [#allocation1], 33
      %7304 = vst [vmem:[%s7303] ss:$4 sm:$0xff] %v7011
      %s7305 = scalar_lea.vmem [#allocation1], 34
      %7306 = vst [vmem:[%s7305] ss:$4 sm:$0xff] %v7012
      %s7307 = scalar_lea.vmem [#allocation1], 35
      %7308 = vst [vmem:[%s7307] ss:$4 sm:$0xff] %v7013
      %v7309 = vld.sshfl [vmem:[#allocation1] sm:$0xff pattern:$0x73625140]
      %v7310 = vld.sshfl [vmem:[#allocation1 + $0x20] sm:$0xff pattern:$0x73625140]
      %7311 = vst [vmem:[#allocation1] ss:$4 sm:$0xff] %v7014
      %v7312 = vld.sshfl [vmem:[#allocation1] sm:$0xff pattern:$0x73625140]
      %7313 = vst [vmem:[%s7301] ss:$4 sm:$0xff] %v7015
      %7314 = vst [vmem:[%s7303] ss:$4 sm:$0xff] %v7016
      %7315 = vst [vmem:[%s7305] ss:$4 sm:$0xff] %v7017
      %7316 = vst [vmem:[%s7307] ss:$4 sm:$0xff] %v7018
      %v7317 = vld.sshfl [vmem:[#allocation1 + $0x20] sm:$0xff pattern:$0x73625140]
      %7318 = vst [vmem:[#allocation1] ss:$4 sm:$0xff] %v7019
      %7319 = vst [vmem:[%s7295] ss:$4 sm:$0xff] %v7020
      %7320 = vst [vmem:[%s7297] ss:$4 sm:$0xff] %v7021
      %7321 = vst [vmem:[%s7299] ss:$4 sm:$0xff] %v7022
      %7322 = vst [vmem:[%s7301] ss:$4 sm:$0xff] %v7023
      %v7323 = vld.sshfl [vmem:[#allocation1] sm:$0xff pattern:$0x73625140]
      %v7324 = vld.sshfl [vmem:[#allocation1 + $0x20] sm:$0xff pattern:$0x73625140]
      %7325 = vst [vmem:[#allocation1] ss:$4 sm:$0xff] %v7024
      %7326 = vst [vmem:[%s7295] ss:$4 sm:$0xff] %v7025
      %7327 = vst [vmem:[%s7297] ss:$4 sm:$0xff] %v7026
      %7328 = vst [vmem:[%s7299] ss:$4 sm:$0xff] %v7027
      %7329 = vst [vmem:[%s7301] ss:$4 sm:$0xff] %v7028
      %7330 = vst [vmem:[%s7303] ss:$4 sm:$0xff] %v7029
      %7331 = vst [vmem:[%s7305] ss:$4 sm:$0xff] %v7030
      %7332 = vst [vmem:[%s7307] ss:$4 sm:$0xff] %v7031
      %v7333 = vld.sshfl [vmem:[#allocation1] sm:$0xff pattern:$0x73625140]
      %v7334 = vld.sshfl [vmem:[#allocation1 + $0x20] sm:$0xff pattern:$0x73625140]
      %7335 = vst [vmem:[#allocation1] ss:$4 sm:$0xff] %v7032
      %v7336 = vld.sshfl [vmem:[#allocation1] sm:$0xff pattern:$0x73625140]
      %7337 = vst [vmem:[%s7301] ss:$4 sm:$0xff] %v7033
      %7338 = vst [vmem:[%s7303] ss:$4 sm:$0xff] %v7034
      %7339 = vst [vmem:[%s7305] ss:$4 sm:$0xff] %v7035
      %7340 = vst [vmem:[%s7307] ss:$4 sm:$0xff] %v7036
      %v7341 = vld.sshfl [vmem:[#allocation1 + $0x20] sm:$0xff pattern:$0x73625140]
      %7342 = vst [vmem:[#allocation1] ss:$4 sm:$0xff] %v7037
      %7343 = vst [vmem:[%s7295] ss:$4 sm:$0xff] %v7038
      %7344 = vst [vmem:[%s7297] ss:$4 sm:$0xff] %v7039
      %7345 = vst [vmem:[%s7299] ss:$4 sm:$0xff] %v7040
      %7346 = vst [vmem:[%s7301] ss:$4 sm:$0xff] %v7041
      %v7347 = vld.sshfl [vmem:[#allocation1] sm:$0xff pattern:$0x73625140]
      %v7348 = vld.sshfl [vmem:[#allocation1 + $0x20] sm:$0xff pattern:$0x73625140]
      %7349 = vst [vmem:[#allocation1] ss:$4 sm:$0xff] %v7042
      %7350 = vst [vmem:[%s7295] ss:$4 sm:$0xff] %v7043
      %7351 = vst [vmem:[%s7297] ss:$4 sm:$0xff] %v7044
      %7352 = vst [vmem:[%s7299] ss:$4 sm:$0xff] %v7045
      %7353 = vst [vmem:[%s7301] ss:$4 sm:$0xff] %v7046
      %7354 = vst [vmem:[%s7303] ss:$4 sm:$0xff] %v7047
      %7355 = vst [vmem:[%s7305] ss:$4 sm:$0xff] %v7048
      %7356 = vst [vmem:[%s7307] ss:$4 sm:$0xff] %v7049
      %v7357 = vld.sshfl [vmem:[#allocation1] sm:$0xff pattern:$0x73625140]
      %v7358 = vld.sshfl [vmem:[#allocation1 + $0x20] sm:$0xff pattern:$0x73625140]
      %7359 = vst [vmem:[#allocation1] ss:$4 sm:$0xff] %v7050
      %v7360 = vld.sshfl [vmem:[#allocation1] sm:$0xff pattern:$0x73625140]
      %7361 = vst [vmem:[%s7301] ss:$4 sm:$0xff] %v7051
      %7362 = vst [vmem:[%s7303] ss:$4 sm:$0xff] %v7052
      %7363 = vst [vmem:[%s7305] ss:$4 sm:$0xff] %v7053
      %7364 = vst [vmem:[%s7307] ss:$4 sm:$0xff] %v7054
      %v7365 = vld.sshfl [vmem:[#allocation1 + $0x20] sm:$0xff pattern:$0x73625140]
      %7366 = vst [vmem:[#allocation1] ss:$4 sm:$0xff] %v7055
      %7367 = vst [vmem:[%s7295] ss:$4 sm:$0xff] %v7056
      %7368 = vst [vmem:[%s7297] ss:$4 sm:$0xff] %v7057
      %7369 = vst [vmem:[%s7299] ss:$4 sm:$0xff] %v7058
      %7370 = vst [vmem:[%s7301] ss:$4 sm:$0xff] %v7059
      %v7371 = vld.sshfl [vmem:[#allocation1] sm:$0xff pattern:$0x73625140]
      %v7372 = vld.sshfl [vmem:[#allocation1 + $0x20] sm:$0xff pattern:$0x73625140]
      %7373 = vst [vmem:[#allocation1] ss:$4 sm:$0xff] %v7060
      %7374 = vst [vmem:[%s7295] ss:$4 sm:$0xff] %v7061
      %7375 = vst [vmem:[%s7297] ss:$4 sm:$0xff] %v7062
      %7376 = vst [vmem:[%s7299] ss:$4 sm:$0xff] %v7063
      %7377 = vst [vmem:[%s7301] ss:$4 sm:$0xff] %v7064
      %7378 = vst [vmem:[%s7303] ss:$4 sm:$0xff] %v7065
      %7379 = vst [vmem:[%s7305] ss:$4 sm:$0xff] %v7066
      %7380 = vst [vmem:[%s7307] ss:$4 sm:$0xff] %v7067
      %v7381 = vld.sshfl [vmem:[#allocation1] sm:$0xff pattern:$0x73625140]
      %v7382 = vld.sshfl [vmem:[#allocation1 + $0x20] sm:$0xff pattern:$0x73625140]
      %7383 = vst [vmem:[#allocation1] ss:$4 sm:$0xff] %v7068
      %v7384 = vld.sshfl [vmem:[#allocation1] sm:$0xff pattern:$0x73625140]
      %7385 = vst [vmem:[%s7301] ss:$4 sm:$0xff] %v7069
      %7386 = vst [vmem:[%s7303] ss:$4 sm:$0xff] %v7070
      %7387 = vst [vmem:[%s7305] ss:$4 sm:$0xff] %v7071
      %7388 = vst [vmem:[%s7307] ss:$4 sm:$0xff] %v7072
      %v7389 = vld.sshfl [vmem:[#allocation1 + $0x20] sm:$0xff pattern:$0x73625140]
      %7390 = vst [vmem:[#allocation1] ss:$4 sm:$0xff] %v7073
      %7391 = vst [vmem:[%s7295] ss:$4 sm:$0xff] %v7074
      %7392 = vst [vmem:[%s7297] ss:$4 sm:$0xff] %v7075
      %7393 = vst [vmem:[%s7299] ss:$4 sm:$0xff] %v7076
      %7394 = vst [vmem:[%s7301] ss:$4 sm:$0xff] %v7077
      %v7395 = vld.sshfl [vmem:[#allocation1] sm:$0xff pattern:$0x73625140]
      %v7396 = vld.sshfl [vmem:[#allocation1 + $0x20] sm:$0xff pattern:$0x73625140]
      %7397 = vst [vmem:[#allocation1] ss:$4 sm:$0xff] %v7078
      %7398 = vst [vmem:[%s7295] ss:$4 sm:$0xff] %v7079
      %7399 = vst [vmem:[%s7297] ss:$4 sm:$0xff] %v7080
      %7400 = vst [vmem:[%s7299] ss:$4 sm:$0xff] %v7081
      %7401 = vst [vmem:[%s7301] ss:$4 sm:$0xff] %v7082
      %7402 = vst [vmem:[%s7303] ss:$4 sm:$0xff] %v7083
      %7403 = vst [vmem:[%s7305] ss:$4 sm:$0xff] %v7084
      %7404 = vst [vmem:[%s7307] ss:$4 sm:$0xff] %v7085
      %v7405 = vld.sshfl [vmem:[#allocation1] sm:$0xff pattern:$0x73625140]
      %v7406 = vld.sshfl [vmem:[#allocation1 + $0x20] sm:$0xff pattern:$0x73625140]
      %7407 = vst [vmem:[#allocation1] ss:$4 sm:$0xff] %v7086
      %v7408 = vld.sshfl [vmem:[#allocation1] sm:$0xff pattern:$0x73625140]
      %7409 = vst [vmem:[%s7301] ss:$4 sm:$0xff] %v7087
      %7410 = vst [vmem:[%s7303] ss:$4 sm:$0xff] %v7088
      %7411 = vst [vmem:[%s7305] ss:$4 sm:$0xff] %v7089
      %7412 = vst [vmem:[%s7307] ss:$4 sm:$0xff] %v7090
      %v7413 = vld.sshfl [vmem:[#allocation1 + $0x20] sm:$0xff pattern:$0x73625140]
      %7414 = vst [vmem:[#allocation1] ss:$4 sm:$0xff] %v7091
      %7415 = vst [vmem:[%s7295] ss:$4 sm:$0xff] %v7092
      %7416 = vst [vmem:[%s7297] ss:$4 sm:$0xff] %v7093
      %7417 = vst [vmem:[%s7299] ss:$4 sm:$0xff] %v7094
      %7418 = vst [vmem:[%s7301] ss:$4 sm:$0xff] %v7095
      %v7419 = vld.sshfl [vmem:[#allocation1] sm:$0xff pattern:$0x73625140]
      %v7420 = vld.sshfl [vmem:[#allocation1 + $0x20] sm:$0xff pattern:$0x73625140]
      %7421 = vst [vmem:[#allocation1] ss:$4 sm:$0xff] %v7096
      %7422 = vst [vmem:[%s7295] ss:$4 sm:$0xff] %v7097
      %7423 = vst [vmem:[%s7297] ss:$4 sm:$0xff] %v7098
      %7424 = vst [vmem:[%s7299] ss:$4 sm:$0xff] %v7099
      %7425 = vst [vmem:[%s7301] ss:$4 sm:$0xff] %v7100
      %7426 = vst [vmem:[%s7303] ss:$4 sm:$0xff] %v7101
      %7427 = vst [vmem:[%s7305] ss:$4 sm:$0xff] %v7102
      %7428 = vst [vmem:[%s7307] ss:$4 sm:$0xff] %v7103
      %v7429 = vld.sshfl [vmem:[#allocation1] sm:$0xff pattern:$0x73625140]
      %v7430 = vld.sshfl [vmem:[#allocation1 + $0x20] sm:$0xff pattern:$0x73625140]
      %7431 = vst [vmem:[#allocation1] ss:$4 sm:$0xff] %v7104
      %v7432 = vld.sshfl [vmem:[#allocation1] sm:$0xff pattern:$0x73625140]
      %7433 = vst [vmem:[%s7301] ss:$4 sm:$0xff] %v7105
      %7434 = vst [vmem:[%s7303] ss:$4 sm:$0xff] %v7106
      %7435 = vst [vmem:[%s7305] ss:$4 sm:$0xff] %v7107
      %7436 = vst [vmem:[%s7307] ss:$4 sm:$0xff] %v7108
      %v7437 = vld.sshfl [vmem:[#allocation1 + $0x20] sm:$0xff pattern:$0x73625140]
      %7438 = vst [vmem:[#allocation1] ss:$4 sm:$0xff] %v7109
      %7439 = vst [vmem:[%s7295] ss:$4 sm:$0xff] %v7110
      %7440 = vst [vmem:[%s7297] ss:$4 sm:$0xff] %v7111
      %7441 = vst [vmem:[%s7299] ss:$4 sm:$0xff] %v7112
      %7442 = vst [vmem:[%s7301] ss:$4 sm:$0xff] %v7113
      %v7443 = vld.sshfl [vmem:[#allocation1] sm:$0xff pattern:$0x73625140]
      %v7444 = vld.sshfl [vmem:[#allocation1 + $0x20] sm:$0xff pattern:$0x73625140]
      %7445 = vst [vmem:[#allocation1] ss:$4 sm:$0xff] %v7114
      %7446 = vst [vmem:[%s7295] ss:$4 sm:$0xff] %v7115
      %7447 = vst [vmem:[%s7297] ss:$4 sm:$0xff] %v7116
      %7448 = vst [vmem:[%s7299] ss:$4 sm:$0xff] %v7117
      %7449 = vst [vmem:[%s7301] ss:$4 sm:$0xff] %v7118
      %7450 = vst [vmem:[%s7303] ss:$4 sm:$0xff] %v7119
      %7451 = vst [vmem:[%s7305] ss:$4 sm:$0xff] %v7120
      %7452 = vst [vmem:[%s7307] ss:$4 sm:$0xff] %v7121
      %v7453 = vld.sshfl [vmem:[#allocation1] sm:$0xff pattern:$0x73625140]
      %v7454 = vld.sshfl [vmem:[#allocation1 + $0x20] sm:$0xff pattern:$0x73625140]
      %7455 = vst [vmem:[#allocation1] ss:$4 sm:$0xff] %v7122
      %v7456 = vld.sshfl [vmem:[#allocation1] sm:$0xff pattern:$0x73625140]
      %7457 = vst [vmem:[%s7301] ss:$4 sm:$0xff] %v7123
      %7458 = vst [vmem:[%s7303] ss:$4 sm:$0xff] %v7124
      %7459 = vst [vmem:[%s7305] ss:$4 sm:$0xff] %v7125
      %7460 = vst [vmem:[%s7307] ss:$4 sm:$0xff] %v7126
      %v7461 = vld.sshfl [vmem:[#allocation1 + $0x20] sm:$0xff pattern:$0x73625140]
      %7462 = vst [vmem:[#allocation1] ss:$4 sm:$0xff] %v7127
      %7463 = vst [vmem:[%s7295] ss:$4 sm:$0xff] %v7128
      %7464 = vst [vmem:[%s7297] ss:$4 sm:$0xff] %v7129
      %7465 = vst [vmem:[%s7299] ss:$4 sm:$0xff] %v7130
      %7466 = vst [vmem:[%s7301] ss:$4 sm:$0xff] %v7131
      %v7467 = vld.sshfl [vmem:[#allocation1] sm:$0xff pattern:$0x73625140]
      %v7468 = vld.sshfl [vmem:[#allocation1 + $0x20] sm:$0xff pattern:$0x73625140]
      %7469 = vst [vmem:[#allocation1] ss:$4 sm:$0xff] %v7132
      %7470 = vst [vmem:[%s7295] ss:$4 sm:$0xff] %v7133
      %7471 = vst [vmem:[%s7297] ss:$4 sm:$0xff] %v7134
      %7472 = vst [vmem:[%s7299] ss:$4 sm:$0xff] %v7135
      %7473 = vst [vmem:[%s7301] ss:$4 sm:$0xff] %v7136
      %7474 = vst [vmem:[%s7303] ss:$4 sm:$0xff] %v7137
      %7475 = vst [vmem:[%s7305] ss:$4 sm:$0xff] %v7138
      %7476 = vst [vmem:[%s7307] ss:$4 sm:$0xff] %v7139
      %v7477 = vld.sshfl [vmem:[#allocation1] sm:$0xff pattern:$0x73625140]
      %v7478 = vld.sshfl [vmem:[#allocation1 + $0x20] sm:$0xff pattern:$0x73625140]
      %7479 = vst [vmem:[#allocation1] ss:$4 sm:$0xff] %v7140
      %v7480 = vld.sshfl [vmem:[#allocation1] sm:$0xff pattern:$0x73625140]
      %7481 = vst [vmem:[%s7301] ss:$4 sm:$0xff] %v7141
      %7482 = vst [vmem:[%s7303] ss:$4 sm:$0xff] %v7142
      %7483 = vst [vmem:[%s7305] ss:$4 sm:$0xff] %v7143
      %7484 = vst [vmem:[%s7307] ss:$4 sm:$0xff] %v7144
      %v7485 = vld.sshfl [vmem:[#allocation1 + $0x20] sm:$0xff pattern:$0x73625140]
      %7486 = vst [vmem:[#allocation1] ss:$4 sm:$0xff] %v7145
      %7487 = vst [vmem:[%s7295] ss:$4 sm:$0xff] %v7146
      %7488 = vst [vmem:[%s7297] ss:$4 sm:$0xff] %v7147
      %7489 = vst [vmem:[%s7299] ss:$4 sm:$0xff] %v7148
      %7490 = vst [vmem:[%s7301] ss:$4 sm:$0xff] %v7149
      %v7491 = vld.sshfl [vmem:[#allocation1] sm:$0xff pattern:$0x73625140]
      %v7492 = vld.sshfl [vmem:[#allocation1 + $0x20] sm:$0xff pattern:$0x73625140]
      %v7493 = vrot.slane %v7309, 1
      %v7494 = vrot.slane %v7310, 1
      %v7495 = vsel %vm4204, %v7493, %v7494
      %v7496 = vrot.slane %v7312, 1
      %v7497 = vsel %vm4204, %v7494, %v7496
      %v7498 = vrot.slane %v7317, 1
      %v7499 = vrot.slane %v7323, 1
      %v7500 = vsel %vm4204, %v7498, %v7499
      %v7501 = vrot.slane %v7324, 1
      %v7502 = vsel %vm4204, %v7499, %v7501
      %v7503 = vrot.slane %v7333, 1
      %v7504 = vrot.slane %v7334, 1
      %v7505 = vsel %vm4204, %v7503, %v7504
      %v7506 = vrot.slane %v7336, 1
      %v7507 = vsel %vm4204, %v7504, %v7506
      %v7508 = vrot.slane %v7341, 1
      %v7509 = vrot.slane %v7347, 1
      %v7510 = vsel %vm4204, %v7508, %v7509
      %v7511 = vrot.slane %v7348, 1
      %v7512 = vsel %vm4204, %v7509, %v7511
      %v7513 = vrot.slane %v7357, 1
      %v7514 = vrot.slane %v7358, 1
      %v7515 = vsel %vm4204, %v7513, %v7514
      %v7516 = vrot.slane %v7360, 1
      %v7517 = vsel %vm4204, %v7514, %v7516
      %v7518 = vrot.slane %v7365, 1
      %v7519 = vrot.slane %v7371, 1
      %v7520 = vsel %vm4204, %v7518, %v7519
      %v7521 = vrot.slane %v7372, 1
      %v7522 = vsel %vm4204, %v7519, %v7521
      %v7523 = vrot.slane %v7381, 1
      %v7524 = vrot.slane %v7382, 1
      %v7525 = vsel %vm4204, %v7523, %v7524
      %v7526 = vrot.slane %v7384, 1
      %v7527 = vsel %vm4204, %v7524, %v7526
      %v7528 = vrot.slane %v7389, 1
      %v7529 = vrot.slane %v7395, 1
      %v7530 = vsel %vm4204, %v7528, %v7529
      %v7531 = vrot.slane %v7396, 1
      %v7532 = vsel %vm4204, %v7529, %v7531
      %v7533 = vrot.slane %v7405, 1
      %v7534 = vrot.slane %v7406, 1
      %v7535 = vsel %vm4204, %v7533, %v7534
      %v7536 = vrot.slane %v7408, 1
      %v7537 = vsel %vm4204, %v7534, %v7536
      %v7538 = vrot.slane %v7413, 1
      %v7539 = vrot.slane %v7419, 1
      %v7540 = vsel %vm4204, %v7538, %v7539
      %v7541 = vrot.slane %v7420, 1
      %v7542 = vsel %vm4204, %v7539, %v7541
      %v7543 = vrot.slane %v7429, 1
      %v7544 = vrot.slane %v7430, 1
      %v7545 = vsel %vm4204, %v7543, %v7544
      %v7546 = vrot.slane %v7432, 1
      %v7547 = vsel %vm4204, %v7544, %v7546
      %v7548 = vrot.slane %v7437, 1
      %v7549 = vrot.slane %v7443, 1
      %v7550 = vsel %vm4204, %v7548, %v7549
      %v7551 = vrot.slane %v7444, 1
      %v7552 = vsel %vm4204, %v7549, %v7551
      %v7553 = vrot.slane %v7453, 1
      %v7554 = vrot.slane %v7454, 1
      %v7555 = vsel %vm4204, %v7553, %v7554
      %v7556 = vrot.slane %v7456, 1
      %v7557 = vsel %vm4204, %v7554, %v7556
      %v7558 = vrot.slane %v7461, 1
      %v7559 = vrot.slane %v7467, 1
      %v7560 = vsel %vm4204, %v7558, %v7559
      %v7561 = vrot.slane %v7468, 1
      %v7562 = vsel %vm4204, %v7559, %v7561
      %v7563 = vrot.slane %v7477, 1
      %v7564 = vrot.slane %v7478, 1
      %v7565 = vsel %vm4204, %v7563, %v7564
      %v7566 = vrot.slane %v7480, 1
      %v7567 = vsel %vm4204, %v7564, %v7566
      %v7568 = vrot.slane %v7485, 1
      %v7569 = vrot.slane %v7491, 1
      %v7570 = vsel %vm4204, %v7568, %v7569
      %v7571 = vrot.slane %v7492, 1
      %v7572 = vsel %vm4204, %v7569, %v7571
      %v7605 = vadd.f32 %v6951, %v7495
      %v7606 = vadd.f32 %v6952, %v7497
      %v7607 = vadd.f32 %v6953, %v7500
      %v7608 = vadd.f32 %v6954, %v7502
      %v7609 = vadd.f32 %v6955, %v7505
      %v7610 = vadd.f32 %v6956, %v7507
      %v7611 = vadd.f32 %v6957, %v7510
      %v7612 = vadd.f32 %v6958, %v7512
      %v7613 = vadd.f32 %v6959, %v7515
      %v7614 = vadd.f32 %v6960, %v7517
      %v7615 = vadd.f32 %v6961, %v7520
      %v7616 = vadd.f32 %v6962, %v7522
      %v7617 = vadd.f32 %v6963, %v7525
      %v7618 = vadd.f32 %v6964, %v7527
      %v7619 = vadd.f32 %v6965, %v7530
      %v7620 = vadd.f32 %v6966, %v7532
      %v7621 = vadd.f32 %v6967, %v7535
      %v7622 = vadd.f32 %v6968, %v7537
      %v7623 = vadd.f32 %v6969, %v7540
      %v7624 = vadd.f32 %v6970, %v7542
      %v7625 = vadd.f32 %v6971, %v7545
      %v7626 = vadd.f32 %v6972, %v7547
      %v7627 = vadd.f32 %v6973, %v7550
      %v7628 = vadd.f32 %v6974, %v7552
      %v7629 = vadd.f32 %v6975, %v7555
      %v7630 = vadd.f32 %v6976, %v7557
      %v7631 = vadd.f32 %v6977, %v7560
      %v7632 = vadd.f32 %v6978, %v7562
      %v7633 = vadd.f32 %v6979, %v7565
      %v7634 = vadd.f32 %v6980, %v7567
      %v7635 = vadd.f32 %v6981, %v7570
      %v7636 = vadd.f32 %v6982, %v7572
      %v7637 = vperm.slane %v3189, 0
      %v7639 = vrot.slane %v7637, 2
      %v7640 = vrot.slane %v7637, 4
      %v7641 = vrot.slane %v7637, 6
      %v7645 = vmul.f32 %v3045, %v7637
      %v7646 = vmul.f32 %v3046, %v7639
      %v7647 = vmul.f32 %v3047, %v7640
      %v7648 = vmul.f32 %v3048, %v7641
      %v7649 = vmul.f32 %v3049, %v7637
      %v7650 = vmul.f32 %v3050, %v7639
      %v7651 = vmul.f32 %v3051, %v7640
      %v7652 = vmul.f32 %v3052, %v7641
      %v7653 = vmul.f32 %v3054, %v7637
      %v7654 = vmul.f32 %v3055, %v7639
      %v7655 = vmul.f32 %v3056, %v7640
      %v7656 = vmul.f32 %v3057, %v7641
      %v7657 = vmul.f32 %v3058, %v7637
      %v7658 = vmul.f32 %v3059, %v7639
      %v7659 = vmul.f32 %v3060, %v7640
      %v7660 = vmul.f32 %v3061, %v7641
      %v7661 = vmul.f32 %v3063, %v7637
      %v7662 = vmul.f32 %v3064, %v7639
      %v7663 = vmul.f32 %v3065, %v7640
      %v7664 = vmul.f32 %v3066, %v7641
      %v7665 = vmul.f32 %v3067, %v7637
      %v7666 = vmul.f32 %v3068, %v7639
      %v7667 = vmul.f32 %v3069, %v7640
      %v7668 = vmul.f32 %v3070, %v7641
      %v7669 = vmul.f32 %v3072, %v7637
      %v7670 = vmul.f32 %v3073, %v7639
      %v7671 = vmul.f32 %v3074, %v7640
      %v7672 = vmul.f32 %v3075, %v7641
      %v7673 = vmul.f32 %v3076, %v7637
      %v7674 = vmul.f32 %v3077, %v7639
      %v7675 = vmul.f32 %v3078, %v7640
      %v7676 = vmul.f32 %v3079, %v7641
      %v7677 = vmul.f32 %v3081, %v7637
      %v7678 = vmul.f32 %v3082, %v7639
      %v7679 = vmul.f32 %v3083, %v7640
      %v7680 = vmul.f32 %v3084, %v7641
      %v7681 = vmul.f32 %v3085, %v7637
      %v7682 = vmul.f32 %v3086, %v7639
      %v7683 = vmul.f32 %v3087, %v7640
      %v7684 = vmul.f32 %v3088, %v7641
      %v7685 = vmul.f32 %v3090, %v7637
      %v7686 = vmul.f32 %v3091, %v7639
      %v7687 = vmul.f32 %v3092, %v7640
      %v7688 = vmul.f32 %v3093, %v7641
      %v7689 = vmul.f32 %v3094, %v7637
      %v7690 = vmul.f32 %v3095, %v7639
      %v7691 = vmul.f32 %v3096, %v7640
      %v7692 = vmul.f32 %v3097, %v7641
      %v7693 = vmul.f32 %v3099, %v7637
      %v7694 = vmul.f32 %v3100, %v7639
      %v7695 = vmul.f32 %v3101, %v7640
      %v7696 = vmul.f32 %v3102, %v7641
      %v7697 = vmul.f32 %v3103, %v7637
      %v7698 = vmul.f32 %v3104, %v7639
      %v7699 = vmul.f32 %v3105, %v7640
      %v7700 = vmul.f32 %v3106, %v7641
      %v7701 = vmul.f32 %v3108, %v7637
      %v7702 = vmul.f32 %v3109, %v7639
      %v7703 = vmul.f32 %v3110, %v7640
      %v7704 = vmul.f32 %v3111, %v7641
      %v7705 = vmul.f32 %v3112, %v7637
      %v7706 = vmul.f32 %v3113, %v7639
      %v7707 = vmul.f32 %v3114, %v7640
      %v7708 = vmul.f32 %v3115, %v7641
      %v7709 = vmul.f32 %v3117, %v7637
      %v7710 = vmul.f32 %v3118, %v7639
      %v7711 = vmul.f32 %v3119, %v7640
      %v7712 = vmul.f32 %v3120, %v7641
      %v7713 = vmul.f32 %v3121, %v7637
      %v7714 = vmul.f32 %v3122, %v7639
      %v7715 = vmul.f32 %v3123, %v7640
      %v7716 = vmul.f32 %v3124, %v7641
      %v7717 = vmul.f32 %v3126, %v7637
      %v7718 = vmul.f32 %v3127, %v7639
      %v7719 = vmul.f32 %v3128, %v7640
      %v7720 = vmul.f32 %v3129, %v7641
      %v7721 = vmul.f32 %v3130, %v7637
      %v7722 = vmul.f32 %v3131, %v7639
      %v7723 = vmul.f32 %v3132, %v7640
      %v7724 = vmul.f32 %v3133, %v7641
      %v7725 = vmul.f32 %v3135, %v7637
      %v7726 = vmul.f32 %v3136, %v7639
      %v7727 = vmul.f32 %v3137, %v7640
      %v7728 = vmul.f32 %v3138, %v7641
      %v7729 = vmul.f32 %v3139, %v7637
      %v7730 = vmul.f32 %v3140, %v7639
      %v7731 = vmul.f32 %v3141, %v7640
      %v7732 = vmul.f32 %v3142, %v7641
      %v7733 = vmul.f32 %v3144, %v7637
      %v7734 = vmul.f32 %v3145, %v7639
      %v7735 = vmul.f32 %v3146, %v7640
      %v7736 = vmul.f32 %v3147, %v7641
      %v7737 = vmul.f32 %v3148, %v7637
      %v7738 = vmul.f32 %v3149, %v7639
      %v7739 = vmul.f32 %v3150, %v7640
      %v7740 = vmul.f32 %v3151, %v7641
      %v7741 = vmul.f32 %v3153, %v7637
      %v7742 = vmul.f32 %v3154, %v7639
      %v7743 = vmul.f32 %v3155, %v7640
      %v7744 = vmul.f32 %v3156, %v7641
      %v7745 = vmul.f32 %v3157, %v7637
      %v7746 = vmul.f32 %v3158, %v7639
      %v7747 = vmul.f32 %v3159, %v7640
      %v7748 = vmul.f32 %v3160, %v7641
      %v7749 = vmul.f32 %v3162, %v7637
      %v7750 = vmul.f32 %v3163, %v7639
      %v7751 = vmul.f32 %v3164, %v7640
      %v7752 = vmul.f32 %v3165, %v7641
      %v7753 = vmul.f32 %v3166, %v7637
      %v7754 = vmul.f32 %v3167, %v7639
      %v7755 = vmul.f32 %v3168, %v7640
      %v7756 = vmul.f32 %v3169, %v7641
      %v7757 = vmul.f32 %v3171, %v7637
      %v7758 = vmul.f32 %v3172, %v7639
      %v7759 = vmul.f32 %v3173, %v7640
      %v7760 = vmul.f32 %v3174, %v7641
      %v7761 = vmul.f32 %v3175, %v7637
      %v7762 = vmul.f32 %v3176, %v7639
      %v7763 = vmul.f32 %v3177, %v7640
      %v7764 = vmul.f32 %v3178, %v7641
      %v7765 = vmul.f32 %v3180, %v7637
      %v7766 = vmul.f32 %v3181, %v7639
      %v7767 = vmul.f32 %v3182, %v7640
      %v7768 = vmul.f32 %v3183, %v7641
      %v7769 = vmul.f32 %v3184, %v7637
      %v7770 = vmul.f32 %v3185, %v7639
      %v7771 = vmul.f32 %v3186, %v7640
      %v7772 = vmul.f32 %v3187, %v7641
      %7901 = vst [vmem:[#allocation1] ss:$4 sm:$0xff] %v7645
      %s7902 = scalar_lea.vmem [#allocation1], 1
      %7903 = vst [vmem:[%s7902] ss:$4 sm:$0xff] %v7646
      %s7904 = scalar_lea.vmem [#allocation1], 2
      %7905 = vst [vmem:[%s7904] ss:$4 sm:$0xff] %v7647
      %s7906 = scalar_lea.vmem [#allocation1], 3
      %7907 = vst [vmem:[%s7906] ss:$4 sm:$0xff] %v7648
      %s7908 = scalar_lea.vmem [#allocation1], 32
      %7909 = vst [vmem:[%s7908] ss:$4 sm:$0xff] %v7649
      %s7910 = scalar_lea.vmem [#allocation1], 33
      %7911 = vst [vmem:[%s7910] ss:$4 sm:$0xff] %v7650
      %s7912 = scalar_lea.vmem [#allocation1], 34
      %7913 = vst [vmem:[%s7912] ss:$4 sm:$0xff] %v7651
      %s7914 = scalar_lea.vmem [#allocation1], 35
      %7915 = vst [vmem:[%s7914] ss:$4 sm:$0xff] %v7652
      %v7916 = vld.sshfl [vmem:[#allocation1] sm:$0xff pattern:$0x73625140]
      %v7917 = vld.sshfl [vmem:[#allocation1 + $0x20] sm:$0xff pattern:$0x73625140]
      %7918 = vst [vmem:[#allocation1] ss:$4 sm:$0xff] %v7653
      %7919 = vst [vmem:[%s7902] ss:$4 sm:$0xff] %v7654
      %7920 = vst [vmem:[%s7904] ss:$4 sm:$0xff] %v7655
      %7921 = vst [vmem:[%s7906] ss:$4 sm:$0xff] %v7656
      %7922 = vst [vmem:[%s7908] ss:$4 sm:$0xff] %v7657
      %7923 = vst [vmem:[%s7910] ss:$4 sm:$0xff] %v7658
      %7924 = vst [vmem:[%s7912] ss:$4 sm:$0xff] %v7659
      %7925 = vst [vmem:[%s7914] ss:$4 sm:$0xff] %v7660
      %v7926 = vld.sshfl [vmem:[#allocation1] sm:$0xff pattern:$0x73625140]
      %v7927 = vld.sshfl [vmem:[#allocation1 + $0x20] sm:$0xff pattern:$0x73625140]
      %7928 = vst [vmem:[#allocation1] ss:$4 sm:$0xff] %v7661
      %7929 = vst [vmem:[%s7902] ss:$4 sm:$0xff] %v7662
      %7930 = vst [vmem:[%s7904] ss:$4 sm:$0xff] %v7663
      %7931 = vst [vmem:[%s7906] ss:$4 sm:$0xff] %v7664
      %7932 = vst [vmem:[%s7908] ss:$4 sm:$0xff] %v7665
      %7933 = vst [vmem:[%s7910] ss:$4 sm:$0xff] %v7666
      %7934 = vst [vmem:[%s7912] ss:$4 sm:$0xff] %v7667
      %7935 = vst [vmem:[%s7914] ss:$4 sm:$0xff] %v7668
      %v7936 = vld.sshfl [vmem:[#allocation1] sm:$0xff pattern:$0x73625140]
      %v7937 = vld.sshfl [vmem:[#allocation1 + $0x20] sm:$0xff pattern:$0x73625140]
      %7938 = vst [vmem:[#allocation1] ss:$4 sm:$0xff] %v7669
      %7939 = vst [vmem:[%s7902] ss:$4 sm:$0xff] %v7670
      %7940 = vst [vmem:[%s7904] ss:$4 sm:$0xff] %v7671
      %7941 = vst [vmem:[%s7906] ss:$4 sm:$0xff] %v7672
      %7942 = vst [vmem:[%s7908] ss:$4 sm:$0xff] %v7673
      %7943 = vst [vmem:[%s7910] ss:$4 sm:$0xff] %v7674
      %7944 = vst [vmem:[%s7912] ss:$4 sm:$0xff] %v7675
      %7945 = vst [vmem:[%s7914] ss:$4 sm:$0xff] %v7676
      %v7946 = vld.sshfl [vmem:[#allocation1] sm:$0xff pattern:$0x73625140]
      %v7947 = vld.sshfl [vmem:[#allocation1 + $0x20] sm:$0xff pattern:$0x73625140]
      %7948 = vst [vmem:[#allocation1] ss:$4 sm:$0xff] %v7677
      %7949 = vst [vmem:[%s7902] ss:$4 sm:$0xff] %v7678
      %7950 = vst [vmem:[%s7904] ss:$4 sm:$0xff] %v7679
      %7951 = vst [vmem:[%s7906] ss:$4 sm:$0xff] %v7680
      %7952 = vst [vmem:[%s7908] ss:$4 sm:$0xff] %v7681
      %7953 = vst [vmem:[%s7910] ss:$4 sm:$0xff] %v7682
      %7954 = vst [vmem:[%s7912] ss:$4 sm:$0xff] %v7683
      %7955 = vst [vmem:[%s7914] ss:$4 sm:$0xff] %v7684
      %v7956 = vld.sshfl [vmem:[#allocation1] sm:$0xff pattern:$0x73625140]
      %v7957 = vld.sshfl [vmem:[#allocation1 + $0x20] sm:$0xff pattern:$0x73625140]
      %7958 = vst [vmem:[#allocation1] ss:$4 sm:$0xff] %v7685
      %7959 = vst [vmem:[%s7902] ss:$4 sm:$0xff] %v7686
      %7960 = vst [vmem:[%s7904] ss:$4 sm:$0xff] %v7687
      %7961 = vst [vmem:[%s7906] ss:$4 sm:$0xff] %v7688
      %7962 = vst [vmem:[%s7908] ss:$4 sm:$0xff] %v7689
      %7963 = vst [vmem:[%s7910] ss:$4 sm:$0xff] %v7690
      %7964 = vst [vmem:[%s7912] ss:$4 sm:$0xff] %v7691
      %7965 = vst [vmem:[%s7914] ss:$4 sm:$0xff] %v7692
      %v7966 = vld.sshfl [vmem:[#allocation1] sm:$0xff pattern:$0x73625140]
      %v7967 = vld.sshfl [vmem:[#allocation1 + $0x20] sm:$0xff pattern:$0x73625140]
      %7968 = vst [vmem:[#allocation1] ss:$4 sm:$0xff] %v7693
      %7969 = vst [vmem:[%s7902] ss:$4 sm:$0xff] %v7694
      %7970 = vst [vmem:[%s7904] ss:$4 sm:$0xff] %v7695
      %7971 = vst [vmem:[%s7906] ss:$4 sm:$0xff] %v7696
      %7972 = vst [vmem:[%s7908] ss:$4 sm:$0xff] %v7697
      %7973 = vst [vmem:[%s7910] ss:$4 sm:$0xff] %v7698
      %7974 = vst [vmem:[%s7912] ss:$4 sm:$0xff] %v7699
      %7975 = vst [vmem:[%s7914] ss:$4 sm:$0xff] %v7700
      %v7976 = vld.sshfl [vmem:[#allocation1] sm:$0xff pattern:$0x73625140]
      %v7977 = vld.sshfl [vmem:[#allocation1 + $0x20] sm:$0xff pattern:$0x73625140]
      %7978 = vst [vmem:[#allocation1] ss:$4 sm:$0xff] %v7701
      %7979 = vst [vmem:[%s7902] ss:$4 sm:$0xff] %v7702
      %7980 = vst [vmem:[%s7904] ss:$4 sm:$0xff] %v7703
      %7981 = vst [vmem:[%s7906] ss:$4 sm:$0xff] %v7704
      %7982 = vst [vmem:[%s7908] ss:$4 sm:$0xff] %v7705
      %7983 = vst [vmem:[%s7910] ss:$4 sm:$0xff] %v7706
      %7984 = vst [vmem:[%s7912] ss:$4 sm:$0xff] %v7707
      %7985 = vst [vmem:[%s7914] ss:$4 sm:$0xff] %v7708
      %v7986 = vld.sshfl [vmem:[#allocation1] sm:$0xff pattern:$0x73625140]
      %v7987 = vld.sshfl [vmem:[#allocation1 + $0x20] sm:$0xff pattern:$0x73625140]
      %7988 = vst [vmem:[#allocation1] ss:$4 sm:$0xff] %v7709
      %7989 = vst [vmem:[%s7902] ss:$4 sm:$0xff] %v7710
      %7990 = vst [vmem:[%s7904] ss:$4 sm:$0xff] %v7711
      %7991 = vst [vmem:[%s7906] ss:$4 sm:$0xff] %v7712
      %7992 = vst [vmem:[%s7908] ss:$4 sm:$0xff] %v7713
      %7993 = vst [vmem:[%s7910] ss:$4 sm:$0xff] %v7714
      %7994 = vst [vmem:[%s7912] ss:$4 sm:$0xff] %v7715
      %7995 = vst [vmem:[%s7914] ss:$4 sm:$0xff] %v7716
      %v7996 = vld.sshfl [vmem:[#allocation1] sm:$0xff pattern:$0x73625140]
      %v7997 = vld.sshfl [vmem:[#allocation1 + $0x20] sm:$0xff pattern:$0x73625140]
      %7998 = vst [vmem:[#allocation1] ss:$4 sm:$0xff] %v7717
      %7999 = vst [vmem:[%s7902] ss:$4 sm:$0xff] %v7718
      %8000 = vst [vmem:[%s7904] ss:$4 sm:$0xff] %v7719
      %8001 = vst [vmem:[%s7906] ss:$4 sm:$0xff] %v7720
      %8002 = vst [vmem:[%s7908] ss:$4 sm:$0xff] %v7721
      %8003 = vst [vmem:[%s7910] ss:$4 sm:$0xff] %v7722
      %8004 = vst [vmem:[%s7912] ss:$4 sm:$0xff] %v7723
      %8005 = vst [vmem:[%s7914] ss:$4 sm:$0xff] %v7724
      %v8006 = vld.sshfl [vmem:[#allocation1] sm:$0xff pattern:$0x73625140]
      %v8007 = vld.sshfl [vmem:[#allocation1 + $0x20] sm:$0xff pattern:$0x73625140]
      %8008 = vst [vmem:[#allocation1] ss:$4 sm:$0xff] %v7725
      %8009 = vst [vmem:[%s7902] ss:$4 sm:$0xff] %v7726
      %8010 = vst [vmem:[%s7904] ss:$4 sm:$0xff] %v7727
      %8011 = vst [vmem:[%s7906] ss:$4 sm:$0xff] %v7728
      %8012 = vst [vmem:[%s7908] ss:$4 sm:$0xff] %v7729
      %8013 = vst [vmem:[%s7910] ss:$4 sm:$0xff] %v7730
      %8014 = vst [vmem:[%s7912] ss:$4 sm:$0xff] %v7731
      %8015 = vst [vmem:[%s7914] ss:$4 sm:$0xff] %v7732
      %v8016 = vld.sshfl [vmem:[#allocation1] sm:$0xff pattern:$0x73625140]
      %v8017 = vld.sshfl [vmem:[#allocation1 + $0x20] sm:$0xff pattern:$0x73625140]
      %8018 = vst [vmem:[#allocation1] ss:$4 sm:$0xff] %v7733
      %8019 = vst [vmem:[%s7902] ss:$4 sm:$0xff] %v7734
      %8020 = vst [vmem:[%s7904] ss:$4 sm:$0xff] %v7735
      %8021 = vst [vmem:[%s7906] ss:$4 sm:$0xff] %v7736
      %8022 = vst [vmem:[%s7908] ss:$4 sm:$0xff] %v7737
      %8023 = vst [vmem:[%s7910] ss:$4 sm:$0xff] %v7738
      %8024 = vst [vmem:[%s7912] ss:$4 sm:$0xff] %v7739
      %8025 = vst [vmem:[%s7914] ss:$4 sm:$0xff] %v7740
      %v8026 = vld.sshfl [vmem:[#allocation1] sm:$0xff pattern:$0x73625140]
      %v8027 = vld.sshfl [vmem:[#allocation1 + $0x20] sm:$0xff pattern:$0x73625140]
      %8028 = vst [vmem:[#allocation1] ss:$4 sm:$0xff] %v7741
      %8029 = vst [vmem:[%s7902] ss:$4 sm:$0xff] %v7742
      %8030 = vst [vmem:[%s7904] ss:$4 sm:$0xff] %v7743
      %8031 = vst [vmem:[%s7906] ss:$4 sm:$0xff] %v7744
      %8032 = vst [vmem:[%s7908] ss:$4 sm:$0xff] %v7745
      %8033 = vst [vmem:[%s7910] ss:$4 sm:$0xff] %v7746
      %8034 = vst [vmem:[%s7912] ss:$4 sm:$0xff] %v7747
      %8035 = vst [vmem:[%s7914] ss:$4 sm:$0xff] %v7748
      %v8036 = vld.sshfl [vmem:[#allocation1] sm:$0xff pattern:$0x73625140]
      %v8037 = vld.sshfl [vmem:[#allocation1 + $0x20] sm:$0xff pattern:$0x73625140]
      %8038 = vst [vmem:[#allocation1] ss:$4 sm:$0xff] %v7749
      %8039 = vst [vmem:[%s7902] ss:$4 sm:$0xff] %v7750
      %8040 = vst [vmem:[%s7904] ss:$4 sm:$0xff] %v7751
      %8041 = vst [vmem:[%s7906] ss:$4 sm:$0xff] %v7752
      %8042 = vst [vmem:[%s7908] ss:$4 sm:$0xff] %v7753
      %8043 = vst [vmem:[%s7910] ss:$4 sm:$0xff] %v7754
      %8044 = vst [vmem:[%s7912] ss:$4 sm:$0xff] %v7755
      %8045 = vst [vmem:[%s7914] ss:$4 sm:$0xff] %v7756
      %v8046 = vld.sshfl [vmem:[#allocation1] sm:$0xff pattern:$0x73625140]
      %v8047 = vld.sshfl [vmem:[#allocation1 + $0x20] sm:$0xff pattern:$0x73625140]
      %8048 = vst [vmem:[#allocation1] ss:$4 sm:$0xff] %v7757
      %8049 = vst [vmem:[%s7902] ss:$4 sm:$0xff] %v7758
      %8050 = vst [vmem:[%s7904] ss:$4 sm:$0xff] %v7759
      %8051 = vst [vmem:[%s7906] ss:$4 sm:$0xff] %v7760
      %8052 = vst [vmem:[%s7908] ss:$4 sm:$0xff] %v7761
      %8053 = vst [vmem:[%s7910] ss:$4 sm:$0xff] %v7762
      %8054 = vst [vmem:[%s7912] ss:$4 sm:$0xff] %v7763
      %8055 = vst [vmem:[%s7914] ss:$4 sm:$0xff] %v7764
      %v8056 = vld.sshfl [vmem:[#allocation1] sm:$0xff pattern:$0x73625140]
      %v8057 = vld.sshfl [vmem:[#allocation1 + $0x20] sm:$0xff pattern:$0x73625140]
      %8058 = vst [vmem:[#allocation1] ss:$4 sm:$0xff] %v7765
      %8059 = vst [vmem:[%s7902] ss:$4 sm:$0xff] %v7766
      %8060 = vst [vmem:[%s7904] ss:$4 sm:$0xff] %v7767
      %8061 = vst [vmem:[%s7906] ss:$4 sm:$0xff] %v7768
      %8062 = vst [vmem:[%s7908] ss:$4 sm:$0xff] %v7769
      %8063 = vst [vmem:[%s7910] ss:$4 sm:$0xff] %v7770
      %8064 = vst [vmem:[%s7912] ss:$4 sm:$0xff] %v7771
      %8065 = vst [vmem:[%s7914] ss:$4 sm:$0xff] %v7772
      %v8066 = vld.sshfl [vmem:[#allocation1] sm:$0xff pattern:$0x73625140]
      %v8067 = vld.sshfl [vmem:[#allocation1 + $0x20] sm:$0xff pattern:$0x73625140]
      %v8100 = vadd.f32 %v7605, %v7916
      %v8101 = vadd.f32 %v7606, %v7917
      %v8102 = vadd.f32 %v7607, %v7926
      %v8103 = vadd.f32 %v7608, %v7927
      %v8104 = vadd.f32 %v7609, %v7936
      %v8105 = vadd.f32 %v7610, %v7937
      %v8106 = vadd.f32 %v7611, %v7946
      %v8107 = vadd.f32 %v7612, %v7947
      %v8108 = vadd.f32 %v7613, %v7956
      %v8109 = vadd.f32 %v7614, %v7957
      %v8110 = vadd.f32 %v7615, %v7966
      %v8111 = vadd.f32 %v7616, %v7967
      %v8112 = vadd.f32 %v7617, %v7976
      %v8113 = vadd.f32 %v7618, %v7977
      %v8114 = vadd.f32 %v7619, %v7986
      %v8115 = vadd.f32 %v7620, %v7987
      %v8116 = vadd.f32 %v7621, %v7996
      %v8117 = vadd.f32 %v7622, %v7997
      %v8118 = vadd.f32 %v7623, %v8006
      %v8119 = vadd.f32 %v7624, %v8007
      %v8120 = vadd.f32 %v7625, %v8016
      %v8121 = vadd.f32 %v7626, %v8017
      %v8122 = vadd.f32 %v7627, %v8026
      %v8123 = vadd.f32 %v7628, %v8027
      %v8124 = vadd.f32 %v7629, %v8036
      %v8125 = vadd.f32 %v7630, %v8037
      %v8126 = vadd.f32 %v7631, %v8046
      %v8127 = vadd.f32 %v7632, %v8047
      %v8128 = vadd.f32 %v7633, %v8056
      %v8129 = vadd.f32 %v7634, %v8057
      %v8130 = vadd.f32 %v7635, %v8066
      %v8131 = vadd.f32 %v7636, %v8067
      %v8132 = vmax.f32 %v8100, 0.0
      %v8133 = vmax.f32 %v8101, 0.0
      %v8134 = vmax.f32 %v8102, 0.0
      %v8135 = vmax.f32 %v8103, 0.0
      %v8136 = vmax.f32 %v8104, 0.0
      %v8137 = vmax.f32 %v8105, 0.0
      %v8138 = vmax.f32 %v8106, 0.0
      %v8139 = vmax.f32 %v8107, 0.0
      %v8140 = vmax.f32 %v8108, 0.0
      %v8141 = vmax.f32 %v8109, 0.0
      %v8142 = vmax.f32 %v8110, 0.0
      %v8143 = vmax.f32 %v8111, 0.0
      %v8144 = vmax.f32 %v8112, 0.0
      %v8145 = vmax.f32 %v8113, 0.0
      %v8146 = vmax.f32 %v8114, 0.0
      %v8147 = vmax.f32 %v8115, 0.0
      %v8148 = vmax.f32 %v8116, 0.0
      %v8149 = vmax.f32 %v8117, 0.0
      %v8150 = vmax.f32 %v8118, 0.0
      %v8151 = vmax.f32 %v8119, 0.0
      %v8152 = vmax.f32 %v8120, 0.0
      %v8153 = vmax.f32 %v8121, 0.0
      %v8154 = vmax.f32 %v8122, 0.0
      %v8155 = vmax.f32 %v8123, 0.0
      %v8156 = vmax.f32 %v8124, 0.0
      %v8157 = vmax.f32 %v8125, 0.0
      %v8158 = vmax.f32 %v8126, 0.0
      %v8159 = vmax.f32 %v8127, 0.0
      %v8160 = vmax.f32 %v8128, 0.0
      %v8161 = vmax.f32 %v8129, 0.0
      %v8162 = vmax.f32 %v8130, 0.0
      %v8163 = vmax.f32 %v8131, 0.0
      %v8164 = vmin.f32 %v8132, 6.0
      %v8165 = vmin.f32 %v8133, 6.0
      %v8166 = vmin.f32 %v8134, 6.0
      %v8167 = vmin.f32 %v8135, 6.0
      %v8168 = vmin.f32 %v8136, 6.0
      %v8169 = vmin.f32 %v8137, 6.0
      %v8170 = vmin.f32 %v8138, 6.0
      %v8171 = vmin.f32 %v8139, 6.0
      %v8172 = vmin.f32 %v8140, 6.0
      %v8173 = vmin.f32 %v8141, 6.0
      %v8174 = vmin.f32 %v8142, 6.0
      %v8175 = vmin.f32 %v8143, 6.0
      %v8176 = vmin.f32 %v8144, 6.0
      %v8177 = vmin.f32 %v8145, 6.0
      %v8178 = vmin.f32 %v8146, 6.0
      %v8179 = vmin.f32 %v8147, 6.0
      %v8180 = vmin.f32 %v8148, 6.0
      %v8181 = vmin.f32 %v8149, 6.0
      %v8182 = vmin.f32 %v8150, 6.0
      %v8183 = vmin.f32 %v8151, 6.0
      %v8184 = vmin.f32 %v8152, 6.0
      %v8185 = vmin.f32 %v8153, 6.0
      %v8186 = vmin.f32 %v8154, 6.0
      %v8187 = vmin.f32 %v8155, 6.0
      %v8188 = vmin.f32 %v8156, 6.0
      %v8189 = vmin.f32 %v8157, 6.0
      %v8190 = vmin.f32 %v8158, 6.0
      %v8191 = vmin.f32 %v8159, 6.0
      %v8192 = vmin.f32 %v8160, 6.0
      %v8193 = vmin.f32 %v8161, 6.0
      %v8194 = vmin.f32 %v8162, 6.0
      %v8195 = vmin.f32 %v8163, 6.0
      %v8196 = vpack.c.bf16 %v8165, %v8164
      %v8197 = vpack.c.bf16 %v8167, %v8166
      %v8198 = vpack.c.bf16 %v8169, %v8168
      %v8199 = vpack.c.bf16 %v8171, %v8170
      %v8200 = vpack.c.bf16 %v8173, %v8172
      %v8201 = vpack.c.bf16 %v8175, %v8174
      %v8202 = vpack.c.bf16 %v8177, %v8176
      %v8203 = vpack.c.bf16 %v8179, %v8178
      %v8204 = vpack.c.bf16 %v8181, %v8180
      %v8205 = vpack.c.bf16 %v8183, %v8182
      %v8206 = vpack.c.bf16 %v8185, %v8184
      %v8207 = vpack.c.bf16 %v8187, %v8186
      %v8208 = vpack.c.bf16 %v8189, %v8188
      %v8209 = vpack.c.bf16 %v8191, %v8190
      %v8210 = vpack.c.bf16 %v8193, %v8192
      %v8211 = vpack.c.bf16 %v8195, %v8194
      %v8212 = vld [vmem:[%s6] sm:$0xf]
      %v8213 = vld [vmem:[%s6 + $0x4] sm:$0xf]
      %v8214 = vld [vmem:[%s6 + $0x8] sm:$0xf]
      %v8215 = vld [vmem:[%s7] sm:$0x1]
      %v8217 = vperm.slane %v8215, 0
      %v8222 = vunpack.c.l.b16 %v8212
      %v8223 = vunpack.c.l.b16 %v8213
      %v8224 = vunpack.c.l.b16 %v8214
      %v8225 = vpack.c.b16 %v8223, %v8222
      %v8226 = vpack.c.b16 %v8224, %v8224
      %vm8228 = vcmask 195584
      %v8230 = vsel %vm8228, %v8196, 0
      %v8233 = vsel %vm8228, %v8197, 0
      %v8236 = vsel %vm8228, %v8198, 0
      %v8239 = vsel %vm8228, %v8199, 0
      %v8242 = vsel %vm8228, %v8200, 0
      %v8245 = vsel %vm8228, %v8201, 0
      %v8248 = vsel %vm8228, %v8202, 0
      %v8251 = vsel %vm8228, %v8203, 0
      %v8254 = vsel %vm8228, %v8204, 0
      %v8257 = vsel %vm8228, %v8205, 0
      %v8260 = vsel %vm8228, %v8206, 0
      %v8263 = vsel %vm8228, %v8207, 0
      %v8266 = vsel %vm8228, %v8208, 0
      %v8269 = vsel %vm8228, %v8209, 0
      %v8272 = vsel %vm8228, %v8210, 0
      %v8275 = vsel %vm8228, %v8211, 0
      %v8278 = vsel %vm1334, %v8226, 0
      %8280 = vmatpush.bf16.msra.mxu0 0
      %8281 = vmatpush.bf16.msra.mxu0 0
      %8282 = vmatpush.bf16.msra.mxu0 0
      %8283 = vmatpush.bf16.msra.mxu0 0
      %8284 = vmatpush.bf16.msra.mxu0 0
      %8285 = vmatpush.bf16.msra.mxu0 0
      %8286 = vmatpush.bf16.msra.mxu0 %v8278
      %8287 = vmatpush.bf16.msra.mxu0 %v8225
      %8288 = vmatmul.bf16.gmra.mxu0 %v8230
      %v8289 = vpop.f32.mrf.mxu0
      %v8290 = vadd.f32 %v8217, %v8289
      %v8291 = vpop.f32.mrf.mxu0
      %v8292 = vadd.f32 %v8217, %v8291
      %8293 = vmatmul.bf16.gmra.mxu0 %v8233
      %v8294 = vpop.f32.mrf.mxu0
      %v8295 = vadd.f32 %v8217, %v8294
      %v8296 = vpop.f32.mrf.mxu0
      %v8297 = vadd.f32 %v8217, %v8296
      %8298 = vmatmul.bf16.gmra.mxu0 %v8236
      %v8299 = vpop.f32.mrf.mxu0
      %v8300 = vadd.f32 %v8217, %v8299
      %v8301 = vpop.f32.mrf.mxu0
      %v8302 = vadd.f32 %v8217, %v8301
      %8303 = vmatmul.bf16.gmra.mxu0 %v8239
      %v8304 = vpop.f32.mrf.mxu0
      %v8305 = vadd.f32 %v8217, %v8304
      %v8306 = vpop.f32.mrf.mxu0
      %v8307 = vadd.f32 %v8217, %v8306
      %8308 = vmatmul.bf16.gmra.mxu0 %v8242
      %v8309 = vpop.f32.mrf.mxu0
      %v8310 = vadd.f32 %v8217, %v8309
      %v8311 = vpop.f32.mrf.mxu0
      %v8312 = vadd.f32 %v8217, %v8311
      %8313 = vmatmul.bf16.gmra.mxu0 %v8245
      %v8314 = vpop.f32.mrf.mxu0
      %v8315 = vadd.f32 %v8217, %v8314
      %v8316 = vpop.f32.mrf.mxu0
      %v8317 = vadd.f32 %v8217, %v8316
      %8318 = vmatmul.bf16.gmra.mxu0 %v8248
      %v8319 = vpop.f32.mrf.mxu0
      %v8320 = vadd.f32 %v8217, %v8319
      %v8321 = vpop.f32.mrf.mxu0
      %v8322 = vadd.f32 %v8217, %v8321
      %8323 = vmatmul.bf16.gmra.mxu0 %v8251
      %v8324 = vpop.f32.mrf.mxu0
      %v8325 = vadd.f32 %v8217, %v8324
      %v8326 = vpop.f32.mrf.mxu0
      %v8327 = vadd.f32 %v8217, %v8326
      %8328 = vmatmul.bf16.gmra.mxu0 %v8254
      %v8329 = vpop.f32.mrf.mxu0
      %v8330 = vadd.f32 %v8217, %v8329
      %v8331 = vpop.f32.mrf.mxu0
      %v8332 = vadd.f32 %v8217, %v8331
      %8333 = vmatmul.bf16.gmra.mxu0 %v8257
      %v8334 = vpop.f32.mrf.mxu0
      %v8335 = vadd.f32 %v8217, %v8334
      %v8336 = vpop.f32.mrf.mxu0
      %v8337 = vadd.f32 %v8217, %v8336
      %8338 = vmatmul.bf16.gmra.mxu0 %v8260
      %v8339 = vpop.f32.mrf.mxu0
      %v8340 = vadd.f32 %v8217, %v8339
      %v8341 = vpop.f32.mrf.mxu0
      %v8342 = vadd.f32 %v8217, %v8341
      %8343 = vmatmul.bf16.gmra.mxu0 %v8263
      %v8344 = vpop.f32.mrf.mxu0
      %v8345 = vadd.f32 %v8217, %v8344
      %v8346 = vpop.f32.mrf.mxu0
      %v8347 = vadd.f32 %v8217, %v8346
      %8348 = vmatmul.bf16.gmra.mxu0 %v8266
      %v8349 = vpop.f32.mrf.mxu0
      %v8350 = vadd.f32 %v8217, %v8349
      %v8351 = vpop.f32.mrf.mxu0
      %v8352 = vadd.f32 %v8217, %v8351
      %8353 = vmatmul.bf16.gmra.mxu0 %v8269
      %v8354 = vpop.f32.mrf.mxu0
      %v8355 = vadd.f32 %v8217, %v8354
      %v8356 = vpop.f32.mrf.mxu0
      %v8357 = vadd.f32 %v8217, %v8356
      %8358 = vmatmul.bf16.gmra.mxu0 %v8272
      %v8359 = vpop.f32.mrf.mxu0
      %v8360 = vadd.f32 %v8217, %v8359
      %v8361 = vpop.f32.mrf.mxu0
      %v8362 = vadd.f32 %v8217, %v8361
      %8363 = vmatmul.bf16.gmra.mxu0 %v8275
      %v8364 = vpop.f32.mrf.mxu0
      %v8365 = vadd.f32 %v8217, %v8364
      %v8366 = vpop.f32.mrf.mxu0
      %v8367 = vadd.f32 %v8217, %v8366
      %8368 = vdwg.mxu0
      %v8369 = vunpack.c.l.bf16 %v339
      %v8370 = vunpack.c.l.bf16 %v340
      %v8371 = vunpack.c.l.bf16 %v341
      %v8372 = vunpack.c.l.bf16 %v342
      %v8373 = vunpack.c.l.bf16 %v343
      %v8374 = vunpack.c.l.bf16 %v344
      %v8375 = vunpack.c.l.bf16 %v345
      %v8376 = vunpack.c.l.bf16 %v346
      %v8377 = vunpack.c.l.bf16 %v347
      %v8378 = vunpack.c.l.bf16 %v348
      %v8379 = vunpack.c.l.bf16 %v349
      %v8380 = vunpack.c.l.bf16 %v350
      %v8381 = vunpack.c.l.bf16 %v351
      %v8382 = vunpack.c.l.bf16 %v352
      %v8383 = vunpack.c.l.bf16 %v353
      %v8384 = vunpack.c.l.bf16 %v354
      %v8385 = vunpack.c.l.bf16 %v355
      %v8386 = vunpack.c.l.bf16 %v356
      %v8387 = vunpack.c.l.bf16 %v357
      %v8388 = vunpack.c.l.bf16 %v358
      %v8389 = vunpack.c.l.bf16 %v359
      %v8390 = vunpack.c.l.bf16 %v360
      %v8391 = vunpack.c.l.bf16 %v361
      %v8392 = vunpack.c.l.bf16 %v362
      %v8393 = vunpack.c.l.bf16 %v363
      %v8394 = vunpack.c.l.bf16 %v364
      %v8395 = vunpack.c.l.bf16 %v365
      %v8396 = vunpack.c.l.bf16 %v366
      %v8397 = vunpack.c.l.bf16 %v367
      %v8398 = vunpack.c.l.bf16 %v368
      %v8399 = vunpack.c.l.bf16 %v369
      %v8400 = vunpack.c.l.bf16 %v370
      %v8401 = vunpack.c.l.bf16 %v371
      %v8402 = vunpack.c.l.bf16 %v372
      %v8403 = vunpack.c.l.bf16 %v373
      %v8404 = vunpack.c.l.bf16 %v374
      %v8405 = vunpack.c.l.bf16 %v375
      %v8406 = vunpack.c.l.bf16 %v376
      %v8407 = vunpack.c.l.bf16 %v377
      %v8408 = vunpack.c.l.bf16 %v378
      %v8409 = vunpack.c.l.bf16 %v379
      %v8410 = vunpack.c.l.bf16 %v380
      %v8411 = vunpack.c.l.bf16 %v381
      %v8412 = vunpack.c.l.bf16 %v382
      %v8413 = vunpack.c.l.bf16 %v383
      %v8414 = vunpack.c.l.bf16 %v384
      %v8415 = vunpack.c.l.bf16 %v385
      %v8416 = vunpack.c.l.bf16 %v386
      %v8465 = vrot.slane %v8369, 1
      %v8466 = vrot.slane %v8370, 1
      %v8467 = vsel %vm4204, %v8465, %v8466
      %v8468 = vrot.slane %v8371, 1
      %v8469 = vsel %vm4204, %v8466, %v8468
      %v8470 = vrot.slane %v8372, 1
      %v8471 = vrot.slane %v8373, 1
      %v8472 = vsel %vm4204, %v8470, %v8471
      %v8473 = vrot.slane %v8374, 1
      %v8474 = vsel %vm4204, %v8471, %v8473
      %v8475 = vrot.slane %v8375, 1
      %v8476 = vrot.slane %v8376, 1
      %v8477 = vsel %vm4204, %v8475, %v8476
      %v8478 = vrot.slane %v8377, 1
      %v8479 = vsel %vm4204, %v8476, %v8478
      %v8480 = vrot.slane %v8378, 1
      %v8481 = vrot.slane %v8379, 1
      %v8482 = vsel %vm4204, %v8480, %v8481
      %v8483 = vrot.slane %v8380, 1
      %v8484 = vsel %vm4204, %v8481, %v8483
      %v8485 = vrot.slane %v8381, 1
      %v8486 = vrot.slane %v8382, 1
      %v8487 = vsel %vm4204, %v8485, %v8486
      %v8488 = vrot.slane %v8383, 1
      %v8489 = vsel %vm4204, %v8486, %v8488
      %v8490 = vrot.slane %v8384, 1
      %v8491 = vrot.slane %v8385, 1
      %v8492 = vsel %vm4204, %v8490, %v8491
      %v8493 = vrot.slane %v8386, 1
      %v8494 = vsel %vm4204, %v8491, %v8493
      %v8495 = vrot.slane %v8387, 1
      %v8496 = vrot.slane %v8388, 1
      %v8497 = vsel %vm4204, %v8495, %v8496
      %v8498 = vrot.slane %v8389, 1
      %v8499 = vsel %vm4204, %v8496, %v8498
      %v8500 = vrot.slane %v8390, 1
      %v8501 = vrot.slane %v8391, 1
      %v8502 = vsel %vm4204, %v8500, %v8501
      %v8503 = vrot.slane %v8392, 1
      %v8504 = vsel %vm4204, %v8501, %v8503
      %v8505 = vrot.slane %v8393, 1
      %v8506 = vrot.slane %v8394, 1
      %v8507 = vsel %vm4204, %v8505, %v8506
      %v8508 = vrot.slane %v8395, 1
      %v8509 = vsel %vm4204, %v8506, %v8508
      %v8510 = vrot.slane %v8396, 1
      %v8511 = vrot.slane %v8397, 1
      %v8512 = vsel %vm4204, %v8510, %v8511
      %v8513 = vrot.slane %v8398, 1
      %v8514 = vsel %vm4204, %v8511, %v8513
      %v8515 = vrot.slane %v8399, 1
      %v8516 = vrot.slane %v8400, 1
      %v8517 = vsel %vm4204, %v8515, %v8516
      %v8518 = vrot.slane %v8401, 1
      %v8519 = vsel %vm4204, %v8516, %v8518
      %v8520 = vrot.slane %v8402, 1
      %v8521 = vrot.slane %v8403, 1
      %v8522 = vsel %vm4204, %v8520, %v8521
      %v8523 = vrot.slane %v8404, 1
      %v8524 = vsel %vm4204, %v8521, %v8523
      %v8525 = vrot.slane %v8405, 1
      %v8526 = vrot.slane %v8406, 1
      %v8527 = vsel %vm4204, %v8525, %v8526
      %v8528 = vrot.slane %v8407, 1
      %v8529 = vsel %vm4204, %v8526, %v8528
      %v8530 = vrot.slane %v8408, 1
      %v8531 = vrot.slane %v8409, 1
      %v8532 = vsel %vm4204, %v8530, %v8531
      %v8533 = vrot.slane %v8410, 1
      %v8534 = vsel %vm4204, %v8531, %v8533
      %v8535 = vrot.slane %v8411, 1
      %v8536 = vrot.slane %v8412, 1
      %v8537 = vsel %vm4204, %v8535, %v8536
      %v8538 = vrot.slane %v8413, 1
      %v8539 = vsel %vm4204, %v8536, %v8538
      %v8540 = vrot.slane %v8414, 1
      %v8541 = vrot.slane %v8415, 1
      %v8542 = vsel %vm4204, %v8540, %v8541
      %v8543 = vrot.slane %v8416, 1
      %v8544 = vsel %vm4204, %v8541, %v8543
      %v8577 = vadd.f32 %v8290, %v8467
      %v8578 = vadd.f32 %v8292, %v8469
      %v8579 = vadd.f32 %v8295, %v8472
      %v8580 = vadd.f32 %v8297, %v8474
      %v8581 = vadd.f32 %v8300, %v8477
      %v8582 = vadd.f32 %v8302, %v8479
      %v8583 = vadd.f32 %v8305, %v8482
      %v8584 = vadd.f32 %v8307, %v8484
      %v8585 = vadd.f32 %v8310, %v8487
      %v8586 = vadd.f32 %v8312, %v8489
      %v8587 = vadd.f32 %v8315, %v8492
      %v8588 = vadd.f32 %v8317, %v8494
      %v8589 = vadd.f32 %v8320, %v8497
      %v8590 = vadd.f32 %v8322, %v8499
      %v8591 = vadd.f32 %v8325, %v8502
      %v8592 = vadd.f32 %v8327, %v8504
      %v8593 = vadd.f32 %v8330, %v8507
      %v8594 = vadd.f32 %v8332, %v8509
      %v8595 = vadd.f32 %v8335, %v8512
      %v8596 = vadd.f32 %v8337, %v8514
      %v8597 = vadd.f32 %v8340, %v8517
      %v8598 = vadd.f32 %v8342, %v8519
      %v8599 = vadd.f32 %v8345, %v8522
      %v8600 = vadd.f32 %v8347, %v8524
      %v8601 = vadd.f32 %v8350, %v8527
      %v8602 = vadd.f32 %v8352, %v8529
      %v8603 = vadd.f32 %v8355, %v8532
      %v8604 = vadd.f32 %v8357, %v8534
      %v8605 = vadd.f32 %v8360, %v8537
      %v8606 = vadd.f32 %v8362, %v8539
      %v8607 = vadd.f32 %v8365, %v8542
      %v8608 = vadd.f32 %v8367, %v8544
      %8609 = vst.msk [vmem:[%s329] sm:$0xff] %vm1291, %v8577
      %8610 = vst.msk [vmem:[%s329 + $0x8] sm:$0xff] %vm1291, %v8578
      %8611 = vst.msk [vmem:[%s329 + $0x10] sm:$0xff] %vm1291, %v8579
      %8612 = vst.msk [vmem:[%s329 + $0x18] sm:$0xff] %vm1291, %v8580
      %8613 = vst.msk [vmem:[%s329 + $0x20] sm:$0xff] %vm1291, %v8581
      %8614 = vst.msk [vmem:[%s329 + $0x28] sm:$0xff] %vm1291, %v8582
      %8615 = vst.msk [vmem:[%s329 + $0x30] sm:$0xff] %vm1291, %v8583
      %8616 = vst.msk [vmem:[%s329 + $0x38] sm:$0xff] %vm1291, %v8584
      %8617 = vst.msk [vmem:[%s329 + $0x40] sm:$0xff] %vm1291, %v8585
      %8618 = vst.msk [vmem:[%s329 + $0x48] sm:$0xff] %vm1291, %v8586
      %8619 = vst.msk [vmem:[%s329 + $0x50] sm:$0xff] %vm1291, %v8587
      %8620 = vst.msk [vmem:[%s329 + $0x58] sm:$0xff] %vm1291, %v8588
      %8621 = vst.msk [vmem:[%s329 + $0x60] sm:$0xff] %vm1291, %v8589
      %8622 = vst.msk [vmem:[%s329 + $0x68] sm:$0xff] %vm1291, %v8590
      %8623 = vst.msk [vmem:[%s329 + $0x70] sm:$0xff] %vm1291, %v8591
      %8624 = vst.msk [vmem:[%s329 + $0x78] sm:$0xff] %vm1291, %v8592
      %8625 = vst.msk [vmem:[%s329 + $0x80] sm:$0xff] %vm1291, %v8593
      %8626 = vst.msk [vmem:[%s329 + $0x88] sm:$0xff] %vm1291, %v8594
      %8627 = vst.msk [vmem:[%s329 + $0x90] sm:$0xff] %vm1291, %v8595
      %8628 = vst.msk [vmem:[%s329 + $0x98] sm:$0xff] %vm1291, %v8596
      %8629 = vst.msk [vmem:[%s329 + $0xa0] sm:$0xff] %vm1291, %v8597
      %8630 = vst.msk [vmem:[%s329 + $0xa8] sm:$0xff] %vm1291, %v8598
      %8631 = vst.msk [vmem:[%s329 + $0xb0] sm:$0xff] %vm1291, %v8599
      %8632 = vst.msk [vmem:[%s329 + $0xb8] sm:$0xff] %vm1291, %v8600
      %8633 = vst.msk [vmem:[%s329 + $0xc0] sm:$0xff] %vm1291, %v8601
      %8634 = vst.msk [vmem:[%s329 + $0xc8] sm:$0xff] %vm1291, %v8602
      %8635 = vst.msk [vmem:[%s329 + $0xd0] sm:$0xff] %vm1291, %v8603
      %8636 = vst.msk [vmem:[%s329 + $0xd8] sm:$0xff] %vm1291, %v8604
      %8637 = vst.msk [vmem:[%s329 + $0xe0] sm:$0xff] %vm1291, %v8605
      %8638 = vst.msk [vmem:[%s329 + $0xe8] sm:$0xff] %vm1291, %v8606
      %8639 = vst.msk [vmem:[%s329 + $0xf0] sm:$0xff] %vm1291, %v8607
      %8640 = vst.msk [vmem:[%s329 + $0xf8] sm:$0xff] %vm1291, %v8608
      %s8641 = smul.u32 16, %s24
      %p8642 = scmp.lt.s32.totalorder %s23, 1
      %s8643 = scalar_select %p8642, %s23, 1
      %p8644 = scmp.lt.s32.totalorder %s8641, 15
      %s8645 = scalar_select %p8644, %s8641, 15
      %s8646 = smul.addr %s8645, 2
      %s8647 = smul.addr %s8643, 32
      %s8648 = sadd.s32 %s8646, %s8647
      %s8649 = smul.addr %s8648, 8
      %s8650 = scalar_lea.vmem %s8, %s8649
      // Predicated region
      $region53: #{tpu_custom_call.1} parent=51 // pred_check
        %p8651 = pneg %p224
      $region54: #{tpu_custom_call.1} parent=51 // pred_check_branch
        %8653 = sbr.rel (%p8651) target = $region56
      $region55: #{tpu_custom_call.1} parent=51 // pred_region
        %s8654 = smul.u32 16, %s24
      $region56: #{tpu_custom_call.1} parent=51 // pred_fallthru
        _
    $region52: #{tpu_custom_call.1} parent=5 // pred_fallthru
      _
    %p8655 = scmp.le.s32.totalorder 2, %s14
    // Predicated region
    $region57: #{tpu_custom_call.1} parent=5 // pred_check
      %p8656 = pneg %p8655
    $region58: #{tpu_custom_call.1} parent=5 // pred_check_branch
      %8658 = sbr.rel (%p8656) target = $region60
    $region59: #{tpu_custom_call.1} parent=5 // pred_region
      %s8659 = ssub.s32 %s14, 2
      // Predicated region
      $region61: #{tpu_custom_call.1} parent=59 // pred_check
        %p8660 = pneg %p230
      $region62: #{tpu_custom_call.1} parent=59 // pred_check_branch
        %8662 = sbr.rel (%p8660) target = $region64
      $region63: #{tpu_custom_call.1} parent=59 // pred_region
        %s8663 = smul.u32 16, %s26
        %p8664 = scmp.lt.s32.totalorder %s25, 1
        %s8665 = scalar_select %p8664, %s25, 1
        %p8666 = scmp.lt.s32.totalorder %s8663, 15
        %s8667 = scalar_select %p8666, %s8663, 15
        %s8668 = smul.addr %s8667, 2
        %s8669 = smul.addr %s8665, 32
        %s8670 = sadd.s32 %s8668, %s8669
        %s8671 = smul.addr %s8670, 8
        %s8672 = scalar_lea.vmem %s8, %s8671
      $region64: #{tpu_custom_call.1} parent=59 // pred_fallthru
        _
    $region60: #{tpu_custom_call.1} parent=5 // pred_fallthru
      _
  $region6: #{tpu_custom_call.1} parent=0 // loop_footer
    %s18 = sadd.s32 1, %s14
  $region7: #{tpu_custom_call.1} parent=0 // loop_footer_branch
    %13 = sbr.rel target = $region3
  $region8: #{tpu_custom_call.1} parent=0 // loop_exit
    _

</llo_original>
